<compile_context>
chip_gen: v7x
topology: tpu7x:2x2x1
jax: 0.10.0
libtpu: 0.0.40
codegen_flags: <defaults>
</compile_context>

<pallas_src>
import functools

import numpy as np
import jax
import jax.numpy as jnp
from jax.experimental import pallas as pl
from jax.experimental.pallas import tpu as pltpu

NEG_SLOPE = 0.01
BN_EPS = 1e-5
LANE = 128
VMEM_LIMIT = 32 * 1024 * 1024    # explicit scoped-VMEM cap; safe on v5e/v6e/v7x
TILE_BUDGET = 20 * 1024 * 1024   # per-kernel double-buffered tile budget


def _round_up(x, m):
    return (x + m - 1) // m * m


def _pick_block_m(M, K, Np):
    """Largest power-of-two row tile that fits the VMEM tile budget.

    Capped so the M grid has >= 2 iterations whenever Mp >= 16 (keeps both of
    v7x's TensorCores busy and gives the pipeline prefetch/compute overlap).
    """
    m8 = _round_up(M, 8)
    cap = m8 if m8 < 16 else _round_up(m8 // 2, 8)
    for bm in (1024, 512, 256, 128, 64, 32, 16, 8):
        if bm > cap:
            continue
        # 2x (bf16 x-tile + bf16 out-tile) + resident bf16 weight + f32 shift
        vmem = 2 * (bm * K * 2 + bm * Np * 2) + 2 * K * Np * 2 + 2 * Np * 4
        if vmem <= TILE_BUDGET:
            return bm
    return 8


# ----------------------------------------------------------------------------
# Pallas kernels
# ----------------------------------------------------------------------------
def _fused_matmul_kernel(x_ref, w_ref, shift_ref, o_ref, *, act, slope):
    # bf16 operands, f32 accumulation on the MXU; additive epilogue in f32.
    # (Any multiplicative scale has already been folded into the weight columns.)
    y = jnp.dot(x_ref[...], w_ref[...], preferred_element_type=jnp.float32)
    y = y + shift_ref[...]
    if act == "leaky_relu":
        y = jnp.maximum(y, slope * y)
    elif act == "sigmoid":
        y = 1.0 / (1.0 + jnp.exp(-y))        # exact sigmoid -> output stays in [0, 1]
    o_ref[...] = y.astype(o_ref.dtype)


def _fused_mlp2_kernel(x_ref, w1_ref, b1_ref, w2_ref, b2_ref, o_ref, *, act2, slope):
    h = jnp.dot(x_ref[...], w1_ref[...], preferred_element_type=jnp.float32) + b1_ref[...]
    h = jnp.maximum(h, slope * h)                              # LeakyReLU between layers
    y = jnp.dot(h.astype(w2_ref.dtype), w2_ref[...],
                preferred_element_type=jnp.float32) + b2_ref[...]
    if act2 == "leaky_relu":
        y = jnp.maximum(y, slope * y)
    elif act2 == "sigmoid":
        y = 1.0 / (1.0 + jnp.exp(-y))
    o_ref[...] = y.astype(o_ref.dtype)


def fused_matmul(x, w, shift, act="none", slope=NEG_SLOPE):
    """act((x @ w) + shift); M-tiled, N padded to 128 lanes, bf16 in/out, f32 accum."""
    M, K = x.shape
    _, N = w.shape
    Np = _round_up(N, LANE)
    bm = _pick_block_m(M, K, Np)
    Mp = _round_up(M, bm)

    xb = jnp.pad(x.astype(jnp.bfloat16), ((0, Mp - M), (0, 0)))
    wb = jnp.pad(w.astype(jnp.bfloat16), ((0, 0), (0, Np - N)))
    sh = jnp.pad(shift.astype(jnp.float32).reshape(-1), (0, Np - N)).reshape(1, Np)

    kernel = functools.partial(_fused_matmul_kernel, act=act, slope=slope)
    out = pl.pallas_call(
        kernel,
        out_shape=jax.ShapeDtypeStruct((Mp, Np), jnp.bfloat16),
        grid=(Mp // bm,),
        in_specs=[
            pl.BlockSpec((bm, K), lambda i: (i, 0)),
            pl.BlockSpec((K, Np), lambda i: (0, 0)),
            pl.BlockSpec((1, Np), lambda i: (0, 0)),
        ],
        out_specs=pl.BlockSpec((bm, Np), lambda i: (i, 0)),
        compiler_params=pltpu.CompilerParams(
            dimension_semantics=("parallel",),          # shards rows across v7x's 2 TCs
            vmem_limit_bytes=VMEM_LIMIT),
        cost_estimate=pl.CostEstimate(
            flops=2 * Mp * K * Np,
            transcendentals=Mp * Np if act == "sigmoid" else 0,
            bytes_accessed=Mp * K * 2 + K * Np * 2 + Np * 4 + Mp * Np * 2),
    )(xb, wb, sh)
    return out[:M, :N]


def fused_mlp2(x, w1, b1, w2, b2, act2="none", slope=NEG_SLOPE):
    """Two stacked linears (LeakyReLU in between) in ONE Pallas kernel (tiny-M fusion)."""
    M, K = x.shape
    K1, N1 = w1.shape
    N1b, N2 = w2.shape
    assert K == K1 and N1 == N1b
    N1p = _round_up(N1, LANE)
    N2p = _round_up(N2, LANE)
    m8 = _round_up(M, 8)
    bm = m8 if m8 < 16 else min(256, _round_up(m8 // 2, 8))   # >=2 grid steps when possible
    Mp = _round_up(M, bm)

    xb = jnp.pad(x.astype(jnp.bfloat16), ((0, Mp - M), (0, 0)))
    w1b = jnp.pad(w1.astype(jnp.bfloat16), ((0, 0), (0, N1p - N1)))
    b1p = jnp.pad(b1.astype(jnp.float32), (0, N1p - N1)).reshape(1, N1p)
    w2b = jnp.pad(w2.astype(jnp.bfloat16), ((0, N1p - N1), (0, N2p - N2)))
    b2p = jnp.pad(b2.astype(jnp.float32), (0, N2p - N2)).reshape(1, N2p)

    kernel = functools.partial(_fused_mlp2_kernel, act2=act2, slope=slope)
    out = pl.pallas_call(
        kernel,
        out_shape=jax.ShapeDtypeStruct((Mp, N2p), jnp.bfloat16),
        grid=(Mp // bm,),
        in_specs=[
            pl.BlockSpec((bm, K), lambda i: (i, 0)),
            pl.BlockSpec((K, N1p), lambda i: (0, 0)),
            pl.BlockSpec((1, N1p), lambda i: (0, 0)),
            pl.BlockSpec((N1p, N2p), lambda i: (0, 0)),
            pl.BlockSpec((1, N2p), lambda i: (0, 0)),
        ],
        out_specs=pl.BlockSpec((bm, N2p), lambda i: (i, 0)),
        compiler_params=pltpu.CompilerParams(
            dimension_semantics=("parallel",),
            vmem_limit_bytes=VMEM_LIMIT),
        cost_estimate=pl.CostEstimate(
            flops=2 * Mp * (K * N1p + N1p * N2p),
            transcendentals=Mp * N2p if act2 == "sigmoid" else 0,
            bytes_accessed=Mp * K * 2 + K * N1p * 2 + N1p * N2p * 2
                           + (N1p + N2p) * 4 + Mp * N2p * 2),
    )(xb, w1b, b1p, w2b, b2p)
    return out[:M, :N2]


# ----------------------------------------------------------------------------
# NHWC im2col glue (plain-JAX data movement)
# TODO(synk): im2col is still materialized in HBM; in-kernel halo-tiled patch
#             construction (memory_space=pl.ANY + manual copies) is the next step.
# ----------------------------------------------------------------------------
def im2col_nhwc(x, kh, kw, stride):
    """x: (B, H, W, C) -> (B*Ho*Wo, kh*kw*C), columns ordered (kh, kw, C)."""
    B, H, W, C = x.shape
    Ho = (H - kh) // stride + 1
    Wo = (W - kw) // stride + 1
    cols = []
    for i in range(kh):
        for j in range(kw):
            cols.append(x[:, i:i + stride * Ho:stride, j:j + stride * Wo:stride, :])
    p = jnp.stack(cols, axis=3)                       # (B, Ho, Wo, kh*kw, C)
    return p.reshape(B * Ho * Wo, kh * kw * C), Ho, Wo


def conv2d_fused(x_nhwc, w, b, stride, padding, bn=None, act="leaky_relu"):
    """Conv2d (+ eval-mode BatchNorm) (+ activation); matmul in Pallas, NHWC layout."""
    Cout, Cin, kh, kw = w.shape
    B = x_nhwc.shape[0]
    xp = x_nhwc
    if padding > 0:
        xp = jnp.pad(x_nhwc, ((0, 0), (padding, padding), (padding, padding), (0, 0)))
    patches, Ho, Wo = im2col_nhwc(xp, kh, kw, stride)
    wm = jnp.transpose(w, (2, 3, 1, 0)).reshape(kh * kw * Cin, Cout)   # (kh,kw,Cin)->Cout
    if bn is not None:
        scale = bn["gamma"] / jnp.sqrt(bn["var"] + BN_EPS)
        shift = (b - bn["mean"]) * scale + bn["beta"]
        wm = wm * scale[None, :]               # fold BN scale into weight columns (f32)
    else:
        shift = b
    y = fused_matmul(patches, wm, shift, act=act)
    return y.reshape(B, Ho, Wo, Cout)


def conv_transpose2d_s2k4_fused(x_nhwc, w_t, b, act):
    """ConvTranspose2d(stride=2, kernel=4, padding=1) via sub-pixel decomposition.

    out[2i+0] = w[k=1]*x[i] + w[k=3]*x[i-1];  out[2i+1] = w[k=2]*x[i] + w[k=0]*x[i+1]
    => one stride-1 matmul with an effective 3x3 kernel per output parity, then
    pixel-shuffle.  No zero-dilated input, no structurally-zero patch rows.
    w_t: PyTorch layout (Cin, Cout, 4, 4).
    TODO(synk): the per-layer pixel-shuffle transpose could be deferred (parity-major
                layout / full-decoder fusion) to cut inter-layer HBM traffic further.
    """
    Cin, Cout, kh, kw = w_t.shape
    assert kh == 4 and kw == 4
    B, H, W, C = x_nhwc.shape
    assert C == Cin

    # (parity, window offset in {-1,0,+1} -> {0,1,2}) -> original kernel tap
    tap = {(0, 0): 3, (0, 1): 1, (1, 1): 2, (1, 2): 0}
    wm = jnp.zeros((3, 3, Cin, 2, 2, Cout), w_t.dtype)
    for (ph, a), ki in tap.items():
        for (pw, bb), kj in tap.items():
            wm = wm.at[a, bb, :, ph, pw, :].set(w_t[:, :, ki, kj])
    wm = wm.reshape(9 * Cin, 4 * Cout)                 # cols ordered (ph, pw, cout)

    xp = jnp.pad(x_nhwc, ((0, 0), (1, 1), (1, 1), (0, 0)))
    patches, Ho, Wo = im2col_nhwc(xp, 3, 3, 1)          # Ho == H, Wo == W
    shift = jnp.tile(b, 4)
    y = fused_matmul(patches, wm, shift, act=act)       # (B*H*W, 4*Cout)
    y = y.reshape(B, H, W, 2, 2, Cout).transpose(0, 1, 3, 2, 4, 5)
    return y.reshape(B, 2 * H, 2 * W, Cout)


# ----------------------------------------------------------------------------
# Deterministic parameter initialization (shapes follow the PyTorch __init__)
# ----------------------------------------------------------------------------
def _init_linear(key, in_f, out_f):
    kw_, kb = jax.random.split(key)
    bound = 1.0 / float(np.sqrt(in_f))
    return {"w": jax.random.uniform(kw_, (out_f, in_f), jnp.float32, -bound, bound),
            "b": jax.random.uniform(kb, (out_f,), jnp.float32, -bound, bound)}


def _init_conv(key, cin, cout, k):
    kw_, kb = jax.random.split(key)
    bound = 1.0 / float(np.sqrt(cin * k * k))
    return {"w": jax.random.uniform(kw_, (cout, cin, k, k), jnp.float32, -bound, bound),
            "b": jax.random.uniform(kb, (cout,), jnp.float32, -bound, bound)}


def _init_convt(key, cin, cout, k):
    kw_, kb = jax.random.split(key)
    bound = 1.0 / float(np.sqrt(cout * k * k))
    return {"w": jax.random.uniform(kw_, (cin, cout, k, k), jnp.float32, -bound, bound),
            "b": jax.random.uniform(kb, (cout,), jnp.float32, -bound, bound)}


def _init_bn(key, c):
    k1, k2, k3, k4 = jax.random.split(key, 4)
    # TODO(synk): BatchNorm is eval/inference-mode with deterministic running stats;
    #             training-mode batch statistics are not computed.
    return {"gamma": 1.0 + 0.1 * jax.random.normal(k1, (c,), jnp.float32),
            "beta": 0.1 * jax.random.normal(k2, (c,), jnp.float32),
            "mean": 0.1 * jax.random.normal(k3, (c,), jnp.float32),
            "var": 1.0 + 0.1 * jnp.abs(jax.random.normal(k4, (c,), jnp.float32))}


def init_params(key, latent_dim, backbone, image_res):
    keys = jax.random.split(key, 16)
    init_size = image_res // 32
    return {
        "enc": {
            "conv1": _init_conv(keys[0], 3, 64, 4),    "bn1": _init_bn(keys[1], 64),
            "conv2": _init_conv(keys[2], 64, 128, 4),  "bn2": _init_bn(keys[3], 128),
            "conv3": _init_conv(keys[4], 128, backbone, 3), "bn3": _init_bn(keys[5], backbone),
            "lin1": _init_linear(keys[6], backbone * 4 * 4, backbone * 4),
            "lin2": _init_linear(keys[7], backbone * 4, latent_dim),
        },
        "dec": {
            "lin": _init_linear(keys[8], latent_dim, latent_dim * 8),
            "convt1": _init_convt(keys[9], latent_dim * 8, 256, init_size),
            "convt2": _init_convt(keys[10], 256, 128, 4),
            "convt3": _init_convt(keys[11], 128, 64, 4),
            "convt4": _init_convt(keys[12], 64, 32, 4),
            "convt5": _init_convt(keys[13], 32, 3, 4),
        },
    }


# ----------------------------------------------------------------------------
# Forward passes (activations in NHWC, bf16 between layers)
# ----------------------------------------------------------------------------
def encoder_forward(p, x_nhwc):
    B = x_nhwc.shape[0]
    h = conv2d_fused(x_nhwc, p["conv1"]["w"], p["conv1"]["b"], 2, 1, bn=p["bn1"])
    h = conv2d_fused(h, p["conv2"]["w"], p["conv2"]["b"], 2, 1, bn=p["bn2"])
    h = conv2d_fused(h, p["conv3"]["w"], p["conv3"]["b"], 1, 1, bn=p["bn3"])

    # AdaptiveAvgPool2d((4,4)) as a tiny XLA mean reduction (NOT folded into lin1's
    # weight -- folding inflates the weight/MXU work by Hc*Wc/16).
    Hc, Wc, Cb = h.shape[1], h.shape[2], h.shape[3]
    # TODO(synk): general (non-divisible) adaptive-pool bin boundaries unimplemented.
    assert Hc % 4 == 0 and Wc % 4 == 0
    khp, kwp = Hc // 4, Wc // 4
    pooled = h.astype(jnp.float32).reshape(B, 4, khp, 4, kwp, Cb).mean(axis=(2, 4))
    pooled = pooled.reshape(B, 4 * 4 * Cb)                    # column order (ph, pw, c)

    # PyTorch lin1 columns are ordered (c, ph, pw); permute to match (ph, pw, c).
    out1 = p["lin1"]["w"].shape[0]
    W1 = jnp.transpose(p["lin1"]["w"].reshape(out1, Cb, 4, 4),
                       (2, 3, 1, 0)).reshape(4 * 4 * Cb, out1)

    # Fuse lin1 (+LeakyReLU) and lin2 into one two-dot Pallas kernel (tiny M = batch).
    latent = fused_mlp2(pooled, W1, p["lin1"]["b"],
                        p["lin2"]["w"].T, p["lin2"]["b"], act2="none")
    return latent


def decoder_forward(p, latent):
    B = latent.shape[0]
    # Fuse dec.lin (LeakyReLU) with convt1 (1x1-input deconv == linear) in one kernel.
    w_c1 = p["convt1"]["w"]                                   # (Cin, Cout, k, k)
    Cin1, Cout1, k1, _ = w_c1.shape
    W2 = jnp.transpose(w_c1, (0, 2, 3, 1)).reshape(Cin1, k1 * k1 * Cout1)
    b2 = jnp.tile(p["convt1"]["b"], k1 * k1)
    x = fused_mlp2(latent, p["lin"]["w"].T, p["lin"]["b"], W2, b2, act2="leaky_relu")
    x = x.reshape(B, k1, k1, Cout1)                           # NHWC

    # TODO(synk): full single-pallas_call decoder fusion (weights ~3.2 MB bf16) would
    #             remove 3 launches and the inter-layer pixel-shuffle round-trips.
    x = conv_transpose2d_s2k4_fused(x, p["convt2"]["w"], p["convt2"]["b"], "leaky_relu")
    x = conv_transpose2d_s2k4_fused(x, p["convt3"]["w"], p["convt3"]["b"], "leaky_relu")
    x = conv_transpose2d_s2k4_fused(x, p["convt4"]["w"], p["convt4"]["b"], "leaky_relu")
    x = conv_transpose2d_s2k4_fused(x, p["convt5"]["w"], p["convt5"]["b"], "sigmoid")
    return x                                                   # NHWC


@jax.jit
def clagnosco_autoencoder_forward(params, x_nchw):
    x_nhwc = jnp.transpose(x_nchw, (0, 2, 3, 1))
    latent = encoder_forward(params["enc"], x_nhwc)
    recon_nhwc = decoder_forward(params["dec"], latent)
    recon = jnp.transpose(recon_nhwc, (0, 3, 1, 2)).astype(jnp.float32)  # back to NCHW
    return latent.astype(jnp.float32), recon


# ----------------------------------------------------------------------------
# Pure-XLA reference of the PyTorch forward (for the self-check in __main__)
# ----------------------------------------------------------------------------
def _ref_leaky(x):
    return jnp.where(x > 0, x, NEG_SLOPE * x)


def _ref_conv(x, w, b, stride, padding):
    y = jax.lax.conv_general_dilated(x, w, (stride, stride),
                                     [(padding, padding), (padding, padding)],
                                     dimension_numbers=("NCHW", "OIHW", "NCHW"))
    return y + b.reshape(1, -1, 1, 1)


def _ref_bn(x, bn):
    s = bn["gamma"] / jnp.sqrt(bn["var"] + BN_EPS)
    return (x - bn["mean"].reshape(1, -1, 1, 1)) * s.reshape(1, -1, 1, 1) \
        + bn["beta"].reshape(1, -1, 1, 1)


def _ref_convt(x, w_t, b, stride, padding):
    k = w_t.shape[2]
    w_conv = jnp.transpose(jnp.flip(w_t, (2, 3)), (1, 0, 2, 3))
    pad = k - 1 - padding
    y = jax.lax.conv_general_dilated(x, w_conv, (1, 1), [(pad, pad), (pad, pad)],
                                     lhs_dilation=(stride, stride),
                                     dimension_numbers=("NCHW", "OIHW", "NCHW"))
    return y + b.reshape(1, -1, 1, 1)


def _ref_pool4(x):
    B, C, H, W = x.shape
    return x.reshape(B, C, 4, H // 4, 4, W // 4).mean(axis=(3, 5))


def reference_forward(params, x):
    e, d = params["enc"], params["dec"]
    h = _ref_leaky(_ref_bn(_ref_conv(x, e["conv1"]["w"], e["conv1"]["b"], 2, 1), e["bn1"]))
    h = _ref_leaky(_ref_bn(_ref_conv(h, e["conv2"]["w"], e["conv2"]["b"], 2, 1), e["bn2"]))
    h = _ref_leaky(_ref_bn(_ref_conv(h, e["conv3"]["w"], e["conv3"]["b"], 1, 1), e["bn3"]))
    pooled = _ref_pool4(h).reshape(x.shape[0], -1)
    h1 = _ref_leaky(pooled @ e["lin1"]["w"].T + e["lin1"]["b"])
    latent = h1 @ e["lin2"]["w"].T + e["lin2"]["b"]
    z = _ref_leaky(latent @ d["lin"]["w"].T + d["lin"]["b"]).reshape(latent.shape[0], -1, 1, 1)
    z = _ref_leaky(_ref_convt(z, d["convt1"]["w"], d["convt1"]["b"], 1, 0))
    z = _ref_leaky(_ref_convt(z, d["convt2"]["w"], d["convt2"]["b"], 2, 1))
    z = _ref_leaky(_ref_convt(z, d["convt3"]["w"], d["convt3"]["b"], 2, 1))
    z = _ref_leaky(_ref_convt(z, d["convt4"]["w"], d["convt4"]["b"], 2, 1))
    recon = jax.nn.sigmoid(_ref_convt(z, d["convt5"]["w"], d["convt5"]["b"], 2, 1))
    return latent, recon


# ----------------------------------------------------------------------------
if __name__ == "__main__":
    B, H, W = 2, 32, 32
    latent_dim, backbone, image_res = 32, 32, 32   # small config (must be % 32 == 0)

    key = jax.random.PRNGKey(0)
    k_params, k_x = jax.random.split(key)
    params = init_params(k_params, latent_dim, backbone, image_res)
    x = jax.random.normal(k_x, (B, 3, H, W), jnp.float32)

    latent, recon = clagnosco_autoencoder_forward(params, x)
    latent, recon = jax.block_until_ready((latent, recon))

    out_res = (image_res // 32) * 16
    assert latent.shape == (B, latent_dim), latent.shape
    assert recon.shape == (B, 3, out_res, out_res), recon.shape
    assert bool(jnp.all(jnp.isfinite(latent))) and bool(jnp.all(jnp.isfinite(recon)))
    assert bool(jnp.all(recon >= 0.0)) and bool(jnp.all(recon <= 1.0))

    # Numerical check vs a pure-XLA f32 reference.  Loose tolerance is intentional:
    # all matmul operands AND inter-layer activations are bf16 (inference precision).
    lat_ref, rec_ref = jax.jit(reference_forward)(params, x)
    lat_ref, rec_ref = jax.block_until_ready((lat_ref, rec_ref))
    np.testing.assert_allclose(np.asarray(latent), np.asarray(lat_ref), rtol=0.08, atol=0.03)
    np.testing.assert_allclose(np.asarray(recon), np.asarray(rec_ref), rtol=0.08, atol=0.03)

    print("KERNEL_OK")
</pallas_src>

<mosaic_0001>
module attributes {stable_mosaic.version = 11 : i64} {
  func.func @_fused_matmul_kernel(%arg0: i32, %arg1: memref<256x48xbf16, #tpu.memory_space<vmem>>, %arg2: memref<48x128xbf16, #tpu.memory_space<vmem>>, %arg3: memref<1x128xf32, #tpu.memory_space<vmem>>, %arg4: memref<256x128xbf16, #tpu.memory_space<vmem>>) attributes {dimension_semantics = [#tpu.dimension_semantics<parallel>], iteration_bounds = array<i64: 2>, scalar_prefetch = 0 : i64, scratch_operands = 0 : i64, tpu.core_type = #tpu.core_type<tc>, window_params = [{transform_indices = @transform_0, window_bounds = array<i64: 256, 48>}, {pipeline_mode = #tpu.pipeline_mode<synchronous>, transform_indices = @transform_1, window_bounds = array<i64: 48, 128>}, {pipeline_mode = #tpu.pipeline_mode<synchronous>, transform_indices = @transform_2, window_bounds = array<i64: 1, 128>}, {transform_indices = @transform_3, window_bounds = array<i64: 256, 128>}]} {
    %c0 = arith.constant 0 : index
    %c0_0 = arith.constant 0 : index
    %0 = vector.load %arg1[%c0, %c0_0] : memref<256x48xbf16, #tpu.memory_space<vmem>>, vector<256x48xbf16>
    %c0_1 = arith.constant 0 : index
    %c0_2 = arith.constant 0 : index
    %1 = vector.load %arg2[%c0_1, %c0_2] : memref<48x128xbf16, #tpu.memory_space<vmem>>, vector<48x128xbf16>
    %cst = arith.constant dense<0.000000e+00> : vector<256x128xf32>
    %2 = tpu.matmul %0, %1, %cst {dimension_numbers = #tpu.dot_dimension_numbers<[1], [0], [0], [1], [0, 0, 1, 1], [], []>} : vector<256x48xbf16>, vector<48x128xbf16>, vector<256x128xf32> -> vector<256x128xf32>
    %c0_3 = arith.constant 0 : index
    %c0_4 = arith.constant 0 : index
    %3 = vector.load %arg3[%c0_3, %c0_4] : memref<1x128xf32, #tpu.memory_space<vmem>>, vector<1x128xf32>
    %4 = vector.broadcast %3 : vector<1x128xf32> to vector<256x128xf32>
    %5 = arith.addf %2, %4 : vector<256x128xf32>
    %cst_5 = arith.constant 0.00999999977 : f32
    %6 = vector.broadcast %cst_5 : f32 to vector<256x128xf32>
    %7 = arith.mulf %6, %5 : vector<256x128xf32>
    %8 = arith.maximumf %5, %7 : vector<256x128xf32>
    %9 = arith.truncf %8 : vector<256x128xf32> to vector<256x128xbf16>
    %c0_6 = arith.constant 0 : index
    %c0_7 = arith.constant 0 : index
    %10 = vector.load %arg4[%c0_6, %c0_7] : memref<256x128xbf16, #tpu.memory_space<vmem>>, vector<256x128xbf16>
    tpu.vector_store %arg4[%c0_6, %c0_7], %9 {strides = array<i32>} : memref<256x128xbf16, #tpu.memory_space<vmem>>, vector<256x128xbf16>,
    return
  }
  func.func @transform_0(%arg0: i32) -> (i32, i32) {
    %c0_i32 = arith.constant 0 : i32
    %c0_i32_0 = arith.constant 0 : i32
    return %arg0, %c0_i32 : i32, i32
  }
  func.func @transform_1(%arg0: i32) -> (i32, i32) {
    %c0_i32 = arith.constant 0 : i32
    %c0_i32_0 = arith.constant 0 : i32
    %c0_i32_1 = arith.constant 0 : i32
    return %c0_i32, %c0_i32_0 : i32, i32
  }
  func.func @transform_2(%arg0: i32) -> (i32, i32) {
    %c0_i32 = arith.constant 0 : i32
    %c0_i32_0 = arith.constant 0 : i32
    %c0_i32_1 = arith.constant 0 : i32
    return %c0_i32, %c0_i32_0 : i32, i32
  }
  func.func @transform_3(%arg0: i32) -> (i32, i32) {
    %c0_i32 = arith.constant 0 : i32
    %c0_i32_0 = arith.constant 0 : i32
    return %arg0, %c0_i32 : i32, i32
  }
}

module attributes {stable_mosaic.version = 11 : i64} {
  func.func @_fused_matmul_kernel(%arg0: i32, %arg1: memref<64x1024xbf16, #tpu.memory_space<vmem>>, %arg2: memref<1024x128xbf16, #tpu.memory_space<vmem>>, %arg3: memref<1x128xf32, #tpu.memory_space<vmem>>, %arg4: memref<64x128xbf16, #tpu.memory_space<vmem>>) attributes {dimension_semantics = [#tpu.dimension_semantics<parallel>], iteration_bounds = array<i64: 2>, scalar_prefetch = 0 : i64, scratch_operands = 0 : i64, tpu.core_type = #tpu.core_type<tc>, window_params = [{transform_indices = @transform_0, window_bounds = array<i64: 64, 1024>}, {pipeline_mode = #tpu.pipeline_mode<synchronous>, transform_indices = @transform_1, window_bounds = array<i64: 1024, 128>}, {pipeline_mode = #tpu.pipeline_mode<synchronous>, transform_indices = @transform_2, window_bounds = array<i64: 1, 128>}, {transform_indices = @transform_3, window_bounds = array<i64: 64, 128>}]} {
    %c0 = arith.constant 0 : index
    %c0_0 = arith.constant 0 : index
    %0 = vector.load %arg1[%c0, %c0_0] : memref<64x1024xbf16, #tpu.memory_space<vmem>>, vector<64x1024xbf16>
    %c0_1 = arith.constant 0 : index
    %c0_2 = arith.constant 0 : index
    %1 = vector.load %arg2[%c0_1, %c0_2] : memref<1024x128xbf16, #tpu.memory_space<vmem>>, vector<1024x128xbf16>
    %cst = arith.constant dense<0.000000e+00> : vector<64x128xf32>
    %2 = tpu.matmul %0, %1, %cst {dimension_numbers = #tpu.dot_dimension_numbers<[1], [0], [0], [1], [0, 0, 1, 1], [], []>} : vector<64x1024xbf16>, vector<1024x128xbf16>, vector<64x128xf32> -> vector<64x128xf32>
    %c0_3 = arith.constant 0 : index
    %c0_4 = arith.constant 0 : index
    %3 = vector.load %arg3[%c0_3, %c0_4] : memref<1x128xf32, #tpu.memory_space<vmem>>, vector<1x128xf32>
    %4 = vector.broadcast %3 : vector<1x128xf32> to vector<64x128xf32>
    %5 = arith.addf %2, %4 : vector<64x128xf32>
    %cst_5 = arith.constant 0.00999999977 : f32
    %6 = vector.broadcast %cst_5 : f32 to vector<64x128xf32>
    %7 = arith.mulf %6, %5 : vector<64x128xf32>
    %8 = arith.maximumf %5, %7 : vector<64x128xf32>
    %9 = arith.truncf %8 : vector<64x128xf32> to vector<64x128xbf16>
    %c0_6 = arith.constant 0 : index
    %c0_7 = arith.constant 0 : index
    %10 = vector.load %arg4[%c0_6, %c0_7] : memref<64x128xbf16, #tpu.memory_space<vmem>>, vector<64x128xbf16>
    tpu.vector_store %arg4[%c0_6, %c0_7], %9 {strides = array<i32>} : memref<64x128xbf16, #tpu.memory_space<vmem>>, vector<64x128xbf16>,
    return
  }
  func.func @transform_0(%arg0: i32) -> (i32, i32) {
    %c0_i32 = arith.constant 0 : i32
    %c0_i32_0 = arith.constant 0 : i32
    return %arg0, %c0_i32 : i32, i32
  }
  func.func @transform_1(%arg0: i32) -> (i32, i32) {
    %c0_i32 = arith.constant 0 : i32
    %c0_i32_0 = arith.constant 0 : i32
    %c0_i32_1 = arith.constant 0 : i32
    return %c0_i32, %c0_i32_0 : i32, i32
  }
  func.func @transform_2(%arg0: i32) -> (i32, i32) {
    %c0_i32 = arith.constant 0 : i32
    %c0_i32_0 = arith.constant 0 : i32
    %c0_i32_1 = arith.constant 0 : i32
    return %c0_i32, %c0_i32_0 : i32, i32
  }
  func.func @transform_3(%arg0: i32) -> (i32, i32) {
    %c0_i32 = arith.constant 0 : i32
    %c0_i32_0 = arith.constant 0 : i32
    return %arg0, %c0_i32 : i32, i32
  }
}

module attributes {stable_mosaic.version = 11 : i64} {
  func.func @_fused_matmul_kernel(%arg0: i32, %arg1: memref<64x1152xbf16, #tpu.memory_space<vmem>>, %arg2: memref<1152x128xbf16, #tpu.memory_space<vmem>>, %arg3: memref<1x128xf32, #tpu.memory_space<vmem>>, %arg4: memref<64x128xbf16, #tpu.memory_space<vmem>>) attributes {dimension_semantics = [#tpu.dimension_semantics<parallel>], iteration_bounds = array<i64: 2>, scalar_prefetch = 0 : i64, scratch_operands = 0 : i64, tpu.core_type = #tpu.core_type<tc>, window_params = [{transform_indices = @transform_0, window_bounds = array<i64: 64, 1152>}, {pipeline_mode = #tpu.pipeline_mode<synchronous>, transform_indices = @transform_1, window_bounds = array<i64: 1152, 128>}, {pipeline_mode = #tpu.pipeline_mode<synchronous>, transform_indices = @transform_2, window_bounds = array<i64: 1, 128>}, {transform_indices = @transform_3, window_bounds = array<i64: 64, 128>}]} {
    %c0 = arith.constant 0 : index
    %c0_0 = arith.constant 0 : index
    %0 = vector.load %arg1[%c0, %c0_0] : memref<64x1152xbf16, #tpu.memory_space<vmem>>, vector<64x1152xbf16>
    %c0_1 = arith.constant 0 : index
    %c0_2 = arith.constant 0 : index
    %1 = vector.load %arg2[%c0_1, %c0_2] : memref<1152x128xbf16, #tpu.memory_space<vmem>>, vector<1152x128xbf16>
    %cst = arith.constant dense<0.000000e+00> : vector<64x128xf32>
    %2 = tpu.matmul %0, %1, %cst {dimension_numbers = #tpu.dot_dimension_numbers<[1], [0], [0], [1], [0, 0, 1, 1], [], []>} : vector<64x1152xbf16>, vector<1152x128xbf16>, vector<64x128xf32> -> vector<64x128xf32>
    %c0_3 = arith.constant 0 : index
    %c0_4 = arith.constant 0 : index
    %3 = vector.load %arg3[%c0_3, %c0_4] : memref<1x128xf32, #tpu.memory_space<vmem>>, vector<1x128xf32>
    %4 = vector.broadcast %3 : vector<1x128xf32> to vector<64x128xf32>
    %5 = arith.addf %2, %4 : vector<64x128xf32>
    %cst_5 = arith.constant 0.00999999977 : f32
    %6 = vector.broadcast %cst_5 : f32 to vector<64x128xf32>
    %7 = arith.mulf %6, %5 : vector<64x128xf32>
    %8 = arith.maximumf %5, %7 : vector<64x128xf32>
    %9 = arith.truncf %8 : vector<64x128xf32> to vector<64x128xbf16>
    %c0_6 = arith.constant 0 : index
    %c0_7 = arith.constant 0 : index
    %10 = vector.load %arg4[%c0_6, %c0_7] : memref<64x128xbf16, #tpu.memory_space<vmem>>, vector<64x128xbf16>
    tpu.vector_store %arg4[%c0_6, %c0_7], %9 {strides = array<i32>} : memref<64x128xbf16, #tpu.memory_space<vmem>>, vector<64x128xbf16>,
    return
  }
  func.func @transform_0(%arg0: i32) -> (i32, i32) {
    %c0_i32 = arith.constant 0 : i32
    %c0_i32_0 = arith.constant 0 : i32
    return %arg0, %c0_i32 : i32, i32
  }
  func.func @transform_1(%arg0: i32) -> (i32, i32) {
    %c0_i32 = arith.constant 0 : i32
    %c0_i32_0 = arith.constant 0 : i32
    %c0_i32_1 = arith.constant 0 : i32
    return %c0_i32, %c0_i32_0 : i32, i32
  }
  func.func @transform_2(%arg0: i32) -> (i32, i32) {
    %c0_i32 = arith.constant 0 : i32
    %c0_i32_0 = arith.constant 0 : i32
    %c0_i32_1 = arith.constant 0 : i32
    return %c0_i32, %c0_i32_0 : i32, i32
  }
  func.func @transform_3(%arg0: i32) -> (i32, i32) {
    %c0_i32 = arith.constant 0 : i32
    %c0_i32_0 = arith.constant 0 : i32
    return %arg0, %c0_i32 : i32, i32
  }
}

module attributes {stable_mosaic.version = 11 : i64} {
  func.func @_fused_mlp2_kernel(%arg0: i32, %arg1: memref<8x512xbf16, #tpu.memory_space<vmem>>, %arg2: memref<512x128xbf16, #tpu.memory_space<vmem>>, %arg3: memref<1x128xf32, #tpu.memory_space<vmem>>, %arg4: memref<128x128xbf16, #tpu.memory_space<vmem>>, %arg5: memref<1x128xf32, #tpu.memory_space<vmem>>, %arg6: memref<8x128xbf16, #tpu.memory_space<vmem>>) attributes {dimension_semantics = [#tpu.dimension_semantics<parallel>], iteration_bounds = array<i64: 1>, scalar_prefetch = 0 : i64, scratch_operands = 0 : i64, tpu.core_type = #tpu.core_type<tc>, window_params = [{transform_indices = @transform_0, window_bounds = array<i64: 8, 512>}, {pipeline_mode = #tpu.pipeline_mode<synchronous>, transform_indices = @transform_1, window_bounds = array<i64: 512, 128>}, {pipeline_mode = #tpu.pipeline_mode<synchronous>, transform_indices = @transform_2, window_bounds = array<i64: 1, 128>}, {pipeline_mode = #tpu.pipeline_mode<synchronous>, transform_indices = @transform_3, window_bounds = array<i64: 128, 128>}, {pipeline_mode = #tpu.pipeline_mode<synchronous>, transform_indices = @transform_4, window_bounds = array<i64: 1, 128>}, {transform_indices = @transform_5, window_bounds = array<i64: 8, 128>}]} {
    %c0 = arith.constant 0 : index
    %c0_0 = arith.constant 0 : index
    %0 = vector.load %arg1[%c0, %c0_0] : memref<8x512xbf16, #tpu.memory_space<vmem>>, vector<8x512xbf16>
    %c0_1 = arith.constant 0 : index
    %c0_2 = arith.constant 0 : index
    %1 = vector.load %arg2[%c0_1, %c0_2] : memref<512x128xbf16, #tpu.memory_space<vmem>>, vector<512x128xbf16>
    %cst = arith.constant dense<0.000000e+00> : vector<8x128xf32>
    %2 = tpu.matmul %0, %1, %cst {dimension_numbers = #tpu.dot_dimension_numbers<[1], [0], [0], [1], [0, 0, 1, 1], [], []>} : vector<8x512xbf16>, vector<512x128xbf16>, vector<8x128xf32> -> vector<8x128xf32>
    %c0_3 = arith.constant 0 : index
    %c0_4 = arith.constant 0 : index
    %3 = vector.load %arg3[%c0_3, %c0_4] : memref<1x128xf32, #tpu.memory_space<vmem>>, vector<1x128xf32>
    %4 = vector.broadcast %3 : vector<1x128xf32> to vector<8x128xf32>
    %5 = arith.addf %2, %4 : vector<8x128xf32>
    %cst_5 = arith.constant 0.00999999977 : f32
    %6 = vector.broadcast %cst_5 : f32 to vector<8x128xf32>
    %7 = arith.mulf %6, %5 : vector<8x128xf32>
    %8 = arith.maximumf %5, %7 : vector<8x128xf32>
    %9 = arith.truncf %8 : vector<8x128xf32> to vector<8x128xbf16>
    %c0_6 = arith.constant 0 : index
    %c0_7 = arith.constant 0 : index
    %10 = vector.load %arg4[%c0_6, %c0_7] : memref<128x128xbf16, #tpu.memory_space<vmem>>, vector<128x128xbf16>
    %cst_8 = arith.constant dense<0.000000e+00> : vector<8x128xf32>
    %11 = tpu.matmul %9, %10, %cst_8 {dimension_numbers = #tpu.dot_dimension_numbers<[1], [0], [0], [1], [0, 0, 1, 1], [], []>} : vector<8x128xbf16>, vector<128x128xbf16>, vector<8x128xf32> -> vector<8x128xf32>
    %c0_9 = arith.constant 0 : index
    %c0_10 = arith.constant 0 : index
    %12 = vector.load %arg5[%c0_9, %c0_10] : memref<1x128xf32, #tpu.memory_space<vmem>>, vector<1x128xf32>
    %13 = vector.broadcast %12 : vector<1x128xf32> to vector<8x128xf32>
    %14 = arith.addf %11, %13 : vector<8x128xf32>
    %15 = arith.truncf %14 : vector<8x128xf32> to vector<8x128xbf16>
    %c0_11 = arith.constant 0 : index
    %c0_12 = arith.constant 0 : index
    %16 = vector.load %arg6[%c0_11, %c0_12] : memref<8x128xbf16, #tpu.memory_space<vmem>>, vector<8x128xbf16>
    tpu.vector_store %arg6[%c0_11, %c0_12], %15 {strides = array<i32>} : memref<8x128xbf16, #tpu.memory_space<vmem>>, vector<8x128xbf16>,
    return
  }
  func.func @transform_0(%arg0: i32) -> (i32, i32) {
    %c0_i32 = arith.constant 0 : i32
    %c0_i32_0 = arith.constant 0 : i32
    return %arg0, %c0_i32 : i32, i32
  }
  func.func @transform_1(%arg0: i32) -> (i32, i32) {
    %c0_i32 = arith.constant 0 : i32
    %c0_i32_0 = arith.constant 0 : i32
    %c0_i32_1 = arith.constant 0 : i32
    return %c0_i32, %c0_i32_0 : i32, i32
  }
  func.func @transform_2(%arg0: i32) -> (i32, i32) {
    %c0_i32 = arith.constant 0 : i32
    %c0_i32_0 = arith.constant 0 : i32
    %c0_i32_1 = arith.constant 0 : i32
    return %c0_i32, %c0_i32_0 : i32, i32
  }
  func.func @transform_3(%arg0: i32) -> (i32, i32) {
    %c0_i32 = arith.constant 0 : i32
    %c0_i32_0 = arith.constant 0 : i32
    %c0_i32_1 = arith.constant 0 : i32
    return %c0_i32, %c0_i32_0 : i32, i32
  }
  func.func @transform_4(%arg0: i32) -> (i32, i32) {
    %c0_i32 = arith.constant 0 : i32
    %c0_i32_0 = arith.constant 0 : i32
    %c0_i32_1 = arith.constant 0 : i32
    return %c0_i32, %c0_i32_0 : i32, i32
  }
  func.func @transform_5(%arg0: i32) -> (i32, i32) {
    %c0_i32 = arith.constant 0 : i32
    %c0_i32_0 = arith.constant 0 : i32
    return %arg0, %c0_i32 : i32, i32
  }
}

module attributes {stable_mosaic.version = 11 : i64} {
  func.func @_fused_mlp2_kernel(%arg0: i32, %arg1: memref<8x32xbf16, #tpu.memory_space<vmem>>, %arg2: memref<32x256xbf16, #tpu.memory_space<vmem>>, %arg3: memref<1x256xf32, #tpu.memory_space<vmem>>, %arg4: memref<256x256xbf16, #tpu.memory_space<vmem>>, %arg5: memref<1x256xf32, #tpu.memory_space<vmem>>, %arg6: memref<8x256xbf16, #tpu.memory_space<vmem>>) attributes {dimension_semantics = [#tpu.dimension_semantics<parallel>], iteration_bounds = array<i64: 1>, scalar_prefetch = 0 : i64, scratch_operands = 0 : i64, tpu.core_type = #tpu.core_type<tc>, window_params = [{transform_indices = @transform_0, window_bounds = array<i64: 8, 32>}, {pipeline_mode = #tpu.pipeline_mode<synchronous>, transform_indices = @transform_1, window_bounds = array<i64: 32, 256>}, {pipeline_mode = #tpu.pipeline_mode<synchronous>, transform_indices = @transform_2, window_bounds = array<i64: 1, 256>}, {pipeline_mode = #tpu.pipeline_mode<synchronous>, transform_indices = @transform_3, window_bounds = array<i64: 256, 256>}, {pipeline_mode = #tpu.pipeline_mode<synchronous>, transform_indices = @transform_4, window_bounds = array<i64: 1, 256>}, {transform_indices = @transform_5, window_bounds = array<i64: 8, 256>}]} {
    %c0 = arith.constant 0 : index
    %c0_0 = arith.constant 0 : index
    %0 = vector.load %arg1[%c0, %c0_0] : memref<8x32xbf16, #tpu.memory_space<vmem>>, vector<8x32xbf16>
    %c0_1 = arith.constant 0 : index
    %c0_2 = arith.constant 0 : index
    %1 = vector.load %arg2[%c0_1, %c0_2] : memref<32x256xbf16, #tpu.memory_space<vmem>>, vector<32x256xbf16>
    %cst = arith.constant dense<0.000000e+00> : vector<8x256xf32>
    %2 = tpu.matmul %0, %1, %cst {dimension_numbers = #tpu.dot_dimension_numbers<[1], [0], [0], [1], [0, 0, 1, 1], [], []>} : vector<8x32xbf16>, vector<32x256xbf16>, vector<8x256xf32> -> vector<8x256xf32>
    %c0_3 = arith.constant 0 : index
    %c0_4 = arith.constant 0 : index
    %3 = vector.load %arg3[%c0_3, %c0_4] : memref<1x256xf32, #tpu.memory_space<vmem>>, vector<1x256xf32>
    %4 = vector.broadcast %3 : vector<1x256xf32> to vector<8x256xf32>
    %5 = arith.addf %2, %4 : vector<8x256xf32>
    %cst_5 = arith.constant 0.00999999977 : f32
    %6 = vector.broadcast %cst_5 : f32 to vector<8x256xf32>
    %7 = arith.mulf %6, %5 : vector<8x256xf32>
    %8 = arith.maximumf %5, %7 : vector<8x256xf32>
    %9 = arith.truncf %8 : vector<8x256xf32> to vector<8x256xbf16>
    %c0_6 = arith.constant 0 : index
    %c0_7 = arith.constant 0 : index
    %10 = vector.load %arg4[%c0_6, %c0_7] : memref<256x256xbf16, #tpu.memory_space<vmem>>, vector<256x256xbf16>
    %cst_8 = arith.constant dense<0.000000e+00> : vector<8x256xf32>
    %11 = tpu.matmul %9, %10, %cst_8 {dimension_numbers = #tpu.dot_dimension_numbers<[1], [0], [0], [1], [0, 0, 1, 1], [], []>} : vector<8x256xbf16>, vector<256x256xbf16>, vector<8x256xf32> -> vector<8x256xf32>
    %c0_9 = arith.constant 0 : index
    %c0_10 = arith.constant 0 : index
    %12 = vector.load %arg5[%c0_9, %c0_10] : memref<1x256xf32, #tpu.memory_space<vmem>>, vector<1x256xf32>
    %13 = vector.broadcast %12 : vector<1x256xf32> to vector<8x256xf32>
    %14 = arith.addf %11, %13 : vector<8x256xf32>
    %cst_11 = arith.constant 0.00999999977 : f32
    %15 = vector.broadcast %cst_11 : f32 to vector<8x256xf32>
    %16 = arith.mulf %15, %14 : vector<8x256xf32>
    %17 = arith.maximumf %14, %16 : vector<8x256xf32>
    %18 = arith.truncf %17 : vector<8x256xf32> to vector<8x256xbf16>
    %c0_12 = arith.constant 0 : index
    %c0_13 = arith.constant 0 : index
    %19 = vector.load %arg6[%c0_12, %c0_13] : memref<8x256xbf16, #tpu.memory_space<vmem>>, vector<8x256xbf16>
    tpu.vector_store %arg6[%c0_12, %c0_13], %18 {strides = array<i32>} : memref<8x256xbf16, #tpu.memory_space<vmem>>, vector<8x256xbf16>,
    return
  }
  func.func @transform_0(%arg0: i32) -> (i32, i32) {
    %c0_i32 = arith.constant 0 : i32
    %c0_i32_0 = arith.constant 0 : i32
    return %arg0, %c0_i32 : i32, i32
  }
  func.func @transform_1(%arg0: i32) -> (i32, i32) {
    %c0_i32 = arith.constant 0 : i32
    %c0_i32_0 = arith.constant 0 : i32
    %c0_i32_1 = arith.constant 0 : i32
    return %c0_i32, %c0_i32_0 : i32, i32
  }
  func.func @transform_2(%arg0: i32) -> (i32, i32) {
    %c0_i32 = arith.constant 0 : i32
    %c0_i32_0 = arith.constant 0 : i32
    %c0_i32_1 = arith.constant 0 : i32
    return %c0_i32, %c0_i32_0 : i32, i32
  }
  func.func @transform_3(%arg0: i32) -> (i32, i32) {
    %c0_i32 = arith.constant 0 : i32
    %c0_i32_0 = arith.constant 0 : i32
    %c0_i32_1 = arith.constant 0 : i32
    return %c0_i32, %c0_i32_0 : i32, i32
  }
  func.func @transform_4(%arg0: i32) -> (i32, i32) {
    %c0_i32 = arith.constant 0 : i32
    %c0_i32_0 = arith.constant 0 : i32
    %c0_i32_1 = arith.constant 0 : i32
    return %c0_i32, %c0_i32_0 : i32, i32
  }
  func.func @transform_5(%arg0: i32) -> (i32, i32) {
    %c0_i32 = arith.constant 0 : i32
    %c0_i32_0 = arith.constant 0 : i32
    return %arg0, %c0_i32 : i32, i32
  }
}

module attributes {stable_mosaic.version = 11 : i64} {
  func.func @_fused_matmul_kernel(%arg0: i32, %arg1: memref<8x2304xbf16, #tpu.memory_space<vmem>>, %arg2: memref<2304x512xbf16, #tpu.memory_space<vmem>>, %arg3: memref<1x512xf32, #tpu.memory_space<vmem>>, %arg4: memref<8x512xbf16, #tpu.memory_space<vmem>>) attributes {dimension_semantics = [#tpu.dimension_semantics<parallel>], iteration_bounds = array<i64: 1>, scalar_prefetch = 0 : i64, scratch_operands = 0 : i64, tpu.core_type = #tpu.core_type<tc>, window_params = [{transform_indices = @transform_0, window_bounds = array<i64: 8, 2304>}, {pipeline_mode = #tpu.pipeline_mode<synchronous>, transform_indices = @transform_1, window_bounds = array<i64: 2304, 512>}, {pipeline_mode = #tpu.pipeline_mode<synchronous>, transform_indices = @transform_2, window_bounds = array<i64: 1, 512>}, {transform_indices = @transform_3, window_bounds = array<i64: 8, 512>}]} {
    %c0 = arith.constant 0 : index
    %c0_0 = arith.constant 0 : index
    %0 = vector.load %arg1[%c0, %c0_0] : memref<8x2304xbf16, #tpu.memory_space<vmem>>, vector<8x2304xbf16>
    %c0_1 = arith.constant 0 : index
    %c0_2 = arith.constant 0 : index
    %1 = vector.load %arg2[%c0_1, %c0_2] : memref<2304x512xbf16, #tpu.memory_space<vmem>>, vector<2304x512xbf16>
    %cst = arith.constant dense<0.000000e+00> : vector<8x512xf32>
    %2 = tpu.matmul %0, %1, %cst {dimension_numbers = #tpu.dot_dimension_numbers<[1], [0], [0], [1], [0, 0, 1, 1], [], []>} : vector<8x2304xbf16>, vector<2304x512xbf16>, vector<8x512xf32> -> vector<8x512xf32>
    %c0_3 = arith.constant 0 : index
    %c0_4 = arith.constant 0 : index
    %3 = vector.load %arg3[%c0_3, %c0_4] : memref<1x512xf32, #tpu.memory_space<vmem>>, vector<1x512xf32>
    %4 = vector.broadcast %3 : vector<1x512xf32> to vector<8x512xf32>
    %5 = arith.addf %2, %4 : vector<8x512xf32>
    %cst_5 = arith.constant 0.00999999977 : f32
    %6 = vector.broadcast %cst_5 : f32 to vector<8x512xf32>
    %7 = arith.mulf %6, %5 : vector<8x512xf32>
    %8 = arith.maximumf %5, %7 : vector<8x512xf32>
    %9 = arith.truncf %8 : vector<8x512xf32> to vector<8x512xbf16>
    %c0_6 = arith.constant 0 : index
    %c0_7 = arith.constant 0 : index
    %10 = vector.load %arg4[%c0_6, %c0_7] : memref<8x512xbf16, #tpu.memory_space<vmem>>, vector<8x512xbf16>
    tpu.vector_store %arg4[%c0_6, %c0_7], %9 {strides = array<i32>} : memref<8x512xbf16, #tpu.memory_space<vmem>>, vector<8x512xbf16>,
    return
  }
  func.func @transform_0(%arg0: i32) -> (i32, i32) {
    %c0_i32 = arith.constant 0 : i32
    %c0_i32_0 = arith.constant 0 : i32
    return %arg0, %c0_i32 : i32, i32
  }
  func.func @transform_1(%arg0: i32) -> (i32, i32) {
    %c0_i32 = arith.constant 0 : i32
    %c0_i32_0 = arith.constant 0 : i32
    %c0_i32_1 = arith.constant 0 : i32
    return %c0_i32, %c0_i32_0 : i32, i32
  }
  func.func @transform_2(%arg0: i32) -> (i32, i32) {
    %c0_i32 = arith.constant 0 : i32
    %c0_i32_0 = arith.constant 0 : i32
    %c0_i32_1 = arith.constant 0 : i32
    return %c0_i32, %c0_i32_0 : i32, i32
  }
  func.func @transform_3(%arg0: i32) -> (i32, i32) {
    %c0_i32 = arith.constant 0 : i32
    %c0_i32_0 = arith.constant 0 : i32
    return %arg0, %c0_i32 : i32, i32
  }
}

module attributes {stable_mosaic.version = 11 : i64} {
  func.func @_fused_matmul_kernel(%arg0: i32, %arg1: memref<8x1152xbf16, #tpu.memory_space<vmem>>, %arg2: memref<1152x256xbf16, #tpu.memory_space<vmem>>, %arg3: memref<1x256xf32, #tpu.memory_space<vmem>>, %arg4: memref<8x256xbf16, #tpu.memory_space<vmem>>) attributes {dimension_semantics = [#tpu.dimension_semantics<parallel>], iteration_bounds = array<i64: 1>, scalar_prefetch = 0 : i64, scratch_operands = 0 : i64, tpu.core_type = #tpu.core_type<tc>, window_params = [{transform_indices = @transform_0, window_bounds = array<i64: 8, 1152>}, {pipeline_mode = #tpu.pipeline_mode<synchronous>, transform_indices = @transform_1, window_bounds = array<i64: 1152, 256>}, {pipeline_mode = #tpu.pipeline_mode<synchronous>, transform_indices = @transform_2, window_bounds = array<i64: 1, 256>}, {transform_indices = @transform_3, window_bounds = array<i64: 8, 256>}]} {
    %c0 = arith.constant 0 : index
    %c0_0 = arith.constant 0 : index
    %0 = vector.load %arg1[%c0, %c0_0] : memref<8x1152xbf16, #tpu.memory_space<vmem>>, vector<8x1152xbf16>
    %c0_1 = arith.constant 0 : index
    %c0_2 = arith.constant 0 : index
    %1 = vector.load %arg2[%c0_1, %c0_2] : memref<1152x256xbf16, #tpu.memory_space<vmem>>, vector<1152x256xbf16>
    %cst = arith.constant dense<0.000000e+00> : vector<8x256xf32>
    %2 = tpu.matmul %0, %1, %cst {dimension_numbers = #tpu.dot_dimension_numbers<[1], [0], [0], [1], [0, 0, 1, 1], [], []>} : vector<8x1152xbf16>, vector<1152x256xbf16>, vector<8x256xf32> -> vector<8x256xf32>
    %c0_3 = arith.constant 0 : index
    %c0_4 = arith.constant 0 : index
    %3 = vector.load %arg3[%c0_3, %c0_4] : memref<1x256xf32, #tpu.memory_space<vmem>>, vector<1x256xf32>
    %4 = vector.broadcast %3 : vector<1x256xf32> to vector<8x256xf32>
    %5 = arith.addf %2, %4 : vector<8x256xf32>
    %cst_5 = arith.constant 0.00999999977 : f32
    %6 = vector.broadcast %cst_5 : f32 to vector<8x256xf32>
    %7 = arith.mulf %6, %5 : vector<8x256xf32>
    %8 = arith.maximumf %5, %7 : vector<8x256xf32>
    %9 = arith.truncf %8 : vector<8x256xf32> to vector<8x256xbf16>
    %c0_6 = arith.constant 0 : index
    %c0_7 = arith.constant 0 : index
    %10 = vector.load %arg4[%c0_6, %c0_7] : memref<8x256xbf16, #tpu.memory_space<vmem>>, vector<8x256xbf16>
    tpu.vector_store %arg4[%c0_6, %c0_7], %9 {strides = array<i32>} : memref<8x256xbf16, #tpu.memory_space<vmem>>, vector<8x256xbf16>,
    return
  }
  func.func @transform_0(%arg0: i32) -> (i32, i32) {
    %c0_i32 = arith.constant 0 : i32
    %c0_i32_0 = arith.constant 0 : i32
    return %arg0, %c0_i32 : i32, i32
  }
  func.func @transform_1(%arg0: i32) -> (i32, i32) {
    %c0_i32 = arith.constant 0 : i32
    %c0_i32_0 = arith.constant 0 : i32
    %c0_i32_1 = arith.constant 0 : i32
    return %c0_i32, %c0_i32_0 : i32, i32
  }
  func.func @transform_2(%arg0: i32) -> (i32, i32) {
    %c0_i32 = arith.constant 0 : i32
    %c0_i32_0 = arith.constant 0 : i32
    %c0_i32_1 = arith.constant 0 : i32
    return %c0_i32, %c0_i32_0 : i32, i32
  }
  func.func @transform_3(%arg0: i32) -> (i32, i32) {
    %c0_i32 = arith.constant 0 : i32
    %c0_i32_0 = arith.constant 0 : i32
    return %arg0, %c0_i32 : i32, i32
  }
}

module attributes {stable_mosaic.version = 11 : i64} {
  func.func @_fused_matmul_kernel(%arg0: i32, %arg1: memref<16x576xbf16, #tpu.memory_space<vmem>>, %arg2: memref<576x128xbf16, #tpu.memory_space<vmem>>, %arg3: memref<1x128xf32, #tpu.memory_space<vmem>>, %arg4: memref<16x128xbf16, #tpu.memory_space<vmem>>) attributes {dimension_semantics = [#tpu.dimension_semantics<parallel>], iteration_bounds = array<i64: 2>, scalar_prefetch = 0 : i64, scratch_operands = 0 : i64, tpu.core_type = #tpu.core_type<tc>, window_params = [{transform_indices = @transform_0, window_bounds = array<i64: 16, 576>}, {pipeline_mode = #tpu.pipeline_mode<synchronous>, transform_indices = @transform_1, window_bounds = array<i64: 576, 128>}, {pipeline_mode = #tpu.pipeline_mode<synchronous>, transform_indices = @transform_2, window_bounds = array<i64: 1, 128>}, {transform_indices = @transform_3, window_bounds = array<i64: 16, 128>}]} {
    %c0 = arith.constant 0 : index
    %c0_0 = arith.constant 0 : index
    %0 = vector.load %arg1[%c0, %c0_0] : memref<16x576xbf16, #tpu.memory_space<vmem>>, vector<16x576xbf16>
    %c0_1 = arith.constant 0 : index
    %c0_2 = arith.constant 0 : index
    %1 = vector.load %arg2[%c0_1, %c0_2] : memref<576x128xbf16, #tpu.memory_space<vmem>>, vector<576x128xbf16>
    %cst = arith.constant dense<0.000000e+00> : vector<16x128xf32>
    %2 = tpu.matmul %0, %1, %cst {dimension_numbers = #tpu.dot_dimension_numbers<[1], [0], [0], [1], [0, 0, 1, 1], [], []>} : vector<16x576xbf16>, vector<576x128xbf16>, vector<16x128xf32> -> vector<16x128xf32>
    %c0_3 = arith.constant 0 : index
    %c0_4 = arith.constant 0 : index
    %3 = vector.load %arg3[%c0_3, %c0_4] : memref<1x128xf32, #tpu.memory_space<vmem>>, vector<1x128xf32>
    %4 = vector.broadcast %3 : vector<1x128xf32> to vector<16x128xf32>
    %5 = arith.addf %2, %4 : vector<16x128xf32>
    %cst_5 = arith.constant 0.00999999977 : f32
    %6 = vector.broadcast %cst_5 : f32 to vector<16x128xf32>
    %7 = arith.mulf %6, %5 : vector<16x128xf32>
    %8 = arith.maximumf %5, %7 : vector<16x128xf32>
    %9 = arith.truncf %8 : vector<16x128xf32> to vector<16x128xbf16>
    %c0_6 = arith.constant 0 : index
    %c0_7 = arith.constant 0 : index
    %10 = vector.load %arg4[%c0_6, %c0_7] : memref<16x128xbf16, #tpu.memory_space<vmem>>, vector<16x128xbf16>
    tpu.vector_store %arg4[%c0_6, %c0_7], %9 {strides = array<i32>} : memref<16x128xbf16, #tpu.memory_space<vmem>>, vector<16x128xbf16>,
    return
  }
  func.func @transform_0(%arg0: i32) -> (i32, i32) {
    %c0_i32 = arith.constant 0 : i32
    %c0_i32_0 = arith.constant 0 : i32
    return %arg0, %c0_i32 : i32, i32
  }
  func.func @transform_1(%arg0: i32) -> (i32, i32) {
    %c0_i32 = arith.constant 0 : i32
    %c0_i32_0 = arith.constant 0 : i32
    %c0_i32_1 = arith.constant 0 : i32
    return %c0_i32, %c0_i32_0 : i32, i32
  }
  func.func @transform_2(%arg0: i32) -> (i32, i32) {
    %c0_i32 = arith.constant 0 : i32
    %c0_i32_0 = arith.constant 0 : i32
    %c0_i32_1 = arith.constant 0 : i32
    return %c0_i32, %c0_i32_0 : i32, i32
  }
  func.func @transform_3(%arg0: i32) -> (i32, i32) {
    %c0_i32 = arith.constant 0 : i32
    %c0_i32_0 = arith.constant 0 : i32
    return %arg0, %c0_i32 : i32, i32
  }
}

module attributes {stable_mosaic.version = 11 : i64} {
  func.func @_fused_matmul_kernel(%arg0: i32, %arg1: memref<64x288xbf16, #tpu.memory_space<vmem>>, %arg2: memref<288x128xbf16, #tpu.memory_space<vmem>>, %arg3: memref<1x128xf32, #tpu.memory_space<vmem>>, %arg4: memref<64x128xbf16, #tpu.memory_space<vmem>>) attributes {dimension_semantics = [#tpu.dimension_semantics<parallel>], iteration_bounds = array<i64: 2>, scalar_prefetch = 0 : i64, scratch_operands = 0 : i64, tpu.core_type = #tpu.core_type<tc>, window_params = [{transform_indices = @transform_0, window_bounds = array<i64: 64, 288>}, {pipeline_mode = #tpu.pipeline_mode<synchronous>, transform_indices = @transform_1, window_bounds = array<i64: 288, 128>}, {pipeline_mode = #tpu.pipeline_mode<synchronous>, transform_indices = @transform_2, window_bounds = array<i64: 1, 128>}, {transform_indices = @transform_3, window_bounds = array<i64: 64, 128>}]} {
    %c0 = arith.constant 0 : index
    %c0_0 = arith.constant 0 : index
    %0 = vector.load %arg1[%c0, %c0_0] : memref<64x288xbf16, #tpu.memory_space<vmem>>, vector<64x288xbf16>
    %c0_1 = arith.constant 0 : index
    %c0_2 = arith.constant 0 : index
    %1 = vector.load %arg2[%c0_1, %c0_2] : memref<288x128xbf16, #tpu.memory_space<vmem>>, vector<288x128xbf16>
    %cst = arith.constant dense<0.000000e+00> : vector<64x128xf32>
    %2 = tpu.matmul %0, %1, %cst {dimension_numbers = #tpu.dot_dimension_numbers<[1], [0], [0], [1], [0, 0, 1, 1], [], []>} : vector<64x288xbf16>, vector<288x128xbf16>, vector<64x128xf32> -> vector<64x128xf32>
    %c0_3 = arith.constant 0 : index
    %c0_4 = arith.constant 0 : index
    %3 = vector.load %arg3[%c0_3, %c0_4] : memref<1x128xf32, #tpu.memory_space<vmem>>, vector<1x128xf32>
    %4 = vector.broadcast %3 : vector<1x128xf32> to vector<64x128xf32>
    %5 = arith.addf %2, %4 : vector<64x128xf32>
    %cst_5 = arith.constant 0.000000e+00 : f32
    %6 = vector.broadcast %cst_5 : f32 to vector<64x128xf32>
    %7 = arith.subf %6, %5 : vector<64x128xf32>
    %8 = math.exp %7 : vector<64x128xf32>
    %cst_6 = arith.constant 1.000000e+00 : f32
    %9 = vector.broadcast %cst_6 : f32 to vector<64x128xf32>
    %10 = arith.addf %9, %8 : vector<64x128xf32>
    %cst_7 = arith.constant 1.000000e+00 : f32
    %11 = vector.broadcast %cst_7 : f32 to vector<64x128xf32>
    %12 = arith.divf %11, %10 : vector<64x128xf32>
    %13 = arith.truncf %12 : vector<64x128xf32> to vector<64x128xbf16>
    %c0_8 = arith.constant 0 : index
    %c0_9 = arith.constant 0 : index
    %14 = vector.load %arg4[%c0_8, %c0_9] : memref<64x128xbf16, #tpu.memory_space<vmem>>, vector<64x128xbf16>
    tpu.vector_store %arg4[%c0_8, %c0_9], %13 {strides = array<i32>} : memref<64x128xbf16, #tpu.memory_space<vmem>>, vector<64x128xbf16>,
    return
  }
  func.func @transform_0(%arg0: i32) -> (i32, i32) {
    %c0_i32 = arith.constant 0 : i32
    %c0_i32_0 = arith.constant 0 : i32
    return %arg0, %c0_i32 : i32, i32
  }
  func.func @transform_1(%arg0: i32) -> (i32, i32) {
    %c0_i32 = arith.constant 0 : i32
    %c0_i32_0 = arith.constant 0 : i32
    %c0_i32_1 = arith.constant 0 : i32
    return %c0_i32, %c0_i32_0 : i32, i32
  }
  func.func @transform_2(%arg0: i32) -> (i32, i32) {
    %c0_i32 = arith.constant 0 : i32
    %c0_i32_0 = arith.constant 0 : i32
    %c0_i32_1 = arith.constant 0 : i32
    return %c0_i32, %c0_i32_0 : i32, i32
  }
  func.func @transform_3(%arg0: i32) -> (i32, i32) {
    %c0_i32 = arith.constant 0 : i32
    %c0_i32_0 = arith.constant 0 : i32
    return %arg0, %c0_i32 : i32, i32
  }
}

</mosaic_0001>

<llo_original>
// kernel: clagnosco_autoencoder_forward.9
$region0: #{clagnosco_autoencoder_forward.9}
  #allocation0 [shape = 'u32[]', space=smem, size = 0x4, offset = 0x4, fixed_abs, tag = 'smem constant byte address 0x4 - core index']
  #allocation1 [shape = 'u32[144,128]{1,0:T(1,128)}', space=vmem, size = 0x12000, scoped, tag = 'internal scratch']
  %s0 = inlined_call_operand.vmem [shape: bf16[512,48], index: 0, kind: input, shape index: {}]
  %s1 = inlined_call_operand.vmem [shape: bf16[48,128], index: 1, kind: input, shape index: {}]
  %s2 = inlined_call_operand.vmem [shape: f32[1,128], index: 2, kind: input, shape index: {}]
  %s3 = inlined_call_operand.vmem [shape: bf16[512,128], index: 3, kind: output, shape index: {}]
  %s4 = sld [smem:[#allocation0]]
  $region45: #{clagnosco_autoencoder_forward.9} parent=0
    _
  %s6 = ssub.s32 1, %s4
  %s7 = scalar_select 0, %s6, %s4
  loop: start=0, step=1, limit=4
  $region2: #{clagnosco_autoencoder_forward.9} parent=0 // loop_pre_header
    _
  $region3: #{clagnosco_autoencoder_forward.9} parent=0 // loop_header
    %s9 = sphi 0, %s13
    %p10 = scmp.ge.s32.totalorder %s9, 4
    %s19 = sphi 0, %s21
    %s22 = sphi 0, %s19
    %s23 = sphi 0, %s22
    %s39 = sphi 0, %s23
    %s43 = sphi 0, %s43
    %s45 = sphi 0, %s43
    %s46 = sphi 0, %s45
    %s60 = sphi 0, %s46
    %s64 = sphi 0, %s64
    %s66 = sphi 0, %s64
    %s67 = sphi 0, %s66
    %s81 = sphi 0, %s67
    %s87 = sphi 0, %s89
    %s90 = sphi 0, %s87
    %s91 = sphi 0, %s90
    %s107 = sphi 0, %s91
  $region4: #{clagnosco_autoencoder_forward.9} parent=0 // loop_header_branch
    %12 = sbr.rel (%p10) target = $region8
  $region5: #{clagnosco_autoencoder_forward.9} parent=0 // loop_body
    %s14 = ssub.s32 %s9, 1
    %s15 = ssub.s32 %s9, 2
    %s16 = sadd.s32 %s9, 1
    %s17 = ssub.s32 %s9, %s16
    %p18 = scmp.eq.s32.totalorder %s17, 0
    %s20 = sadd.s32 %s19, 1
    %s21 = scalar_select %p18, %s19, %s20
    %p24 = pneg %p18
    %p25 = scmp.eq.s32.totalorder %s9, 1
    %p26 = por %p24, %p25
    %p27 = scmp.ne.s32.totalorder %s19, %s22
    %p28 = scmp.eq.s32.totalorder %s9, 0
    %p29 = por %p27, %p28
    %p30 = scmp.ne.s32.totalorder %s19, %s22
    %p31 = scmp.eq.s32.totalorder %s14, 1
    %p32 = por %p30, %p31
    %p33 = scmp.ne.s32.totalorder %s22, %s23
    %p34 = scmp.eq.s32.totalorder %s14, 0
    %p35 = por %p33, %p34
    %p36 = scmp.ne.s32.totalorder %s22, %s23
    %p37 = scmp.eq.s32.totalorder %s15, 1
    %p38 = por %p36, %p37
    %p40 = scmp.ne.s32.totalorder %s23, %s39
    %p41 = scmp.eq.s32.totalorder %s15, 0
    %p42 = por %p40, %p41
    %s44 = sadd.s32 %s43, 1
    %p47 = scmp.eq.s32.totalorder %s9, 1
    %p48 = scmp.ne.s32.totalorder %s43, %s45
    %p49 = scmp.eq.s32.totalorder %s9, 0
    %p50 = por %p48, %p49
    %p51 = scmp.ne.s32.totalorder %s43, %s45
    %p52 = scmp.eq.s32.totalorder %s14, 1
    %p53 = por %p51, %p52
    %p54 = scmp.ne.s32.totalorder %s45, %s46
    %p55 = scmp.eq.s32.totalorder %s14, 0
    %p56 = por %p54, %p55
    %p57 = scmp.ne.s32.totalorder %s45, %s46
    %p58 = scmp.eq.s32.totalorder %s15, 1
    %p59 = por %p57, %p58
    %p61 = scmp.ne.s32.totalorder %s46, %s60
    %p62 = scmp.eq.s32.totalorder %s15, 0
    %p63 = por %p61, %p62
    %s65 = sadd.s32 %s64, 1
    %p68 = scmp.eq.s32.totalorder %s9, 1
    %p69 = scmp.ne.s32.totalorder %s64, %s66
    %p70 = scmp.eq.s32.totalorder %s9, 0
    %p71 = por %p69, %p70
    %p72 = scmp.ne.s32.totalorder %s64, %s66
    %p73 = scmp.eq.s32.totalorder %s14, 1
    %p74 = por %p72, %p73
    %p75 = scmp.ne.s32.totalorder %s66, %s67
    %p76 = scmp.eq.s32.totalorder %s14, 0
    %p77 = por %p75, %p76
    %p78 = scmp.ne.s32.totalorder %s66, %s67
    %p79 = scmp.eq.s32.totalorder %s15, 1
    %p80 = por %p78, %p79
    %p82 = scmp.ne.s32.totalorder %s67, %s81
    %p83 = scmp.eq.s32.totalorder %s15, 0
    %p84 = por %p82, %p83
    %s85 = ssub.s32 %s9, %s16
    %p86 = scmp.eq.s32.totalorder %s85, 0
    %s88 = sadd.s32 %s87, 1
    %s89 = scalar_select %p86, %s87, %s88
    %p92 = pneg %p86
    %p93 = scmp.eq.s32.totalorder %s9, 1
    %p94 = por %p92, %p93
    %p95 = scmp.ne.s32.totalorder %s87, %s90
    %p96 = scmp.eq.s32.totalorder %s9, 0
    %p97 = por %p95, %p96
    %p98 = scmp.ne.s32.totalorder %s87, %s90
    %p99 = scmp.eq.s32.totalorder %s14, 1
    %p100 = por %p98, %p99
    %p101 = scmp.ne.s32.totalorder %s90, %s91
    %p102 = scmp.eq.s32.totalorder %s14, 0
    %p103 = por %p101, %p102
    %p104 = scmp.ne.s32.totalorder %s90, %s91
    %p105 = scmp.eq.s32.totalorder %s15, 1
    %p106 = por %p104, %p105
    %p108 = scmp.ne.s32.totalorder %s91, %s107
    %p109 = scmp.eq.s32.totalorder %s15, 0
    %p110 = por %p108, %p109
    %p111 = scmp.le.s32.totalorder 1, %s9
    %p112 = scmp.lt.s32.totalorder %s9, 3
    %p113 = pnand %p111, %p112
    %p114 = pneg %p113
    // Predicated region
    $region9: #{clagnosco_autoencoder_forward.9} parent=5 // pred_check
      _
    $region10: #{clagnosco_autoencoder_forward.9} parent=5 // pred_check_branch
      %116 = sbr.rel (%p113) target = $region12
    $region11: #{clagnosco_autoencoder_forward.9} parent=5 // pred_region
      %s117 = ssub.s32 %s9, 1
      // Predicated region
      $region13: #{clagnosco_autoencoder_forward.9} parent=11 // pred_check
        %p118 = pneg %p56
      $region14: #{clagnosco_autoencoder_forward.9} parent=11 // pred_check_branch
        %120 = sbr.rel (%p118) target = $region16
      $region15: #{clagnosco_autoencoder_forward.9} parent=11 // pred_region
        _
      $region16: #{clagnosco_autoencoder_forward.9} parent=11 // pred_fallthru
        _
      // Predicated region
      $region17: #{clagnosco_autoencoder_forward.9} parent=11 // pred_check
        %p121 = pneg %p77
      $region18: #{clagnosco_autoencoder_forward.9} parent=11 // pred_check_branch
        %123 = sbr.rel (%p121) target = $region20
      $region19: #{clagnosco_autoencoder_forward.9} parent=11 // pred_region
        _
      $region20: #{clagnosco_autoencoder_forward.9} parent=11 // pred_fallthru
        _
    $region12: #{clagnosco_autoencoder_forward.9} parent=5 // pred_fallthru
      _
    %p124 = scmp.lt.s32.totalorder %s9, 2
    // Predicated region
    $region21: #{clagnosco_autoencoder_forward.9} parent=5 // pred_check
      %p125 = pneg %p124
    $region22: #{clagnosco_autoencoder_forward.9} parent=5 // pred_check_branch
      %127 = sbr.rel (%p125) target = $region24
    $region23: #{clagnosco_autoencoder_forward.9} parent=5 // pred_region
      // Predicated region
      $region25: #{clagnosco_autoencoder_forward.9} parent=23 // pred_check
        %p128 = pneg %p29
      $region26: #{clagnosco_autoencoder_forward.9} parent=23 // pred_check_branch
        %130 = sbr.rel (%p128) target = $region28
      $region27: #{clagnosco_autoencoder_forward.9} parent=23 // pred_region
        %s131 = smul.u32 32, %s9
        %p132 = scmp.lt.s32.totalorder %s131, 63
        %s133 = scalar_select %p132, %s131, 63
        %s134 = smul.addr %s133, 4
        %s135 = scalar_lea.vmem %s0, %s134
        %s136 = smul.u32 32, %s9
      $region28: #{clagnosco_autoencoder_forward.9} parent=23 // pred_fallthru
        _
    $region24: #{clagnosco_autoencoder_forward.9} parent=5 // pred_fallthru
      _
    %p137 = scmp.le.s32.totalorder 1, %s9
    %p138 = scmp.lt.s32.totalorder %s9, 3
    %p139 = pnand %p137, %p138
    %p140 = pneg %p139
    // Predicated region
    $region29: #{clagnosco_autoencoder_forward.9} parent=5 // pred_check
      _
    $region30: #{clagnosco_autoencoder_forward.9} parent=5 // pred_check_branch
      %142 = sbr.rel (%p139) target = $region32
    $region31: #{clagnosco_autoencoder_forward.9} parent=5 // pred_region
      %s143 = ssub.s32 %s9, 1
      %s144 = smul.u32 32, %s14
      %p145 = scmp.lt.s32.totalorder %s144, 63
      %s146 = scalar_select %p145, %s144, 63
      %s147 = smul.addr %s146, 4
      %s148 = scalar_lea.vmem %s0, %s147
      %p149 = pneg %p35
      %p150 = pneg %p32
      %p151 = pneg %p56
      %p152 = pneg %p53
      %p153 = pneg %p77
      %p154 = pneg %p74
      %p155 = pneg %p103
      %p156 = pneg %p100
      %s157 = smul.u32 32, %s14
      %p158 = scmp.lt.s32.totalorder %s157, 63
      %s159 = scalar_select %p158, %s157, 63
      %s160 = smul.addr %s159, 4
      %s161 = scalar_lea.vmem %s3, %s160
      %s162 = smul.u32 32, %s14
      %p163 = scmp.lt.s32.totalorder %s162, 63
      %s164 = scalar_select %p163, %s162, 63
      %s165 = smul.addr %s164, 4
      %s166 = scalar_lea.vmem %s0, %s165
      %s167 = smul.u32 32, %s14
      %s168 = smul.u32 32, %s14
      %p169 = scmp.lt.s32.totalorder %s168, 63
      %s170 = scalar_select %p169, %s168, 63
      %s171 = smul.addr %s170, 4
      %s172 = scalar_lea.vmem %s3, %s171
      %s173 = smul.u32 32, %s14
      %v175 = vld [vmem:[%s166] sm:$0xf]
      %v176 = vld [vmem:[%s166 + $0x4] sm:$0xf]
      %v177 = vld [vmem:[%s166 + $0x8] sm:$0xf]
      %v178 = vld [vmem:[%s166 + $0xc] sm:$0xf]
      %v179 = vld [vmem:[%s166 + $0x10] sm:$0xf]
      %v180 = vld [vmem:[%s166 + $0x14] sm:$0xf]
      %v181 = vld [vmem:[%s166 + $0x18] sm:$0xf]
      %v182 = vld [vmem:[%s166 + $0x1c] sm:$0xf]
      %v183 = vld [vmem:[%s166 + $0x20] sm:$0xf]
      %v184 = vld [vmem:[%s166 + $0x24] sm:$0xf]
      %v185 = vld [vmem:[%s166 + $0x28] sm:$0xf]
      %v186 = vld [vmem:[%s166 + $0x2c] sm:$0xf]
      %v187 = vld [vmem:[%s166 + $0x30] sm:$0xf]
      %v188 = vld [vmem:[%s166 + $0x34] sm:$0xf]
      %v189 = vld [vmem:[%s166 + $0x38] sm:$0xf]
      %v190 = vld [vmem:[%s166 + $0x3c] sm:$0xf]
      %v191 = vld [vmem:[%s166 + $0x40] sm:$0xf]
      %v192 = vld [vmem:[%s166 + $0x44] sm:$0xf]
      %v193 = vld [vmem:[%s166 + $0x48] sm:$0xf]
      %v194 = vld [vmem:[%s166 + $0x4c] sm:$0xf]
      %v195 = vld [vmem:[%s166 + $0x50] sm:$0xf]
      %v196 = vld [vmem:[%s166 + $0x54] sm:$0xf]
      %v197 = vld [vmem:[%s166 + $0x58] sm:$0xf]
      %v198 = vld [vmem:[%s166 + $0x5c] sm:$0xf]
      %v199 = vld [vmem:[%s166 + $0x60] sm:$0xf]
      %v200 = vld [vmem:[%s166 + $0x64] sm:$0xf]
      %v201 = vld [vmem:[%s166 + $0x68] sm:$0xf]
      %v202 = vld [vmem:[%s166 + $0x6c] sm:$0xf]
      %v203 = vld [vmem:[%s166 + $0x70] sm:$0xf]
      %v204 = vld [vmem:[%s166 + $0x74] sm:$0xf]
      %v205 = vld [vmem:[%s166 + $0x78] sm:$0xf]
      %v206 = vld [vmem:[%s166 + $0x7c] sm:$0xf]
      %v207 = vld [vmem:[%s1] sm:$0xf]
      %v208 = vld [vmem:[%s1 + $0x4] sm:$0xf]
      %v209 = vld [vmem:[%s1 + $0x8] sm:$0xf]
      %v210 = vld [vmem:[%s1 + $0xc] sm:$0xf]
      %v211 = vld [vmem:[%s1 + $0x10] sm:$0xf]
      %v212 = vld [vmem:[%s1 + $0x14] sm:$0xf]
      %v213 = vld [vmem:[%s2] sm:$0x1]
      %v215 = vlaneseq
      %v216 = vshrl.u32 %v215, 7
      %v217 = vsub.s32 0, %v216
      %v218 = vrot.slane %v213, %v217
      %v252 = vunpack.c.l.b16 %v175
      %v253 = vunpack.c.l.b16 %v176
      %v254 = vunpack.c.l.b16 %v177
      %v255 = vunpack.c.l.b16 %v178
      %v256 = vunpack.c.l.b16 %v179
      %v257 = vunpack.c.l.b16 %v180
      %v258 = vunpack.c.l.b16 %v181
      %v259 = vunpack.c.l.b16 %v182
      %v260 = vunpack.c.l.b16 %v183
      %v261 = vunpack.c.l.b16 %v184
      %v262 = vunpack.c.l.b16 %v185
      %v263 = vunpack.c.l.b16 %v186
      %v264 = vunpack.c.l.b16 %v187
      %v265 = vunpack.c.l.b16 %v188
      %v266 = vunpack.c.l.b16 %v189
      %v267 = vunpack.c.l.b16 %v190
      %v268 = vunpack.c.l.b16 %v191
      %v269 = vunpack.c.l.b16 %v192
      %v270 = vunpack.c.l.b16 %v193
      %v271 = vunpack.c.l.b16 %v194
      %v272 = vunpack.c.l.b16 %v195
      %v273 = vunpack.c.l.b16 %v196
      %v274 = vunpack.c.l.b16 %v197
      %v275 = vunpack.c.l.b16 %v198
      %v276 = vunpack.c.l.b16 %v199
      %v277 = vunpack.c.l.b16 %v200
      %v278 = vunpack.c.l.b16 %v201
      %v279 = vunpack.c.l.b16 %v202
      %v280 = vunpack.c.l.b16 %v203
      %v281 = vunpack.c.l.b16 %v204
      %v282 = vunpack.c.l.b16 %v205
      %v283 = vunpack.c.l.b16 %v206
      %v284 = vpack.c.b16 %v253, %v252
      %v285 = vpack.c.b16 %v255, %v254
      %v286 = vpack.c.b16 %v257, %v256
      %v287 = vpack.c.b16 %v259, %v258
      %v288 = vpack.c.b16 %v261, %v260
      %v289 = vpack.c.b16 %v263, %v262
      %v290 = vpack.c.b16 %v265, %v264
      %v291 = vpack.c.b16 %v267, %v266
      %v292 = vpack.c.b16 %v269, %v268
      %v293 = vpack.c.b16 %v271, %v270
      %v294 = vpack.c.b16 %v273, %v272
      %v295 = vpack.c.b16 %v275, %v274
      %v296 = vpack.c.b16 %v277, %v276
      %v297 = vpack.c.b16 %v279, %v278
      %v298 = vpack.c.b16 %v281, %v280
      %v299 = vpack.c.b16 %v283, %v282
      %v306 = vunpack.c.l.b16 %v207
      %v307 = vunpack.c.l.b16 %v208
      %v308 = vunpack.c.l.b16 %v209
      %v309 = vunpack.c.l.b16 %v210
      %v310 = vunpack.c.l.b16 %v211
      %v311 = vunpack.c.l.b16 %v212
      %v312 = vpack.c.b16 %v307, %v306
      %v313 = vpack.c.b16 %v309, %v308
      %v314 = vpack.c.b16 %v311, %v310
      %vm318 = vcmask 392192
      %v320 = vsel %vm318, %v284, 0
      %v323 = vsel %vm318, %v285, 0
      %v326 = vsel %vm318, %v286, 0
      %v329 = vsel %vm318, %v287, 0
      %v332 = vsel %vm318, %v288, 0
      %v335 = vsel %vm318, %v289, 0
      %v338 = vsel %vm318, %v290, 0
      %v341 = vsel %vm318, %v291, 0
      %v344 = vsel %vm318, %v292, 0
      %v347 = vsel %vm318, %v293, 0
      %v350 = vsel %vm318, %v294, 0
      %v353 = vsel %vm318, %v295, 0
      %v356 = vsel %vm318, %v296, 0
      %v359 = vsel %vm318, %v297, 0
      %v362 = vsel %vm318, %v298, 0
      %v365 = vsel %vm318, %v299, 0
      %367 = vmatprep.subr.bf16.mxu0 0
      %368 = vmatpush1.bf16.msra.mxu0 %v312
      %369 = vmatprep.subr.bf16.mxu0 0
      %370 = vmatpush1.bf16.msra.mxu0 %v313
      %371 = vmatprep.subr.bf16.mxu0 0
      %372 = vmatpush1.bf16.msra.mxu0 %v314
      %373 = vmatprep.subr.bf16.mxu0 0
      %374 = vmatpush1.bf16.msra.mxu0 0
      %375 = vmatprep.subr.bf16.mxu0 0
      %376 = vmatpush1.bf16.msra.mxu0 0
      %377 = vmatprep.subr.bf16.mxu0 0
      %378 = vmatpush1.bf16.msra.mxu0 0
      %379 = vmatprep.subr.bf16.mxu0 0
      %380 = vmatpush1.bf16.msra.mxu0 0
      %381 = vmatprep.subr.bf16.mxu0 0
      %382 = vmatpush1.bf16.msra.mxu0 0
      %383 = vmatprep.subr.bf16.mxu0 0
      %384 = vmatpush1.bf16.msra.mxu0 0
      %385 = vmatprep.subr.bf16.mxu0 0
      %386 = vmatpush1.bf16.msra.mxu0 0
      %387 = vmatprep.subr.bf16.mxu0 0
      %388 = vmatpush1.bf16.msra.mxu0 0
      %389 = vmatprep.subr.bf16.mxu0 0
      %390 = vmatpush1.bf16.msra.mxu0 0
      %391 = vmatprep.subr.bf16.mxu0 0
      %392 = vmatpush1.bf16.msra.mxu0 0
      %393 = vmatprep.subr.bf16.mxu0 0
      %394 = vmatpush1.bf16.msra.mxu0 0
      %395 = vmatprep.subr.bf16.mxu0 0
      %396 = vmatpush1.bf16.msra.mxu0 0
      %397 = vmatprep.subr.bf16.mxu0 0
      %398 = vmatpush1.bf16.msra.mxu0 0
      %399 = vmatprep.mubr.bf16.mxu0 0
      %400 = vmatmul.mubr.bf16.gmra.mrb[0].mxu0 %v320
      %v401 = vpop.f32.mrb[0].mxu0
      %v402 = vadd.f32 %v218, %v401
      %v403 = vpop.f32.mrb[0].mxu0
      %v404 = vpop.f32.mrb[0].mxu0
      %v405 = vadd.f32 %v218, %v404
      %v406 = vpop.f32.mrb[0].mxu0
      %407 = vmatprep.mubr.bf16.mxu0 0
      %408 = vmatmul.mubr.bf16.gmra.mrb[0].mxu0 %v323
      %v409 = vpop.f32.mrb[0].mxu0
      %v410 = vadd.f32 %v218, %v409
      %v411 = vpop.f32.mrb[0].mxu0
      %v412 = vpop.f32.mrb[0].mxu0
      %v413 = vadd.f32 %v218, %v412
      %v414 = vpop.f32.mrb[0].mxu0
      %415 = vmatprep.mubr.bf16.mxu0 0
      %416 = vmatmul.mubr.bf16.gmra.mrb[0].mxu0 %v326
      %v417 = vpop.f32.mrb[0].mxu0
      %v418 = vadd.f32 %v218, %v417
      %v419 = vpop.f32.mrb[0].mxu0
      %v420 = vpop.f32.mrb[0].mxu0
      %v421 = vadd.f32 %v218, %v420
      %v422 = vpop.f32.mrb[0].mxu0
      %423 = vmatprep.mubr.bf16.mxu0 0
      %424 = vmatmul.mubr.bf16.gmra.mrb[0].mxu0 %v329
      %v425 = vpop.f32.mrb[0].mxu0
      %v426 = vadd.f32 %v218, %v425
      %v427 = vpop.f32.mrb[0].mxu0
      %v428 = vpop.f32.mrb[0].mxu0
      %v429 = vadd.f32 %v218, %v428
      %v430 = vpop.f32.mrb[0].mxu0
      %431 = vmatprep.mubr.bf16.mxu0 0
      %432 = vmatmul.mubr.bf16.gmra.mrb[0].mxu0 %v332
      %v433 = vpop.f32.mrb[0].mxu0
      %v434 = vadd.f32 %v218, %v433
      %v435 = vpop.f32.mrb[0].mxu0
      %v436 = vpop.f32.mrb[0].mxu0
      %v437 = vadd.f32 %v218, %v436
      %v438 = vpop.f32.mrb[0].mxu0
      %439 = vmatprep.mubr.bf16.mxu0 0
      %440 = vmatmul.mubr.bf16.gmra.mrb[0].mxu0 %v335
      %v441 = vpop.f32.mrb[0].mxu0
      %v442 = vadd.f32 %v218, %v441
      %v443 = vpop.f32.mrb[0].mxu0
      %v444 = vpop.f32.mrb[0].mxu0
      %v445 = vadd.f32 %v218, %v444
      %v446 = vpop.f32.mrb[0].mxu0
      %447 = vmatprep.mubr.bf16.mxu0 0
      %448 = vmatmul.mubr.bf16.gmra.mrb[0].mxu0 %v338
      %v449 = vpop.f32.mrb[0].mxu0
      %v450 = vadd.f32 %v218, %v449
      %v451 = vpop.f32.mrb[0].mxu0
      %v452 = vpop.f32.mrb[0].mxu0
      %v453 = vadd.f32 %v218, %v452
      %v454 = vpop.f32.mrb[0].mxu0
      %455 = vmatprep.mubr.bf16.mxu0 0
      %456 = vmatmul.mubr.bf16.gmra.mrb[0].mxu0 %v341
      %v457 = vpop.f32.mrb[0].mxu0
      %v458 = vadd.f32 %v218, %v457
      %v459 = vpop.f32.mrb[0].mxu0
      %v460 = vpop.f32.mrb[0].mxu0
      %v461 = vadd.f32 %v218, %v460
      %v462 = vpop.f32.mrb[0].mxu0
      %463 = vmatprep.mubr.bf16.mxu0 0
      %464 = vmatmul.mubr.bf16.gmra.mrb[0].mxu0 %v344
      %v465 = vpop.f32.mrb[0].mxu0
      %v466 = vadd.f32 %v218, %v465
      %v467 = vpop.f32.mrb[0].mxu0
      %v468 = vpop.f32.mrb[0].mxu0
      %v469 = vadd.f32 %v218, %v468
      %v470 = vpop.f32.mrb[0].mxu0
      %471 = vmatprep.mubr.bf16.mxu0 0
      %472 = vmatmul.mubr.bf16.gmra.mrb[0].mxu0 %v347
      %v473 = vpop.f32.mrb[0].mxu0
      %v474 = vadd.f32 %v218, %v473
      %v475 = vpop.f32.mrb[0].mxu0
      %v476 = vpop.f32.mrb[0].mxu0
      %v477 = vadd.f32 %v218, %v476
      %v478 = vpop.f32.mrb[0].mxu0
      %479 = vmatprep.mubr.bf16.mxu0 0
      %480 = vmatmul.mubr.bf16.gmra.mrb[0].mxu0 %v350
      %v481 = vpop.f32.mrb[0].mxu0
      %v482 = vadd.f32 %v218, %v481
      %v483 = vpop.f32.mrb[0].mxu0
      %v484 = vpop.f32.mrb[0].mxu0
      %v485 = vadd.f32 %v218, %v484
      %v486 = vpop.f32.mrb[0].mxu0
      %487 = vmatprep.mubr.bf16.mxu0 0
      %488 = vmatmul.mubr.bf16.gmra.mrb[0].mxu0 %v353
      %v489 = vpop.f32.mrb[0].mxu0
      %v490 = vadd.f32 %v218, %v489
      %v491 = vpop.f32.mrb[0].mxu0
      %v492 = vpop.f32.mrb[0].mxu0
      %v493 = vadd.f32 %v218, %v492
      %v494 = vpop.f32.mrb[0].mxu0
      %495 = vmatprep.mubr.bf16.mxu0 0
      %496 = vmatmul.mubr.bf16.gmra.mrb[0].mxu0 %v356
      %v497 = vpop.f32.mrb[0].mxu0
      %v498 = vadd.f32 %v218, %v497
      %v499 = vpop.f32.mrb[0].mxu0
      %v500 = vpop.f32.mrb[0].mxu0
      %v501 = vadd.f32 %v218, %v500
      %v502 = vpop.f32.mrb[0].mxu0
      %503 = vmatprep.mubr.bf16.mxu0 0
      %504 = vmatmul.mubr.bf16.gmra.mrb[0].mxu0 %v359
      %v505 = vpop.f32.mrb[0].mxu0
      %v506 = vadd.f32 %v218, %v505
      %v507 = vpop.f32.mrb[0].mxu0
      %v508 = vpop.f32.mrb[0].mxu0
      %v509 = vadd.f32 %v218, %v508
      %v510 = vpop.f32.mrb[0].mxu0
      %511 = vmatprep.mubr.bf16.mxu0 0
      %512 = vmatmul.mubr.bf16.gmra.mrb[0].mxu0 %v362
      %v513 = vpop.f32.mrb[0].mxu0
      %v514 = vadd.f32 %v218, %v513
      %v515 = vpop.f32.mrb[0].mxu0
      %v516 = vpop.f32.mrb[0].mxu0
      %v517 = vadd.f32 %v218, %v516
      %v518 = vpop.f32.mrb[0].mxu0
      %519 = vmatprep.mubr.bf16.mxu0 0
      %520 = vmatmul.mubr.bf16.gmra.mrb[0].mxu0 %v365
      %v521 = vpop.f32.mrb[0].mxu0
      %v522 = vadd.f32 %v218, %v521
      %v523 = vpop.f32.mrb[0].mxu0
      %v524 = vpop.f32.mrb[0].mxu0
      %v525 = vadd.f32 %v218, %v524
      %v526 = vpop.f32.mrb[0].mxu0
      %527 = vdwg.mxu0
      %v528 = vmul.f32 %v402, 0.01
      %v529 = vmul.f32 %v405, 0.01
      %v530 = vmul.f32 %v410, 0.01
      %v531 = vmul.f32 %v413, 0.01
      %v532 = vmul.f32 %v418, 0.01
      %v533 = vmul.f32 %v421, 0.01
      %v534 = vmul.f32 %v426, 0.01
      %v535 = vmul.f32 %v429, 0.01
      %v536 = vmul.f32 %v434, 0.01
      %v537 = vmul.f32 %v437, 0.01
      %v538 = vmul.f32 %v442, 0.01
      %v539 = vmul.f32 %v445, 0.01
      %v540 = vmul.f32 %v450, 0.01
      %v541 = vmul.f32 %v453, 0.01
      %v542 = vmul.f32 %v458, 0.01
      %v543 = vmul.f32 %v461, 0.01
      %v544 = vmul.f32 %v466, 0.01
      %v545 = vmul.f32 %v469, 0.01
      %v546 = vmul.f32 %v474, 0.01
      %v547 = vmul.f32 %v477, 0.01
      %v548 = vmul.f32 %v482, 0.01
      %v549 = vmul.f32 %v485, 0.01
      %v550 = vmul.f32 %v490, 0.01
      %v551 = vmul.f32 %v493, 0.01
      %v552 = vmul.f32 %v498, 0.01
      %v553 = vmul.f32 %v501, 0.01
      %v554 = vmul.f32 %v506, 0.01
      %v555 = vmul.f32 %v509, 0.01
      %v556 = vmul.f32 %v514, 0.01
      %v557 = vmul.f32 %v517, 0.01
      %v558 = vmul.f32 %v522, 0.01
      %v559 = vmul.f32 %v525, 0.01
      %v560 = vmax.f32 %v402, %v528
      %v561 = vmax.f32 %v405, %v529
      %v562 = vmax.f32 %v410, %v530
      %v563 = vmax.f32 %v413, %v531
      %v564 = vmax.f32 %v418, %v532
      %v565 = vmax.f32 %v421, %v533
      %v566 = vmax.f32 %v426, %v534
      %v567 = vmax.f32 %v429, %v535
      %v568 = vmax.f32 %v434, %v536
      %v569 = vmax.f32 %v437, %v537
      %v570 = vmax.f32 %v442, %v538
      %v571 = vmax.f32 %v445, %v539
      %v572 = vmax.f32 %v450, %v540
      %v573 = vmax.f32 %v453, %v541
      %v574 = vmax.f32 %v458, %v542
      %v575 = vmax.f32 %v461, %v543
      %v576 = vmax.f32 %v466, %v544
      %v577 = vmax.f32 %v469, %v545
      %v578 = vmax.f32 %v474, %v546
      %v579 = vmax.f32 %v477, %v547
      %v580 = vmax.f32 %v482, %v548
      %v581 = vmax.f32 %v485, %v549
      %v582 = vmax.f32 %v490, %v550
      %v583 = vmax.f32 %v493, %v551
      %v584 = vmax.f32 %v498, %v552
      %v585 = vmax.f32 %v501, %v553
      %v586 = vmax.f32 %v506, %v554
      %v587 = vmax.f32 %v509, %v555
      %v588 = vmax.f32 %v514, %v556
      %v589 = vmax.f32 %v517, %v557
      %v590 = vmax.f32 %v522, %v558
      %v591 = vmax.f32 %v525, %v559
      %v592 = vpack.c.bf16 %v561, %v560
      %v593 = vpack.c.bf16 %v563, %v562
      %v594 = vpack.c.bf16 %v565, %v564
      %v595 = vpack.c.bf16 %v567, %v566
      %v596 = vpack.c.bf16 %v569, %v568
      %v597 = vpack.c.bf16 %v571, %v570
      %v598 = vpack.c.bf16 %v573, %v572
      %v599 = vpack.c.bf16 %v575, %v574
      %v600 = vpack.c.bf16 %v577, %v576
      %v601 = vpack.c.bf16 %v579, %v578
      %v602 = vpack.c.bf16 %v581, %v580
      %v603 = vpack.c.bf16 %v583, %v582
      %v604 = vpack.c.bf16 %v585, %v584
      %v605 = vpack.c.bf16 %v587, %v586
      %v606 = vpack.c.bf16 %v589, %v588
      %v607 = vpack.c.bf16 %v591, %v590
      %v624 = vunpack.c.l.b16 %v592
      %v625 = vunpack.c.h.b16 %v592
      %v626 = vunpack.c.l.b16 %v593
      %v627 = vunpack.c.h.b16 %v593
      %v628 = vunpack.c.l.b16 %v594
      %v629 = vunpack.c.h.b16 %v594
      %v630 = vunpack.c.l.b16 %v595
      %v631 = vunpack.c.h.b16 %v595
      %v632 = vunpack.c.l.b16 %v596
      %v633 = vunpack.c.h.b16 %v596
      %v634 = vunpack.c.l.b16 %v597
      %v635 = vunpack.c.h.b16 %v597
      %v636 = vunpack.c.l.b16 %v598
      %v637 = vunpack.c.h.b16 %v598
      %v638 = vunpack.c.l.b16 %v599
      %v639 = vunpack.c.h.b16 %v599
      %v640 = vunpack.c.l.b16 %v600
      %v641 = vunpack.c.h.b16 %v600
      %v642 = vunpack.c.l.b16 %v601
      %v643 = vunpack.c.h.b16 %v601
      %v644 = vunpack.c.l.b16 %v602
      %v645 = vunpack.c.h.b16 %v602
      %v646 = vunpack.c.l.b16 %v603
      %v647 = vunpack.c.h.b16 %v603
      %v648 = vunpack.c.l.b16 %v604
      %v649 = vunpack.c.h.b16 %v604
      %v650 = vunpack.c.l.b16 %v605
      %v651 = vunpack.c.h.b16 %v605
      %v652 = vunpack.c.l.b16 %v606
      %v653 = vunpack.c.h.b16 %v606
      %v654 = vunpack.c.l.b16 %v607
      %v655 = vunpack.c.h.b16 %v607
      %v656 = vpack.c.b16 %v624, %v624
      %v657 = vpack.c.b16 %v625, %v625
      %v658 = vpack.c.b16 %v626, %v626
      %v659 = vpack.c.b16 %v627, %v627
      %v660 = vpack.c.b16 %v628, %v628
      %v661 = vpack.c.b16 %v629, %v629
      %v662 = vpack.c.b16 %v630, %v630
      %v663 = vpack.c.b16 %v631, %v631
      %v664 = vpack.c.b16 %v632, %v632
      %v665 = vpack.c.b16 %v633, %v633
      %v666 = vpack.c.b16 %v634, %v634
      %v667 = vpack.c.b16 %v635, %v635
      %v668 = vpack.c.b16 %v636, %v636
      %v669 = vpack.c.b16 %v637, %v637
      %v670 = vpack.c.b16 %v638, %v638
      %v671 = vpack.c.b16 %v639, %v639
      %v672 = vpack.c.b16 %v640, %v640
      %v673 = vpack.c.b16 %v641, %v641
      %v674 = vpack.c.b16 %v642, %v642
      %v675 = vpack.c.b16 %v643, %v643
      %v676 = vpack.c.b16 %v644, %v644
      %v677 = vpack.c.b16 %v645, %v645
      %v678 = vpack.c.b16 %v646, %v646
      %v679 = vpack.c.b16 %v647, %v647
      %v680 = vpack.c.b16 %v648, %v648
      %v681 = vpack.c.b16 %v649, %v649
      %v682 = vpack.c.b16 %v650, %v650
      %v683 = vpack.c.b16 %v651, %v651
      %v684 = vpack.c.b16 %v652, %v652
      %v685 = vpack.c.b16 %v653, %v653
      %v686 = vpack.c.b16 %v654, %v654
      %v687 = vpack.c.b16 %v655, %v655
      %720 = vst [vmem:[%s172] sm:$0xf] %v656
      %721 = vst [vmem:[%s172 + $0x4] sm:$0xf] %v657
      %722 = vst [vmem:[%s172 + $0x8] sm:$0xf] %v658
      %723 = vst [vmem:[%s172 + $0xc] sm:$0xf] %v659
      %724 = vst [vmem:[%s172 + $0x10] sm:$0xf] %v660
      %725 = vst [vmem:[%s172 + $0x14] sm:$0xf] %v661
      %726 = vst [vmem:[%s172 + $0x18] sm:$0xf] %v662
      %727 = vst [vmem:[%s172 + $0x1c] sm:$0xf] %v663
      %728 = vst [vmem:[%s172 + $0x20] sm:$0xf] %v664
      %729 = vst [vmem:[%s172 + $0x24] sm:$0xf] %v665
      %730 = vst [vmem:[%s172 + $0x28] sm:$0xf] %v666
      %731 = vst [vmem:[%s172 + $0x2c] sm:$0xf] %v667
      %732 = vst [vmem:[%s172 + $0x30] sm:$0xf] %v668
      %733 = vst [vmem:[%s172 + $0x34] sm:$0xf] %v669
      %734 = vst [vmem:[%s172 + $0x38] sm:$0xf] %v670
      %735 = vst [vmem:[%s172 + $0x3c] sm:$0xf] %v671
      %736 = vst [vmem:[%s172 + $0x40] sm:$0xf] %v672
      %737 = vst [vmem:[%s172 + $0x44] sm:$0xf] %v673
      %738 = vst [vmem:[%s172 + $0x48] sm:$0xf] %v674
      %739 = vst [vmem:[%s172 + $0x4c] sm:$0xf] %v675
      %740 = vst [vmem:[%s172 + $0x50] sm:$0xf] %v676
      %741 = vst [vmem:[%s172 + $0x54] sm:$0xf] %v677
      %742 = vst [vmem:[%s172 + $0x58] sm:$0xf] %v678
      %743 = vst [vmem:[%s172 + $0x5c] sm:$0xf] %v679
      %744 = vst [vmem:[%s172 + $0x60] sm:$0xf] %v680
      %745 = vst [vmem:[%s172 + $0x64] sm:$0xf] %v681
      %746 = vst [vmem:[%s172 + $0x68] sm:$0xf] %v682
      %747 = vst [vmem:[%s172 + $0x6c] sm:$0xf] %v683
      %748 = vst [vmem:[%s172 + $0x70] sm:$0xf] %v684
      %749 = vst [vmem:[%s172 + $0x74] sm:$0xf] %v685
      %750 = vst [vmem:[%s172 + $0x78] sm:$0xf] %v686
      %751 = vst [vmem:[%s172 + $0x7c] sm:$0xf] %v687
      %s752 = smul.u32 32, %s14
      %p753 = scmp.lt.s32.totalorder %s752, 63
      %s754 = scalar_select %p753, %s752, 63
      %s755 = smul.addr %s754, 4
      %s756 = scalar_lea.vmem %s3, %s755
      // Predicated region
      $region33: #{clagnosco_autoencoder_forward.9} parent=31 // pred_check
        %p757 = pneg %p100
      $region34: #{clagnosco_autoencoder_forward.9} parent=31 // pred_check_branch
        %759 = sbr.rel (%p757) target = $region36
      $region35: #{clagnosco_autoencoder_forward.9} parent=31 // pred_region
        %s760 = smul.u32 32, %s14
      $region36: #{clagnosco_autoencoder_forward.9} parent=31 // pred_fallthru
        _
    $region32: #{clagnosco_autoencoder_forward.9} parent=5 // pred_fallthru
      _
    %p761 = scmp.le.s32.totalorder 2, %s9
    // Predicated region
    $region37: #{clagnosco_autoencoder_forward.9} parent=5 // pred_check
      %p762 = pneg %p761
    $region38: #{clagnosco_autoencoder_forward.9} parent=5 // pred_check_branch
      %764 = sbr.rel (%p762) target = $region40
    $region39: #{clagnosco_autoencoder_forward.9} parent=5 // pred_region
      %s765 = ssub.s32 %s9, 2
      // Predicated region
      $region41: #{clagnosco_autoencoder_forward.9} parent=39 // pred_check
        %p766 = pneg %p106
      $region42: #{clagnosco_autoencoder_forward.9} parent=39 // pred_check_branch
        %768 = sbr.rel (%p766) target = $region44
      $region43: #{clagnosco_autoencoder_forward.9} parent=39 // pred_region
        %s769 = smul.u32 32, %s15
        %p770 = scmp.lt.s32.totalorder %s769, 63
        %s771 = scalar_select %p770, %s769, 63
        %s772 = smul.addr %s771, 4
        %s773 = scalar_lea.vmem %s3, %s772
      $region44: #{clagnosco_autoencoder_forward.9} parent=39 // pred_fallthru
        _
    $region40: #{clagnosco_autoencoder_forward.9} parent=5 // pred_fallthru
      _
  $region6: #{clagnosco_autoencoder_forward.9} parent=0 // loop_footer
    %s13 = sadd.s32 1, %s9
  $region7: #{clagnosco_autoencoder_forward.9} parent=0 // loop_footer_branch
    %8 = sbr.rel target = $region3
  $region8: #{clagnosco_autoencoder_forward.9} parent=0 // loop_exit
    _

// kernel: clagnosco_autoencoder_forward.10
$region0: #{clagnosco_autoencoder_forward.10}
  #allocation0 [shape = 'u32[]', space=smem, size = 0x4, offset = 0x4, fixed_abs, tag = 'smem constant byte address 0x4 - core index']
  #allocation1 [shape = 'u32[144,128]{1,0:T(1,128)}', space=vmem, size = 0x12000, scoped, tag = 'internal scratch']
  %s0 = inlined_call_operand.vmem [shape: bf16[128,1024], index: 0, kind: input, shape index: {}]
  %s1 = inlined_call_operand.vmem [shape: bf16[1024,128], index: 1, kind: input, shape index: {}]
  %s2 = inlined_call_operand.vmem [shape: f32[1,128], index: 2, kind: input, shape index: {}]
  %s3 = inlined_call_operand.vmem [shape: bf16[128,128], index: 3, kind: output, shape index: {}]
  %s4 = sld [smem:[#allocation0]]
  $region45: #{clagnosco_autoencoder_forward.10} parent=0
    _
  %s6 = ssub.s32 1, %s4
  %s7 = scalar_select 0, %s6, %s4
  loop: start=0, step=1, limit=4
  $region2: #{clagnosco_autoencoder_forward.10} parent=0 // loop_pre_header
    _
  $region3: #{clagnosco_autoencoder_forward.10} parent=0 // loop_header
    %s9 = sphi 0, %s13
    %p10 = scmp.ge.s32.totalorder %s9, 4
    %s19 = sphi 0, %s21
    %s22 = sphi 0, %s19
    %s23 = sphi 0, %s22
    %s39 = sphi 0, %s23
    %s43 = sphi 0, %s43
    %s45 = sphi 0, %s43
    %s46 = sphi 0, %s45
    %s60 = sphi 0, %s46
    %s64 = sphi 0, %s64
    %s66 = sphi 0, %s64
    %s67 = sphi 0, %s66
    %s81 = sphi 0, %s67
    %s87 = sphi 0, %s89
    %s90 = sphi 0, %s87
    %s91 = sphi 0, %s90
    %s107 = sphi 0, %s91
  $region4: #{clagnosco_autoencoder_forward.10} parent=0 // loop_header_branch
    %12 = sbr.rel (%p10) target = $region8
  $region5: #{clagnosco_autoencoder_forward.10} parent=0 // loop_body
    %s14 = ssub.s32 %s9, 1
    %s15 = ssub.s32 %s9, 2
    %s16 = sadd.s32 %s9, 1
    %s17 = ssub.s32 %s9, %s16
    %p18 = scmp.eq.s32.totalorder %s17, 0
    %s20 = sadd.s32 %s19, 1
    %s21 = scalar_select %p18, %s19, %s20
    %p24 = pneg %p18
    %p25 = scmp.eq.s32.totalorder %s9, 1
    %p26 = por %p24, %p25
    %p27 = scmp.ne.s32.totalorder %s19, %s22
    %p28 = scmp.eq.s32.totalorder %s9, 0
    %p29 = por %p27, %p28
    %p30 = scmp.ne.s32.totalorder %s19, %s22
    %p31 = scmp.eq.s32.totalorder %s14, 1
    %p32 = por %p30, %p31
    %p33 = scmp.ne.s32.totalorder %s22, %s23
    %p34 = scmp.eq.s32.totalorder %s14, 0
    %p35 = por %p33, %p34
    %p36 = scmp.ne.s32.totalorder %s22, %s23
    %p37 = scmp.eq.s32.totalorder %s15, 1
    %p38 = por %p36, %p37
    %p40 = scmp.ne.s32.totalorder %s23, %s39
    %p41 = scmp.eq.s32.totalorder %s15, 0
    %p42 = por %p40, %p41
    %s44 = sadd.s32 %s43, 1
    %p47 = scmp.eq.s32.totalorder %s9, 1
    %p48 = scmp.ne.s32.totalorder %s43, %s45
    %p49 = scmp.eq.s32.totalorder %s9, 0
    %p50 = por %p48, %p49
    %p51 = scmp.ne.s32.totalorder %s43, %s45
    %p52 = scmp.eq.s32.totalorder %s14, 1
    %p53 = por %p51, %p52
    %p54 = scmp.ne.s32.totalorder %s45, %s46
    %p55 = scmp.eq.s32.totalorder %s14, 0
    %p56 = por %p54, %p55
    %p57 = scmp.ne.s32.totalorder %s45, %s46
    %p58 = scmp.eq.s32.totalorder %s15, 1
    %p59 = por %p57, %p58
    %p61 = scmp.ne.s32.totalorder %s46, %s60
    %p62 = scmp.eq.s32.totalorder %s15, 0
    %p63 = por %p61, %p62
    %s65 = sadd.s32 %s64, 1
    %p68 = scmp.eq.s32.totalorder %s9, 1
    %p69 = scmp.ne.s32.totalorder %s64, %s66
    %p70 = scmp.eq.s32.totalorder %s9, 0
    %p71 = por %p69, %p70
    %p72 = scmp.ne.s32.totalorder %s64, %s66
    %p73 = scmp.eq.s32.totalorder %s14, 1
    %p74 = por %p72, %p73
    %p75 = scmp.ne.s32.totalorder %s66, %s67
    %p76 = scmp.eq.s32.totalorder %s14, 0
    %p77 = por %p75, %p76
    %p78 = scmp.ne.s32.totalorder %s66, %s67
    %p79 = scmp.eq.s32.totalorder %s15, 1
    %p80 = por %p78, %p79
    %p82 = scmp.ne.s32.totalorder %s67, %s81
    %p83 = scmp.eq.s32.totalorder %s15, 0
    %p84 = por %p82, %p83
    %s85 = ssub.s32 %s9, %s16
    %p86 = scmp.eq.s32.totalorder %s85, 0
    %s88 = sadd.s32 %s87, 1
    %s89 = scalar_select %p86, %s87, %s88
    %p92 = pneg %p86
    %p93 = scmp.eq.s32.totalorder %s9, 1
    %p94 = por %p92, %p93
    %p95 = scmp.ne.s32.totalorder %s87, %s90
    %p96 = scmp.eq.s32.totalorder %s9, 0
    %p97 = por %p95, %p96
    %p98 = scmp.ne.s32.totalorder %s87, %s90
    %p99 = scmp.eq.s32.totalorder %s14, 1
    %p100 = por %p98, %p99
    %p101 = scmp.ne.s32.totalorder %s90, %s91
    %p102 = scmp.eq.s32.totalorder %s14, 0
    %p103 = por %p101, %p102
    %p104 = scmp.ne.s32.totalorder %s90, %s91
    %p105 = scmp.eq.s32.totalorder %s15, 1
    %p106 = por %p104, %p105
    %p108 = scmp.ne.s32.totalorder %s91, %s107
    %p109 = scmp.eq.s32.totalorder %s15, 0
    %p110 = por %p108, %p109
    %p111 = scmp.le.s32.totalorder 1, %s9
    %p112 = scmp.lt.s32.totalorder %s9, 3
    %p113 = pnand %p111, %p112
    %p114 = pneg %p113
    // Predicated region
    $region9: #{clagnosco_autoencoder_forward.10} parent=5 // pred_check
      _
    $region10: #{clagnosco_autoencoder_forward.10} parent=5 // pred_check_branch
      %116 = sbr.rel (%p113) target = $region12
    $region11: #{clagnosco_autoencoder_forward.10} parent=5 // pred_region
      %s117 = ssub.s32 %s9, 1
      // Predicated region
      $region13: #{clagnosco_autoencoder_forward.10} parent=11 // pred_check
        %p118 = pneg %p56
      $region14: #{clagnosco_autoencoder_forward.10} parent=11 // pred_check_branch
        %120 = sbr.rel (%p118) target = $region16
      $region15: #{clagnosco_autoencoder_forward.10} parent=11 // pred_region
        _
      $region16: #{clagnosco_autoencoder_forward.10} parent=11 // pred_fallthru
        _
      // Predicated region
      $region17: #{clagnosco_autoencoder_forward.10} parent=11 // pred_check
        %p121 = pneg %p77
      $region18: #{clagnosco_autoencoder_forward.10} parent=11 // pred_check_branch
        %123 = sbr.rel (%p121) target = $region20
      $region19: #{clagnosco_autoencoder_forward.10} parent=11 // pred_region
        _
      $region20: #{clagnosco_autoencoder_forward.10} parent=11 // pred_fallthru
        _
    $region12: #{clagnosco_autoencoder_forward.10} parent=5 // pred_fallthru
      _
    %p124 = scmp.lt.s32.totalorder %s9, 2
    // Predicated region
    $region21: #{clagnosco_autoencoder_forward.10} parent=5 // pred_check
      %p125 = pneg %p124
    $region22: #{clagnosco_autoencoder_forward.10} parent=5 // pred_check_branch
      %127 = sbr.rel (%p125) target = $region24
    $region23: #{clagnosco_autoencoder_forward.10} parent=5 // pred_region
      // Predicated region
      $region25: #{clagnosco_autoencoder_forward.10} parent=23 // pred_check
        %p128 = pneg %p29
      $region26: #{clagnosco_autoencoder_forward.10} parent=23 // pred_check_branch
        %130 = sbr.rel (%p128) target = $region28
      $region27: #{clagnosco_autoencoder_forward.10} parent=23 // pred_region
        %s131 = smul.u32 8, %s9
        %p132 = scmp.lt.s32.totalorder %s131, 15
        %s133 = scalar_select %p132, %s131, 15
        %s134 = smul.addr %s133, 8
        %s135 = smul.addr %s134, 4
        %s136 = scalar_lea.vmem %s0, %s135
        %s137 = smul.u32 8, %s9
      $region28: #{clagnosco_autoencoder_forward.10} parent=23 // pred_fallthru
        _
    $region24: #{clagnosco_autoencoder_forward.10} parent=5 // pred_fallthru
      _
    %p138 = scmp.le.s32.totalorder 1, %s9
    %p139 = scmp.lt.s32.totalorder %s9, 3
    %p140 = pnand %p138, %p139
    %p141 = pneg %p140
    // Predicated region
    $region29: #{clagnosco_autoencoder_forward.10} parent=5 // pred_check
      _
    $region30: #{clagnosco_autoencoder_forward.10} parent=5 // pred_check_branch
      %143 = sbr.rel (%p140) target = $region32
    $region31: #{clagnosco_autoencoder_forward.10} parent=5 // pred_region
      %s144 = ssub.s32 %s9, 1
      %s145 = smul.u32 8, %s14
      %p146 = scmp.lt.s32.totalorder %s145, 15
      %s147 = scalar_select %p146, %s145, 15
      %s148 = smul.addr %s147, 8
      %s149 = smul.addr %s148, 4
      %s150 = scalar_lea.vmem %s0, %s149
      %p151 = pneg %p35
      %p152 = pneg %p32
      %p153 = pneg %p56
      %p154 = pneg %p53
      %p155 = pneg %p77
      %p156 = pneg %p74
      %p157 = pneg %p103
      %p158 = pneg %p100
      %s159 = smul.u32 8, %s14
      %p160 = scmp.lt.s32.totalorder %s159, 15
      %s161 = scalar_select %p160, %s159, 15
      %s162 = smul.addr %s161, 4
      %s163 = scalar_lea.vmem %s3, %s162
      %s164 = smul.u32 8, %s14
      %p165 = scmp.lt.s32.totalorder %s164, 15
      %s166 = scalar_select %p165, %s164, 15
      %s167 = smul.addr %s166, 8
      %s168 = smul.addr %s167, 4
      %s169 = scalar_lea.vmem %s0, %s168
      %s170 = smul.u32 8, %s14
      %s171 = smul.u32 8, %s14
      %p172 = scmp.lt.s32.totalorder %s171, 15
      %s173 = scalar_select %p172, %s171, 15
      %s174 = smul.addr %s173, 4
      %s175 = scalar_lea.vmem %s3, %s174
      %s176 = smul.u32 8, %s14
      %v178 = vld [vmem:[%s169] sm:$0xff]
      %v179 = vld [vmem:[%s169 + $0x8] sm:$0xff]
      %v180 = vld [vmem:[%s169 + $0x10] sm:$0xff]
      %v181 = vld [vmem:[%s169 + $0x18] sm:$0xff]
      %v182 = vld [vmem:[%s169 + $0x20] sm:$0xff]
      %v183 = vld [vmem:[%s169 + $0x28] sm:$0xff]
      %v184 = vld [vmem:[%s169 + $0x30] sm:$0xff]
      %v185 = vld [vmem:[%s169 + $0x38] sm:$0xff]
      %v186 = vld [vmem:[%s169 + $0x40] sm:$0xff]
      %v187 = vld [vmem:[%s169 + $0x48] sm:$0xff]
      %v188 = vld [vmem:[%s169 + $0x50] sm:$0xff]
      %v189 = vld [vmem:[%s169 + $0x58] sm:$0xff]
      %v190 = vld [vmem:[%s169 + $0x60] sm:$0xff]
      %v191 = vld [vmem:[%s169 + $0x68] sm:$0xff]
      %v192 = vld [vmem:[%s169 + $0x70] sm:$0xff]
      %v193 = vld [vmem:[%s169 + $0x78] sm:$0xff]
      %v194 = vld [vmem:[%s169 + $0x80] sm:$0xff]
      %v195 = vld [vmem:[%s169 + $0x88] sm:$0xff]
      %v196 = vld [vmem:[%s169 + $0x90] sm:$0xff]
      %v197 = vld [vmem:[%s169 + $0x98] sm:$0xff]
      %v198 = vld [vmem:[%s169 + $0xa0] sm:$0xff]
      %v199 = vld [vmem:[%s169 + $0xa8] sm:$0xff]
      %v200 = vld [vmem:[%s169 + $0xb0] sm:$0xff]
      %v201 = vld [vmem:[%s169 + $0xb8] sm:$0xff]
      %v202 = vld [vmem:[%s169 + $0xc0] sm:$0xff]
      %v203 = vld [vmem:[%s169 + $0xc8] sm:$0xff]
      %v204 = vld [vmem:[%s169 + $0xd0] sm:$0xff]
      %v205 = vld [vmem:[%s169 + $0xd8] sm:$0xff]
      %v206 = vld [vmem:[%s169 + $0xe0] sm:$0xff]
      %v207 = vld [vmem:[%s169 + $0xe8] sm:$0xff]
      %v208 = vld [vmem:[%s169 + $0xf0] sm:$0xff]
      %v209 = vld [vmem:[%s169 + $0xf8] sm:$0xff]
      %v210 = vld [vmem:[%s1] sm:$0xf]
      %v211 = vld [vmem:[%s1 + $0x4] sm:$0xf]
      %v212 = vld [vmem:[%s1 + $0x8] sm:$0xf]
      %v213 = vld [vmem:[%s1 + $0xc] sm:$0xf]
      %v214 = vld [vmem:[%s1 + $0x10] sm:$0xf]
      %v215 = vld [vmem:[%s1 + $0x14] sm:$0xf]
      %v216 = vld [vmem:[%s1 + $0x18] sm:$0xf]
      %v217 = vld [vmem:[%s1 + $0x1c] sm:$0xf]
      %v218 = vld [vmem:[%s1 + $0x20] sm:$0xf]
      %v219 = vld [vmem:[%s1 + $0x24] sm:$0xf]
      %v220 = vld [vmem:[%s1 + $0x28] sm:$0xf]
      %v221 = vld [vmem:[%s1 + $0x2c] sm:$0xf]
      %v222 = vld [vmem:[%s1 + $0x30] sm:$0xf]
      %v223 = vld [vmem:[%s1 + $0x34] sm:$0xf]
      %v224 = vld [vmem:[%s1 + $0x38] sm:$0xf]
      %v225 = vld [vmem:[%s1 + $0x3c] sm:$0xf]
      %v226 = vld [vmem:[%s1 + $0x40] sm:$0xf]
      %v227 = vld [vmem:[%s1 + $0x44] sm:$0xf]
      %v228 = vld [vmem:[%s1 + $0x48] sm:$0xf]
      %v229 = vld [vmem:[%s1 + $0x4c] sm:$0xf]
      %v230 = vld [vmem:[%s1 + $0x50] sm:$0xf]
      %v231 = vld [vmem:[%s1 + $0x54] sm:$0xf]
      %v232 = vld [vmem:[%s1 + $0x58] sm:$0xf]
      %v233 = vld [vmem:[%s1 + $0x5c] sm:$0xf]
      %v234 = vld [vmem:[%s1 + $0x60] sm:$0xf]
      %v235 = vld [vmem:[%s1 + $0x64] sm:$0xf]
      %v236 = vld [vmem:[%s1 + $0x68] sm:$0xf]
      %v237 = vld [vmem:[%s1 + $0x6c] sm:$0xf]
      %v238 = vld [vmem:[%s1 + $0x70] sm:$0xf]
      %v239 = vld [vmem:[%s1 + $0x74] sm:$0xf]
      %v240 = vld [vmem:[%s1 + $0x78] sm:$0xf]
      %v241 = vld [vmem:[%s1 + $0x7c] sm:$0xf]
      %v242 = vld [vmem:[%s1 + $0x80] sm:$0xf]
      %v243 = vld [vmem:[%s1 + $0x84] sm:$0xf]
      %v244 = vld [vmem:[%s1 + $0x88] sm:$0xf]
      %v245 = vld [vmem:[%s1 + $0x8c] sm:$0xf]
      %v246 = vld [vmem:[%s1 + $0x90] sm:$0xf]
      %v247 = vld [vmem:[%s1 + $0x94] sm:$0xf]
      %v248 = vld [vmem:[%s1 + $0x98] sm:$0xf]
      %v249 = vld [vmem:[%s1 + $0x9c] sm:$0xf]
      %v250 = vld [vmem:[%s1 + $0xa0] sm:$0xf]
      %v251 = vld [vmem:[%s1 + $0xa4] sm:$0xf]
      %v252 = vld [vmem:[%s1 + $0xa8] sm:$0xf]
      %v253 = vld [vmem:[%s1 + $0xac] sm:$0xf]
      %v254 = vld [vmem:[%s1 + $0xb0] sm:$0xf]
      %v255 = vld [vmem:[%s1 + $0xb4] sm:$0xf]
      %v256 = vld [vmem:[%s1 + $0xb8] sm:$0xf]
      %v257 = vld [vmem:[%s1 + $0xbc] sm:$0xf]
      %v258 = vld [vmem:[%s1 + $0xc0] sm:$0xf]
      %v259 = vld [vmem:[%s1 + $0xc4] sm:$0xf]
      %v260 = vld [vmem:[%s1 + $0xc8] sm:$0xf]
      %v261 = vld [vmem:[%s1 + $0xcc] sm:$0xf]
      %v262 = vld [vmem:[%s1 + $0xd0] sm:$0xf]
      %v263 = vld [vmem:[%s1 + $0xd4] sm:$0xf]
      %v264 = vld [vmem:[%s1 + $0xd8] sm:$0xf]
      %v265 = vld [vmem:[%s1 + $0xdc] sm:$0xf]
      %v266 = vld [vmem:[%s1 + $0xe0] sm:$0xf]
      %v267 = vld [vmem:[%s1 + $0xe4] sm:$0xf]
      %v268 = vld [vmem:[%s1 + $0xe8] sm:$0xf]
      %v269 = vld [vmem:[%s1 + $0xec] sm:$0xf]
      %v270 = vld [vmem:[%s1 + $0xf0] sm:$0xf]
      %v271 = vld [vmem:[%s1 + $0xf4] sm:$0xf]
      %v272 = vld [vmem:[%s1 + $0xf8] sm:$0xf]
      %v273 = vld [vmem:[%s1 + $0xfc] sm:$0xf]
      %v274 = vld [vmem:[%s1 + $0x100] sm:$0xf]
      %v275 = vld [vmem:[%s1 + $0x104] sm:$0xf]
      %v276 = vld [vmem:[%s1 + $0x108] sm:$0xf]
      %v277 = vld [vmem:[%s1 + $0x10c] sm:$0xf]
      %v278 = vld [vmem:[%s1 + $0x110] sm:$0xf]
      %v279 = vld [vmem:[%s1 + $0x114] sm:$0xf]
      %v280 = vld [vmem:[%s1 + $0x118] sm:$0xf]
      %v281 = vld [vmem:[%s1 + $0x11c] sm:$0xf]
      %v282 = vld [vmem:[%s1 + $0x120] sm:$0xf]
      %v283 = vld [vmem:[%s1 + $0x124] sm:$0xf]
      %v284 = vld [vmem:[%s1 + $0x128] sm:$0xf]
      %v285 = vld [vmem:[%s1 + $0x12c] sm:$0xf]
      %v286 = vld [vmem:[%s1 + $0x130] sm:$0xf]
      %v287 = vld [vmem:[%s1 + $0x134] sm:$0xf]
      %v288 = vld [vmem:[%s1 + $0x138] sm:$0xf]
      %v289 = vld [vmem:[%s1 + $0x13c] sm:$0xf]
      %v290 = vld [vmem:[%s1 + $0x140] sm:$0xf]
      %v291 = vld [vmem:[%s1 + $0x144] sm:$0xf]
      %v292 = vld [vmem:[%s1 + $0x148] sm:$0xf]
      %v293 = vld [vmem:[%s1 + $0x14c] sm:$0xf]
      %v294 = vld [vmem:[%s1 + $0x150] sm:$0xf]
      %v295 = vld [vmem:[%s1 + $0x154] sm:$0xf]
      %v296 = vld [vmem:[%s1 + $0x158] sm:$0xf]
      %v297 = vld [vmem:[%s1 + $0x15c] sm:$0xf]
      %v298 = vld [vmem:[%s1 + $0x160] sm:$0xf]
      %v299 = vld [vmem:[%s1 + $0x164] sm:$0xf]
      %v300 = vld [vmem:[%s1 + $0x168] sm:$0xf]
      %v301 = vld [vmem:[%s1 + $0x16c] sm:$0xf]
      %v302 = vld [vmem:[%s1 + $0x170] sm:$0xf]
      %v303 = vld [vmem:[%s1 + $0x174] sm:$0xf]
      %v304 = vld [vmem:[%s1 + $0x178] sm:$0xf]
      %v305 = vld [vmem:[%s1 + $0x17c] sm:$0xf]
      %v306 = vld [vmem:[%s1 + $0x180] sm:$0xf]
      %v307 = vld [vmem:[%s1 + $0x184] sm:$0xf]
      %v308 = vld [vmem:[%s1 + $0x188] sm:$0xf]
      %v309 = vld [vmem:[%s1 + $0x18c] sm:$0xf]
      %v310 = vld [vmem:[%s1 + $0x190] sm:$0xf]
      %v311 = vld [vmem:[%s1 + $0x194] sm:$0xf]
      %v312 = vld [vmem:[%s1 + $0x198] sm:$0xf]
      %v313 = vld [vmem:[%s1 + $0x19c] sm:$0xf]
      %v314 = vld [vmem:[%s1 + $0x1a0] sm:$0xf]
      %v315 = vld [vmem:[%s1 + $0x1a4] sm:$0xf]
      %v316 = vld [vmem:[%s1 + $0x1a8] sm:$0xf]
      %v317 = vld [vmem:[%s1 + $0x1ac] sm:$0xf]
      %v318 = vld [vmem:[%s1 + $0x1b0] sm:$0xf]
      %v319 = vld [vmem:[%s1 + $0x1b4] sm:$0xf]
      %v320 = vld [vmem:[%s1 + $0x1b8] sm:$0xf]
      %v321 = vld [vmem:[%s1 + $0x1bc] sm:$0xf]
      %v322 = vld [vmem:[%s1 + $0x1c0] sm:$0xf]
      %v323 = vld [vmem:[%s1 + $0x1c4] sm:$0xf]
      %v324 = vld [vmem:[%s1 + $0x1c8] sm:$0xf]
      %v325 = vld [vmem:[%s1 + $0x1cc] sm:$0xf]
      %v326 = vld [vmem:[%s1 + $0x1d0] sm:$0xf]
      %v327 = vld [vmem:[%s1 + $0x1d4] sm:$0xf]
      %v328 = vld [vmem:[%s1 + $0x1d8] sm:$0xf]
      %v329 = vld [vmem:[%s1 + $0x1dc] sm:$0xf]
      %v330 = vld [vmem:[%s1 + $0x1e0] sm:$0xf]
      %v331 = vld [vmem:[%s1 + $0x1e4] sm:$0xf]
      %v332 = vld [vmem:[%s1 + $0x1e8] sm:$0xf]
      %v333 = vld [vmem:[%s1 + $0x1ec] sm:$0xf]
      %v334 = vld [vmem:[%s1 + $0x1f0] sm:$0xf]
      %v335 = vld [vmem:[%s1 + $0x1f4] sm:$0xf]
      %v336 = vld [vmem:[%s1 + $0x1f8] sm:$0xf]
      %v337 = vld [vmem:[%s1 + $0x1fc] sm:$0xf]
      %v338 = vld [vmem:[%s2] sm:$0x1]
      %v340 = vlaneseq
      %v341 = vshrl.u32 %v340, 7
      %v342 = vsub.s32 0, %v341
      %v343 = vrot.slane %v338, %v342
      %v377 = vunpack.c.l.b16 %v178
      %v378 = vunpack.c.h.b16 %v178
      %v379 = vunpack.c.l.b16 %v179
      %v380 = vunpack.c.h.b16 %v179
      %v381 = vunpack.c.l.b16 %v180
      %v382 = vunpack.c.h.b16 %v180
      %v383 = vunpack.c.l.b16 %v181
      %v384 = vunpack.c.h.b16 %v181
      %v385 = vunpack.c.l.b16 %v182
      %v386 = vunpack.c.h.b16 %v182
      %v387 = vunpack.c.l.b16 %v183
      %v388 = vunpack.c.h.b16 %v183
      %v389 = vunpack.c.l.b16 %v184
      %v390 = vunpack.c.h.b16 %v184
      %v391 = vunpack.c.l.b16 %v185
      %v392 = vunpack.c.h.b16 %v185
      %v393 = vunpack.c.l.b16 %v186
      %v394 = vunpack.c.h.b16 %v186
      %v395 = vunpack.c.l.b16 %v187
      %v396 = vunpack.c.h.b16 %v187
      %v397 = vunpack.c.l.b16 %v188
      %v398 = vunpack.c.h.b16 %v188
      %v399 = vunpack.c.l.b16 %v189
      %v400 = vunpack.c.h.b16 %v189
      %v401 = vunpack.c.l.b16 %v190
      %v402 = vunpack.c.h.b16 %v190
      %v403 = vunpack.c.l.b16 %v191
      %v404 = vunpack.c.h.b16 %v191
      %v405 = vunpack.c.l.b16 %v192
      %v406 = vunpack.c.h.b16 %v192
      %v407 = vunpack.c.l.b16 %v193
      %v408 = vunpack.c.h.b16 %v193
      %v409 = vunpack.c.l.b16 %v194
      %v410 = vunpack.c.h.b16 %v194
      %v411 = vunpack.c.l.b16 %v195
      %v412 = vunpack.c.h.b16 %v195
      %v413 = vunpack.c.l.b16 %v196
      %v414 = vunpack.c.h.b16 %v196
      %v415 = vunpack.c.l.b16 %v197
      %v416 = vunpack.c.h.b16 %v197
      %v417 = vunpack.c.l.b16 %v198
      %v418 = vunpack.c.h.b16 %v198
      %v419 = vunpack.c.l.b16 %v199
      %v420 = vunpack.c.h.b16 %v199
      %v421 = vunpack.c.l.b16 %v200
      %v422 = vunpack.c.h.b16 %v200
      %v423 = vunpack.c.l.b16 %v201
      %v424 = vunpack.c.h.b16 %v201
      %v425 = vunpack.c.l.b16 %v202
      %v426 = vunpack.c.h.b16 %v202
      %v427 = vunpack.c.l.b16 %v203
      %v428 = vunpack.c.h.b16 %v203
      %v429 = vunpack.c.l.b16 %v204
      %v430 = vunpack.c.h.b16 %v204
      %v431 = vunpack.c.l.b16 %v205
      %v432 = vunpack.c.h.b16 %v205
      %v433 = vunpack.c.l.b16 %v206
      %v434 = vunpack.c.h.b16 %v206
      %v435 = vunpack.c.l.b16 %v207
      %v436 = vunpack.c.h.b16 %v207
      %v437 = vunpack.c.l.b16 %v208
      %v438 = vunpack.c.h.b16 %v208
      %v439 = vunpack.c.l.b16 %v209
      %v440 = vunpack.c.h.b16 %v209
      %v441 = vpack.c.b16 %v385, %v377
      %v442 = vpack.c.b16 %v386, %v378
      %v443 = vpack.c.b16 %v387, %v379
      %v444 = vpack.c.b16 %v388, %v380
      %v445 = vpack.c.b16 %v389, %v381
      %v446 = vpack.c.b16 %v390, %v382
      %v447 = vpack.c.b16 %v391, %v383
      %v448 = vpack.c.b16 %v392, %v384
      %v449 = vpack.c.b16 %v401, %v393
      %v450 = vpack.c.b16 %v402, %v394
      %v451 = vpack.c.b16 %v403, %v395
      %v452 = vpack.c.b16 %v404, %v396
      %v453 = vpack.c.b16 %v405, %v397
      %v454 = vpack.c.b16 %v406, %v398
      %v455 = vpack.c.b16 %v407, %v399
      %v456 = vpack.c.b16 %v408, %v400
      %v457 = vpack.c.b16 %v417, %v409
      %v458 = vpack.c.b16 %v418, %v410
      %v459 = vpack.c.b16 %v419, %v411
      %v460 = vpack.c.b16 %v420, %v412
      %v461 = vpack.c.b16 %v421, %v413
      %v462 = vpack.c.b16 %v422, %v414
      %v463 = vpack.c.b16 %v423, %v415
      %v464 = vpack.c.b16 %v424, %v416
      %v465 = vpack.c.b16 %v433, %v425
      %v466 = vpack.c.b16 %v434, %v426
      %v467 = vpack.c.b16 %v435, %v427
      %v468 = vpack.c.b16 %v436, %v428
      %v469 = vpack.c.b16 %v437, %v429
      %v470 = vpack.c.b16 %v438, %v430
      %v471 = vpack.c.b16 %v439, %v431
      %v472 = vpack.c.b16 %v440, %v432
      %v633 = vunpack.c.l.b16 %v210
      %v634 = vunpack.c.l.b16 %v211
      %v635 = vunpack.c.l.b16 %v212
      %v636 = vunpack.c.l.b16 %v213
      %v637 = vunpack.c.l.b16 %v214
      %v638 = vunpack.c.l.b16 %v215
      %v639 = vunpack.c.l.b16 %v216
      %v640 = vunpack.c.l.b16 %v217
      %v641 = vunpack.c.l.b16 %v218
      %v642 = vunpack.c.l.b16 %v219
      %v643 = vunpack.c.l.b16 %v220
      %v644 = vunpack.c.l.b16 %v221
      %v645 = vunpack.c.l.b16 %v222
      %v646 = vunpack.c.l.b16 %v223
      %v647 = vunpack.c.l.b16 %v224
      %v648 = vunpack.c.l.b16 %v225
      %v649 = vunpack.c.l.b16 %v226
      %v650 = vunpack.c.l.b16 %v227
      %v651 = vunpack.c.l.b16 %v228
      %v652 = vunpack.c.l.b16 %v229
      %v653 = vunpack.c.l.b16 %v230
      %v654 = vunpack.c.l.b16 %v231
      %v655 = vunpack.c.l.b16 %v232
      %v656 = vunpack.c.l.b16 %v233
      %v657 = vunpack.c.l.b16 %v234
      %v658 = vunpack.c.l.b16 %v235
      %v659 = vunpack.c.l.b16 %v236
      %v660 = vunpack.c.l.b16 %v237
      %v661 = vunpack.c.l.b16 %v238
      %v662 = vunpack.c.l.b16 %v239
      %v663 = vunpack.c.l.b16 %v240
      %v664 = vunpack.c.l.b16 %v241
      %v665 = vunpack.c.l.b16 %v242
      %v666 = vunpack.c.l.b16 %v243
      %v667 = vunpack.c.l.b16 %v244
      %v668 = vunpack.c.l.b16 %v245
      %v669 = vunpack.c.l.b16 %v246
      %v670 = vunpack.c.l.b16 %v247
      %v671 = vunpack.c.l.b16 %v248
      %v672 = vunpack.c.l.b16 %v249
      %v673 = vunpack.c.l.b16 %v250
      %v674 = vunpack.c.l.b16 %v251
      %v675 = vunpack.c.l.b16 %v252
      %v676 = vunpack.c.l.b16 %v253
      %v677 = vunpack.c.l.b16 %v254
      %v678 = vunpack.c.l.b16 %v255
      %v679 = vunpack.c.l.b16 %v256
      %v680 = vunpack.c.l.b16 %v257
      %v681 = vunpack.c.l.b16 %v258
      %v682 = vunpack.c.l.b16 %v259
      %v683 = vunpack.c.l.b16 %v260
      %v684 = vunpack.c.l.b16 %v261
      %v685 = vunpack.c.l.b16 %v262
      %v686 = vunpack.c.l.b16 %v263
      %v687 = vunpack.c.l.b16 %v264
      %v688 = vunpack.c.l.b16 %v265
      %v689 = vunpack.c.l.b16 %v266
      %v690 = vunpack.c.l.b16 %v267
      %v691 = vunpack.c.l.b16 %v268
      %v692 = vunpack.c.l.b16 %v269
      %v693 = vunpack.c.l.b16 %v270
      %v694 = vunpack.c.l.b16 %v271
      %v695 = vunpack.c.l.b16 %v272
      %v696 = vunpack.c.l.b16 %v273
      %v697 = vunpack.c.l.b16 %v274
      %v698 = vunpack.c.l.b16 %v275
      %v699 = vunpack.c.l.b16 %v276
      %v700 = vunpack.c.l.b16 %v277
      %v701 = vunpack.c.l.b16 %v278
      %v702 = vunpack.c.l.b16 %v279
      %v703 = vunpack.c.l.b16 %v280
      %v704 = vunpack.c.l.b16 %v281
      %v705 = vunpack.c.l.b16 %v282
      %v706 = vunpack.c.l.b16 %v283
      %v707 = vunpack.c.l.b16 %v284
      %v708 = vunpack.c.l.b16 %v285
      %v709 = vunpack.c.l.b16 %v286
      %v710 = vunpack.c.l.b16 %v287
      %v711 = vunpack.c.l.b16 %v288
      %v712 = vunpack.c.l.b16 %v289
      %v713 = vunpack.c.l.b16 %v290
      %v714 = vunpack.c.l.b16 %v291
      %v715 = vunpack.c.l.b16 %v292
      %v716 = vunpack.c.l.b16 %v293
      %v717 = vunpack.c.l.b16 %v294
      %v718 = vunpack.c.l.b16 %v295
      %v719 = vunpack.c.l.b16 %v296
      %v720 = vunpack.c.l.b16 %v297
      %v721 = vunpack.c.l.b16 %v298
      %v722 = vunpack.c.l.b16 %v299
      %v723 = vunpack.c.l.b16 %v300
      %v724 = vunpack.c.l.b16 %v301
      %v725 = vunpack.c.l.b16 %v302
      %v726 = vunpack.c.l.b16 %v303
      %v727 = vunpack.c.l.b16 %v304
      %v728 = vunpack.c.l.b16 %v305
      %v729 = vunpack.c.l.b16 %v306
      %v730 = vunpack.c.l.b16 %v307
      %v731 = vunpack.c.l.b16 %v308
      %v732 = vunpack.c.l.b16 %v309
      %v733 = vunpack.c.l.b16 %v310
      %v734 = vunpack.c.l.b16 %v311
      %v735 = vunpack.c.l.b16 %v312
      %v736 = vunpack.c.l.b16 %v313
      %v737 = vunpack.c.l.b16 %v314
      %v738 = vunpack.c.l.b16 %v315
      %v739 = vunpack.c.l.b16 %v316
      %v740 = vunpack.c.l.b16 %v317
      %v741 = vunpack.c.l.b16 %v318
      %v742 = vunpack.c.l.b16 %v319
      %v743 = vunpack.c.l.b16 %v320
      %v744 = vunpack.c.l.b16 %v321
      %v745 = vunpack.c.l.b16 %v322
      %v746 = vunpack.c.l.b16 %v323
      %v747 = vunpack.c.l.b16 %v324
      %v748 = vunpack.c.l.b16 %v325
      %v749 = vunpack.c.l.b16 %v326
      %v750 = vunpack.c.l.b16 %v327
      %v751 = vunpack.c.l.b16 %v328
      %v752 = vunpack.c.l.b16 %v329
      %v753 = vunpack.c.l.b16 %v330
      %v754 = vunpack.c.l.b16 %v331
      %v755 = vunpack.c.l.b16 %v332
      %v756 = vunpack.c.l.b16 %v333
      %v757 = vunpack.c.l.b16 %v334
      %v758 = vunpack.c.l.b16 %v335
      %v759 = vunpack.c.l.b16 %v336
      %v760 = vunpack.c.l.b16 %v337
      %v761 = vpack.c.b16 %v634, %v633
      %v762 = vpack.c.b16 %v636, %v635
      %v763 = vpack.c.b16 %v638, %v637
      %v764 = vpack.c.b16 %v640, %v639
      %v765 = vpack.c.b16 %v642, %v641
      %v766 = vpack.c.b16 %v644, %v643
      %v767 = vpack.c.b16 %v646, %v645
      %v768 = vpack.c.b16 %v648, %v647
      %v769 = vpack.c.b16 %v650, %v649
      %v770 = vpack.c.b16 %v652, %v651
      %v771 = vpack.c.b16 %v654, %v653
      %v772 = vpack.c.b16 %v656, %v655
      %v773 = vpack.c.b16 %v658, %v657
      %v774 = vpack.c.b16 %v660, %v659
      %v775 = vpack.c.b16 %v662, %v661
      %v776 = vpack.c.b16 %v664, %v663
      %v777 = vpack.c.b16 %v666, %v665
      %v778 = vpack.c.b16 %v668, %v667
      %v779 = vpack.c.b16 %v670, %v669
      %v780 = vpack.c.b16 %v672, %v671
      %v781 = vpack.c.b16 %v674, %v673
      %v782 = vpack.c.b16 %v676, %v675
      %v783 = vpack.c.b16 %v678, %v677
      %v784 = vpack.c.b16 %v680, %v679
      %v785 = vpack.c.b16 %v682, %v681
      %v786 = vpack.c.b16 %v684, %v683
      %v787 = vpack.c.b16 %v686, %v685
      %v788 = vpack.c.b16 %v688, %v687
      %v789 = vpack.c.b16 %v690, %v689
      %v790 = vpack.c.b16 %v692, %v691
      %v791 = vpack.c.b16 %v694, %v693
      %v792 = vpack.c.b16 %v696, %v695
      %v793 = vpack.c.b16 %v698, %v697
      %v794 = vpack.c.b16 %v700, %v699
      %v795 = vpack.c.b16 %v702, %v701
      %v796 = vpack.c.b16 %v704, %v703
      %v797 = vpack.c.b16 %v706, %v705
      %v798 = vpack.c.b16 %v708, %v707
      %v799 = vpack.c.b16 %v710, %v709
      %v800 = vpack.c.b16 %v712, %v711
      %v801 = vpack.c.b16 %v714, %v713
      %v802 = vpack.c.b16 %v716, %v715
      %v803 = vpack.c.b16 %v718, %v717
      %v804 = vpack.c.b16 %v720, %v719
      %v805 = vpack.c.b16 %v722, %v721
      %v806 = vpack.c.b16 %v724, %v723
      %v807 = vpack.c.b16 %v726, %v725
      %v808 = vpack.c.b16 %v728, %v727
      %v809 = vpack.c.b16 %v730, %v729
      %v810 = vpack.c.b16 %v732, %v731
      %v811 = vpack.c.b16 %v734, %v733
      %v812 = vpack.c.b16 %v736, %v735
      %v813 = vpack.c.b16 %v738, %v737
      %v814 = vpack.c.b16 %v740, %v739
      %v815 = vpack.c.b16 %v742, %v741
      %v816 = vpack.c.b16 %v744, %v743
      %v817 = vpack.c.b16 %v746, %v745
      %v818 = vpack.c.b16 %v748, %v747
      %v819 = vpack.c.b16 %v750, %v749
      %v820 = vpack.c.b16 %v752, %v751
      %v821 = vpack.c.b16 %v754, %v753
      %v822 = vpack.c.b16 %v756, %v755
      %v823 = vpack.c.b16 %v758, %v757
      %v824 = vpack.c.b16 %v760, %v759
      %889 = vmatprep.subr.bf16.mxu0 0
      %890 = vmatpush1.bf16.msra.mxu0 %v761
      %891 = vmatprep.subr.bf16.mxu0 0
      %892 = vmatpush1.bf16.msra.mxu0 %v762
      %893 = vmatprep.subr.bf16.mxu0 0
      %894 = vmatpush1.bf16.msra.mxu0 %v763
      %895 = vmatprep.subr.bf16.mxu0 0
      %896 = vmatpush1.bf16.msra.mxu0 %v764
      %897 = vmatprep.subr.bf16.mxu0 0
      %898 = vmatpush1.bf16.msra.mxu0 %v765
      %899 = vmatprep.subr.bf16.mxu0 0
      %900 = vmatpush1.bf16.msra.mxu0 %v766
      %901 = vmatprep.subr.bf16.mxu0 0
      %902 = vmatpush1.bf16.msra.mxu0 %v767
      %903 = vmatprep.subr.bf16.mxu0 0
      %904 = vmatpush1.bf16.msra.mxu0 %v768
      %905 = vmatprep.subr.bf16.mxu0 0
      %906 = vmatpush1.bf16.msra.mxu0 %v769
      %907 = vmatprep.subr.bf16.mxu0 0
      %908 = vmatpush1.bf16.msra.mxu0 %v770
      %909 = vmatprep.subr.bf16.mxu0 0
      %910 = vmatpush1.bf16.msra.mxu0 %v771
      %911 = vmatprep.subr.bf16.mxu0 0
      %912 = vmatpush1.bf16.msra.mxu0 %v772
      %913 = vmatprep.subr.bf16.mxu0 0
      %914 = vmatpush1.bf16.msra.mxu0 %v773
      %915 = vmatprep.subr.bf16.mxu0 0
      %916 = vmatpush1.bf16.msra.mxu0 %v774
      %917 = vmatprep.subr.bf16.mxu0 0
      %918 = vmatpush1.bf16.msra.mxu0 %v775
      %919 = vmatprep.subr.bf16.mxu0 0
      %920 = vmatpush1.bf16.msra.mxu0 %v776
      %921 = vmatprep.mubr.bf16.mxu0 %v442
      %922 = vmatmul.mubr.bf16.gmra.mrb[0].mxu0 %v441
      %v923 = vpop.f32.mrb[0].mxu0
      %v924 = vadd.f32 %v343, %v923
      %v925 = vpop.f32.mrb[0].mxu0
      %v926 = vpop.f32.mrb[0].mxu0
      %v927 = vadd.f32 %v343, %v926
      %v928 = vpop.f32.mrb[0].mxu0
      %929 = vmatprep.mubr.bf16.mxu0 %v450
      %930 = vmatmul.mubr.bf16.gmra.mrb[0].mxu0 %v449
      %v931 = vpop.f32.mrb[0].mxu0
      %v932 = vadd.f32 %v343, %v931
      %v933 = vpop.f32.mrb[0].mxu0
      %v934 = vpop.f32.mrb[0].mxu0
      %v935 = vadd.f32 %v343, %v934
      %v936 = vpop.f32.mrb[0].mxu0
      %937 = vmatprep.mubr.bf16.mxu0 %v458
      %938 = vmatmul.mubr.bf16.gmra.mrb[0].mxu0 %v457
      %v939 = vpop.f32.mrb[0].mxu0
      %v940 = vadd.f32 %v343, %v939
      %v941 = vpop.f32.mrb[0].mxu0
      %v942 = vpop.f32.mrb[0].mxu0
      %v943 = vadd.f32 %v343, %v942
      %v944 = vpop.f32.mrb[0].mxu0
      %945 = vmatprep.mubr.bf16.mxu0 %v466
      %946 = vmatmul.mubr.bf16.gmra.mrb[0].mxu0 %v465
      %v947 = vpop.f32.mrb[0].mxu0
      %v948 = vadd.f32 %v343, %v947
      %v949 = vpop.f32.mrb[0].mxu0
      %v950 = vpop.f32.mrb[0].mxu0
      %v951 = vadd.f32 %v343, %v950
      %v952 = vpop.f32.mrb[0].mxu0
      %953 = vdwg.mxu0
      %954 = vmatprep.subr.bf16.mxu0 0
      %955 = vmatpush1.bf16.msra.mxu0 %v777
      %956 = vmatprep.subr.bf16.mxu0 0
      %957 = vmatpush1.bf16.msra.mxu0 %v778
      %958 = vmatprep.subr.bf16.mxu0 0
      %959 = vmatpush1.bf16.msra.mxu0 %v779
      %960 = vmatprep.subr.bf16.mxu0 0
      %961 = vmatpush1.bf16.msra.mxu0 %v780
      %962 = vmatprep.subr.bf16.mxu0 0
      %963 = vmatpush1.bf16.msra.mxu0 %v781
      %964 = vmatprep.subr.bf16.mxu0 0
      %965 = vmatpush1.bf16.msra.mxu0 %v782
      %966 = vmatprep.subr.bf16.mxu0 0
      %967 = vmatpush1.bf16.msra.mxu0 %v783
      %968 = vmatprep.subr.bf16.mxu0 0
      %969 = vmatpush1.bf16.msra.mxu0 %v784
      %970 = vmatprep.subr.bf16.mxu0 0
      %971 = vmatpush1.bf16.msra.mxu0 %v785
      %972 = vmatprep.subr.bf16.mxu0 0
      %973 = vmatpush1.bf16.msra.mxu0 %v786
      %974 = vmatprep.subr.bf16.mxu0 0
      %975 = vmatpush1.bf16.msra.mxu0 %v787
      %976 = vmatprep.subr.bf16.mxu0 0
      %977 = vmatpush1.bf16.msra.mxu0 %v788
      %978 = vmatprep.subr.bf16.mxu0 0
      %979 = vmatpush1.bf16.msra.mxu0 %v789
      %980 = vmatprep.subr.bf16.mxu0 0
      %981 = vmatpush1.bf16.msra.mxu0 %v790
      %982 = vmatprep.subr.bf16.mxu0 0
      %983 = vmatpush1.bf16.msra.mxu0 %v791
      %984 = vmatprep.subr.bf16.mxu0 0
      %985 = vmatpush1.bf16.msra.mxu0 %v792
      %986 = vmatprep.mubr.bf16.mxu0 %v444
      %987 = vmatmul.mubr.bf16.gmra.mrb[0].mxu0 %v443
      %v988 = vpop.f32.mrb[0].mxu0
      %v989 = vadd.f32 %v924, %v988
      %v990 = vpop.f32.mrb[0].mxu0
      %v991 = vpop.f32.mrb[0].mxu0
      %v992 = vadd.f32 %v927, %v991
      %v993 = vpop.f32.mrb[0].mxu0
      %994 = vmatprep.mubr.bf16.mxu0 %v452
      %995 = vmatmul.mubr.bf16.gmra.mrb[0].mxu0 %v451
      %v996 = vpop.f32.mrb[0].mxu0
      %v997 = vadd.f32 %v932, %v996
      %v998 = vpop.f32.mrb[0].mxu0
      %v999 = vpop.f32.mrb[0].mxu0
      %v1000 = vadd.f32 %v935, %v999
      %v1001 = vpop.f32.mrb[0].mxu0
      %1002 = vmatprep.mubr.bf16.mxu0 %v460
      %1003 = vmatmul.mubr.bf16.gmra.mrb[0].mxu0 %v459
      %v1004 = vpop.f32.mrb[0].mxu0
      %v1005 = vadd.f32 %v940, %v1004
      %v1006 = vpop.f32.mrb[0].mxu0
      %v1007 = vpop.f32.mrb[0].mxu0
      %v1008 = vadd.f32 %v943, %v1007
      %v1009 = vpop.f32.mrb[0].mxu0
      %1010 = vmatprep.mubr.bf16.mxu0 %v468
      %1011 = vmatmul.mubr.bf16.gmra.mrb[0].mxu0 %v467
      %v1012 = vpop.f32.mrb[0].mxu0
      %v1013 = vadd.f32 %v948, %v1012
      %v1014 = vpop.f32.mrb[0].mxu0
      %v1015 = vpop.f32.mrb[0].mxu0
      %v1016 = vadd.f32 %v951, %v1015
      %v1017 = vpop.f32.mrb[0].mxu0
      %1018 = vdwg.mxu0
      %1019 = vmatprep.subr.bf16.mxu0 0
      %1020 = vmatpush1.bf16.msra.mxu0 %v793
      %1021 = vmatprep.subr.bf16.mxu0 0
      %1022 = vmatpush1.bf16.msra.mxu0 %v794
      %1023 = vmatprep.subr.bf16.mxu0 0
      %1024 = vmatpush1.bf16.msra.mxu0 %v795
      %1025 = vmatprep.subr.bf16.mxu0 0
      %1026 = vmatpush1.bf16.msra.mxu0 %v796
      %1027 = vmatprep.subr.bf16.mxu0 0
      %1028 = vmatpush1.bf16.msra.mxu0 %v797
      %1029 = vmatprep.subr.bf16.mxu0 0
      %1030 = vmatpush1.bf16.msra.mxu0 %v798
      %1031 = vmatprep.subr.bf16.mxu0 0
      %1032 = vmatpush1.bf16.msra.mxu0 %v799
      %1033 = vmatprep.subr.bf16.mxu0 0
      %1034 = vmatpush1.bf16.msra.mxu0 %v800
      %1035 = vmatprep.subr.bf16.mxu0 0
      %1036 = vmatpush1.bf16.msra.mxu0 %v801
      %1037 = vmatprep.subr.bf16.mxu0 0
      %1038 = vmatpush1.bf16.msra.mxu0 %v802
      %1039 = vmatprep.subr.bf16.mxu0 0
      %1040 = vmatpush1.bf16.msra.mxu0 %v803
      %1041 = vmatprep.subr.bf16.mxu0 0
      %1042 = vmatpush1.bf16.msra.mxu0 %v804
      %1043 = vmatprep.subr.bf16.mxu0 0
      %1044 = vmatpush1.bf16.msra.mxu0 %v805
      %1045 = vmatprep.subr.bf16.mxu0 0
      %1046 = vmatpush1.bf16.msra.mxu0 %v806
      %1047 = vmatprep.subr.bf16.mxu0 0
      %1048 = vmatpush1.bf16.msra.mxu0 %v807
      %1049 = vmatprep.subr.bf16.mxu0 0
      %1050 = vmatpush1.bf16.msra.mxu0 %v808
      %1051 = vmatprep.mubr.bf16.mxu0 %v446
      %1052 = vmatmul.mubr.bf16.gmra.mrb[0].mxu0 %v445
      %v1053 = vpop.f32.mrb[0].mxu0
      %v1054 = vadd.f32 %v989, %v1053
      %v1055 = vpop.f32.mrb[0].mxu0
      %v1056 = vpop.f32.mrb[0].mxu0
      %v1057 = vadd.f32 %v992, %v1056
      %v1058 = vpop.f32.mrb[0].mxu0
      %1059 = vmatprep.mubr.bf16.mxu0 %v454
      %1060 = vmatmul.mubr.bf16.gmra.mrb[0].mxu0 %v453
      %v1061 = vpop.f32.mrb[0].mxu0
      %v1062 = vadd.f32 %v997, %v1061
      %v1063 = vpop.f32.mrb[0].mxu0
      %v1064 = vpop.f32.mrb[0].mxu0
      %v1065 = vadd.f32 %v1000, %v1064
      %v1066 = vpop.f32.mrb[0].mxu0
      %1067 = vmatprep.mubr.bf16.mxu0 %v462
      %1068 = vmatmul.mubr.bf16.gmra.mrb[0].mxu0 %v461
      %v1069 = vpop.f32.mrb[0].mxu0
      %v1070 = vadd.f32 %v1005, %v1069
      %v1071 = vpop.f32.mrb[0].mxu0
      %v1072 = vpop.f32.mrb[0].mxu0
      %v1073 = vadd.f32 %v1008, %v1072
      %v1074 = vpop.f32.mrb[0].mxu0
      %1075 = vmatprep.mubr.bf16.mxu0 %v470
      %1076 = vmatmul.mubr.bf16.gmra.mrb[0].mxu0 %v469
      %v1077 = vpop.f32.mrb[0].mxu0
      %v1078 = vadd.f32 %v1013, %v1077
      %v1079 = vpop.f32.mrb[0].mxu0
      %v1080 = vpop.f32.mrb[0].mxu0
      %v1081 = vadd.f32 %v1016, %v1080
      %v1082 = vpop.f32.mrb[0].mxu0
      %1083 = vdwg.mxu0
      %1084 = vmatprep.subr.bf16.mxu0 0
      %1085 = vmatpush1.bf16.msra.mxu0 %v809
      %1086 = vmatprep.subr.bf16.mxu0 0
      %1087 = vmatpush1.bf16.msra.mxu0 %v810
      %1088 = vmatprep.subr.bf16.mxu0 0
      %1089 = vmatpush1.bf16.msra.mxu0 %v811
      %1090 = vmatprep.subr.bf16.mxu0 0
      %1091 = vmatpush1.bf16.msra.mxu0 %v812
      %1092 = vmatprep.subr.bf16.mxu0 0
      %1093 = vmatpush1.bf16.msra.mxu0 %v813
      %1094 = vmatprep.subr.bf16.mxu0 0
      %1095 = vmatpush1.bf16.msra.mxu0 %v814
      %1096 = vmatprep.subr.bf16.mxu0 0
      %1097 = vmatpush1.bf16.msra.mxu0 %v815
      %1098 = vmatprep.subr.bf16.mxu0 0
      %1099 = vmatpush1.bf16.msra.mxu0 %v816
      %1100 = vmatprep.subr.bf16.mxu0 0
      %1101 = vmatpush1.bf16.msra.mxu0 %v817
      %1102 = vmatprep.subr.bf16.mxu0 0
      %1103 = vmatpush1.bf16.msra.mxu0 %v818
      %1104 = vmatprep.subr.bf16.mxu0 0
      %1105 = vmatpush1.bf16.msra.mxu0 %v819
      %1106 = vmatprep.subr.bf16.mxu0 0
      %1107 = vmatpush1.bf16.msra.mxu0 %v820
      %1108 = vmatprep.subr.bf16.mxu0 0
      %1109 = vmatpush1.bf16.msra.mxu0 %v821
      %1110 = vmatprep.subr.bf16.mxu0 0
      %1111 = vmatpush1.bf16.msra.mxu0 %v822
      %1112 = vmatprep.subr.bf16.mxu0 0
      %1113 = vmatpush1.bf16.msra.mxu0 %v823
      %1114 = vmatprep.subr.bf16.mxu0 0
      %1115 = vmatpush1.bf16.msra.mxu0 %v824
      %1116 = vmatprep.mubr.bf16.mxu0 %v448
      %1117 = vmatmul.mubr.bf16.gmra.mrb[0].mxu0 %v447
      %v1118 = vpop.f32.mrb[0].mxu0
      %v1119 = vadd.f32 %v1054, %v1118
      %v1120 = vpop.f32.mrb[0].mxu0
      %v1121 = vpop.f32.mrb[0].mxu0
      %v1122 = vadd.f32 %v1057, %v1121
      %v1123 = vpop.f32.mrb[0].mxu0
      %1124 = vmatprep.mubr.bf16.mxu0 %v456
      %1125 = vmatmul.mubr.bf16.gmra.mrb[0].mxu0 %v455
      %v1126 = vpop.f32.mrb[0].mxu0
      %v1127 = vadd.f32 %v1062, %v1126
      %v1128 = vpop.f32.mrb[0].mxu0
      %v1129 = vpop.f32.mrb[0].mxu0
      %v1130 = vadd.f32 %v1065, %v1129
      %v1131 = vpop.f32.mrb[0].mxu0
      %1132 = vmatprep.mubr.bf16.mxu0 %v464
      %1133 = vmatmul.mubr.bf16.gmra.mrb[0].mxu0 %v463
      %v1134 = vpop.f32.mrb[0].mxu0
      %v1135 = vadd.f32 %v1070, %v1134
      %v1136 = vpop.f32.mrb[0].mxu0
      %v1137 = vpop.f32.mrb[0].mxu0
      %v1138 = vadd.f32 %v1073, %v1137
      %v1139 = vpop.f32.mrb[0].mxu0
      %1140 = vmatprep.mubr.bf16.mxu0 %v472
      %1141 = vmatmul.mubr.bf16.gmra.mrb[0].mxu0 %v471
      %v1142 = vpop.f32.mrb[0].mxu0
      %v1143 = vadd.f32 %v1078, %v1142
      %v1144 = vpop.f32.mrb[0].mxu0
      %v1145 = vpop.f32.mrb[0].mxu0
      %v1146 = vadd.f32 %v1081, %v1145
      %v1147 = vpop.f32.mrb[0].mxu0
      %1148 = vdwg.mxu0
      %v1149 = vmul.f32 %v1119, 0.01
      %v1150 = vmul.f32 %v1122, 0.01
      %v1151 = vmul.f32 %v1127, 0.01
      %v1152 = vmul.f32 %v1130, 0.01
      %v1153 = vmul.f32 %v1135, 0.01
      %v1154 = vmul.f32 %v1138, 0.01
      %v1155 = vmul.f32 %v1143, 0.01
      %v1156 = vmul.f32 %v1146, 0.01
      %v1157 = vmax.f32 %v1119, %v1149
      %v1158 = vmax.f32 %v1122, %v1150
      %v1159 = vmax.f32 %v1127, %v1151
      %v1160 = vmax.f32 %v1130, %v1152
      %v1161 = vmax.f32 %v1135, %v1153
      %v1162 = vmax.f32 %v1138, %v1154
      %v1163 = vmax.f32 %v1143, %v1155
      %v1164 = vmax.f32 %v1146, %v1156
      %v1165 = vpack.c.bf16 %v1158, %v1157
      %v1166 = vpack.c.bf16 %v1160, %v1159
      %v1167 = vpack.c.bf16 %v1162, %v1161
      %v1168 = vpack.c.bf16 %v1164, %v1163
      %v1173 = vunpack.c.l.b16 %v1165
      %v1174 = vunpack.c.h.b16 %v1165
      %v1175 = vunpack.c.l.b16 %v1166
      %v1176 = vunpack.c.h.b16 %v1166
      %v1177 = vunpack.c.l.b16 %v1167
      %v1178 = vunpack.c.h.b16 %v1167
      %v1179 = vunpack.c.l.b16 %v1168
      %v1180 = vunpack.c.h.b16 %v1168
      %v1181 = vpack.c.b16 %v1173, %v1173
      %v1182 = vpack.c.b16 %v1174, %v1174
      %v1183 = vpack.c.b16 %v1175, %v1175
      %v1184 = vpack.c.b16 %v1176, %v1176
      %v1185 = vpack.c.b16 %v1177, %v1177
      %v1186 = vpack.c.b16 %v1178, %v1178
      %v1187 = vpack.c.b16 %v1179, %v1179
      %v1188 = vpack.c.b16 %v1180, %v1180
      %1197 = vst [vmem:[%s175] sm:$0xf] %v1181
      %1198 = vst [vmem:[%s175 + $0x4] sm:$0xf] %v1182
      %1199 = vst [vmem:[%s175 + $0x8] sm:$0xf] %v1183
      %1200 = vst [vmem:[%s175 + $0xc] sm:$0xf] %v1184
      %1201 = vst [vmem:[%s175 + $0x10] sm:$0xf] %v1185
      %1202 = vst [vmem:[%s175 + $0x14] sm:$0xf] %v1186
      %1203 = vst [vmem:[%s175 + $0x18] sm:$0xf] %v1187
      %1204 = vst [vmem:[%s175 + $0x1c] sm:$0xf] %v1188
      %s1205 = smul.u32 8, %s14
      %p1206 = scmp.lt.s32.totalorder %s1205, 15
      %s1207 = scalar_select %p1206, %s1205, 15
      %s1208 = smul.addr %s1207, 4
      %s1209 = scalar_lea.vmem %s3, %s1208
      // Predicated region
      $region33: #{clagnosco_autoencoder_forward.10} parent=31 // pred_check
        %p1210 = pneg %p100
      $region34: #{clagnosco_autoencoder_forward.10} parent=31 // pred_check_branch
        %1212 = sbr.rel (%p1210) target = $region36
      $region35: #{clagnosco_autoencoder_forward.10} parent=31 // pred_region
        %s1213 = smul.u32 8, %s14
      $region36: #{clagnosco_autoencoder_forward.10} parent=31 // pred_fallthru
        _
    $region32: #{clagnosco_autoencoder_forward.10} parent=5 // pred_fallthru
      _
    %p1214 = scmp.le.s32.totalorder 2, %s9
    // Predicated region
    $region37: #{clagnosco_autoencoder_forward.10} parent=5 // pred_check
      %p1215 = pneg %p1214
    $region38: #{clagnosco_autoencoder_forward.10} parent=5 // pred_check_branch
      %1217 = sbr.rel (%p1215) target = $region40
    $region39: #{clagnosco_autoencoder_forward.10} parent=5 // pred_region
      %s1218 = ssub.s32 %s9, 2
      // Predicated region
      $region41: #{clagnosco_autoencoder_forward.10} parent=39 // pred_check
        %p1219 = pneg %p106
      $region42: #{clagnosco_autoencoder_forward.10} parent=39 // pred_check_branch
        %1221 = sbr.rel (%p1219) target = $region44
      $region43: #{clagnosco_autoencoder_forward.10} parent=39 // pred_region
        %s1222 = smul.u32 8, %s15
        %p1223 = scmp.lt.s32.totalorder %s1222, 15
        %s1224 = scalar_select %p1223, %s1222, 15
        %s1225 = smul.addr %s1224, 4
        %s1226 = scalar_lea.vmem %s3, %s1225
      $region44: #{clagnosco_autoencoder_forward.10} parent=39 // pred_fallthru
        _
    $region40: #{clagnosco_autoencoder_forward.10} parent=5 // pred_fallthru
      _
  $region6: #{clagnosco_autoencoder_forward.10} parent=0 // loop_footer
    %s13 = sadd.s32 1, %s9
  $region7: #{clagnosco_autoencoder_forward.10} parent=0 // loop_footer_branch
    %8 = sbr.rel target = $region3
  $region8: #{clagnosco_autoencoder_forward.10} parent=0 // loop_exit
    _

// kernel: clagnosco_autoencoder_forward.11
$region0: #{clagnosco_autoencoder_forward.11}
  #allocation0 [shape = 'u32[]', space=smem, size = 0x4, offset = 0x4, fixed_abs, tag = 'smem constant byte address 0x4 - core index']
  #allocation1 [shape = 'u32[144,128]{1,0:T(1,128)}', space=vmem, size = 0x12000, scoped, tag = 'internal scratch']
  %s0 = inlined_call_operand.vmem [shape: bf16[128,1152], index: 0, kind: input, shape index: {}]
  %s1 = inlined_call_operand.vmem [shape: bf16[1152,128], index: 1, kind: input, shape index: {}]
  %s2 = inlined_call_operand.vmem [shape: f32[1,128], index: 2, kind: input, shape index: {}]
  %s3 = inlined_call_operand.vmem [shape: bf16[128,128], index: 3, kind: output, shape index: {}]
  %s4 = sld [smem:[#allocation0]]
  $region45: #{clagnosco_autoencoder_forward.11} parent=0
    _
  %s6 = ssub.s32 1, %s4
  %s7 = scalar_select 0, %s6, %s4
  loop: start=0, step=1, limit=4
  $region2: #{clagnosco_autoencoder_forward.11} parent=0 // loop_pre_header
    _
  $region3: #{clagnosco_autoencoder_forward.11} parent=0 // loop_header
    %s9 = sphi 0, %s13
    %p10 = scmp.ge.s32.totalorder %s9, 4
    %s19 = sphi 0, %s21
    %s22 = sphi 0, %s19
    %s23 = sphi 0, %s22
    %s39 = sphi 0, %s23
    %s43 = sphi 0, %s43
    %s45 = sphi 0, %s43
    %s46 = sphi 0, %s45
    %s60 = sphi 0, %s46
    %s64 = sphi 0, %s64
    %s66 = sphi 0, %s64
    %s67 = sphi 0, %s66
    %s81 = sphi 0, %s67
    %s87 = sphi 0, %s89
    %s90 = sphi 0, %s87
    %s91 = sphi 0, %s90
    %s107 = sphi 0, %s91
  $region4: #{clagnosco_autoencoder_forward.11} parent=0 // loop_header_branch
    %12 = sbr.rel (%p10) target = $region8
  $region5: #{clagnosco_autoencoder_forward.11} parent=0 // loop_body
    %s14 = ssub.s32 %s9, 1
    %s15 = ssub.s32 %s9, 2
    %s16 = sadd.s32 %s9, 1
    %s17 = ssub.s32 %s9, %s16
    %p18 = scmp.eq.s32.totalorder %s17, 0
    %s20 = sadd.s32 %s19, 1
    %s21 = scalar_select %p18, %s19, %s20
    %p24 = pneg %p18
    %p25 = scmp.eq.s32.totalorder %s9, 1
    %p26 = por %p24, %p25
    %p27 = scmp.ne.s32.totalorder %s19, %s22
    %p28 = scmp.eq.s32.totalorder %s9, 0
    %p29 = por %p27, %p28
    %p30 = scmp.ne.s32.totalorder %s19, %s22
    %p31 = scmp.eq.s32.totalorder %s14, 1
    %p32 = por %p30, %p31
    %p33 = scmp.ne.s32.totalorder %s22, %s23
    %p34 = scmp.eq.s32.totalorder %s14, 0
    %p35 = por %p33, %p34
    %p36 = scmp.ne.s32.totalorder %s22, %s23
    %p37 = scmp.eq.s32.totalorder %s15, 1
    %p38 = por %p36, %p37
    %p40 = scmp.ne.s32.totalorder %s23, %s39
    %p41 = scmp.eq.s32.totalorder %s15, 0
    %p42 = por %p40, %p41
    %s44 = sadd.s32 %s43, 1
    %p47 = scmp.eq.s32.totalorder %s9, 1
    %p48 = scmp.ne.s32.totalorder %s43, %s45
    %p49 = scmp.eq.s32.totalorder %s9, 0
    %p50 = por %p48, %p49
    %p51 = scmp.ne.s32.totalorder %s43, %s45
    %p52 = scmp.eq.s32.totalorder %s14, 1
    %p53 = por %p51, %p52
    %p54 = scmp.ne.s32.totalorder %s45, %s46
    %p55 = scmp.eq.s32.totalorder %s14, 0
    %p56 = por %p54, %p55
    %p57 = scmp.ne.s32.totalorder %s45, %s46
    %p58 = scmp.eq.s32.totalorder %s15, 1
    %p59 = por %p57, %p58
    %p61 = scmp.ne.s32.totalorder %s46, %s60
    %p62 = scmp.eq.s32.totalorder %s15, 0
    %p63 = por %p61, %p62
    %s65 = sadd.s32 %s64, 1
    %p68 = scmp.eq.s32.totalorder %s9, 1
    %p69 = scmp.ne.s32.totalorder %s64, %s66
    %p70 = scmp.eq.s32.totalorder %s9, 0
    %p71 = por %p69, %p70
    %p72 = scmp.ne.s32.totalorder %s64, %s66
    %p73 = scmp.eq.s32.totalorder %s14, 1
    %p74 = por %p72, %p73
    %p75 = scmp.ne.s32.totalorder %s66, %s67
    %p76 = scmp.eq.s32.totalorder %s14, 0
    %p77 = por %p75, %p76
    %p78 = scmp.ne.s32.totalorder %s66, %s67
    %p79 = scmp.eq.s32.totalorder %s15, 1
    %p80 = por %p78, %p79
    %p82 = scmp.ne.s32.totalorder %s67, %s81
    %p83 = scmp.eq.s32.totalorder %s15, 0
    %p84 = por %p82, %p83
    %s85 = ssub.s32 %s9, %s16
    %p86 = scmp.eq.s32.totalorder %s85, 0
    %s88 = sadd.s32 %s87, 1
    %s89 = scalar_select %p86, %s87, %s88
    %p92 = pneg %p86
    %p93 = scmp.eq.s32.totalorder %s9, 1
    %p94 = por %p92, %p93
    %p95 = scmp.ne.s32.totalorder %s87, %s90
    %p96 = scmp.eq.s32.totalorder %s9, 0
    %p97 = por %p95, %p96
    %p98 = scmp.ne.s32.totalorder %s87, %s90
    %p99 = scmp.eq.s32.totalorder %s14, 1
    %p100 = por %p98, %p99
    %p101 = scmp.ne.s32.totalorder %s90, %s91
    %p102 = scmp.eq.s32.totalorder %s14, 0
    %p103 = por %p101, %p102
    %p104 = scmp.ne.s32.totalorder %s90, %s91
    %p105 = scmp.eq.s32.totalorder %s15, 1
    %p106 = por %p104, %p105
    %p108 = scmp.ne.s32.totalorder %s91, %s107
    %p109 = scmp.eq.s32.totalorder %s15, 0
    %p110 = por %p108, %p109
    %p111 = scmp.le.s32.totalorder 1, %s9
    %p112 = scmp.lt.s32.totalorder %s9, 3
    %p113 = pnand %p111, %p112
    %p114 = pneg %p113
    // Predicated region
    $region9: #{clagnosco_autoencoder_forward.11} parent=5 // pred_check
      _
    $region10: #{clagnosco_autoencoder_forward.11} parent=5 // pred_check_branch
      %116 = sbr.rel (%p113) target = $region12
    $region11: #{clagnosco_autoencoder_forward.11} parent=5 // pred_region
      %s117 = ssub.s32 %s9, 1
      // Predicated region
      $region13: #{clagnosco_autoencoder_forward.11} parent=11 // pred_check
        %p118 = pneg %p56
      $region14: #{clagnosco_autoencoder_forward.11} parent=11 // pred_check_branch
        %120 = sbr.rel (%p118) target = $region16
      $region15: #{clagnosco_autoencoder_forward.11} parent=11 // pred_region
        _
      $region16: #{clagnosco_autoencoder_forward.11} parent=11 // pred_fallthru
        _
      // Predicated region
      $region17: #{clagnosco_autoencoder_forward.11} parent=11 // pred_check
        %p121 = pneg %p77
      $region18: #{clagnosco_autoencoder_forward.11} parent=11 // pred_check_branch
        %123 = sbr.rel (%p121) target = $region20
      $region19: #{clagnosco_autoencoder_forward.11} parent=11 // pred_region
        _
      $region20: #{clagnosco_autoencoder_forward.11} parent=11 // pred_fallthru
        _
    $region12: #{clagnosco_autoencoder_forward.11} parent=5 // pred_fallthru
      _
    %p124 = scmp.lt.s32.totalorder %s9, 2
    // Predicated region
    $region21: #{clagnosco_autoencoder_forward.11} parent=5 // pred_check
      %p125 = pneg %p124
    $region22: #{clagnosco_autoencoder_forward.11} parent=5 // pred_check_branch
      %127 = sbr.rel (%p125) target = $region24
    $region23: #{clagnosco_autoencoder_forward.11} parent=5 // pred_region
      // Predicated region
      $region25: #{clagnosco_autoencoder_forward.11} parent=23 // pred_check
        %p128 = pneg %p29
      $region26: #{clagnosco_autoencoder_forward.11} parent=23 // pred_check_branch
        %130 = sbr.rel (%p128) target = $region28
      $region27: #{clagnosco_autoencoder_forward.11} parent=23 // pred_region
        %s131 = smul.u32 8, %s9
        %p132 = scmp.lt.s32.totalorder %s131, 15
        %s133 = scalar_select %p132, %s131, 15
        %s134 = smul.addr %s133, 9
        %s135 = smul.addr %s134, 4
        %s136 = scalar_lea.vmem %s0, %s135
        %s137 = smul.u32 8, %s9
      $region28: #{clagnosco_autoencoder_forward.11} parent=23 // pred_fallthru
        _
    $region24: #{clagnosco_autoencoder_forward.11} parent=5 // pred_fallthru
      _
    %p138 = scmp.le.s32.totalorder 1, %s9
    %p139 = scmp.lt.s32.totalorder %s9, 3
    %p140 = pnand %p138, %p139
    %p141 = pneg %p140
    // Predicated region
    $region29: #{clagnosco_autoencoder_forward.11} parent=5 // pred_check
      _
    $region30: #{clagnosco_autoencoder_forward.11} parent=5 // pred_check_branch
      %143 = sbr.rel (%p140) target = $region32
    $region31: #{clagnosco_autoencoder_forward.11} parent=5 // pred_region
      %s144 = ssub.s32 %s9, 1
      %s145 = smul.u32 8, %s14
      %p146 = scmp.lt.s32.totalorder %s145, 15
      %s147 = scalar_select %p146, %s145, 15
      %s148 = smul.addr %s147, 9
      %s149 = smul.addr %s148, 4
      %s150 = scalar_lea.vmem %s0, %s149
      %p151 = pneg %p35
      %p152 = pneg %p32
      %p153 = pneg %p56
      %p154 = pneg %p53
      %p155 = pneg %p77
      %p156 = pneg %p74
      %p157 = pneg %p103
      %p158 = pneg %p100
      %s159 = smul.u32 8, %s14
      %p160 = scmp.lt.s32.totalorder %s159, 15
      %s161 = scalar_select %p160, %s159, 15
      %s162 = smul.addr %s161, 4
      %s163 = scalar_lea.vmem %s3, %s162
      %s164 = smul.u32 8, %s14
      %p165 = scmp.lt.s32.totalorder %s164, 15
      %s166 = scalar_select %p165, %s164, 15
      %s167 = smul.addr %s166, 9
      %s168 = smul.addr %s167, 4
      %s169 = scalar_lea.vmem %s0, %s168
      %s170 = smul.u32 8, %s14
      %s171 = smul.u32 8, %s14
      %p172 = scmp.lt.s32.totalorder %s171, 15
      %s173 = scalar_select %p172, %s171, 15
      %s174 = smul.addr %s173, 4
      %s175 = scalar_lea.vmem %s3, %s174
      %s176 = smul.u32 8, %s14
      %v178 = vld [vmem:[%s169] sm:$0xff]
      %v179 = vld [vmem:[%s169 + $0x8] sm:$0xff]
      %v180 = vld [vmem:[%s169 + $0x10] sm:$0xff]
      %v181 = vld [vmem:[%s169 + $0x18] sm:$0xff]
      %v182 = vld [vmem:[%s169 + $0x20] sm:$0xf]
      %v183 = vld [vmem:[%s169 + $0x24] sm:$0xff]
      %v184 = vld [vmem:[%s169 + $0x2c] sm:$0xff]
      %v185 = vld [vmem:[%s169 + $0x34] sm:$0xff]
      %v186 = vld [vmem:[%s169 + $0x3c] sm:$0xff]
      %v187 = vld [vmem:[%s169 + $0x44] sm:$0xf]
      %v188 = vld [vmem:[%s169 + $0x48] sm:$0xff]
      %v189 = vld [vmem:[%s169 + $0x50] sm:$0xff]
      %v190 = vld [vmem:[%s169 + $0x58] sm:$0xff]
      %v191 = vld [vmem:[%s169 + $0x60] sm:$0xff]
      %v192 = vld [vmem:[%s169 + $0x68] sm:$0xf]
      %v193 = vld [vmem:[%s169 + $0x6c] sm:$0xff]
      %v194 = vld [vmem:[%s169 + $0x74] sm:$0xff]
      %v195 = vld [vmem:[%s169 + $0x7c] sm:$0xff]
      %v196 = vld [vmem:[%s169 + $0x84] sm:$0xff]
      %v197 = vld [vmem:[%s169 + $0x8c] sm:$0xf]
      %v198 = vld [vmem:[%s169 + $0x90] sm:$0xff]
      %v199 = vld [vmem:[%s169 + $0x98] sm:$0xff]
      %v200 = vld [vmem:[%s169 + $0xa0] sm:$0xff]
      %v201 = vld [vmem:[%s169 + $0xa8] sm:$0xff]
      %v202 = vld [vmem:[%s169 + $0xb0] sm:$0xf]
      %v203 = vld [vmem:[%s169 + $0xb4] sm:$0xff]
      %v204 = vld [vmem:[%s169 + $0xbc] sm:$0xff]
      %v205 = vld [vmem:[%s169 + $0xc4] sm:$0xff]
      %v206 = vld [vmem:[%s169 + $0xcc] sm:$0xff]
      %v207 = vld [vmem:[%s169 + $0xd4] sm:$0xf]
      %v208 = vld [vmem:[%s169 + $0xd8] sm:$0xff]
      %v209 = vld [vmem:[%s169 + $0xe0] sm:$0xff]
      %v210 = vld [vmem:[%s169 + $0xe8] sm:$0xff]
      %v211 = vld [vmem:[%s169 + $0xf0] sm:$0xff]
      %v212 = vld [vmem:[%s169 + $0xf8] sm:$0xf]
      %v213 = vld [vmem:[%s169 + $0xfc] sm:$0xff]
      %v214 = vld [vmem:[%s169 + $0x104] sm:$0xff]
      %v215 = vld [vmem:[%s169 + $0x10c] sm:$0xff]
      %v216 = vld [vmem:[%s169 + $0x114] sm:$0xff]
      %v217 = vld [vmem:[%s169 + $0x11c] sm:$0xf]
      %v218 = vld [vmem:[%s1] sm:$0xf]
      %v219 = vld [vmem:[%s1 + $0x4] sm:$0xf]
      %v220 = vld [vmem:[%s1 + $0x8] sm:$0xf]
      %v221 = vld [vmem:[%s1 + $0xc] sm:$0xf]
      %v222 = vld [vmem:[%s1 + $0x10] sm:$0xf]
      %v223 = vld [vmem:[%s1 + $0x14] sm:$0xf]
      %v224 = vld [vmem:[%s1 + $0x18] sm:$0xf]
      %v225 = vld [vmem:[%s1 + $0x1c] sm:$0xf]
      %v226 = vld [vmem:[%s1 + $0x20] sm:$0xf]
      %v227 = vld [vmem:[%s1 + $0x24] sm:$0xf]
      %v228 = vld [vmem:[%s1 + $0x28] sm:$0xf]
      %v229 = vld [vmem:[%s1 + $0x2c] sm:$0xf]
      %v230 = vld [vmem:[%s1 + $0x30] sm:$0xf]
      %v231 = vld [vmem:[%s1 + $0x34] sm:$0xf]
      %v232 = vld [vmem:[%s1 + $0x38] sm:$0xf]
      %v233 = vld [vmem:[%s1 + $0x3c] sm:$0xf]
      %v234 = vld [vmem:[%s1 + $0x40] sm:$0xf]
      %v235 = vld [vmem:[%s1 + $0x44] sm:$0xf]
      %v236 = vld [vmem:[%s1 + $0x48] sm:$0xf]
      %v237 = vld [vmem:[%s1 + $0x4c] sm:$0xf]
      %v238 = vld [vmem:[%s1 + $0x50] sm:$0xf]
      %v239 = vld [vmem:[%s1 + $0x54] sm:$0xf]
      %v240 = vld [vmem:[%s1 + $0x58] sm:$0xf]
      %v241 = vld [vmem:[%s1 + $0x5c] sm:$0xf]
      %v242 = vld [vmem:[%s1 + $0x60] sm:$0xf]
      %v243 = vld [vmem:[%s1 + $0x64] sm:$0xf]
      %v244 = vld [vmem:[%s1 + $0x68] sm:$0xf]
      %v245 = vld [vmem:[%s1 + $0x6c] sm:$0xf]
      %v246 = vld [vmem:[%s1 + $0x70] sm:$0xf]
      %v247 = vld [vmem:[%s1 + $0x74] sm:$0xf]
      %v248 = vld [vmem:[%s1 + $0x78] sm:$0xf]
      %v249 = vld [vmem:[%s1 + $0x7c] sm:$0xf]
      %v250 = vld [vmem:[%s1 + $0x80] sm:$0xf]
      %v251 = vld [vmem:[%s1 + $0x84] sm:$0xf]
      %v252 = vld [vmem:[%s1 + $0x88] sm:$0xf]
      %v253 = vld [vmem:[%s1 + $0x8c] sm:$0xf]
      %v254 = vld [vmem:[%s1 + $0x90] sm:$0xf]
      %v255 = vld [vmem:[%s1 + $0x94] sm:$0xf]
      %v256 = vld [vmem:[%s1 + $0x98] sm:$0xf]
      %v257 = vld [vmem:[%s1 + $0x9c] sm:$0xf]
      %v258 = vld [vmem:[%s1 + $0xa0] sm:$0xf]
      %v259 = vld [vmem:[%s1 + $0xa4] sm:$0xf]
      %v260 = vld [vmem:[%s1 + $0xa8] sm:$0xf]
      %v261 = vld [vmem:[%s1 + $0xac] sm:$0xf]
      %v262 = vld [vmem:[%s1 + $0xb0] sm:$0xf]
      %v263 = vld [vmem:[%s1 + $0xb4] sm:$0xf]
      %v264 = vld [vmem:[%s1 + $0xb8] sm:$0xf]
      %v265 = vld [vmem:[%s1 + $0xbc] sm:$0xf]
      %v266 = vld [vmem:[%s1 + $0xc0] sm:$0xf]
      %v267 = vld [vmem:[%s1 + $0xc4] sm:$0xf]
      %v268 = vld [vmem:[%s1 + $0xc8] sm:$0xf]
      %v269 = vld [vmem:[%s1 + $0xcc] sm:$0xf]
      %v270 = vld [vmem:[%s1 + $0xd0] sm:$0xf]
      %v271 = vld [vmem:[%s1 + $0xd4] sm:$0xf]
      %v272 = vld [vmem:[%s1 + $0xd8] sm:$0xf]
      %v273 = vld [vmem:[%s1 + $0xdc] sm:$0xf]
      %v274 = vld [vmem:[%s1 + $0xe0] sm:$0xf]
      %v275 = vld [vmem:[%s1 + $0xe4] sm:$0xf]
      %v276 = vld [vmem:[%s1 + $0xe8] sm:$0xf]
      %v277 = vld [vmem:[%s1 + $0xec] sm:$0xf]
      %v278 = vld [vmem:[%s1 + $0xf0] sm:$0xf]
      %v279 = vld [vmem:[%s1 + $0xf4] sm:$0xf]
      %v280 = vld [vmem:[%s1 + $0xf8] sm:$0xf]
      %v281 = vld [vmem:[%s1 + $0xfc] sm:$0xf]
      %v282 = vld [vmem:[%s1 + $0x100] sm:$0xf]
      %v283 = vld [vmem:[%s1 + $0x104] sm:$0xf]
      %v284 = vld [vmem:[%s1 + $0x108] sm:$0xf]
      %v285 = vld [vmem:[%s1 + $0x10c] sm:$0xf]
      %v286 = vld [vmem:[%s1 + $0x110] sm:$0xf]
      %v287 = vld [vmem:[%s1 + $0x114] sm:$0xf]
      %v288 = vld [vmem:[%s1 + $0x118] sm:$0xf]
      %v289 = vld [vmem:[%s1 + $0x11c] sm:$0xf]
      %v290 = vld [vmem:[%s1 + $0x120] sm:$0xf]
      %v291 = vld [vmem:[%s1 + $0x124] sm:$0xf]
      %v292 = vld [vmem:[%s1 + $0x128] sm:$0xf]
      %v293 = vld [vmem:[%s1 + $0x12c] sm:$0xf]
      %v294 = vld [vmem:[%s1 + $0x130] sm:$0xf]
      %v295 = vld [vmem:[%s1 + $0x134] sm:$0xf]
      %v296 = vld [vmem:[%s1 + $0x138] sm:$0xf]
      %v297 = vld [vmem:[%s1 + $0x13c] sm:$0xf]
      %v298 = vld [vmem:[%s1 + $0x140] sm:$0xf]
      %v299 = vld [vmem:[%s1 + $0x144] sm:$0xf]
      %v300 = vld [vmem:[%s1 + $0x148] sm:$0xf]
      %v301 = vld [vmem:[%s1 + $0x14c] sm:$0xf]
      %v302 = vld [vmem:[%s1 + $0x150] sm:$0xf]
      %v303 = vld [vmem:[%s1 + $0x154] sm:$0xf]
      %v304 = vld [vmem:[%s1 + $0x158] sm:$0xf]
      %v305 = vld [vmem:[%s1 + $0x15c] sm:$0xf]
      %v306 = vld [vmem:[%s1 + $0x160] sm:$0xf]
      %v307 = vld [vmem:[%s1 + $0x164] sm:$0xf]
      %v308 = vld [vmem:[%s1 + $0x168] sm:$0xf]
      %v309 = vld [vmem:[%s1 + $0x16c] sm:$0xf]
      %v310 = vld [vmem:[%s1 + $0x170] sm:$0xf]
      %v311 = vld [vmem:[%s1 + $0x174] sm:$0xf]
      %v312 = vld [vmem:[%s1 + $0x178] sm:$0xf]
      %v313 = vld [vmem:[%s1 + $0x17c] sm:$0xf]
      %v314 = vld [vmem:[%s1 + $0x180] sm:$0xf]
      %v315 = vld [vmem:[%s1 + $0x184] sm:$0xf]
      %v316 = vld [vmem:[%s1 + $0x188] sm:$0xf]
      %v317 = vld [vmem:[%s1 + $0x18c] sm:$0xf]
      %v318 = vld [vmem:[%s1 + $0x190] sm:$0xf]
      %v319 = vld [vmem:[%s1 + $0x194] sm:$0xf]
      %v320 = vld [vmem:[%s1 + $0x198] sm:$0xf]
      %v321 = vld [vmem:[%s1 + $0x19c] sm:$0xf]
      %v322 = vld [vmem:[%s1 + $0x1a0] sm:$0xf]
      %v323 = vld [vmem:[%s1 + $0x1a4] sm:$0xf]
      %v324 = vld [vmem:[%s1 + $0x1a8] sm:$0xf]
      %v325 = vld [vmem:[%s1 + $0x1ac] sm:$0xf]
      %v326 = vld [vmem:[%s1 + $0x1b0] sm:$0xf]
      %v327 = vld [vmem:[%s1 + $0x1b4] sm:$0xf]
      %v328 = vld [vmem:[%s1 + $0x1b8] sm:$0xf]
      %v329 = vld [vmem:[%s1 + $0x1bc] sm:$0xf]
      %v330 = vld [vmem:[%s1 + $0x1c0] sm:$0xf]
      %v331 = vld [vmem:[%s1 + $0x1c4] sm:$0xf]
      %v332 = vld [vmem:[%s1 + $0x1c8] sm:$0xf]
      %v333 = vld [vmem:[%s1 + $0x1cc] sm:$0xf]
      %v334 = vld [vmem:[%s1 + $0x1d0] sm:$0xf]
      %v335 = vld [vmem:[%s1 + $0x1d4] sm:$0xf]
      %v336 = vld [vmem:[%s1 + $0x1d8] sm:$0xf]
      %v337 = vld [vmem:[%s1 + $0x1dc] sm:$0xf]
      %v338 = vld [vmem:[%s1 + $0x1e0] sm:$0xf]
      %v339 = vld [vmem:[%s1 + $0x1e4] sm:$0xf]
      %v340 = vld [vmem:[%s1 + $0x1e8] sm:$0xf]
      %v341 = vld [vmem:[%s1 + $0x1ec] sm:$0xf]
      %v342 = vld [vmem:[%s1 + $0x1f0] sm:$0xf]
      %v343 = vld [vmem:[%s1 + $0x1f4] sm:$0xf]
      %v344 = vld [vmem:[%s1 + $0x1f8] sm:$0xf]
      %v345 = vld [vmem:[%s1 + $0x1fc] sm:$0xf]
      %v346 = vld [vmem:[%s1 + $0x200] sm:$0xf]
      %v347 = vld [vmem:[%s1 + $0x204] sm:$0xf]
      %v348 = vld [vmem:[%s1 + $0x208] sm:$0xf]
      %v349 = vld [vmem:[%s1 + $0x20c] sm:$0xf]
      %v350 = vld [vmem:[%s1 + $0x210] sm:$0xf]
      %v351 = vld [vmem:[%s1 + $0x214] sm:$0xf]
      %v352 = vld [vmem:[%s1 + $0x218] sm:$0xf]
      %v353 = vld [vmem:[%s1 + $0x21c] sm:$0xf]
      %v354 = vld [vmem:[%s1 + $0x220] sm:$0xf]
      %v355 = vld [vmem:[%s1 + $0x224] sm:$0xf]
      %v356 = vld [vmem:[%s1 + $0x228] sm:$0xf]
      %v357 = vld [vmem:[%s1 + $0x22c] sm:$0xf]
      %v358 = vld [vmem:[%s1 + $0x230] sm:$0xf]
      %v359 = vld [vmem:[%s1 + $0x234] sm:$0xf]
      %v360 = vld [vmem:[%s1 + $0x238] sm:$0xf]
      %v361 = vld [vmem:[%s1 + $0x23c] sm:$0xf]
      %v362 = vld [vmem:[%s2] sm:$0x1]
      %v364 = vlaneseq
      %v365 = vshrl.u32 %v364, 7
      %v366 = vsub.s32 0, %v365
      %v367 = vrot.slane %v362, %v366
      %v409 = vunpack.c.l.b16 %v178
      %v410 = vunpack.c.h.b16 %v178
      %v411 = vunpack.c.l.b16 %v179
      %v412 = vunpack.c.h.b16 %v179
      %v413 = vunpack.c.l.b16 %v180
      %v414 = vunpack.c.h.b16 %v180
      %v415 = vunpack.c.l.b16 %v181
      %v416 = vunpack.c.h.b16 %v181
      %v417 = vunpack.c.l.b16 %v182
      %v418 = vunpack.c.l.b16 %v183
      %v419 = vunpack.c.h.b16 %v183
      %v420 = vunpack.c.l.b16 %v184
      %v421 = vunpack.c.h.b16 %v184
      %v422 = vunpack.c.l.b16 %v185
      %v423 = vunpack.c.h.b16 %v185
      %v424 = vunpack.c.l.b16 %v186
      %v425 = vunpack.c.h.b16 %v186
      %v426 = vunpack.c.l.b16 %v187
      %v427 = vunpack.c.l.b16 %v188
      %v428 = vunpack.c.h.b16 %v188
      %v429 = vunpack.c.l.b16 %v189
      %v430 = vunpack.c.h.b16 %v189
      %v431 = vunpack.c.l.b16 %v190
      %v432 = vunpack.c.h.b16 %v190
      %v433 = vunpack.c.l.b16 %v191
      %v434 = vunpack.c.h.b16 %v191
      %v435 = vunpack.c.l.b16 %v192
      %v436 = vunpack.c.l.b16 %v193
      %v437 = vunpack.c.h.b16 %v193
      %v438 = vunpack.c.l.b16 %v194
      %v439 = vunpack.c.h.b16 %v194
      %v440 = vunpack.c.l.b16 %v195
      %v441 = vunpack.c.h.b16 %v195
      %v442 = vunpack.c.l.b16 %v196
      %v443 = vunpack.c.h.b16 %v196
      %v444 = vunpack.c.l.b16 %v197
      %v445 = vunpack.c.l.b16 %v198
      %v446 = vunpack.c.h.b16 %v198
      %v447 = vunpack.c.l.b16 %v199
      %v448 = vunpack.c.h.b16 %v199
      %v449 = vunpack.c.l.b16 %v200
      %v450 = vunpack.c.h.b16 %v200
      %v451 = vunpack.c.l.b16 %v201
      %v452 = vunpack.c.h.b16 %v201
      %v453 = vunpack.c.l.b16 %v202
      %v454 = vunpack.c.l.b16 %v203
      %v455 = vunpack.c.h.b16 %v203
      %v456 = vunpack.c.l.b16 %v204
      %v457 = vunpack.c.h.b16 %v204
      %v458 = vunpack.c.l.b16 %v205
      %v459 = vunpack.c.h.b16 %v205
      %v460 = vunpack.c.l.b16 %v206
      %v461 = vunpack.c.h.b16 %v206
      %v462 = vunpack.c.l.b16 %v207
      %v463 = vunpack.c.l.b16 %v208
      %v464 = vunpack.c.h.b16 %v208
      %v465 = vunpack.c.l.b16 %v209
      %v466 = vunpack.c.h.b16 %v209
      %v467 = vunpack.c.l.b16 %v210
      %v468 = vunpack.c.h.b16 %v210
      %v469 = vunpack.c.l.b16 %v211
      %v470 = vunpack.c.h.b16 %v211
      %v471 = vunpack.c.l.b16 %v212
      %v472 = vunpack.c.l.b16 %v213
      %v473 = vunpack.c.h.b16 %v213
      %v474 = vunpack.c.l.b16 %v214
      %v475 = vunpack.c.h.b16 %v214
      %v476 = vunpack.c.l.b16 %v215
      %v477 = vunpack.c.h.b16 %v215
      %v478 = vunpack.c.l.b16 %v216
      %v479 = vunpack.c.h.b16 %v216
      %v480 = vunpack.c.l.b16 %v217
      %v481 = vpack.c.b16 %v418, %v409
      %v482 = vpack.c.b16 %v419, %v410
      %v483 = vpack.c.b16 %v420, %v411
      %v484 = vpack.c.b16 %v421, %v412
      %v485 = vpack.c.b16 %v422, %v413
      %v486 = vpack.c.b16 %v423, %v414
      %v487 = vpack.c.b16 %v424, %v415
      %v488 = vpack.c.b16 %v425, %v416
      %v489 = vpack.c.b16 %v426, %v417
      %v490 = vpack.c.b16 %v436, %v427
      %v491 = vpack.c.b16 %v437, %v428
      %v492 = vpack.c.b16 %v438, %v429
      %v493 = vpack.c.b16 %v439, %v430
      %v494 = vpack.c.b16 %v440, %v431
      %v495 = vpack.c.b16 %v441, %v432
      %v496 = vpack.c.b16 %v442, %v433
      %v497 = vpack.c.b16 %v443, %v434
      %v498 = vpack.c.b16 %v444, %v435
      %v499 = vpack.c.b16 %v454, %v445
      %v500 = vpack.c.b16 %v455, %v446
      %v501 = vpack.c.b16 %v456, %v447
      %v502 = vpack.c.b16 %v457, %v448
      %v503 = vpack.c.b16 %v458, %v449
      %v504 = vpack.c.b16 %v459, %v450
      %v505 = vpack.c.b16 %v460, %v451
      %v506 = vpack.c.b16 %v461, %v452
      %v507 = vpack.c.b16 %v462, %v453
      %v508 = vpack.c.b16 %v472, %v463
      %v509 = vpack.c.b16 %v473, %v464
      %v510 = vpack.c.b16 %v474, %v465
      %v511 = vpack.c.b16 %v475, %v466
      %v512 = vpack.c.b16 %v476, %v467
      %v513 = vpack.c.b16 %v477, %v468
      %v514 = vpack.c.b16 %v478, %v469
      %v515 = vpack.c.b16 %v479, %v470
      %v516 = vpack.c.b16 %v480, %v471
      %v697 = vunpack.c.l.b16 %v218
      %v698 = vunpack.c.l.b16 %v219
      %v699 = vunpack.c.l.b16 %v220
      %v700 = vunpack.c.l.b16 %v221
      %v701 = vunpack.c.l.b16 %v222
      %v702 = vunpack.c.l.b16 %v223
      %v703 = vunpack.c.l.b16 %v224
      %v704 = vunpack.c.l.b16 %v225
      %v705 = vunpack.c.l.b16 %v226
      %v706 = vunpack.c.l.b16 %v227
      %v707 = vunpack.c.l.b16 %v228
      %v708 = vunpack.c.l.b16 %v229
      %v709 = vunpack.c.l.b16 %v230
      %v710 = vunpack.c.l.b16 %v231
      %v711 = vunpack.c.l.b16 %v232
      %v712 = vunpack.c.l.b16 %v233
      %v713 = vunpack.c.l.b16 %v234
      %v714 = vunpack.c.l.b16 %v235
      %v715 = vunpack.c.l.b16 %v236
      %v716 = vunpack.c.l.b16 %v237
      %v717 = vunpack.c.l.b16 %v238
      %v718 = vunpack.c.l.b16 %v239
      %v719 = vunpack.c.l.b16 %v240
      %v720 = vunpack.c.l.b16 %v241
      %v721 = vunpack.c.l.b16 %v242
      %v722 = vunpack.c.l.b16 %v243
      %v723 = vunpack.c.l.b16 %v244
      %v724 = vunpack.c.l.b16 %v245
      %v725 = vunpack.c.l.b16 %v246
      %v726 = vunpack.c.l.b16 %v247
      %v727 = vunpack.c.l.b16 %v248
      %v728 = vunpack.c.l.b16 %v249
      %v729 = vunpack.c.l.b16 %v250
      %v730 = vunpack.c.l.b16 %v251
      %v731 = vunpack.c.l.b16 %v252
      %v732 = vunpack.c.l.b16 %v253
      %v733 = vunpack.c.l.b16 %v254
      %v734 = vunpack.c.l.b16 %v255
      %v735 = vunpack.c.l.b16 %v256
      %v736 = vunpack.c.l.b16 %v257
      %v737 = vunpack.c.l.b16 %v258
      %v738 = vunpack.c.l.b16 %v259
      %v739 = vunpack.c.l.b16 %v260
      %v740 = vunpack.c.l.b16 %v261
      %v741 = vunpack.c.l.b16 %v262
      %v742 = vunpack.c.l.b16 %v263
      %v743 = vunpack.c.l.b16 %v264
      %v744 = vunpack.c.l.b16 %v265
      %v745 = vunpack.c.l.b16 %v266
      %v746 = vunpack.c.l.b16 %v267
      %v747 = vunpack.c.l.b16 %v268
      %v748 = vunpack.c.l.b16 %v269
      %v749 = vunpack.c.l.b16 %v270
      %v750 = vunpack.c.l.b16 %v271
      %v751 = vunpack.c.l.b16 %v272
      %v752 = vunpack.c.l.b16 %v273
      %v753 = vunpack.c.l.b16 %v274
      %v754 = vunpack.c.l.b16 %v275
      %v755 = vunpack.c.l.b16 %v276
      %v756 = vunpack.c.l.b16 %v277
      %v757 = vunpack.c.l.b16 %v278
      %v758 = vunpack.c.l.b16 %v279
      %v759 = vunpack.c.l.b16 %v280
      %v760 = vunpack.c.l.b16 %v281
      %v761 = vunpack.c.l.b16 %v282
      %v762 = vunpack.c.l.b16 %v283
      %v763 = vunpack.c.l.b16 %v284
      %v764 = vunpack.c.l.b16 %v285
      %v765 = vunpack.c.l.b16 %v286
      %v766 = vunpack.c.l.b16 %v287
      %v767 = vunpack.c.l.b16 %v288
      %v768 = vunpack.c.l.b16 %v289
      %v769 = vunpack.c.l.b16 %v290
      %v770 = vunpack.c.l.b16 %v291
      %v771 = vunpack.c.l.b16 %v292
      %v772 = vunpack.c.l.b16 %v293
      %v773 = vunpack.c.l.b16 %v294
      %v774 = vunpack.c.l.b16 %v295
      %v775 = vunpack.c.l.b16 %v296
      %v776 = vunpack.c.l.b16 %v297
      %v777 = vunpack.c.l.b16 %v298
      %v778 = vunpack.c.l.b16 %v299
      %v779 = vunpack.c.l.b16 %v300
      %v780 = vunpack.c.l.b16 %v301
      %v781 = vunpack.c.l.b16 %v302
      %v782 = vunpack.c.l.b16 %v303
      %v783 = vunpack.c.l.b16 %v304
      %v784 = vunpack.c.l.b16 %v305
      %v785 = vunpack.c.l.b16 %v306
      %v786 = vunpack.c.l.b16 %v307
      %v787 = vunpack.c.l.b16 %v308
      %v788 = vunpack.c.l.b16 %v309
      %v789 = vunpack.c.l.b16 %v310
      %v790 = vunpack.c.l.b16 %v311
      %v791 = vunpack.c.l.b16 %v312
      %v792 = vunpack.c.l.b16 %v313
      %v793 = vunpack.c.l.b16 %v314
      %v794 = vunpack.c.l.b16 %v315
      %v795 = vunpack.c.l.b16 %v316
      %v796 = vunpack.c.l.b16 %v317
      %v797 = vunpack.c.l.b16 %v318
      %v798 = vunpack.c.l.b16 %v319
      %v799 = vunpack.c.l.b16 %v320
      %v800 = vunpack.c.l.b16 %v321
      %v801 = vunpack.c.l.b16 %v322
      %v802 = vunpack.c.l.b16 %v323
      %v803 = vunpack.c.l.b16 %v324
      %v804 = vunpack.c.l.b16 %v325
      %v805 = vunpack.c.l.b16 %v326
      %v806 = vunpack.c.l.b16 %v327
      %v807 = vunpack.c.l.b16 %v328
      %v808 = vunpack.c.l.b16 %v329
      %v809 = vunpack.c.l.b16 %v330
      %v810 = vunpack.c.l.b16 %v331
      %v811 = vunpack.c.l.b16 %v332
      %v812 = vunpack.c.l.b16 %v333
      %v813 = vunpack.c.l.b16 %v334
      %v814 = vunpack.c.l.b16 %v335
      %v815 = vunpack.c.l.b16 %v336
      %v816 = vunpack.c.l.b16 %v337
      %v817 = vunpack.c.l.b16 %v338
      %v818 = vunpack.c.l.b16 %v339
      %v819 = vunpack.c.l.b16 %v340
      %v820 = vunpack.c.l.b16 %v341
      %v821 = vunpack.c.l.b16 %v342
      %v822 = vunpack.c.l.b16 %v343
      %v823 = vunpack.c.l.b16 %v344
      %v824 = vunpack.c.l.b16 %v345
      %v825 = vunpack.c.l.b16 %v346
      %v826 = vunpack.c.l.b16 %v347
      %v827 = vunpack.c.l.b16 %v348
      %v828 = vunpack.c.l.b16 %v349
      %v829 = vunpack.c.l.b16 %v350
      %v830 = vunpack.c.l.b16 %v351
      %v831 = vunpack.c.l.b16 %v352
      %v832 = vunpack.c.l.b16 %v353
      %v833 = vunpack.c.l.b16 %v354
      %v834 = vunpack.c.l.b16 %v355
      %v835 = vunpack.c.l.b16 %v356
      %v836 = vunpack.c.l.b16 %v357
      %v837 = vunpack.c.l.b16 %v358
      %v838 = vunpack.c.l.b16 %v359
      %v839 = vunpack.c.l.b16 %v360
      %v840 = vunpack.c.l.b16 %v361
      %v841 = vpack.c.b16 %v698, %v697
      %v842 = vpack.c.b16 %v700, %v699
      %v843 = vpack.c.b16 %v702, %v701
      %v844 = vpack.c.b16 %v704, %v703
      %v845 = vpack.c.b16 %v706, %v705
      %v846 = vpack.c.b16 %v708, %v707
      %v847 = vpack.c.b16 %v710, %v709
      %v848 = vpack.c.b16 %v712, %v711
      %v849 = vpack.c.b16 %v714, %v713
      %v850 = vpack.c.b16 %v716, %v715
      %v851 = vpack.c.b16 %v718, %v717
      %v852 = vpack.c.b16 %v720, %v719
      %v853 = vpack.c.b16 %v722, %v721
      %v854 = vpack.c.b16 %v724, %v723
      %v855 = vpack.c.b16 %v726, %v725
      %v856 = vpack.c.b16 %v728, %v727
      %v857 = vpack.c.b16 %v730, %v729
      %v858 = vpack.c.b16 %v732, %v731
      %v859 = vpack.c.b16 %v734, %v733
      %v860 = vpack.c.b16 %v736, %v735
      %v861 = vpack.c.b16 %v738, %v737
      %v862 = vpack.c.b16 %v740, %v739
      %v863 = vpack.c.b16 %v742, %v741
      %v864 = vpack.c.b16 %v744, %v743
      %v865 = vpack.c.b16 %v746, %v745
      %v866 = vpack.c.b16 %v748, %v747
      %v867 = vpack.c.b16 %v750, %v749
      %v868 = vpack.c.b16 %v752, %v751
      %v869 = vpack.c.b16 %v754, %v753
      %v870 = vpack.c.b16 %v756, %v755
      %v871 = vpack.c.b16 %v758, %v757
      %v872 = vpack.c.b16 %v760, %v759
      %v873 = vpack.c.b16 %v762, %v761
      %v874 = vpack.c.b16 %v764, %v763
      %v875 = vpack.c.b16 %v766, %v765
      %v876 = vpack.c.b16 %v768, %v767
      %v877 = vpack.c.b16 %v770, %v769
      %v878 = vpack.c.b16 %v772, %v771
      %v879 = vpack.c.b16 %v774, %v773
      %v880 = vpack.c.b16 %v776, %v775
      %v881 = vpack.c.b16 %v778, %v777
      %v882 = vpack.c.b16 %v780, %v779
      %v883 = vpack.c.b16 %v782, %v781
      %v884 = vpack.c.b16 %v784, %v783
      %v885 = vpack.c.b16 %v786, %v785
      %v886 = vpack.c.b16 %v788, %v787
      %v887 = vpack.c.b16 %v790, %v789
      %v888 = vpack.c.b16 %v792, %v791
      %v889 = vpack.c.b16 %v794, %v793
      %v890 = vpack.c.b16 %v796, %v795
      %v891 = vpack.c.b16 %v798, %v797
      %v892 = vpack.c.b16 %v800, %v799
      %v893 = vpack.c.b16 %v802, %v801
      %v894 = vpack.c.b16 %v804, %v803
      %v895 = vpack.c.b16 %v806, %v805
      %v896 = vpack.c.b16 %v808, %v807
      %v897 = vpack.c.b16 %v810, %v809
      %v898 = vpack.c.b16 %v812, %v811
      %v899 = vpack.c.b16 %v814, %v813
      %v900 = vpack.c.b16 %v816, %v815
      %v901 = vpack.c.b16 %v818, %v817
      %v902 = vpack.c.b16 %v820, %v819
      %v903 = vpack.c.b16 %v822, %v821
      %v904 = vpack.c.b16 %v824, %v823
      %v905 = vpack.c.b16 %v826, %v825
      %v906 = vpack.c.b16 %v828, %v827
      %v907 = vpack.c.b16 %v830, %v829
      %v908 = vpack.c.b16 %v832, %v831
      %v909 = vpack.c.b16 %v834, %v833
      %v910 = vpack.c.b16 %v836, %v835
      %v911 = vpack.c.b16 %v838, %v837
      %v912 = vpack.c.b16 %v840, %v839
      %985 = vmatprep.subr.bf16.mxu0 0
      %986 = vmatpush1.bf16.msra.mxu0 %v841
      %987 = vmatprep.subr.bf16.mxu0 0
      %988 = vmatpush1.bf16.msra.mxu0 %v842
      %989 = vmatprep.subr.bf16.mxu0 0
      %990 = vmatpush1.bf16.msra.mxu0 %v843
      %991 = vmatprep.subr.bf16.mxu0 0
      %992 = vmatpush1.bf16.msra.mxu0 %v844
      %993 = vmatprep.subr.bf16.mxu0 0
      %994 = vmatpush1.bf16.msra.mxu0 %v845
      %995 = vmatprep.subr.bf16.mxu0 0
      %996 = vmatpush1.bf16.msra.mxu0 %v846
      %997 = vmatprep.subr.bf16.mxu0 0
      %998 = vmatpush1.bf16.msra.mxu0 %v847
      %999 = vmatprep.subr.bf16.mxu0 0
      %1000 = vmatpush1.bf16.msra.mxu0 %v848
      %1001 = vmatprep.subr.bf16.mxu0 0
      %1002 = vmatpush1.bf16.msra.mxu0 %v849
      %1003 = vmatprep.subr.bf16.mxu0 0
      %1004 = vmatpush1.bf16.msra.mxu0 %v850
      %1005 = vmatprep.subr.bf16.mxu0 0
      %1006 = vmatpush1.bf16.msra.mxu0 %v851
      %1007 = vmatprep.subr.bf16.mxu0 0
      %1008 = vmatpush1.bf16.msra.mxu0 %v852
      %1009 = vmatprep.subr.bf16.mxu0 0
      %1010 = vmatpush1.bf16.msra.mxu0 %v853
      %1011 = vmatprep.subr.bf16.mxu0 0
      %1012 = vmatpush1.bf16.msra.mxu0 %v854
      %1013 = vmatprep.subr.bf16.mxu0 0
      %1014 = vmatpush1.bf16.msra.mxu0 %v855
      %1015 = vmatprep.subr.bf16.mxu0 0
      %1016 = vmatpush1.bf16.msra.mxu0 %v856
      %1017 = vmatprep.mubr.bf16.mxu0 %v482
      %1018 = vmatmul.mubr.bf16.gmra.mrb[0].mxu0 %v481
      %v1019 = vpop.f32.mrb[0].mxu0
      %v1020 = vadd.f32 %v367, %v1019
      %v1021 = vpop.f32.mrb[0].mxu0
      %v1022 = vpop.f32.mrb[0].mxu0
      %v1023 = vadd.f32 %v367, %v1022
      %v1024 = vpop.f32.mrb[0].mxu0
      %1025 = vmatprep.mubr.bf16.mxu0 %v491
      %1026 = vmatmul.mubr.bf16.gmra.mrb[0].mxu0 %v490
      %v1027 = vpop.f32.mrb[0].mxu0
      %v1028 = vadd.f32 %v367, %v1027
      %v1029 = vpop.f32.mrb[0].mxu0
      %v1030 = vpop.f32.mrb[0].mxu0
      %v1031 = vadd.f32 %v367, %v1030
      %v1032 = vpop.f32.mrb[0].mxu0
      %1033 = vmatprep.mubr.bf16.mxu0 %v500
      %1034 = vmatmul.mubr.bf16.gmra.mrb[0].mxu0 %v499
      %v1035 = vpop.f32.mrb[0].mxu0
      %v1036 = vadd.f32 %v367, %v1035
      %v1037 = vpop.f32.mrb[0].mxu0
      %v1038 = vpop.f32.mrb[0].mxu0
      %v1039 = vadd.f32 %v367, %v1038
      %v1040 = vpop.f32.mrb[0].mxu0
      %1041 = vmatprep.mubr.bf16.mxu0 %v509
      %1042 = vmatmul.mubr.bf16.gmra.mrb[0].mxu0 %v508
      %v1043 = vpop.f32.mrb[0].mxu0
      %v1044 = vadd.f32 %v367, %v1043
      %v1045 = vpop.f32.mrb[0].mxu0
      %v1046 = vpop.f32.mrb[0].mxu0
      %v1047 = vadd.f32 %v367, %v1046
      %v1048 = vpop.f32.mrb[0].mxu0
      %1049 = vdwg.mxu0
      %1050 = vmatprep.subr.bf16.mxu0 0
      %1051 = vmatpush1.bf16.msra.mxu0 %v857
      %1052 = vmatprep.subr.bf16.mxu0 0
      %1053 = vmatpush1.bf16.msra.mxu0 %v858
      %1054 = vmatprep.subr.bf16.mxu0 0
      %1055 = vmatpush1.bf16.msra.mxu0 %v859
      %1056 = vmatprep.subr.bf16.mxu0 0
      %1057 = vmatpush1.bf16.msra.mxu0 %v860
      %1058 = vmatprep.subr.bf16.mxu0 0
      %1059 = vmatpush1.bf16.msra.mxu0 %v861
      %1060 = vmatprep.subr.bf16.mxu0 0
      %1061 = vmatpush1.bf16.msra.mxu0 %v862
      %1062 = vmatprep.subr.bf16.mxu0 0
      %1063 = vmatpush1.bf16.msra.mxu0 %v863
      %1064 = vmatprep.subr.bf16.mxu0 0
      %1065 = vmatpush1.bf16.msra.mxu0 %v864
      %1066 = vmatprep.subr.bf16.mxu0 0
      %1067 = vmatpush1.bf16.msra.mxu0 %v865
      %1068 = vmatprep.subr.bf16.mxu0 0
      %1069 = vmatpush1.bf16.msra.mxu0 %v866
      %1070 = vmatprep.subr.bf16.mxu0 0
      %1071 = vmatpush1.bf16.msra.mxu0 %v867
      %1072 = vmatprep.subr.bf16.mxu0 0
      %1073 = vmatpush1.bf16.msra.mxu0 %v868
      %1074 = vmatprep.subr.bf16.mxu0 0
      %1075 = vmatpush1.bf16.msra.mxu0 %v869
      %1076 = vmatprep.subr.bf16.mxu0 0
      %1077 = vmatpush1.bf16.msra.mxu0 %v870
      %1078 = vmatprep.subr.bf16.mxu0 0
      %1079 = vmatpush1.bf16.msra.mxu0 %v871
      %1080 = vmatprep.subr.bf16.mxu0 0
      %1081 = vmatpush1.bf16.msra.mxu0 %v872
      %1082 = vmatprep.mubr.bf16.mxu0 %v484
      %1083 = vmatmul.mubr.bf16.gmra.mrb[0].mxu0 %v483
      %v1084 = vpop.f32.mrb[0].mxu0
      %v1085 = vadd.f32 %v1020, %v1084
      %v1086 = vpop.f32.mrb[0].mxu0
      %v1087 = vpop.f32.mrb[0].mxu0
      %v1088 = vadd.f32 %v1023, %v1087
      %v1089 = vpop.f32.mrb[0].mxu0
      %1090 = vmatprep.mubr.bf16.mxu0 %v493
      %1091 = vmatmul.mubr.bf16.gmra.mrb[0].mxu0 %v492
      %v1092 = vpop.f32.mrb[0].mxu0
      %v1093 = vadd.f32 %v1028, %v1092
      %v1094 = vpop.f32.mrb[0].mxu0
      %v1095 = vpop.f32.mrb[0].mxu0
      %v1096 = vadd.f32 %v1031, %v1095
      %v1097 = vpop.f32.mrb[0].mxu0
      %1098 = vmatprep.mubr.bf16.mxu0 %v502
      %1099 = vmatmul.mubr.bf16.gmra.mrb[0].mxu0 %v501
      %v1100 = vpop.f32.mrb[0].mxu0
      %v1101 = vadd.f32 %v1036, %v1100
      %v1102 = vpop.f32.mrb[0].mxu0
      %v1103 = vpop.f32.mrb[0].mxu0
      %v1104 = vadd.f32 %v1039, %v1103
      %v1105 = vpop.f32.mrb[0].mxu0
      %1106 = vmatprep.mubr.bf16.mxu0 %v511
      %1107 = vmatmul.mubr.bf16.gmra.mrb[0].mxu0 %v510
      %v1108 = vpop.f32.mrb[0].mxu0
      %v1109 = vadd.f32 %v1044, %v1108
      %v1110 = vpop.f32.mrb[0].mxu0
      %v1111 = vpop.f32.mrb[0].mxu0
      %v1112 = vadd.f32 %v1047, %v1111
      %v1113 = vpop.f32.mrb[0].mxu0
      %1114 = vdwg.mxu0
      %1115 = vmatprep.subr.bf16.mxu0 0
      %1116 = vmatpush1.bf16.msra.mxu0 %v873
      %1117 = vmatprep.subr.bf16.mxu0 0
      %1118 = vmatpush1.bf16.msra.mxu0 %v874
      %1119 = vmatprep.subr.bf16.mxu0 0
      %1120 = vmatpush1.bf16.msra.mxu0 %v875
      %1121 = vmatprep.subr.bf16.mxu0 0
      %1122 = vmatpush1.bf16.msra.mxu0 %v876
      %1123 = vmatprep.subr.bf16.mxu0 0
      %1124 = vmatpush1.bf16.msra.mxu0 %v877
      %1125 = vmatprep.subr.bf16.mxu0 0
      %1126 = vmatpush1.bf16.msra.mxu0 %v878
      %1127 = vmatprep.subr.bf16.mxu0 0
      %1128 = vmatpush1.bf16.msra.mxu0 %v879
      %1129 = vmatprep.subr.bf16.mxu0 0
      %1130 = vmatpush1.bf16.msra.mxu0 %v880
      %1131 = vmatprep.subr.bf16.mxu0 0
      %1132 = vmatpush1.bf16.msra.mxu0 %v881
      %1133 = vmatprep.subr.bf16.mxu0 0
      %1134 = vmatpush1.bf16.msra.mxu0 %v882
      %1135 = vmatprep.subr.bf16.mxu0 0
      %1136 = vmatpush1.bf16.msra.mxu0 %v883
      %1137 = vmatprep.subr.bf16.mxu0 0
      %1138 = vmatpush1.bf16.msra.mxu0 %v884
      %1139 = vmatprep.subr.bf16.mxu0 0
      %1140 = vmatpush1.bf16.msra.mxu0 %v885
      %1141 = vmatprep.subr.bf16.mxu0 0
      %1142 = vmatpush1.bf16.msra.mxu0 %v886
      %1143 = vmatprep.subr.bf16.mxu0 0
      %1144 = vmatpush1.bf16.msra.mxu0 %v887
      %1145 = vmatprep.subr.bf16.mxu0 0
      %1146 = vmatpush1.bf16.msra.mxu0 %v888
      %1147 = vmatprep.mubr.bf16.mxu0 %v486
      %1148 = vmatmul.mubr.bf16.gmra.mrb[0].mxu0 %v485
      %v1149 = vpop.f32.mrb[0].mxu0
      %v1150 = vadd.f32 %v1085, %v1149
      %v1151 = vpop.f32.mrb[0].mxu0
      %v1152 = vpop.f32.mrb[0].mxu0
      %v1153 = vadd.f32 %v1088, %v1152
      %v1154 = vpop.f32.mrb[0].mxu0
      %1155 = vmatprep.mubr.bf16.mxu0 %v495
      %1156 = vmatmul.mubr.bf16.gmra.mrb[0].mxu0 %v494
      %v1157 = vpop.f32.mrb[0].mxu0
      %v1158 = vadd.f32 %v1093, %v1157
      %v1159 = vpop.f32.mrb[0].mxu0
      %v1160 = vpop.f32.mrb[0].mxu0
      %v1161 = vadd.f32 %v1096, %v1160
      %v1162 = vpop.f32.mrb[0].mxu0
      %1163 = vmatprep.mubr.bf16.mxu0 %v504
      %1164 = vmatmul.mubr.bf16.gmra.mrb[0].mxu0 %v503
      %v1165 = vpop.f32.mrb[0].mxu0
      %v1166 = vadd.f32 %v1101, %v1165
      %v1167 = vpop.f32.mrb[0].mxu0
      %v1168 = vpop.f32.mrb[0].mxu0
      %v1169 = vadd.f32 %v1104, %v1168
      %v1170 = vpop.f32.mrb[0].mxu0
      %1171 = vmatprep.mubr.bf16.mxu0 %v513
      %1172 = vmatmul.mubr.bf16.gmra.mrb[0].mxu0 %v512
      %v1173 = vpop.f32.mrb[0].mxu0
      %v1174 = vadd.f32 %v1109, %v1173
      %v1175 = vpop.f32.mrb[0].mxu0
      %v1176 = vpop.f32.mrb[0].mxu0
      %v1177 = vadd.f32 %v1112, %v1176
      %v1178 = vpop.f32.mrb[0].mxu0
      %1179 = vdwg.mxu0
      %1180 = vmatprep.subr.bf16.mxu0 0
      %1181 = vmatpush1.bf16.msra.mxu0 %v889
      %1182 = vmatprep.subr.bf16.mxu0 0
      %1183 = vmatpush1.bf16.msra.mxu0 %v890
      %1184 = vmatprep.subr.bf16.mxu0 0
      %1185 = vmatpush1.bf16.msra.mxu0 %v891
      %1186 = vmatprep.subr.bf16.mxu0 0
      %1187 = vmatpush1.bf16.msra.mxu0 %v892
      %1188 = vmatprep.subr.bf16.mxu0 0
      %1189 = vmatpush1.bf16.msra.mxu0 %v893
      %1190 = vmatprep.subr.bf16.mxu0 0
      %1191 = vmatpush1.bf16.msra.mxu0 %v894
      %1192 = vmatprep.subr.bf16.mxu0 0
      %1193 = vmatpush1.bf16.msra.mxu0 %v895
      %1194 = vmatprep.subr.bf16.mxu0 0
      %1195 = vmatpush1.bf16.msra.mxu0 %v896
      %1196 = vmatprep.subr.bf16.mxu0 0
      %1197 = vmatpush1.bf16.msra.mxu0 %v897
      %1198 = vmatprep.subr.bf16.mxu0 0
      %1199 = vmatpush1.bf16.msra.mxu0 %v898
      %1200 = vmatprep.subr.bf16.mxu0 0
      %1201 = vmatpush1.bf16.msra.mxu0 %v899
      %1202 = vmatprep.subr.bf16.mxu0 0
      %1203 = vmatpush1.bf16.msra.mxu0 %v900
      %1204 = vmatprep.subr.bf16.mxu0 0
      %1205 = vmatpush1.bf16.msra.mxu0 %v901
      %1206 = vmatprep.subr.bf16.mxu0 0
      %1207 = vmatpush1.bf16.msra.mxu0 %v902
      %1208 = vmatprep.subr.bf16.mxu0 0
      %1209 = vmatpush1.bf16.msra.mxu0 %v903
      %1210 = vmatprep.subr.bf16.mxu0 0
      %1211 = vmatpush1.bf16.msra.mxu0 %v904
      %1212 = vmatprep.mubr.bf16.mxu0 %v488
      %1213 = vmatmul.mubr.bf16.gmra.mrb[0].mxu0 %v487
      %v1214 = vpop.f32.mrb[0].mxu0
      %v1215 = vadd.f32 %v1150, %v1214
      %v1216 = vpop.f32.mrb[0].mxu0
      %v1217 = vpop.f32.mrb[0].mxu0
      %v1218 = vadd.f32 %v1153, %v1217
      %v1219 = vpop.f32.mrb[0].mxu0
      %1220 = vmatprep.mubr.bf16.mxu0 %v497
      %1221 = vmatmul.mubr.bf16.gmra.mrb[0].mxu0 %v496
      %v1222 = vpop.f32.mrb[0].mxu0
      %v1223 = vadd.f32 %v1158, %v1222
      %v1224 = vpop.f32.mrb[0].mxu0
      %v1225 = vpop.f32.mrb[0].mxu0
      %v1226 = vadd.f32 %v1161, %v1225
      %v1227 = vpop.f32.mrb[0].mxu0
      %1228 = vmatprep.mubr.bf16.mxu0 %v506
      %1229 = vmatmul.mubr.bf16.gmra.mrb[0].mxu0 %v505
      %v1230 = vpop.f32.mrb[0].mxu0
      %v1231 = vadd.f32 %v1166, %v1230
      %v1232 = vpop.f32.mrb[0].mxu0
      %v1233 = vpop.f32.mrb[0].mxu0
      %v1234 = vadd.f32 %v1169, %v1233
      %v1235 = vpop.f32.mrb[0].mxu0
      %1236 = vmatprep.mubr.bf16.mxu0 %v515
      %1237 = vmatmul.mubr.bf16.gmra.mrb[0].mxu0 %v514
      %v1238 = vpop.f32.mrb[0].mxu0
      %v1239 = vadd.f32 %v1174, %v1238
      %v1240 = vpop.f32.mrb[0].mxu0
      %v1241 = vpop.f32.mrb[0].mxu0
      %v1242 = vadd.f32 %v1177, %v1241
      %v1243 = vpop.f32.mrb[0].mxu0
      %1244 = vdwg.mxu0
      %1245 = vmatprep.subr.bf16.mxu0 0
      %1246 = vmatpush1.bf16.msra.mxu0 %v905
      %1247 = vmatprep.subr.bf16.mxu0 0
      %1248 = vmatpush1.bf16.msra.mxu0 %v906
      %1249 = vmatprep.subr.bf16.mxu0 0
      %1250 = vmatpush1.bf16.msra.mxu0 %v907
      %1251 = vmatprep.subr.bf16.mxu0 0
      %1252 = vmatpush1.bf16.msra.mxu0 %v908
      %1253 = vmatprep.subr.bf16.mxu0 0
      %1254 = vmatpush1.bf16.msra.mxu0 %v909
      %1255 = vmatprep.subr.bf16.mxu0 0
      %1256 = vmatpush1.bf16.msra.mxu0 %v910
      %1257 = vmatprep.subr.bf16.mxu0 0
      %1258 = vmatpush1.bf16.msra.mxu0 %v911
      %1259 = vmatprep.subr.bf16.mxu0 0
      %1260 = vmatpush1.bf16.msra.mxu0 %v912
      %1261 = vmatprep.subr.bf16.mxu0 0
      %1262 = vmatpush1.bf16.msra.mxu0 0
      %1263 = vmatprep.subr.bf16.mxu0 0
      %1264 = vmatpush1.bf16.msra.mxu0 0
      %1265 = vmatprep.subr.bf16.mxu0 0
      %1266 = vmatpush1.bf16.msra.mxu0 0
      %1267 = vmatprep.subr.bf16.mxu0 0
      %1268 = vmatpush1.bf16.msra.mxu0 0
      %1269 = vmatprep.subr.bf16.mxu0 0
      %1270 = vmatpush1.bf16.msra.mxu0 0
      %1271 = vmatprep.subr.bf16.mxu0 0
      %1272 = vmatpush1.bf16.msra.mxu0 0
      %1273 = vmatprep.subr.bf16.mxu0 0
      %1274 = vmatpush1.bf16.msra.mxu0 0
      %1275 = vmatprep.subr.bf16.mxu0 0
      %1276 = vmatpush1.bf16.msra.mxu0 0
      %1277 = vmatprep.mubr.bf16.mxu0 0
      %1278 = vmatmul.mubr.bf16.gmra.mrb[0].mxu0 %v489
      %v1279 = vpop.f32.mrb[0].mxu0
      %v1280 = vadd.f32 %v1215, %v1279
      %v1281 = vpop.f32.mrb[0].mxu0
      %v1282 = vpop.f32.mrb[0].mxu0
      %v1283 = vadd.f32 %v1218, %v1282
      %v1284 = vpop.f32.mrb[0].mxu0
      %1285 = vmatprep.mubr.bf16.mxu0 0
      %1286 = vmatmul.mubr.bf16.gmra.mrb[0].mxu0 %v498
      %v1287 = vpop.f32.mrb[0].mxu0
      %v1288 = vadd.f32 %v1223, %v1287
      %v1289 = vpop.f32.mrb[0].mxu0
      %v1290 = vpop.f32.mrb[0].mxu0
      %v1291 = vadd.f32 %v1226, %v1290
      %v1292 = vpop.f32.mrb[0].mxu0
      %1293 = vmatprep.mubr.bf16.mxu0 0
      %1294 = vmatmul.mubr.bf16.gmra.mrb[0].mxu0 %v507
      %v1295 = vpop.f32.mrb[0].mxu0
      %v1296 = vadd.f32 %v1231, %v1295
      %v1297 = vpop.f32.mrb[0].mxu0
      %v1298 = vpop.f32.mrb[0].mxu0
      %v1299 = vadd.f32 %v1234, %v1298
      %v1300 = vpop.f32.mrb[0].mxu0
      %1301 = vmatprep.mubr.bf16.mxu0 0
      %1302 = vmatmul.mubr.bf16.gmra.mrb[0].mxu0 %v516
      %v1303 = vpop.f32.mrb[0].mxu0
      %v1304 = vadd.f32 %v1239, %v1303
      %v1305 = vpop.f32.mrb[0].mxu0
      %v1306 = vpop.f32.mrb[0].mxu0
      %v1307 = vadd.f32 %v1242, %v1306
      %v1308 = vpop.f32.mrb[0].mxu0
      %1309 = vdwg.mxu0
      %v1310 = vmul.f32 %v1280, 0.01
      %v1311 = vmul.f32 %v1283, 0.01
      %v1312 = vmul.f32 %v1288, 0.01
      %v1313 = vmul.f32 %v1291, 0.01
      %v1314 = vmul.f32 %v1296, 0.01
      %v1315 = vmul.f32 %v1299, 0.01
      %v1316 = vmul.f32 %v1304, 0.01
      %v1317 = vmul.f32 %v1307, 0.01
      %v1318 = vmax.f32 %v1280, %v1310
      %v1319 = vmax.f32 %v1283, %v1311
      %v1320 = vmax.f32 %v1288, %v1312
      %v1321 = vmax.f32 %v1291, %v1313
      %v1322 = vmax.f32 %v1296, %v1314
      %v1323 = vmax.f32 %v1299, %v1315
      %v1324 = vmax.f32 %v1304, %v1316
      %v1325 = vmax.f32 %v1307, %v1317
      %v1326 = vpack.c.bf16 %v1319, %v1318
      %v1327 = vpack.c.bf16 %v1321, %v1320
      %v1328 = vpack.c.bf16 %v1323, %v1322
      %v1329 = vpack.c.bf16 %v1325, %v1324
      %v1334 = vunpack.c.l.b16 %v1326
      %v1335 = vunpack.c.h.b16 %v1326
      %v1336 = vunpack.c.l.b16 %v1327
      %v1337 = vunpack.c.h.b16 %v1327
      %v1338 = vunpack.c.l.b16 %v1328
      %v1339 = vunpack.c.h.b16 %v1328
      %v1340 = vunpack.c.l.b16 %v1329
      %v1341 = vunpack.c.h.b16 %v1329
      %v1342 = vpack.c.b16 %v1334, %v1334
      %v1343 = vpack.c.b16 %v1335, %v1335
      %v1344 = vpack.c.b16 %v1336, %v1336
      %v1345 = vpack.c.b16 %v1337, %v1337
      %v1346 = vpack.c.b16 %v1338, %v1338
      %v1347 = vpack.c.b16 %v1339, %v1339
      %v1348 = vpack.c.b16 %v1340, %v1340
      %v1349 = vpack.c.b16 %v1341, %v1341
      %1358 = vst [vmem:[%s175] sm:$0xf] %v1342
      %1359 = vst [vmem:[%s175 + $0x4] sm:$0xf] %v1343
      %1360 = vst [vmem:[%s175 + $0x8] sm:$0xf] %v1344
      %1361 = vst [vmem:[%s175 + $0xc] sm:$0xf] %v1345
      %1362 = vst [vmem:[%s175 + $0x10] sm:$0xf] %v1346
      %1363 = vst [vmem:[%s175 + $0x14] sm:$0xf] %v1347
      %1364 = vst [vmem:[%s175 + $0x18] sm:$0xf] %v1348
      %1365 = vst [vmem:[%s175 + $0x1c] sm:$0xf] %v1349
      %s1366 = smul.u32 8, %s14
      %p1367 = scmp.lt.s32.totalorder %s1366, 15
      %s1368 = scalar_select %p1367, %s1366, 15
      %s1369 = smul.addr %s1368, 4
      %s1370 = scalar_lea.vmem %s3, %s1369
      // Predicated region
      $region33: #{clagnosco_autoencoder_forward.11} parent=31 // pred_check
        %p1371 = pneg %p100
      $region34: #{clagnosco_autoencoder_forward.11} parent=31 // pred_check_branch
        %1373 = sbr.rel (%p1371) target = $region36
      $region35: #{clagnosco_autoencoder_forward.11} parent=31 // pred_region
        %s1374 = smul.u32 8, %s14
      $region36: #{clagnosco_autoencoder_forward.11} parent=31 // pred_fallthru
        _
    $region32: #{clagnosco_autoencoder_forward.11} parent=5 // pred_fallthru
      _
    %p1375 = scmp.le.s32.totalorder 2, %s9
    // Predicated region
    $region37: #{clagnosco_autoencoder_forward.11} parent=5 // pred_check
      %p1376 = pneg %p1375
    $region38: #{clagnosco_autoencoder_forward.11} parent=5 // pred_check_branch
      %1378 = sbr.rel (%p1376) target = $region40
    $region39: #{clagnosco_autoencoder_forward.11} parent=5 // pred_region
      %s1379 = ssub.s32 %s9, 2
      // Predicated region
      $region41: #{clagnosco_autoencoder_forward.11} parent=39 // pred_check
        %p1380 = pneg %p106
      $region42: #{clagnosco_autoencoder_forward.11} parent=39 // pred_check_branch
        %1382 = sbr.rel (%p1380) target = $region44
      $region43: #{clagnosco_autoencoder_forward.11} parent=39 // pred_region
        %s1383 = smul.u32 8, %s15
        %p1384 = scmp.lt.s32.totalorder %s1383, 15
        %s1385 = scalar_select %p1384, %s1383, 15
        %s1386 = smul.addr %s1385, 4
        %s1387 = scalar_lea.vmem %s3, %s1386
      $region44: #{clagnosco_autoencoder_forward.11} parent=39 // pred_fallthru
        _
    $region40: #{clagnosco_autoencoder_forward.11} parent=5 // pred_fallthru
      _
  $region6: #{clagnosco_autoencoder_forward.11} parent=0 // loop_footer
    %s13 = sadd.s32 1, %s9
  $region7: #{clagnosco_autoencoder_forward.11} parent=0 // loop_footer_branch
    %8 = sbr.rel target = $region3
  $region8: #{clagnosco_autoencoder_forward.11} parent=0 // loop_exit
    _

// kernel: clagnosco_autoencoder_forward.12
$region0: #{clagnosco_autoencoder_forward.12}
  #allocation0 [shape = 'u32[]', space=smem, size = 0x4, offset = 0x4, fixed_abs, tag = 'smem constant byte address 0x4 - core index']
  #allocation1 [shape = 'u32[144,128]{1,0:T(1,128)}', space=vmem, size = 0x12000, scoped, tag = 'internal scratch']
  %s0 = inlined_call_operand.vmem [shape: bf16[8,512], index: 0, kind: input, shape index: {}]
  %s1 = inlined_call_operand.vmem [shape: bf16[512,128], index: 1, kind: input, shape index: {}]
  %s2 = inlined_call_operand.vmem [shape: f32[1,128], index: 2, kind: input, shape index: {}]
  %s3 = inlined_call_operand.vmem [shape: bf16[128,128], index: 3, kind: input, shape index: {}]
  %s4 = inlined_call_operand.vmem [shape: f32[1,128], index: 4, kind: input, shape index: {}]
  %s5 = inlined_call_operand.vmem [shape: bf16[8,128], index: 5, kind: output, shape index: {}]
  %s6 = sld [smem:[#allocation0]]
  $region30: #{clagnosco_autoencoder_forward.12} parent=0
    _
  %s8 = ssub.s32 1, %s6
  %s9 = scalar_select 0, %s8, %s6
  // Predicated region
  $region2: #{clagnosco_autoencoder_forward.12} parent=0 // pred_check
    _
  $region3: #{clagnosco_autoencoder_forward.12} parent=0 // pred_check_branch
    %11 = sbr.rel (0) target = $region5
  $region4: #{clagnosco_autoencoder_forward.12} parent=0 // pred_region
    _
  $region5: #{clagnosco_autoencoder_forward.12} parent=0 // pred_fallthru
    _
  // Predicated region
  $region6: #{clagnosco_autoencoder_forward.12} parent=0 // pred_check
    _
  $region7: #{clagnosco_autoencoder_forward.12} parent=0 // pred_check_branch
    %13 = sbr.rel (0) target = $region9
  $region8: #{clagnosco_autoencoder_forward.12} parent=0 // pred_region
    _
  $region9: #{clagnosco_autoencoder_forward.12} parent=0 // pred_fallthru
    _
  // Predicated region
  $region10: #{clagnosco_autoencoder_forward.12} parent=0 // pred_check
    _
  $region11: #{clagnosco_autoencoder_forward.12} parent=0 // pred_check_branch
    %15 = sbr.rel (0) target = $region13
  $region12: #{clagnosco_autoencoder_forward.12} parent=0 // pred_region
    _
  $region13: #{clagnosco_autoencoder_forward.12} parent=0 // pred_fallthru
    _
  // Predicated region
  $region14: #{clagnosco_autoencoder_forward.12} parent=0 // pred_check
    _
  $region15: #{clagnosco_autoencoder_forward.12} parent=0 // pred_check_branch
    %17 = sbr.rel (0) target = $region17
  $region16: #{clagnosco_autoencoder_forward.12} parent=0 // pred_region
    _
  $region17: #{clagnosco_autoencoder_forward.12} parent=0 // pred_fallthru
    _
  // Predicated region
  $region18: #{clagnosco_autoencoder_forward.12} parent=0 // pred_check
    _
  $region19: #{clagnosco_autoencoder_forward.12} parent=0 // pred_check_branch
    %19 = sbr.rel (0) target = $region21
  $region20: #{clagnosco_autoencoder_forward.12} parent=0 // pred_region
    _
  $region21: #{clagnosco_autoencoder_forward.12} parent=0 // pred_fallthru
    _
  %v21 = vld [vmem:[%s0] sm:$0xff]
  %v22 = vld [vmem:[%s0 + $0x8] sm:$0xff]
  %v23 = vld [vmem:[%s1] sm:$0xf]
  %v24 = vld [vmem:[%s1 + $0x4] sm:$0xf]
  %v25 = vld [vmem:[%s1 + $0x8] sm:$0xf]
  %v26 = vld [vmem:[%s1 + $0xc] sm:$0xf]
  %v27 = vld [vmem:[%s1 + $0x10] sm:$0xf]
  %v28 = vld [vmem:[%s1 + $0x14] sm:$0xf]
  %v29 = vld [vmem:[%s1 + $0x18] sm:$0xf]
  %v30 = vld [vmem:[%s1 + $0x1c] sm:$0xf]
  %v31 = vld [vmem:[%s1 + $0x20] sm:$0xf]
  %v32 = vld [vmem:[%s1 + $0x24] sm:$0xf]
  %v33 = vld [vmem:[%s1 + $0x28] sm:$0xf]
  %v34 = vld [vmem:[%s1 + $0x2c] sm:$0xf]
  %v35 = vld [vmem:[%s1 + $0x30] sm:$0xf]
  %v36 = vld [vmem:[%s1 + $0x34] sm:$0xf]
  %v37 = vld [vmem:[%s1 + $0x38] sm:$0xf]
  %v38 = vld [vmem:[%s1 + $0x3c] sm:$0xf]
  %v39 = vld [vmem:[%s1 + $0x40] sm:$0xf]
  %v40 = vld [vmem:[%s1 + $0x44] sm:$0xf]
  %v41 = vld [vmem:[%s1 + $0x48] sm:$0xf]
  %v42 = vld [vmem:[%s1 + $0x4c] sm:$0xf]
  %v43 = vld [vmem:[%s1 + $0x50] sm:$0xf]
  %v44 = vld [vmem:[%s1 + $0x54] sm:$0xf]
  %v45 = vld [vmem:[%s1 + $0x58] sm:$0xf]
  %v46 = vld [vmem:[%s1 + $0x5c] sm:$0xf]
  %v47 = vld [vmem:[%s1 + $0x60] sm:$0xf]
  %v48 = vld [vmem:[%s1 + $0x64] sm:$0xf]
  %v49 = vld [vmem:[%s1 + $0x68] sm:$0xf]
  %v50 = vld [vmem:[%s1 + $0x6c] sm:$0xf]
  %v51 = vld [vmem:[%s1 + $0x70] sm:$0xf]
  %v52 = vld [vmem:[%s1 + $0x74] sm:$0xf]
  %v53 = vld [vmem:[%s1 + $0x78] sm:$0xf]
  %v54 = vld [vmem:[%s1 + $0x7c] sm:$0xf]
  %v55 = vld [vmem:[%s1 + $0x80] sm:$0xf]
  %v56 = vld [vmem:[%s1 + $0x84] sm:$0xf]
  %v57 = vld [vmem:[%s1 + $0x88] sm:$0xf]
  %v58 = vld [vmem:[%s1 + $0x8c] sm:$0xf]
  %v59 = vld [vmem:[%s1 + $0x90] sm:$0xf]
  %v60 = vld [vmem:[%s1 + $0x94] sm:$0xf]
  %v61 = vld [vmem:[%s1 + $0x98] sm:$0xf]
  %v62 = vld [vmem:[%s1 + $0x9c] sm:$0xf]
  %v63 = vld [vmem:[%s1 + $0xa0] sm:$0xf]
  %v64 = vld [vmem:[%s1 + $0xa4] sm:$0xf]
  %v65 = vld [vmem:[%s1 + $0xa8] sm:$0xf]
  %v66 = vld [vmem:[%s1 + $0xac] sm:$0xf]
  %v67 = vld [vmem:[%s1 + $0xb0] sm:$0xf]
  %v68 = vld [vmem:[%s1 + $0xb4] sm:$0xf]
  %v69 = vld [vmem:[%s1 + $0xb8] sm:$0xf]
  %v70 = vld [vmem:[%s1 + $0xbc] sm:$0xf]
  %v71 = vld [vmem:[%s1 + $0xc0] sm:$0xf]
  %v72 = vld [vmem:[%s1 + $0xc4] sm:$0xf]
  %v73 = vld [vmem:[%s1 + $0xc8] sm:$0xf]
  %v74 = vld [vmem:[%s1 + $0xcc] sm:$0xf]
  %v75 = vld [vmem:[%s1 + $0xd0] sm:$0xf]
  %v76 = vld [vmem:[%s1 + $0xd4] sm:$0xf]
  %v77 = vld [vmem:[%s1 + $0xd8] sm:$0xf]
  %v78 = vld [vmem:[%s1 + $0xdc] sm:$0xf]
  %v79 = vld [vmem:[%s1 + $0xe0] sm:$0xf]
  %v80 = vld [vmem:[%s1 + $0xe4] sm:$0xf]
  %v81 = vld [vmem:[%s1 + $0xe8] sm:$0xf]
  %v82 = vld [vmem:[%s1 + $0xec] sm:$0xf]
  %v83 = vld [vmem:[%s1 + $0xf0] sm:$0xf]
  %v84 = vld [vmem:[%s1 + $0xf4] sm:$0xf]
  %v85 = vld [vmem:[%s1 + $0xf8] sm:$0xf]
  %v86 = vld [vmem:[%s1 + $0xfc] sm:$0xf]
  %v87 = vld [vmem:[%s2] sm:$0x1]
  %v89 = vlaneseq
  %v90 = vshrl.u32 %v89, 7
  %v91 = vsub.s32 0, %v90
  %v92 = vrot.slane %v87, %v91
  %v96 = vunpack.c.l.b16 %v21
  %v97 = vunpack.c.h.b16 %v21
  %v98 = vunpack.c.l.b16 %v22
  %v99 = vunpack.c.h.b16 %v22
  %v100 = vpack.c.b16 %v96, %v96
  %v101 = vpack.c.b16 %v97, %v97
  %v102 = vpack.c.b16 %v98, %v98
  %v103 = vpack.c.b16 %v99, %v99
  %v172 = vunpack.c.l.b16 %v23
  %v173 = vunpack.c.l.b16 %v24
  %v174 = vunpack.c.l.b16 %v25
  %v175 = vunpack.c.l.b16 %v26
  %v176 = vunpack.c.l.b16 %v27
  %v177 = vunpack.c.l.b16 %v28
  %v178 = vunpack.c.l.b16 %v29
  %v179 = vunpack.c.l.b16 %v30
  %v180 = vunpack.c.l.b16 %v31
  %v181 = vunpack.c.l.b16 %v32
  %v182 = vunpack.c.l.b16 %v33
  %v183 = vunpack.c.l.b16 %v34
  %v184 = vunpack.c.l.b16 %v35
  %v185 = vunpack.c.l.b16 %v36
  %v186 = vunpack.c.l.b16 %v37
  %v187 = vunpack.c.l.b16 %v38
  %v188 = vunpack.c.l.b16 %v39
  %v189 = vunpack.c.l.b16 %v40
  %v190 = vunpack.c.l.b16 %v41
  %v191 = vunpack.c.l.b16 %v42
  %v192 = vunpack.c.l.b16 %v43
  %v193 = vunpack.c.l.b16 %v44
  %v194 = vunpack.c.l.b16 %v45
  %v195 = vunpack.c.l.b16 %v46
  %v196 = vunpack.c.l.b16 %v47
  %v197 = vunpack.c.l.b16 %v48
  %v198 = vunpack.c.l.b16 %v49
  %v199 = vunpack.c.l.b16 %v50
  %v200 = vunpack.c.l.b16 %v51
  %v201 = vunpack.c.l.b16 %v52
  %v202 = vunpack.c.l.b16 %v53
  %v203 = vunpack.c.l.b16 %v54
  %v204 = vunpack.c.l.b16 %v55
  %v205 = vunpack.c.l.b16 %v56
  %v206 = vunpack.c.l.b16 %v57
  %v207 = vunpack.c.l.b16 %v58
  %v208 = vunpack.c.l.b16 %v59
  %v209 = vunpack.c.l.b16 %v60
  %v210 = vunpack.c.l.b16 %v61
  %v211 = vunpack.c.l.b16 %v62
  %v212 = vunpack.c.l.b16 %v63
  %v213 = vunpack.c.l.b16 %v64
  %v214 = vunpack.c.l.b16 %v65
  %v215 = vunpack.c.l.b16 %v66
  %v216 = vunpack.c.l.b16 %v67
  %v217 = vunpack.c.l.b16 %v68
  %v218 = vunpack.c.l.b16 %v69
  %v219 = vunpack.c.l.b16 %v70
  %v220 = vunpack.c.l.b16 %v71
  %v221 = vunpack.c.l.b16 %v72
  %v222 = vunpack.c.l.b16 %v73
  %v223 = vunpack.c.l.b16 %v74
  %v224 = vunpack.c.l.b16 %v75
  %v225 = vunpack.c.l.b16 %v76
  %v226 = vunpack.c.l.b16 %v77
  %v227 = vunpack.c.l.b16 %v78
  %v228 = vunpack.c.l.b16 %v79
  %v229 = vunpack.c.l.b16 %v80
  %v230 = vunpack.c.l.b16 %v81
  %v231 = vunpack.c.l.b16 %v82
  %v232 = vunpack.c.l.b16 %v83
  %v233 = vunpack.c.l.b16 %v84
  %v234 = vunpack.c.l.b16 %v85
  %v235 = vunpack.c.l.b16 %v86
  %v236 = vpack.c.b16 %v173, %v172
  %v237 = vpack.c.b16 %v175, %v174
  %v238 = vpack.c.b16 %v177, %v176
  %v239 = vpack.c.b16 %v179, %v178
  %v240 = vpack.c.b16 %v181, %v180
  %v241 = vpack.c.b16 %v183, %v182
  %v242 = vpack.c.b16 %v185, %v184
  %v243 = vpack.c.b16 %v187, %v186
  %v244 = vpack.c.b16 %v189, %v188
  %v245 = vpack.c.b16 %v191, %v190
  %v246 = vpack.c.b16 %v193, %v192
  %v247 = vpack.c.b16 %v195, %v194
  %v248 = vpack.c.b16 %v197, %v196
  %v249 = vpack.c.b16 %v199, %v198
  %v250 = vpack.c.b16 %v201, %v200
  %v251 = vpack.c.b16 %v203, %v202
  %v252 = vpack.c.b16 %v205, %v204
  %v253 = vpack.c.b16 %v207, %v206
  %v254 = vpack.c.b16 %v209, %v208
  %v255 = vpack.c.b16 %v211, %v210
  %v256 = vpack.c.b16 %v213, %v212
  %v257 = vpack.c.b16 %v215, %v214
  %v258 = vpack.c.b16 %v217, %v216
  %v259 = vpack.c.b16 %v219, %v218
  %v260 = vpack.c.b16 %v221, %v220
  %v261 = vpack.c.b16 %v223, %v222
  %v262 = vpack.c.b16 %v225, %v224
  %v263 = vpack.c.b16 %v227, %v226
  %v264 = vpack.c.b16 %v229, %v228
  %v265 = vpack.c.b16 %v231, %v230
  %v266 = vpack.c.b16 %v233, %v232
  %v267 = vpack.c.b16 %v235, %v234
  %300 = vmatprep.subr.bf16.mxu0 0
  %301 = vmatpush1.bf16.msra.mxu0 %v236
  %302 = vmatprep.subr.bf16.mxu0 0
  %303 = vmatpush1.bf16.msra.mxu0 %v237
  %304 = vmatprep.subr.bf16.mxu0 0
  %305 = vmatpush1.bf16.msra.mxu0 %v238
  %306 = vmatprep.subr.bf16.mxu0 0
  %307 = vmatpush1.bf16.msra.mxu0 %v239
  %308 = vmatprep.subr.bf16.mxu0 0
  %309 = vmatpush1.bf16.msra.mxu0 %v240
  %310 = vmatprep.subr.bf16.mxu0 0
  %311 = vmatpush1.bf16.msra.mxu0 %v241
  %312 = vmatprep.subr.bf16.mxu0 0
  %313 = vmatpush1.bf16.msra.mxu0 %v242
  %314 = vmatprep.subr.bf16.mxu0 0
  %315 = vmatpush1.bf16.msra.mxu0 %v243
  %316 = vmatprep.subr.bf16.mxu0 0
  %317 = vmatpush1.bf16.msra.mxu0 %v244
  %318 = vmatprep.subr.bf16.mxu0 0
  %319 = vmatpush1.bf16.msra.mxu0 %v245
  %320 = vmatprep.subr.bf16.mxu0 0
  %321 = vmatpush1.bf16.msra.mxu0 %v246
  %322 = vmatprep.subr.bf16.mxu0 0
  %323 = vmatpush1.bf16.msra.mxu0 %v247
  %324 = vmatprep.subr.bf16.mxu0 0
  %325 = vmatpush1.bf16.msra.mxu0 %v248
  %326 = vmatprep.subr.bf16.mxu0 0
  %327 = vmatpush1.bf16.msra.mxu0 %v249
  %328 = vmatprep.subr.bf16.mxu0 0
  %329 = vmatpush1.bf16.msra.mxu0 %v250
  %330 = vmatprep.subr.bf16.mxu0 0
  %331 = vmatpush1.bf16.msra.mxu0 %v251
  %332 = vmatprep.mubr.bf16.mxu0 %v101
  %333 = vmatmul.mubr.bf16.gmra.mrb[0].mxu0 %v100
  %v334 = vpop.f32.mrb[0].mxu0
  %v335 = vadd.f32 %v92, %v334
  %v336 = vpop.f32.mrb[0].mxu0
  %v337 = vpop.f32.mrb[0].mxu0
  %v338 = vpop.f32.mrb[0].mxu0
  %339 = vdwg.mxu0
  %340 = vmatprep.subr.bf16.mxu0 0
  %341 = vmatpush1.bf16.msra.mxu0 %v252
  %342 = vmatprep.subr.bf16.mxu0 0
  %343 = vmatpush1.bf16.msra.mxu0 %v253
  %344 = vmatprep.subr.bf16.mxu0 0
  %345 = vmatpush1.bf16.msra.mxu0 %v254
  %346 = vmatprep.subr.bf16.mxu0 0
  %347 = vmatpush1.bf16.msra.mxu0 %v255
  %348 = vmatprep.subr.bf16.mxu0 0
  %349 = vmatpush1.bf16.msra.mxu0 %v256
  %350 = vmatprep.subr.bf16.mxu0 0
  %351 = vmatpush1.bf16.msra.mxu0 %v257
  %352 = vmatprep.subr.bf16.mxu0 0
  %353 = vmatpush1.bf16.msra.mxu0 %v258
  %354 = vmatprep.subr.bf16.mxu0 0
  %355 = vmatpush1.bf16.msra.mxu0 %v259
  %356 = vmatprep.subr.bf16.mxu0 0
  %357 = vmatpush1.bf16.msra.mxu0 %v260
  %358 = vmatprep.subr.bf16.mxu0 0
  %359 = vmatpush1.bf16.msra.mxu0 %v261
  %360 = vmatprep.subr.bf16.mxu0 0
  %361 = vmatpush1.bf16.msra.mxu0 %v262
  %362 = vmatprep.subr.bf16.mxu0 0
  %363 = vmatpush1.bf16.msra.mxu0 %v263
  %364 = vmatprep.subr.bf16.mxu0 0
  %365 = vmatpush1.bf16.msra.mxu0 %v264
  %366 = vmatprep.subr.bf16.mxu0 0
  %367 = vmatpush1.bf16.msra.mxu0 %v265
  %368 = vmatprep.subr.bf16.mxu0 0
  %369 = vmatpush1.bf16.msra.mxu0 %v266
  %370 = vmatprep.subr.bf16.mxu0 0
  %371 = vmatpush1.bf16.msra.mxu0 %v267
  %372 = vmatprep.mubr.bf16.mxu0 %v103
  %373 = vmatmul.mubr.bf16.gmra.mrb[0].mxu0 %v102
  %v374 = vpop.f32.mrb[0].mxu0
  %v375 = vadd.f32 %v335, %v374
  %v376 = vpop.f32.mrb[0].mxu0
  %v377 = vpop.f32.mrb[0].mxu0
  %v378 = vpop.f32.mrb[0].mxu0
  %379 = vdwg.mxu0
  %v380 = vmul.f32 %v375, 0.01
  %v381 = vmax.f32 %v375, %v380
  %v382 = vpack.c.bf16 %v381, %v381
  %v383 = vld [vmem:[%s3] sm:$0xf]
  %v384 = vld [vmem:[%s3 + $0x4] sm:$0xf]
  %v385 = vld [vmem:[%s3 + $0x8] sm:$0xf]
  %v386 = vld [vmem:[%s3 + $0xc] sm:$0xf]
  %v387 = vld [vmem:[%s3 + $0x10] sm:$0xf]
  %v388 = vld [vmem:[%s3 + $0x14] sm:$0xf]
  %v389 = vld [vmem:[%s3 + $0x18] sm:$0xf]
  %v390 = vld [vmem:[%s3 + $0x1c] sm:$0xf]
  %v391 = vld [vmem:[%s3 + $0x20] sm:$0xf]
  %v392 = vld [vmem:[%s3 + $0x24] sm:$0xf]
  %v393 = vld [vmem:[%s3 + $0x28] sm:$0xf]
  %v394 = vld [vmem:[%s3 + $0x2c] sm:$0xf]
  %v395 = vld [vmem:[%s3 + $0x30] sm:$0xf]
  %v396 = vld [vmem:[%s3 + $0x34] sm:$0xf]
  %v397 = vld [vmem:[%s3 + $0x38] sm:$0xf]
  %v398 = vld [vmem:[%s3 + $0x3c] sm:$0xf]
  %v399 = vld [vmem:[%s4] sm:$0x1]
  %v401 = vlaneseq
  %v402 = vshrl.u32 %v401, 7
  %v403 = vsub.s32 0, %v402
  %v404 = vrot.slane %v399, %v403
  %v422 = vunpack.c.l.b16 %v383
  %v423 = vunpack.c.l.b16 %v384
  %v424 = vunpack.c.l.b16 %v385
  %v425 = vunpack.c.l.b16 %v386
  %v426 = vunpack.c.l.b16 %v387
  %v427 = vunpack.c.l.b16 %v388
  %v428 = vunpack.c.l.b16 %v389
  %v429 = vunpack.c.l.b16 %v390
  %v430 = vunpack.c.l.b16 %v391
  %v431 = vunpack.c.l.b16 %v392
  %v432 = vunpack.c.l.b16 %v393
  %v433 = vunpack.c.l.b16 %v394
  %v434 = vunpack.c.l.b16 %v395
  %v435 = vunpack.c.l.b16 %v396
  %v436 = vunpack.c.l.b16 %v397
  %v437 = vunpack.c.l.b16 %v398
  %v438 = vpack.c.b16 %v423, %v422
  %v439 = vpack.c.b16 %v425, %v424
  %v440 = vpack.c.b16 %v427, %v426
  %v441 = vpack.c.b16 %v429, %v428
  %v442 = vpack.c.b16 %v431, %v430
  %v443 = vpack.c.b16 %v433, %v432
  %v444 = vpack.c.b16 %v435, %v434
  %v445 = vpack.c.b16 %v437, %v436
  %454 = vmatprep.subr.bf16.mxu0 0
  %455 = vmatpush1.bf16.msra.mxu0 %v438
  %456 = vmatprep.subr.bf16.mxu0 0
  %457 = vmatpush1.bf16.msra.mxu0 %v439
  %458 = vmatprep.subr.bf16.mxu0 0
  %459 = vmatpush1.bf16.msra.mxu0 %v440
  %460 = vmatprep.subr.bf16.mxu0 0
  %461 = vmatpush1.bf16.msra.mxu0 %v441
  %462 = vmatprep.subr.bf16.mxu0 0
  %463 = vmatpush1.bf16.msra.mxu0 %v442
  %464 = vmatprep.subr.bf16.mxu0 0
  %465 = vmatpush1.bf16.msra.mxu0 %v443
  %466 = vmatprep.subr.bf16.mxu0 0
  %467 = vmatpush1.bf16.msra.mxu0 %v444
  %468 = vmatprep.subr.bf16.mxu0 0
  %469 = vmatpush1.bf16.msra.mxu0 %v445
  %470 = vmatprep.subr.bf16.mxu0 0
  %471 = vmatpush1.bf16.msra.mxu0 0
  %472 = vmatprep.subr.bf16.mxu0 0
  %473 = vmatpush1.bf16.msra.mxu0 0
  %474 = vmatprep.subr.bf16.mxu0 0
  %475 = vmatpush1.bf16.msra.mxu0 0
  %476 = vmatprep.subr.bf16.mxu0 0
  %477 = vmatpush1.bf16.msra.mxu0 0
  %478 = vmatprep.subr.bf16.mxu0 0
  %479 = vmatpush1.bf16.msra.mxu0 0
  %480 = vmatprep.subr.bf16.mxu0 0
  %481 = vmatpush1.bf16.msra.mxu0 0
  %482 = vmatprep.subr.bf16.mxu0 0
  %483 = vmatpush1.bf16.msra.mxu0 0
  %484 = vmatprep.subr.bf16.mxu0 0
  %485 = vmatpush1.bf16.msra.mxu0 0
  %486 = vmatprep.mubr.bf16.mxu0 0
  %487 = vmatmul.mubr.bf16.gmra.mrb[0].mxu0 %v382
  %v488 = vpop.f32.mrb[0].mxu0
  %v489 = vadd.f32 %v404, %v488
  %v490 = vpop.f32.mrb[0].mxu0
  %v491 = vpop.f32.mrb[0].mxu0
  %v492 = vpop.f32.mrb[0].mxu0
  %493 = vdwg.mxu0
  %v494 = vpack.c.bf16 %v489, %v489
  %495 = vst [vmem:[%s5] sm:$0xf] %v494
  // Predicated region
  $region22: #{clagnosco_autoencoder_forward.12} parent=0 // pred_check
    _
  $region23: #{clagnosco_autoencoder_forward.12} parent=0 // pred_check_branch
    %497 = sbr.rel (0) target = $region25
  $region24: #{clagnosco_autoencoder_forward.12} parent=0 // pred_region
    _
  $region25: #{clagnosco_autoencoder_forward.12} parent=0 // pred_fallthru
    _
  // Predicated region
  $region26: #{clagnosco_autoencoder_forward.12} parent=0 // pred_check
    _
  $region27: #{clagnosco_autoencoder_forward.12} parent=0 // pred_check_branch
    %499 = sbr.rel (0) target = $region29
  $region28: #{clagnosco_autoencoder_forward.12} parent=0 // pred_region
    _
  $region29: #{clagnosco_autoencoder_forward.12} parent=0 // pred_fallthru
    _

// kernel: clagnosco_autoencoder_forward.13
$region0: #{clagnosco_autoencoder_forward.13}
  #allocation0 [shape = 'u32[]', space=smem, size = 0x4, offset = 0x4, fixed_abs, tag = 'smem constant byte address 0x4 - core index']
  #allocation1 [shape = 'u32[144,128]{1,0:T(1,128)}', space=vmem, size = 0x12000, scoped, tag = 'internal scratch']
  %s0 = inlined_call_operand.vmem [shape: bf16[8,32], index: 0, kind: input, shape index: {}]
  %s1 = inlined_call_operand.vmem [shape: bf16[32,256], index: 1, kind: input, shape index: {}]
  %s2 = inlined_call_operand.vmem [shape: f32[1,256], index: 2, kind: input, shape index: {}]
  %s3 = inlined_call_operand.vmem [shape: bf16[256,256], index: 3, kind: input, shape index: {}]
  %s4 = inlined_call_operand.vmem [shape: f32[1,256], index: 4, kind: input, shape index: {}]
  %s5 = inlined_call_operand.vmem [shape: bf16[8,256], index: 5, kind: output, shape index: {}]
  %s6 = sld [smem:[#allocation0]]
  $region30: #{clagnosco_autoencoder_forward.13} parent=0
    _
  %s8 = ssub.s32 1, %s6
  %s9 = scalar_select 0, %s8, %s6
  // Predicated region
  $region2: #{clagnosco_autoencoder_forward.13} parent=0 // pred_check
    _
  $region3: #{clagnosco_autoencoder_forward.13} parent=0 // pred_check_branch
    %11 = sbr.rel (0) target = $region5
  $region4: #{clagnosco_autoencoder_forward.13} parent=0 // pred_region
    _
  $region5: #{clagnosco_autoencoder_forward.13} parent=0 // pred_fallthru
    _
  // Predicated region
  $region6: #{clagnosco_autoencoder_forward.13} parent=0 // pred_check
    _
  $region7: #{clagnosco_autoencoder_forward.13} parent=0 // pred_check_branch
    %13 = sbr.rel (0) target = $region9
  $region8: #{clagnosco_autoencoder_forward.13} parent=0 // pred_region
    _
  $region9: #{clagnosco_autoencoder_forward.13} parent=0 // pred_fallthru
    _
  // Predicated region
  $region10: #{clagnosco_autoencoder_forward.13} parent=0 // pred_check
    _
  $region11: #{clagnosco_autoencoder_forward.13} parent=0 // pred_check_branch
    %15 = sbr.rel (0) target = $region13
  $region12: #{clagnosco_autoencoder_forward.13} parent=0 // pred_region
    _
  $region13: #{clagnosco_autoencoder_forward.13} parent=0 // pred_fallthru
    _
  // Predicated region
  $region14: #{clagnosco_autoencoder_forward.13} parent=0 // pred_check
    _
  $region15: #{clagnosco_autoencoder_forward.13} parent=0 // pred_check_branch
    %17 = sbr.rel (0) target = $region17
  $region16: #{clagnosco_autoencoder_forward.13} parent=0 // pred_region
    _
  $region17: #{clagnosco_autoencoder_forward.13} parent=0 // pred_fallthru
    _
  // Predicated region
  $region18: #{clagnosco_autoencoder_forward.13} parent=0 // pred_check
    _
  $region19: #{clagnosco_autoencoder_forward.13} parent=0 // pred_check_branch
    %19 = sbr.rel (0) target = $region21
  $region20: #{clagnosco_autoencoder_forward.13} parent=0 // pred_region
    _
  $region21: #{clagnosco_autoencoder_forward.13} parent=0 // pred_fallthru
    _
  %v21 = vld [vmem:[%s0] sm:$0xf]
  %v22 = vld [vmem:[%s1] sm:$0xff]
  %v23 = vld [vmem:[%s1 + $0x8] sm:$0xff]
  %v24 = vld [vmem:[%s1 + $0x10] sm:$0xff]
  %v25 = vld [vmem:[%s1 + $0x18] sm:$0xff]
  %v26 = vld [vmem:[%s2] sm:$0x3]
  %v28 = vlaneseq
  %v29 = vshrl.u32 %v28, 7
  %v30 = vsub.s32 0, %v29
  %v31 = vrot.slane %v26, %v30
  %v32 = vlaneseq
  %v33 = vshrl.u32 %v32, 7
  %v34 = vsub.s32 1, %v33
  %v35 = vrot.slane %v26, %v34
  %v42 = vunpack.c.l.b16 %v22
  %v43 = vunpack.c.h.b16 %v22
  %v44 = vunpack.c.l.b16 %v23
  %v45 = vunpack.c.h.b16 %v23
  %v46 = vunpack.c.l.b16 %v24
  %v47 = vunpack.c.h.b16 %v24
  %v48 = vunpack.c.l.b16 %v25
  %v49 = vunpack.c.h.b16 %v25
  %v50 = vpack.c.b16 %v44, %v42
  %v51 = vpack.c.b16 %v45, %v43
  %v52 = vpack.c.b16 %v48, %v46
  %v53 = vpack.c.b16 %v49, %v47
  %vm58 = vcmask 261120
  %v60 = vsel %vm58, %v21, 0
  %62 = vmatprep.subr.bf16.mxu0 %v51
  %63 = vmatpush1.bf16.msra.mxu0 %v50
  %64 = vmatprep.subr.bf16.mxu0 %v53
  %65 = vmatpush1.bf16.msra.mxu0 %v52
  %66 = vmatprep.subr.bf16.mxu0 0
  %67 = vmatpush1.bf16.msra.mxu0 0
  %68 = vmatprep.subr.bf16.mxu0 0
  %69 = vmatpush1.bf16.msra.mxu0 0
  %70 = vmatprep.subr.bf16.mxu0 0
  %71 = vmatpush1.bf16.msra.mxu0 0
  %72 = vmatprep.subr.bf16.mxu0 0
  %73 = vmatpush1.bf16.msra.mxu0 0
  %74 = vmatprep.subr.bf16.mxu0 0
  %75 = vmatpush1.bf16.msra.mxu0 0
  %76 = vmatprep.subr.bf16.mxu0 0
  %77 = vmatpush1.bf16.msra.mxu0 0
  %78 = vmatprep.subr.bf16.mxu0 0
  %79 = vmatpush1.bf16.msra.mxu0 0
  %80 = vmatprep.subr.bf16.mxu0 0
  %81 = vmatpush1.bf16.msra.mxu0 0
  %82 = vmatprep.subr.bf16.mxu0 0
  %83 = vmatpush1.bf16.msra.mxu0 0
  %84 = vmatprep.subr.bf16.mxu0 0
  %85 = vmatpush1.bf16.msra.mxu0 0
  %86 = vmatprep.subr.bf16.mxu0 0
  %87 = vmatpush1.bf16.msra.mxu0 0
  %88 = vmatprep.subr.bf16.mxu0 0
  %89 = vmatpush1.bf16.msra.mxu0 0
  %90 = vmatprep.subr.bf16.mxu0 0
  %91 = vmatpush1.bf16.msra.mxu0 0
  %92 = vmatprep.subr.bf16.mxu0 0
  %93 = vmatpush1.bf16.msra.mxu0 0
  %94 = vmatprep.mubr.bf16.mxu0 0
  %95 = vmatmul.mubr.bf16.gmra.mrb[0].mxu0 %v60
  %v96 = vpop.f32.mrb[0].mxu0
  %v97 = vadd.f32 %v31, %v96
  %v98 = vpop.f32.mrb[0].mxu0
  %v99 = vadd.f32 %v35, %v98
  %v100 = vpop.f32.mrb[0].mxu0
  %v101 = vpop.f32.mrb[0].mxu0
  %102 = vdwg.mxu0
  %v103 = vmul.f32 %v97, 0.01
  %v104 = vmul.f32 %v99, 0.01
  %v105 = vmax.f32 %v97, %v103
  %v106 = vmax.f32 %v99, %v104
  %v107 = vpack.c.bf16 %v105, %v105
  %v108 = vpack.c.bf16 %v106, %v106
  %v109 = vld [vmem:[%s3] sm:$0xff]
  %v110 = vld [vmem:[%s3 + $0x8] sm:$0xff]
  %v111 = vld [vmem:[%s3 + $0x10] sm:$0xff]
  %v112 = vld [vmem:[%s3 + $0x18] sm:$0xff]
  %v113 = vld [vmem:[%s3 + $0x20] sm:$0xff]
  %v114 = vld [vmem:[%s3 + $0x28] sm:$0xff]
  %v115 = vld [vmem:[%s3 + $0x30] sm:$0xff]
  %v116 = vld [vmem:[%s3 + $0x38] sm:$0xff]
  %v117 = vld [vmem:[%s3 + $0x40] sm:$0xff]
  %v118 = vld [vmem:[%s3 + $0x48] sm:$0xff]
  %v119 = vld [vmem:[%s3 + $0x50] sm:$0xff]
  %v120 = vld [vmem:[%s3 + $0x58] sm:$0xff]
  %v121 = vld [vmem:[%s3 + $0x60] sm:$0xff]
  %v122 = vld [vmem:[%s3 + $0x68] sm:$0xff]
  %v123 = vld [vmem:[%s3 + $0x70] sm:$0xff]
  %v124 = vld [vmem:[%s3 + $0x78] sm:$0xff]
  %v125 = vld [vmem:[%s3 + $0x80] sm:$0xff]
  %v126 = vld [vmem:[%s3 + $0x88] sm:$0xff]
  %v127 = vld [vmem:[%s3 + $0x90] sm:$0xff]
  %v128 = vld [vmem:[%s3 + $0x98] sm:$0xff]
  %v129 = vld [vmem:[%s3 + $0xa0] sm:$0xff]
  %v130 = vld [vmem:[%s3 + $0xa8] sm:$0xff]
  %v131 = vld [vmem:[%s3 + $0xb0] sm:$0xff]
  %v132 = vld [vmem:[%s3 + $0xb8] sm:$0xff]
  %v133 = vld [vmem:[%s3 + $0xc0] sm:$0xff]
  %v134 = vld [vmem:[%s3 + $0xc8] sm:$0xff]
  %v135 = vld [vmem:[%s3 + $0xd0] sm:$0xff]
  %v136 = vld [vmem:[%s3 + $0xd8] sm:$0xff]
  %v137 = vld [vmem:[%s3 + $0xe0] sm:$0xff]
  %v138 = vld [vmem:[%s3 + $0xe8] sm:$0xff]
  %v139 = vld [vmem:[%s3 + $0xf0] sm:$0xff]
  %v140 = vld [vmem:[%s3 + $0xf8] sm:$0xff]
  %v141 = vld [vmem:[%s4] sm:$0x3]
  %v143 = vlaneseq
  %v144 = vshrl.u32 %v143, 7
  %v145 = vsub.s32 0, %v144
  %v146 = vrot.slane %v141, %v145
  %v147 = vlaneseq
  %v148 = vshrl.u32 %v147, 7
  %v149 = vsub.s32 1, %v148
  %v150 = vrot.slane %v141, %v149
  %v185 = vunpack.c.l.b16 %v109
  %v186 = vunpack.c.h.b16 %v109
  %v187 = vunpack.c.l.b16 %v110
  %v188 = vunpack.c.h.b16 %v110
  %v189 = vunpack.c.l.b16 %v111
  %v190 = vunpack.c.h.b16 %v111
  %v191 = vunpack.c.l.b16 %v112
  %v192 = vunpack.c.h.b16 %v112
  %v193 = vunpack.c.l.b16 %v113
  %v194 = vunpack.c.h.b16 %v113
  %v195 = vunpack.c.l.b16 %v114
  %v196 = vunpack.c.h.b16 %v114
  %v197 = vunpack.c.l.b16 %v115
  %v198 = vunpack.c.h.b16 %v115
  %v199 = vunpack.c.l.b16 %v116
  %v200 = vunpack.c.h.b16 %v116
  %v201 = vunpack.c.l.b16 %v117
  %v202 = vunpack.c.h.b16 %v117
  %v203 = vunpack.c.l.b16 %v118
  %v204 = vunpack.c.h.b16 %v118
  %v205 = vunpack.c.l.b16 %v119
  %v206 = vunpack.c.h.b16 %v119
  %v207 = vunpack.c.l.b16 %v120
  %v208 = vunpack.c.h.b16 %v120
  %v209 = vunpack.c.l.b16 %v121
  %v210 = vunpack.c.h.b16 %v121
  %v211 = vunpack.c.l.b16 %v122
  %v212 = vunpack.c.h.b16 %v122
  %v213 = vunpack.c.l.b16 %v123
  %v214 = vunpack.c.h.b16 %v123
  %v215 = vunpack.c.l.b16 %v124
  %v216 = vunpack.c.h.b16 %v124
  %v217 = vunpack.c.l.b16 %v125
  %v218 = vunpack.c.h.b16 %v125
  %v219 = vunpack.c.l.b16 %v126
  %v220 = vunpack.c.h.b16 %v126
  %v221 = vunpack.c.l.b16 %v127
  %v222 = vunpack.c.h.b16 %v127
  %v223 = vunpack.c.l.b16 %v128
  %v224 = vunpack.c.h.b16 %v128
  %v225 = vunpack.c.l.b16 %v129
  %v226 = vunpack.c.h.b16 %v129
  %v227 = vunpack.c.l.b16 %v130
  %v228 = vunpack.c.h.b16 %v130
  %v229 = vunpack.c.l.b16 %v131
  %v230 = vunpack.c.h.b16 %v131
  %v231 = vunpack.c.l.b16 %v132
  %v232 = vunpack.c.h.b16 %v132
  %v233 = vunpack.c.l.b16 %v133
  %v234 = vunpack.c.h.b16 %v133
  %v235 = vunpack.c.l.b16 %v134
  %v236 = vunpack.c.h.b16 %v134
  %v237 = vunpack.c.l.b16 %v135
  %v238 = vunpack.c.h.b16 %v135
  %v239 = vunpack.c.l.b16 %v136
  %v240 = vunpack.c.h.b16 %v136
  %v241 = vunpack.c.l.b16 %v137
  %v242 = vunpack.c.h.b16 %v137
  %v243 = vunpack.c.l.b16 %v138
  %v244 = vunpack.c.h.b16 %v138
  %v245 = vunpack.c.l.b16 %v139
  %v246 = vunpack.c.h.b16 %v139
  %v247 = vunpack.c.l.b16 %v140
  %v248 = vunpack.c.h.b16 %v140
  %v249 = vpack.c.b16 %v187, %v185
  %v250 = vpack.c.b16 %v188, %v186
  %v251 = vpack.c.b16 %v191, %v189
  %v252 = vpack.c.b16 %v192, %v190
  %v253 = vpack.c.b16 %v195, %v193
  %v254 = vpack.c.b16 %v196, %v194
  %v255 = vpack.c.b16 %v199, %v197
  %v256 = vpack.c.b16 %v200, %v198
  %v257 = vpack.c.b16 %v203, %v201
  %v258 = vpack.c.b16 %v204, %v202
  %v259 = vpack.c.b16 %v207, %v205
  %v260 = vpack.c.b16 %v208, %v206
  %v261 = vpack.c.b16 %v211, %v209
  %v262 = vpack.c.b16 %v212, %v210
  %v263 = vpack.c.b16 %v215, %v213
  %v264 = vpack.c.b16 %v216, %v214
  %v265 = vpack.c.b16 %v219, %v217
  %v266 = vpack.c.b16 %v220, %v218
  %v267 = vpack.c.b16 %v223, %v221
  %v268 = vpack.c.b16 %v224, %v222
  %v269 = vpack.c.b16 %v227, %v225
  %v270 = vpack.c.b16 %v228, %v226
  %v271 = vpack.c.b16 %v231, %v229
  %v272 = vpack.c.b16 %v232, %v230
  %v273 = vpack.c.b16 %v235, %v233
  %v274 = vpack.c.b16 %v236, %v234
  %v275 = vpack.c.b16 %v239, %v237
  %v276 = vpack.c.b16 %v240, %v238
  %v277 = vpack.c.b16 %v243, %v241
  %v278 = vpack.c.b16 %v244, %v242
  %v279 = vpack.c.b16 %v247, %v245
  %v280 = vpack.c.b16 %v248, %v246
  %313 = vmatprep.subr.bf16.mxu0 %v250
  %314 = vmatpush1.bf16.msra.mxu0 %v249
  %315 = vmatprep.subr.bf16.mxu0 %v252
  %316 = vmatpush1.bf16.msra.mxu0 %v251
  %317 = vmatprep.subr.bf16.mxu0 %v254
  %318 = vmatpush1.bf16.msra.mxu0 %v253
  %319 = vmatprep.subr.bf16.mxu0 %v256
  %320 = vmatpush1.bf16.msra.mxu0 %v255
  %321 = vmatprep.subr.bf16.mxu0 %v258
  %322 = vmatpush1.bf16.msra.mxu0 %v257
  %323 = vmatprep.subr.bf16.mxu0 %v260
  %324 = vmatpush1.bf16.msra.mxu0 %v259
  %325 = vmatprep.subr.bf16.mxu0 %v262
  %326 = vmatpush1.bf16.msra.mxu0 %v261
  %327 = vmatprep.subr.bf16.mxu0 %v264
  %328 = vmatpush1.bf16.msra.mxu0 %v263
  %329 = vmatprep.subr.bf16.mxu0 %v266
  %330 = vmatpush1.bf16.msra.mxu0 %v265
  %331 = vmatprep.subr.bf16.mxu0 %v268
  %332 = vmatpush1.bf16.msra.mxu0 %v267
  %333 = vmatprep.subr.bf16.mxu0 %v270
  %334 = vmatpush1.bf16.msra.mxu0 %v269
  %335 = vmatprep.subr.bf16.mxu0 %v272
  %336 = vmatpush1.bf16.msra.mxu0 %v271
  %337 = vmatprep.subr.bf16.mxu0 %v274
  %338 = vmatpush1.bf16.msra.mxu0 %v273
  %339 = vmatprep.subr.bf16.mxu0 %v276
  %340 = vmatpush1.bf16.msra.mxu0 %v275
  %341 = vmatprep.subr.bf16.mxu0 %v278
  %342 = vmatpush1.bf16.msra.mxu0 %v277
  %343 = vmatprep.subr.bf16.mxu0 %v280
  %344 = vmatpush1.bf16.msra.mxu0 %v279
  %345 = vmatprep.mubr.bf16.mxu0 %v108
  %346 = vmatmul.mubr.bf16.gmra.mrb[0].mxu0 %v107
  %v347 = vpop.f32.mrb[0].mxu0
  %v348 = vadd.f32 %v146, %v347
  %v349 = vpop.f32.mrb[0].mxu0
  %v350 = vadd.f32 %v150, %v349
  %v351 = vpop.f32.mrb[0].mxu0
  %v352 = vpop.f32.mrb[0].mxu0
  %353 = vdwg.mxu0
  %v354 = vmul.f32 %v348, 0.01
  %v355 = vmul.f32 %v350, 0.01
  %v356 = vmax.f32 %v348, %v354
  %v357 = vmax.f32 %v350, %v355
  %v358 = vpack.c.bf16 %v356, %v356
  %v359 = vpack.c.bf16 %v357, %v357
  %v362 = vunpack.c.l.b16 %v358
  %v363 = vunpack.c.l.b16 %v359
  %v364 = vpack.c.b16 %v363, %v362
  %366 = vst [vmem:[%s5] sm:$0xff] %v364
  // Predicated region
  $region22: #{clagnosco_autoencoder_forward.13} parent=0 // pred_check
    _
  $region23: #{clagnosco_autoencoder_forward.13} parent=0 // pred_check_branch
    %368 = sbr.rel (0) target = $region25
  $region24: #{clagnosco_autoencoder_forward.13} parent=0 // pred_region
    _
  $region25: #{clagnosco_autoencoder_forward.13} parent=0 // pred_fallthru
    _
  // Predicated region
  $region26: #{clagnosco_autoencoder_forward.13} parent=0 // pred_check
    _
  $region27: #{clagnosco_autoencoder_forward.13} parent=0 // pred_check_branch
    %370 = sbr.rel (0) target = $region29
  $region28: #{clagnosco_autoencoder_forward.13} parent=0 // pred_region
    _
  $region29: #{clagnosco_autoencoder_forward.13} parent=0 // pred_fallthru
    _

// kernel: tile.23
$region0: #{tile.23}
  #allocation0 [shape = 's32[1]{0}', space=sflag, size = 0x4, scoped, tag = 'scoped memory for tile.23']
  %s0 = inlined_call_operand.vmem [shape: f32[128], index: 0, kind: input, shape index: {}]
  %s1 = inlined_call_operand.vmem [shape: f32[4,128], index: 1, kind: output, shape index: {}]
  // Predicated region
  $region2: #{tile.23} parent=0 // pred_check
    _
  $region3: #{tile.23} parent=0 // pred_check_branch
    %3 = sbr.rel (0) target = $region5
  $region4: #{tile.23} parent=0 // pred_region
    _
  $region5: #{tile.23} parent=0 // pred_fallthru
    _
  %v4 = vld [vmem:[%s0] ss:$0 sm:$0xff]
  %5 = vst [vmem:[%s1] sm:$0xf] %v4

// kernel: clagnosco_autoencoder_forward.14
$region0: #{clagnosco_autoencoder_forward.14}
  #allocation0 [shape = 'u32[]', space=smem, size = 0x4, offset = 0x4, fixed_abs, tag = 'smem constant byte address 0x4 - core index']
  #allocation1 [shape = 'u32[144,128]{1,0:T(1,128)}', space=vmem, size = 0x12000, scoped, tag = 'internal scratch']
  %s0 = inlined_call_operand.vmem [shape: bf16[8,2304], index: 0, kind: input, shape index: {}]
  %s1 = inlined_call_operand.vmem [shape: bf16[2304,512], index: 1, kind: input, shape index: {}]
  %s2 = inlined_call_operand.vmem [shape: f32[1,512], index: 2, kind: input, shape index: {}]
  %s3 = inlined_call_operand.vmem [shape: bf16[8,512], index: 3, kind: output, shape index: {}]
  %s4 = sld [smem:[#allocation0]]
  $region22: #{clagnosco_autoencoder_forward.14} parent=0
    _
  %s6 = ssub.s32 1, %s4
  %s7 = scalar_select 0, %s6, %s4
  // Predicated region
  $region2: #{clagnosco_autoencoder_forward.14} parent=0 // pred_check
    _
  $region3: #{clagnosco_autoencoder_forward.14} parent=0 // pred_check_branch
    %9 = sbr.rel (0) target = $region5
  $region4: #{clagnosco_autoencoder_forward.14} parent=0 // pred_region
    _
  $region5: #{clagnosco_autoencoder_forward.14} parent=0 // pred_fallthru
    _
  // Predicated region
  $region6: #{clagnosco_autoencoder_forward.14} parent=0 // pred_check
    _
  $region7: #{clagnosco_autoencoder_forward.14} parent=0 // pred_check_branch
    %11 = sbr.rel (0) target = $region9
  $region8: #{clagnosco_autoencoder_forward.14} parent=0 // pred_region
    _
  $region9: #{clagnosco_autoencoder_forward.14} parent=0 // pred_fallthru
    _
  // Predicated region
  $region10: #{clagnosco_autoencoder_forward.14} parent=0 // pred_check
    _
  $region11: #{clagnosco_autoencoder_forward.14} parent=0 // pred_check_branch
    %13 = sbr.rel (0) target = $region13
  $region12: #{clagnosco_autoencoder_forward.14} parent=0 // pred_region
    _
  $region13: #{clagnosco_autoencoder_forward.14} parent=0 // pred_fallthru
    _
  %v14 = vld [vmem:[%s0] sm:$0xff]
  %v15 = vld [vmem:[%s0 + $0x8] sm:$0xff]
  %v16 = vld [vmem:[%s0 + $0x10] sm:$0xff]
  %v17 = vld [vmem:[%s0 + $0x18] sm:$0xff]
  %v18 = vld [vmem:[%s0 + $0x20] sm:$0xff]
  %v19 = vld [vmem:[%s0 + $0x28] sm:$0xff]
  %v20 = vld [vmem:[%s0 + $0x30] sm:$0xff]
  %v21 = vld [vmem:[%s0 + $0x38] sm:$0xff]
  %v22 = vld [vmem:[%s0 + $0x40] sm:$0xff]
  %v23 = vld [vmem:[%s1] sm:$0xff]
  %v24 = vld [vmem:[%s1 + $0x8] sm:$0xff]
  %v25 = vld [vmem:[%s1 + $0x10] sm:$0xff]
  %v26 = vld [vmem:[%s1 + $0x18] sm:$0xff]
  %v27 = vld [vmem:[%s1 + $0x20] sm:$0xff]
  %v28 = vld [vmem:[%s1 + $0x28] sm:$0xff]
  %v29 = vld [vmem:[%s1 + $0x30] sm:$0xff]
  %v30 = vld [vmem:[%s1 + $0x38] sm:$0xff]
  %v31 = vld [vmem:[%s1 + $0x40] sm:$0xff]
  %v32 = vld [vmem:[%s1 + $0x48] sm:$0xff]
  %v33 = vld [vmem:[%s1 + $0x50] sm:$0xff]
  %v34 = vld [vmem:[%s1 + $0x58] sm:$0xff]
  %v35 = vld [vmem:[%s1 + $0x60] sm:$0xff]
  %v36 = vld [vmem:[%s1 + $0x68] sm:$0xff]
  %v37 = vld [vmem:[%s1 + $0x70] sm:$0xff]
  %v38 = vld [vmem:[%s1 + $0x78] sm:$0xff]
  %v39 = vld [vmem:[%s1 + $0x80] sm:$0xff]
  %v40 = vld [vmem:[%s1 + $0x88] sm:$0xff]
  %v41 = vld [vmem:[%s1 + $0x90] sm:$0xff]
  %v42 = vld [vmem:[%s1 + $0x98] sm:$0xff]
  %v43 = vld [vmem:[%s1 + $0xa0] sm:$0xff]
  %v44 = vld [vmem:[%s1 + $0xa8] sm:$0xff]
  %v45 = vld [vmem:[%s1 + $0xb0] sm:$0xff]
  %v46 = vld [vmem:[%s1 + $0xb8] sm:$0xff]
  %v47 = vld [vmem:[%s1 + $0xc0] sm:$0xff]
  %v48 = vld [vmem:[%s1 + $0xc8] sm:$0xff]
  %v49 = vld [vmem:[%s1 + $0xd0] sm:$0xff]
  %v50 = vld [vmem:[%s1 + $0xd8] sm:$0xff]
  %v51 = vld [vmem:[%s1 + $0xe0] sm:$0xff]
  %v52 = vld [vmem:[%s1 + $0xe8] sm:$0xff]
  %v53 = vld [vmem:[%s1 + $0xf0] sm:$0xff]
  %v54 = vld [vmem:[%s1 + $0xf8] sm:$0xff]
  %v55 = vld [vmem:[%s1 + $0x100] sm:$0xff]
  %v56 = vld [vmem:[%s1 + $0x108] sm:$0xff]
  %v57 = vld [vmem:[%s1 + $0x110] sm:$0xff]
  %v58 = vld [vmem:[%s1 + $0x118] sm:$0xff]
  %v59 = vld [vmem:[%s1 + $0x120] sm:$0xff]
  %v60 = vld [vmem:[%s1 + $0x128] sm:$0xff]
  %v61 = vld [vmem:[%s1 + $0x130] sm:$0xff]
  %v62 = vld [vmem:[%s1 + $0x138] sm:$0xff]
  %v63 = vld [vmem:[%s1 + $0x140] sm:$0xff]
  %v64 = vld [vmem:[%s1 + $0x148] sm:$0xff]
  %v65 = vld [vmem:[%s1 + $0x150] sm:$0xff]
  %v66 = vld [vmem:[%s1 + $0x158] sm:$0xff]
  %v67 = vld [vmem:[%s1 + $0x160] sm:$0xff]
  %v68 = vld [vmem:[%s1 + $0x168] sm:$0xff]
  %v69 = vld [vmem:[%s1 + $0x170] sm:$0xff]
  %v70 = vld [vmem:[%s1 + $0x178] sm:$0xff]
  %v71 = vld [vmem:[%s1 + $0x180] sm:$0xff]
  %v72 = vld [vmem:[%s1 + $0x188] sm:$0xff]
  %v73 = vld [vmem:[%s1 + $0x190] sm:$0xff]
  %v74 = vld [vmem:[%s1 + $0x198] sm:$0xff]
  %v75 = vld [vmem:[%s1 + $0x1a0] sm:$0xff]
  %v76 = vld [vmem:[%s1 + $0x1a8] sm:$0xff]
  %v77 = vld [vmem:[%s1 + $0x1b0] sm:$0xff]
  %v78 = vld [vmem:[%s1 + $0x1b8] sm:$0xff]
  %v79 = vld [vmem:[%s1 + $0x1c0] sm:$0xff]
  %v80 = vld [vmem:[%s1 + $0x1c8] sm:$0xff]
  %v81 = vld [vmem:[%s1 + $0x1d0] sm:$0xff]
  %v82 = vld [vmem:[%s1 + $0x1d8] sm:$0xff]
  %v83 = vld [vmem:[%s1 + $0x1e0] sm:$0xff]
  %v84 = vld [vmem:[%s1 + $0x1e8] sm:$0xff]
  %v85 = vld [vmem:[%s1 + $0x1f0] sm:$0xff]
  %v86 = vld [vmem:[%s1 + $0x1f8] sm:$0xff]
  %v87 = vld [vmem:[%s1 + $0x200] sm:$0xff]
  %v88 = vld [vmem:[%s1 + $0x208] sm:$0xff]
  %v89 = vld [vmem:[%s1 + $0x210] sm:$0xff]
  %v90 = vld [vmem:[%s1 + $0x218] sm:$0xff]
  %v91 = vld [vmem:[%s1 + $0x220] sm:$0xff]
  %v92 = vld [vmem:[%s1 + $0x228] sm:$0xff]
  %v93 = vld [vmem:[%s1 + $0x230] sm:$0xff]
  %v94 = vld [vmem:[%s1 + $0x238] sm:$0xff]
  %v95 = vld [vmem:[%s1 + $0x240] sm:$0xff]
  %v96 = vld [vmem:[%s1 + $0x248] sm:$0xff]
  %v97 = vld [vmem:[%s1 + $0x250] sm:$0xff]
  %v98 = vld [vmem:[%s1 + $0x258] sm:$0xff]
  %v99 = vld [vmem:[%s1 + $0x260] sm:$0xff]
  %v100 = vld [vmem:[%s1 + $0x268] sm:$0xff]
  %v101 = vld [vmem:[%s1 + $0x270] sm:$0xff]
  %v102 = vld [vmem:[%s1 + $0x278] sm:$0xff]
  %v103 = vld [vmem:[%s1 + $0x280] sm:$0xff]
  %v104 = vld [vmem:[%s1 + $0x288] sm:$0xff]
  %v105 = vld [vmem:[%s1 + $0x290] sm:$0xff]
  %v106 = vld [vmem:[%s1 + $0x298] sm:$0xff]
  %v107 = vld [vmem:[%s1 + $0x2a0] sm:$0xff]
  %v108 = vld [vmem:[%s1 + $0x2a8] sm:$0xff]
  %v109 = vld [vmem:[%s1 + $0x2b0] sm:$0xff]
  %v110 = vld [vmem:[%s1 + $0x2b8] sm:$0xff]
  %v111 = vld [vmem:[%s1 + $0x2c0] sm:$0xff]
  %v112 = vld [vmem:[%s1 + $0x2c8] sm:$0xff]
  %v113 = vld [vmem:[%s1 + $0x2d0] sm:$0xff]
  %v114 = vld [vmem:[%s1 + $0x2d8] sm:$0xff]
  %v115 = vld [vmem:[%s1 + $0x2e0] sm:$0xff]
  %v116 = vld [vmem:[%s1 + $0x2e8] sm:$0xff]
  %v117 = vld [vmem:[%s1 + $0x2f0] sm:$0xff]
  %v118 = vld [vmem:[%s1 + $0x2f8] sm:$0xff]
  %v119 = vld [vmem:[%s1 + $0x300] sm:$0xff]
  %v120 = vld [vmem:[%s1 + $0x308] sm:$0xff]
  %v121 = vld [vmem:[%s1 + $0x310] sm:$0xff]
  %v122 = vld [vmem:[%s1 + $0x318] sm:$0xff]
  %v123 = vld [vmem:[%s1 + $0x320] sm:$0xff]
  %v124 = vld [vmem:[%s1 + $0x328] sm:$0xff]
  %v125 = vld [vmem:[%s1 + $0x330] sm:$0xff]
  %v126 = vld [vmem:[%s1 + $0x338] sm:$0xff]
  %v127 = vld [vmem:[%s1 + $0x340] sm:$0xff]
  %v128 = vld [vmem:[%s1 + $0x348] sm:$0xff]
  %v129 = vld [vmem:[%s1 + $0x350] sm:$0xff]
  %v130 = vld [vmem:[%s1 + $0x358] sm:$0xff]
  %v131 = vld [vmem:[%s1 + $0x360] sm:$0xff]
  %v132 = vld [vmem:[%s1 + $0x368] sm:$0xff]
  %v133 = vld [vmem:[%s1 + $0x370] sm:$0xff]
  %v134 = vld [vmem:[%s1 + $0x378] sm:$0xff]
  %v135 = vld [vmem:[%s1 + $0x380] sm:$0xff]
  %v136 = vld [vmem:[%s1 + $0x388] sm:$0xff]
  %v137 = vld [vmem:[%s1 + $0x390] sm:$0xff]
  %v138 = vld [vmem:[%s1 + $0x398] sm:$0xff]
  %v139 = vld [vmem:[%s1 + $0x3a0] sm:$0xff]
  %v140 = vld [vmem:[%s1 + $0x3a8] sm:$0xff]
  %v141 = vld [vmem:[%s1 + $0x3b0] sm:$0xff]
  %v142 = vld [vmem:[%s1 + $0x3b8] sm:$0xff]
  %v143 = vld [vmem:[%s1 + $0x3c0] sm:$0xff]
  %v144 = vld [vmem:[%s1 + $0x3c8] sm:$0xff]
  %v145 = vld [vmem:[%s1 + $0x3d0] sm:$0xff]
  %v146 = vld [vmem:[%s1 + $0x3d8] sm:$0xff]
  %v147 = vld [vmem:[%s1 + $0x3e0] sm:$0xff]
  %v148 = vld [vmem:[%s1 + $0x3e8] sm:$0xff]
  %v149 = vld [vmem:[%s1 + $0x3f0] sm:$0xff]
  %v150 = vld [vmem:[%s1 + $0x3f8] sm:$0xff]
  %v151 = vld [vmem:[%s1 + $0x400] sm:$0xff]
  %v152 = vld [vmem:[%s1 + $0x408] sm:$0xff]
  %v153 = vld [vmem:[%s1 + $0x410] sm:$0xff]
  %v154 = vld [vmem:[%s1 + $0x418] sm:$0xff]
  %v155 = vld [vmem:[%s1 + $0x420] sm:$0xff]
  %v156 = vld [vmem:[%s1 + $0x428] sm:$0xff]
  %v157 = vld [vmem:[%s1 + $0x430] sm:$0xff]
  %v158 = vld [vmem:[%s1 + $0x438] sm:$0xff]
  %v159 = vld [vmem:[%s1 + $0x440] sm:$0xff]
  %v160 = vld [vmem:[%s1 + $0x448] sm:$0xff]
  %v161 = vld [vmem:[%s1 + $0x450] sm:$0xff]
  %v162 = vld [vmem:[%s1 + $0x458] sm:$0xff]
  %v163 = vld [vmem:[%s1 + $0x460] sm:$0xff]
  %v164 = vld [vmem:[%s1 + $0x468] sm:$0xff]
  %v165 = vld [vmem:[%s1 + $0x470] sm:$0xff]
  %v166 = vld [vmem:[%s1 + $0x478] sm:$0xff]
  %v167 = vld [vmem:[%s1 + $0x480] sm:$0xff]
  %v168 = vld [vmem:[%s1 + $0x488] sm:$0xff]
  %v169 = vld [vmem:[%s1 + $0x490] sm:$0xff]
  %v170 = vld [vmem:[%s1 + $0x498] sm:$0xff]
  %v171 = vld [vmem:[%s1 + $0x4a0] sm:$0xff]
  %v172 = vld [vmem:[%s1 + $0x4a8] sm:$0xff]
  %v173 = vld [vmem:[%s1 + $0x4b0] sm:$0xff]
  %v174 = vld [vmem:[%s1 + $0x4b8] sm:$0xff]
  %v175 = vld [vmem:[%s1 + $0x4c0] sm:$0xff]
  %v176 = vld [vmem:[%s1 + $0x4c8] sm:$0xff]
  %v177 = vld [vmem:[%s1 + $0x4d0] sm:$0xff]
  %v178 = vld [vmem:[%s1 + $0x4d8] sm:$0xff]
  %v179 = vld [vmem:[%s1 + $0x4e0] sm:$0xff]
  %v180 = vld [vmem:[%s1 + $0x4e8] sm:$0xff]
  %v181 = vld [vmem:[%s1 + $0x4f0] sm:$0xff]
  %v182 = vld [vmem:[%s1 + $0x4f8] sm:$0xff]
  %v183 = vld [vmem:[%s1 + $0x500] sm:$0xff]
  %v184 = vld [vmem:[%s1 + $0x508] sm:$0xff]
  %v185 = vld [vmem:[%s1 + $0x510] sm:$0xff]
  %v186 = vld [vmem:[%s1 + $0x518] sm:$0xff]
  %v187 = vld [vmem:[%s1 + $0x520] sm:$0xff]
  %v188 = vld [vmem:[%s1 + $0x528] sm:$0xff]
  %v189 = vld [vmem:[%s1 + $0x530] sm:$0xff]
  %v190 = vld [vmem:[%s1 + $0x538] sm:$0xff]
  %v191 = vld [vmem:[%s1 + $0x540] sm:$0xff]
  %v192 = vld [vmem:[%s1 + $0x548] sm:$0xff]
  %v193 = vld [vmem:[%s1 + $0x550] sm:$0xff]
  %v194 = vld [vmem:[%s1 + $0x558] sm:$0xff]
  %v195 = vld [vmem:[%s1 + $0x560] sm:$0xff]
  %v196 = vld [vmem:[%s1 + $0x568] sm:$0xff]
  %v197 = vld [vmem:[%s1 + $0x570] sm:$0xff]
  %v198 = vld [vmem:[%s1 + $0x578] sm:$0xff]
  %v199 = vld [vmem:[%s1 + $0x580] sm:$0xff]
  %v200 = vld [vmem:[%s1 + $0x588] sm:$0xff]
  %v201 = vld [vmem:[%s1 + $0x590] sm:$0xff]
  %v202 = vld [vmem:[%s1 + $0x598] sm:$0xff]
  %v203 = vld [vmem:[%s1 + $0x5a0] sm:$0xff]
  %v204 = vld [vmem:[%s1 + $0x5a8] sm:$0xff]
  %v205 = vld [vmem:[%s1 + $0x5b0] sm:$0xff]
  %v206 = vld [vmem:[%s1 + $0x5b8] sm:$0xff]
  %v207 = vld [vmem:[%s1 + $0x5c0] sm:$0xff]
  %v208 = vld [vmem:[%s1 + $0x5c8] sm:$0xff]
  %v209 = vld [vmem:[%s1 + $0x5d0] sm:$0xff]
  %v210 = vld [vmem:[%s1 + $0x5d8] sm:$0xff]
  %v211 = vld [vmem:[%s1 + $0x5e0] sm:$0xff]
  %v212 = vld [vmem:[%s1 + $0x5e8] sm:$0xff]
  %v213 = vld [vmem:[%s1 + $0x5f0] sm:$0xff]
  %v214 = vld [vmem:[%s1 + $0x5f8] sm:$0xff]
  %v215 = vld [vmem:[%s1 + $0x600] sm:$0xff]
  %v216 = vld [vmem:[%s1 + $0x608] sm:$0xff]
  %v217 = vld [vmem:[%s1 + $0x610] sm:$0xff]
  %v218 = vld [vmem:[%s1 + $0x618] sm:$0xff]
  %v219 = vld [vmem:[%s1 + $0x620] sm:$0xff]
  %v220 = vld [vmem:[%s1 + $0x628] sm:$0xff]
  %v221 = vld [vmem:[%s1 + $0x630] sm:$0xff]
  %v222 = vld [vmem:[%s1 + $0x638] sm:$0xff]
  %v223 = vld [vmem:[%s1 + $0x640] sm:$0xff]
  %v224 = vld [vmem:[%s1 + $0x648] sm:$0xff]
  %v225 = vld [vmem:[%s1 + $0x650] sm:$0xff]
  %v226 = vld [vmem:[%s1 + $0x658] sm:$0xff]
  %v227 = vld [vmem:[%s1 + $0x660] sm:$0xff]
  %v228 = vld [vmem:[%s1 + $0x668] sm:$0xff]
  %v229 = vld [vmem:[%s1 + $0x670] sm:$0xff]
  %v230 = vld [vmem:[%s1 + $0x678] sm:$0xff]
  %v231 = vld [vmem:[%s1 + $0x680] sm:$0xff]
  %v232 = vld [vmem:[%s1 + $0x688] sm:$0xff]
  %v233 = vld [vmem:[%s1 + $0x690] sm:$0xff]
  %v234 = vld [vmem:[%s1 + $0x698] sm:$0xff]
  %v235 = vld [vmem:[%s1 + $0x6a0] sm:$0xff]
  %v236 = vld [vmem:[%s1 + $0x6a8] sm:$0xff]
  %v237 = vld [vmem:[%s1 + $0x6b0] sm:$0xff]
  %v238 = vld [vmem:[%s1 + $0x6b8] sm:$0xff]
  %v239 = vld [vmem:[%s1 + $0x6c0] sm:$0xff]
  %v240 = vld [vmem:[%s1 + $0x6c8] sm:$0xff]
  %v241 = vld [vmem:[%s1 + $0x6d0] sm:$0xff]
  %v242 = vld [vmem:[%s1 + $0x6d8] sm:$0xff]
  %v243 = vld [vmem:[%s1 + $0x6e0] sm:$0xff]
  %v244 = vld [vmem:[%s1 + $0x6e8] sm:$0xff]
  %v245 = vld [vmem:[%s1 + $0x6f0] sm:$0xff]
  %v246 = vld [vmem:[%s1 + $0x6f8] sm:$0xff]
  %v247 = vld [vmem:[%s1 + $0x700] sm:$0xff]
  %v248 = vld [vmem:[%s1 + $0x708] sm:$0xff]
  %v249 = vld [vmem:[%s1 + $0x710] sm:$0xff]
  %v250 = vld [vmem:[%s1 + $0x718] sm:$0xff]
  %v251 = vld [vmem:[%s1 + $0x720] sm:$0xff]
  %v252 = vld [vmem:[%s1 + $0x728] sm:$0xff]
  %v253 = vld [vmem:[%s1 + $0x730] sm:$0xff]
  %v254 = vld [vmem:[%s1 + $0x738] sm:$0xff]
  %v255 = vld [vmem:[%s1 + $0x740] sm:$0xff]
  %v256 = vld [vmem:[%s1 + $0x748] sm:$0xff]
  %v257 = vld [vmem:[%s1 + $0x750] sm:$0xff]
  %v258 = vld [vmem:[%s1 + $0x758] sm:$0xff]
  %v259 = vld [vmem:[%s1 + $0x760] sm:$0xff]
  %v260 = vld [vmem:[%s1 + $0x768] sm:$0xff]
  %v261 = vld [vmem:[%s1 + $0x770] sm:$0xff]
  %v262 = vld [vmem:[%s1 + $0x778] sm:$0xff]
  %v263 = vld [vmem:[%s1 + $0x780] sm:$0xff]
  %v264 = vld [vmem:[%s1 + $0x788] sm:$0xff]
  %v265 = vld [vmem:[%s1 + $0x790] sm:$0xff]
  %v266 = vld [vmem:[%s1 + $0x798] sm:$0xff]
  %v267 = vld [vmem:[%s1 + $0x7a0] sm:$0xff]
  %v268 = vld [vmem:[%s1 + $0x7a8] sm:$0xff]
  %v269 = vld [vmem:[%s1 + $0x7b0] sm:$0xff]
  %v270 = vld [vmem:[%s1 + $0x7b8] sm:$0xff]
  %v271 = vld [vmem:[%s1 + $0x7c0] sm:$0xff]
  %v272 = vld [vmem:[%s1 + $0x7c8] sm:$0xff]
  %v273 = vld [vmem:[%s1 + $0x7d0] sm:$0xff]
  %v274 = vld [vmem:[%s1 + $0x7d8] sm:$0xff]
  %v275 = vld [vmem:[%s1 + $0x7e0] sm:$0xff]
  %v276 = vld [vmem:[%s1 + $0x7e8] sm:$0xff]
  %v277 = vld [vmem:[%s1 + $0x7f0] sm:$0xff]
  %v278 = vld [vmem:[%s1 + $0x7f8] sm:$0xff]
  %v279 = vld [vmem:[%s1 + $0x800] sm:$0xff]
  %v280 = vld [vmem:[%s1 + $0x808] sm:$0xff]
  %v281 = vld [vmem:[%s1 + $0x810] sm:$0xff]
  %v282 = vld [vmem:[%s1 + $0x818] sm:$0xff]
  %v283 = vld [vmem:[%s1 + $0x820] sm:$0xff]
  %v284 = vld [vmem:[%s1 + $0x828] sm:$0xff]
  %v285 = vld [vmem:[%s1 + $0x830] sm:$0xff]
  %v286 = vld [vmem:[%s1 + $0x838] sm:$0xff]
  %v287 = vld [vmem:[%s1 + $0x840] sm:$0xff]
  %v288 = vld [vmem:[%s1 + $0x848] sm:$0xff]
  %v289 = vld [vmem:[%s1 + $0x850] sm:$0xff]
  %v290 = vld [vmem:[%s1 + $0x858] sm:$0xff]
  %v291 = vld [vmem:[%s1 + $0x860] sm:$0xff]
  %v292 = vld [vmem:[%s1 + $0x868] sm:$0xff]
  %v293 = vld [vmem:[%s1 + $0x870] sm:$0xff]
  %v294 = vld [vmem:[%s1 + $0x878] sm:$0xff]
  %v295 = vld [vmem:[%s1 + $0x880] sm:$0xff]
  %v296 = vld [vmem:[%s1 + $0x888] sm:$0xff]
  %v297 = vld [vmem:[%s1 + $0x890] sm:$0xff]
  %v298 = vld [vmem:[%s1 + $0x898] sm:$0xff]
  %v299 = vld [vmem:[%s1 + $0x8a0] sm:$0xff]
  %v300 = vld [vmem:[%s1 + $0x8a8] sm:$0xff]
  %v301 = vld [vmem:[%s1 + $0x8b0] sm:$0xff]
  %v302 = vld [vmem:[%s1 + $0x8b8] sm:$0xff]
  %v303 = vld [vmem:[%s1 + $0x8c0] sm:$0xff]
  %v304 = vld [vmem:[%s1 + $0x8c8] sm:$0xff]
  %v305 = vld [vmem:[%s1 + $0x8d0] sm:$0xff]
  %v306 = vld [vmem:[%s1 + $0x8d8] sm:$0xff]
  %v307 = vld [vmem:[%s1 + $0x8e0] sm:$0xff]
  %v308 = vld [vmem:[%s1 + $0x8e8] sm:$0xff]
  %v309 = vld [vmem:[%s1 + $0x8f0] sm:$0xff]
  %v310 = vld [vmem:[%s1 + $0x8f8] sm:$0xff]
  %v311 = vld [vmem:[%s1 + $0x900] sm:$0xff]
  %v312 = vld [vmem:[%s1 + $0x908] sm:$0xff]
  %v313 = vld [vmem:[%s1 + $0x910] sm:$0xff]
  %v314 = vld [vmem:[%s1 + $0x918] sm:$0xff]
  %v315 = vld [vmem:[%s1 + $0x920] sm:$0xff]
  %v316 = vld [vmem:[%s1 + $0x928] sm:$0xff]
  %v317 = vld [vmem:[%s1 + $0x930] sm:$0xff]
  %v318 = vld [vmem:[%s1 + $0x938] sm:$0xff]
  %v319 = vld [vmem:[%s1 + $0x940] sm:$0xff]
  %v320 = vld [vmem:[%s1 + $0x948] sm:$0xff]
  %v321 = vld [vmem:[%s1 + $0x950] sm:$0xff]
  %v322 = vld [vmem:[%s1 + $0x958] sm:$0xff]
  %v323 = vld [vmem:[%s1 + $0x960] sm:$0xff]
  %v324 = vld [vmem:[%s1 + $0x968] sm:$0xff]
  %v325 = vld [vmem:[%s1 + $0x970] sm:$0xff]
  %v326 = vld [vmem:[%s1 + $0x978] sm:$0xff]
  %v327 = vld [vmem:[%s1 + $0x980] sm:$0xff]
  %v328 = vld [vmem:[%s1 + $0x988] sm:$0xff]
  %v329 = vld [vmem:[%s1 + $0x990] sm:$0xff]
  %v330 = vld [vmem:[%s1 + $0x998] sm:$0xff]
  %v331 = vld [vmem:[%s1 + $0x9a0] sm:$0xff]
  %v332 = vld [vmem:[%s1 + $0x9a8] sm:$0xff]
  %v333 = vld [vmem:[%s1 + $0x9b0] sm:$0xff]
  %v334 = vld [vmem:[%s1 + $0x9b8] sm:$0xff]
  %v335 = vld [vmem:[%s1 + $0x9c0] sm:$0xff]
  %v336 = vld [vmem:[%s1 + $0x9c8] sm:$0xff]
  %v337 = vld [vmem:[%s1 + $0x9d0] sm:$0xff]
  %v338 = vld [vmem:[%s1 + $0x9d8] sm:$0xff]
  %v339 = vld [vmem:[%s1 + $0x9e0] sm:$0xff]
  %v340 = vld [vmem:[%s1 + $0x9e8] sm:$0xff]
  %v341 = vld [vmem:[%s1 + $0x9f0] sm:$0xff]
  %v342 = vld [vmem:[%s1 + $0x9f8] sm:$0xff]
  %v343 = vld [vmem:[%s1 + $0xa00] sm:$0xff]
  %v344 = vld [vmem:[%s1 + $0xa08] sm:$0xff]
  %v345 = vld [vmem:[%s1 + $0xa10] sm:$0xff]
  %v346 = vld [vmem:[%s1 + $0xa18] sm:$0xff]
  %v347 = vld [vmem:[%s1 + $0xa20] sm:$0xff]
  %v348 = vld [vmem:[%s1 + $0xa28] sm:$0xff]
  %v349 = vld [vmem:[%s1 + $0xa30] sm:$0xff]
  %v350 = vld [vmem:[%s1 + $0xa38] sm:$0xff]
  %v351 = vld [vmem:[%s1 + $0xa40] sm:$0xff]
  %v352 = vld [vmem:[%s1 + $0xa48] sm:$0xff]
  %v353 = vld [vmem:[%s1 + $0xa50] sm:$0xff]
  %v354 = vld [vmem:[%s1 + $0xa58] sm:$0xff]
  %v355 = vld [vmem:[%s1 + $0xa60] sm:$0xff]
  %v356 = vld [vmem:[%s1 + $0xa68] sm:$0xff]
  %v357 = vld [vmem:[%s1 + $0xa70] sm:$0xff]
  %v358 = vld [vmem:[%s1 + $0xa78] sm:$0xff]
  %v359 = vld [vmem:[%s1 + $0xa80] sm:$0xff]
  %v360 = vld [vmem:[%s1 + $0xa88] sm:$0xff]
  %v361 = vld [vmem:[%s1 + $0xa90] sm:$0xff]
  %v362 = vld [vmem:[%s1 + $0xa98] sm:$0xff]
  %v363 = vld [vmem:[%s1 + $0xaa0] sm:$0xff]
  %v364 = vld [vmem:[%s1 + $0xaa8] sm:$0xff]
  %v365 = vld [vmem:[%s1 + $0xab0] sm:$0xff]
  %v366 = vld [vmem:[%s1 + $0xab8] sm:$0xff]
  %v367 = vld [vmem:[%s1 + $0xac0] sm:$0xff]
  %v368 = vld [vmem:[%s1 + $0xac8] sm:$0xff]
  %v369 = vld [vmem:[%s1 + $0xad0] sm:$0xff]
  %v370 = vld [vmem:[%s1 + $0xad8] sm:$0xff]
  %v371 = vld [vmem:[%s1 + $0xae0] sm:$0xff]
  %v372 = vld [vmem:[%s1 + $0xae8] sm:$0xff]
  %v373 = vld [vmem:[%s1 + $0xaf0] sm:$0xff]
  %v374 = vld [vmem:[%s1 + $0xaf8] sm:$0xff]
  %v375 = vld [vmem:[%s1 + $0xb00] sm:$0xff]
  %v376 = vld [vmem:[%s1 + $0xb08] sm:$0xff]
  %v377 = vld [vmem:[%s1 + $0xb10] sm:$0xff]
  %v378 = vld [vmem:[%s1 + $0xb18] sm:$0xff]
  %v379 = vld [vmem:[%s1 + $0xb20] sm:$0xff]
  %v380 = vld [vmem:[%s1 + $0xb28] sm:$0xff]
  %v381 = vld [vmem:[%s1 + $0xb30] sm:$0xff]
  %v382 = vld [vmem:[%s1 + $0xb38] sm:$0xff]
  %v383 = vld [vmem:[%s1 + $0xb40] sm:$0xff]
  %v384 = vld [vmem:[%s1 + $0xb48] sm:$0xff]
  %v385 = vld [vmem:[%s1 + $0xb50] sm:$0xff]
  %v386 = vld [vmem:[%s1 + $0xb58] sm:$0xff]
  %v387 = vld [vmem:[%s1 + $0xb60] sm:$0xff]
  %v388 = vld [vmem:[%s1 + $0xb68] sm:$0xff]
  %v389 = vld [vmem:[%s1 + $0xb70] sm:$0xff]
  %v390 = vld [vmem:[%s1 + $0xb78] sm:$0xff]
  %v391 = vld [vmem:[%s1 + $0xb80] sm:$0xff]
  %v392 = vld [vmem:[%s1 + $0xb88] sm:$0xff]
  %v393 = vld [vmem:[%s1 + $0xb90] sm:$0xff]
  %v394 = vld [vmem:[%s1 + $0xb98] sm:$0xff]
  %v395 = vld [vmem:[%s1 + $0xba0] sm:$0xff]
  %v396 = vld [vmem:[%s1 + $0xba8] sm:$0xff]
  %v397 = vld [vmem:[%s1 + $0xbb0] sm:$0xff]
  %v398 = vld [vmem:[%s1 + $0xbb8] sm:$0xff]
  %v399 = vld [vmem:[%s1 + $0xbc0] sm:$0xff]
  %v400 = vld [vmem:[%s1 + $0xbc8] sm:$0xff]
  %v401 = vld [vmem:[%s1 + $0xbd0] sm:$0xff]
  %v402 = vld [vmem:[%s1 + $0xbd8] sm:$0xff]
  %v403 = vld [vmem:[%s1 + $0xbe0] sm:$0xff]
  %v404 = vld [vmem:[%s1 + $0xbe8] sm:$0xff]
  %v405 = vld [vmem:[%s1 + $0xbf0] sm:$0xff]
  %v406 = vld [vmem:[%s1 + $0xbf8] sm:$0xff]
  %v407 = vld [vmem:[%s1 + $0xc00] sm:$0xff]
  %v408 = vld [vmem:[%s1 + $0xc08] sm:$0xff]
  %v409 = vld [vmem:[%s1 + $0xc10] sm:$0xff]
  %v410 = vld [vmem:[%s1 + $0xc18] sm:$0xff]
  %v411 = vld [vmem:[%s1 + $0xc20] sm:$0xff]
  %v412 = vld [vmem:[%s1 + $0xc28] sm:$0xff]
  %v413 = vld [vmem:[%s1 + $0xc30] sm:$0xff]
  %v414 = vld [vmem:[%s1 + $0xc38] sm:$0xff]
  %v415 = vld [vmem:[%s1 + $0xc40] sm:$0xff]
  %v416 = vld [vmem:[%s1 + $0xc48] sm:$0xff]
  %v417 = vld [vmem:[%s1 + $0xc50] sm:$0xff]
  %v418 = vld [vmem:[%s1 + $0xc58] sm:$0xff]
  %v419 = vld [vmem:[%s1 + $0xc60] sm:$0xff]
  %v420 = vld [vmem:[%s1 + $0xc68] sm:$0xff]
  %v421 = vld [vmem:[%s1 + $0xc70] sm:$0xff]
  %v422 = vld [vmem:[%s1 + $0xc78] sm:$0xff]
  %v423 = vld [vmem:[%s1 + $0xc80] sm:$0xff]
  %v424 = vld [vmem:[%s1 + $0xc88] sm:$0xff]
  %v425 = vld [vmem:[%s1 + $0xc90] sm:$0xff]
  %v426 = vld [vmem:[%s1 + $0xc98] sm:$0xff]
  %v427 = vld [vmem:[%s1 + $0xca0] sm:$0xff]
  %v428 = vld [vmem:[%s1 + $0xca8] sm:$0xff]
  %v429 = vld [vmem:[%s1 + $0xcb0] sm:$0xff]
  %v430 = vld [vmem:[%s1 + $0xcb8] sm:$0xff]
  %v431 = vld [vmem:[%s1 + $0xcc0] sm:$0xff]
  %v432 = vld [vmem:[%s1 + $0xcc8] sm:$0xff]
  %v433 = vld [vmem:[%s1 + $0xcd0] sm:$0xff]
  %v434 = vld [vmem:[%s1 + $0xcd8] sm:$0xff]
  %v435 = vld [vmem:[%s1 + $0xce0] sm:$0xff]
  %v436 = vld [vmem:[%s1 + $0xce8] sm:$0xff]
  %v437 = vld [vmem:[%s1 + $0xcf0] sm:$0xff]
  %v438 = vld [vmem:[%s1 + $0xcf8] sm:$0xff]
  %v439 = vld [vmem:[%s1 + $0xd00] sm:$0xff]
  %v440 = vld [vmem:[%s1 + $0xd08] sm:$0xff]
  %v441 = vld [vmem:[%s1 + $0xd10] sm:$0xff]
  %v442 = vld [vmem:[%s1 + $0xd18] sm:$0xff]
  %v443 = vld [vmem:[%s1 + $0xd20] sm:$0xff]
  %v444 = vld [vmem:[%s1 + $0xd28] sm:$0xff]
  %v445 = vld [vmem:[%s1 + $0xd30] sm:$0xff]
  %v446 = vld [vmem:[%s1 + $0xd38] sm:$0xff]
  %v447 = vld [vmem:[%s1 + $0xd40] sm:$0xff]
  %v448 = vld [vmem:[%s1 + $0xd48] sm:$0xff]
  %v449 = vld [vmem:[%s1 + $0xd50] sm:$0xff]
  %v450 = vld [vmem:[%s1 + $0xd58] sm:$0xff]
  %v451 = vld [vmem:[%s1 + $0xd60] sm:$0xff]
  %v452 = vld [vmem:[%s1 + $0xd68] sm:$0xff]
  %v453 = vld [vmem:[%s1 + $0xd70] sm:$0xff]
  %v454 = vld [vmem:[%s1 + $0xd78] sm:$0xff]
  %v455 = vld [vmem:[%s1 + $0xd80] sm:$0xff]
  %v456 = vld [vmem:[%s1 + $0xd88] sm:$0xff]
  %v457 = vld [vmem:[%s1 + $0xd90] sm:$0xff]
  %v458 = vld [vmem:[%s1 + $0xd98] sm:$0xff]
  %v459 = vld [vmem:[%s1 + $0xda0] sm:$0xff]
  %v460 = vld [vmem:[%s1 + $0xda8] sm:$0xff]
  %v461 = vld [vmem:[%s1 + $0xdb0] sm:$0xff]
  %v462 = vld [vmem:[%s1 + $0xdb8] sm:$0xff]
  %v463 = vld [vmem:[%s1 + $0xdc0] sm:$0xff]
  %v464 = vld [vmem:[%s1 + $0xdc8] sm:$0xff]
  %v465 = vld [vmem:[%s1 + $0xdd0] sm:$0xff]
  %v466 = vld [vmem:[%s1 + $0xdd8] sm:$0xff]
  %v467 = vld [vmem:[%s1 + $0xde0] sm:$0xff]
  %v468 = vld [vmem:[%s1 + $0xde8] sm:$0xff]
  %v469 = vld [vmem:[%s1 + $0xdf0] sm:$0xff]
  %v470 = vld [vmem:[%s1 + $0xdf8] sm:$0xff]
  %v471 = vld [vmem:[%s1 + $0xe00] sm:$0xff]
  %v472 = vld [vmem:[%s1 + $0xe08] sm:$0xff]
  %v473 = vld [vmem:[%s1 + $0xe10] sm:$0xff]
  %v474 = vld [vmem:[%s1 + $0xe18] sm:$0xff]
  %v475 = vld [vmem:[%s1 + $0xe20] sm:$0xff]
  %v476 = vld [vmem:[%s1 + $0xe28] sm:$0xff]
  %v477 = vld [vmem:[%s1 + $0xe30] sm:$0xff]
  %v478 = vld [vmem:[%s1 + $0xe38] sm:$0xff]
  %v479 = vld [vmem:[%s1 + $0xe40] sm:$0xff]
  %v480 = vld [vmem:[%s1 + $0xe48] sm:$0xff]
  %v481 = vld [vmem:[%s1 + $0xe50] sm:$0xff]
  %v482 = vld [vmem:[%s1 + $0xe58] sm:$0xff]
  %v483 = vld [vmem:[%s1 + $0xe60] sm:$0xff]
  %v484 = vld [vmem:[%s1 + $0xe68] sm:$0xff]
  %v485 = vld [vmem:[%s1 + $0xe70] sm:$0xff]
  %v486 = vld [vmem:[%s1 + $0xe78] sm:$0xff]
  %v487 = vld [vmem:[%s1 + $0xe80] sm:$0xff]
  %v488 = vld [vmem:[%s1 + $0xe88] sm:$0xff]
  %v489 = vld [vmem:[%s1 + $0xe90] sm:$0xff]
  %v490 = vld [vmem:[%s1 + $0xe98] sm:$0xff]
  %v491 = vld [vmem:[%s1 + $0xea0] sm:$0xff]
  %v492 = vld [vmem:[%s1 + $0xea8] sm:$0xff]
  %v493 = vld [vmem:[%s1 + $0xeb0] sm:$0xff]
  %v494 = vld [vmem:[%s1 + $0xeb8] sm:$0xff]
  %v495 = vld [vmem:[%s1 + $0xec0] sm:$0xff]
  %v496 = vld [vmem:[%s1 + $0xec8] sm:$0xff]
  %v497 = vld [vmem:[%s1 + $0xed0] sm:$0xff]
  %v498 = vld [vmem:[%s1 + $0xed8] sm:$0xff]
  %v499 = vld [vmem:[%s1 + $0xee0] sm:$0xff]
  %v500 = vld [vmem:[%s1 + $0xee8] sm:$0xff]
  %v501 = vld [vmem:[%s1 + $0xef0] sm:$0xff]
  %v502 = vld [vmem:[%s1 + $0xef8] sm:$0xff]
  %v503 = vld [vmem:[%s1 + $0xf00] sm:$0xff]
  %v504 = vld [vmem:[%s1 + $0xf08] sm:$0xff]
  %v505 = vld [vmem:[%s1 + $0xf10] sm:$0xff]
  %v506 = vld [vmem:[%s1 + $0xf18] sm:$0xff]
  %v507 = vld [vmem:[%s1 + $0xf20] sm:$0xff]
  %v508 = vld [vmem:[%s1 + $0xf28] sm:$0xff]
  %v509 = vld [vmem:[%s1 + $0xf30] sm:$0xff]
  %v510 = vld [vmem:[%s1 + $0xf38] sm:$0xff]
  %v511 = vld [vmem:[%s1 + $0xf40] sm:$0xff]
  %v512 = vld [vmem:[%s1 + $0xf48] sm:$0xff]
  %v513 = vld [vmem:[%s1 + $0xf50] sm:$0xff]
  %v514 = vld [vmem:[%s1 + $0xf58] sm:$0xff]
  %v515 = vld [vmem:[%s1 + $0xf60] sm:$0xff]
  %v516 = vld [vmem:[%s1 + $0xf68] sm:$0xff]
  %v517 = vld [vmem:[%s1 + $0xf70] sm:$0xff]
  %v518 = vld [vmem:[%s1 + $0xf78] sm:$0xff]
  %v519 = vld [vmem:[%s1 + $0xf80] sm:$0xff]
  %v520 = vld [vmem:[%s1 + $0xf88] sm:$0xff]
  %v521 = vld [vmem:[%s1 + $0xf90] sm:$0xff]
  %v522 = vld [vmem:[%s1 + $0xf98] sm:$0xff]
  %v523 = vld [vmem:[%s1 + $0xfa0] sm:$0xff]
  %v524 = vld [vmem:[%s1 + $0xfa8] sm:$0xff]
  %v525 = vld [vmem:[%s1 + $0xfb0] sm:$0xff]
  %v526 = vld [vmem:[%s1 + $0xfb8] sm:$0xff]
  %v527 = vld [vmem:[%s1 + $0xfc0] sm:$0xff]
  %v528 = vld [vmem:[%s1 + $0xfc8] sm:$0xff]
  %v529 = vld [vmem:[%s1 + $0xfd0] sm:$0xff]
  %v530 = vld [vmem:[%s1 + $0xfd8] sm:$0xff]
  %v531 = vld [vmem:[%s1 + $0xfe0] sm:$0xff]
  %v532 = vld [vmem:[%s1 + $0xfe8] sm:$0xff]
  %v533 = vld [vmem:[%s1 + $0xff0] sm:$0xff]
  %v534 = vld [vmem:[%s1 + $0xff8] sm:$0xff]
  %v535 = vld [vmem:[%s1 + $0x1000] sm:$0xff]
  %v536 = vld [vmem:[%s1 + $0x1008] sm:$0xff]
  %v537 = vld [vmem:[%s1 + $0x1010] sm:$0xff]
  %v538 = vld [vmem:[%s1 + $0x1018] sm:$0xff]
  %v539 = vld [vmem:[%s1 + $0x1020] sm:$0xff]
  %v540 = vld [vmem:[%s1 + $0x1028] sm:$0xff]
  %v541 = vld [vmem:[%s1 + $0x1030] sm:$0xff]
  %v542 = vld [vmem:[%s1 + $0x1038] sm:$0xff]
  %v543 = vld [vmem:[%s1 + $0x1040] sm:$0xff]
  %v544 = vld [vmem:[%s1 + $0x1048] sm:$0xff]
  %v545 = vld [vmem:[%s1 + $0x1050] sm:$0xff]
  %v546 = vld [vmem:[%s1 + $0x1058] sm:$0xff]
  %v547 = vld [vmem:[%s1 + $0x1060] sm:$0xff]
  %v548 = vld [vmem:[%s1 + $0x1068] sm:$0xff]
  %v549 = vld [vmem:[%s1 + $0x1070] sm:$0xff]
  %v550 = vld [vmem:[%s1 + $0x1078] sm:$0xff]
  %v551 = vld [vmem:[%s1 + $0x1080] sm:$0xff]
  %v552 = vld [vmem:[%s1 + $0x1088] sm:$0xff]
  %v553 = vld [vmem:[%s1 + $0x1090] sm:$0xff]
  %v554 = vld [vmem:[%s1 + $0x1098] sm:$0xff]
  %v555 = vld [vmem:[%s1 + $0x10a0] sm:$0xff]
  %v556 = vld [vmem:[%s1 + $0x10a8] sm:$0xff]
  %v557 = vld [vmem:[%s1 + $0x10b0] sm:$0xff]
  %v558 = vld [vmem:[%s1 + $0x10b8] sm:$0xff]
  %v559 = vld [vmem:[%s1 + $0x10c0] sm:$0xff]
  %v560 = vld [vmem:[%s1 + $0x10c8] sm:$0xff]
  %v561 = vld [vmem:[%s1 + $0x10d0] sm:$0xff]
  %v562 = vld [vmem:[%s1 + $0x10d8] sm:$0xff]
  %v563 = vld [vmem:[%s1 + $0x10e0] sm:$0xff]
  %v564 = vld [vmem:[%s1 + $0x10e8] sm:$0xff]
  %v565 = vld [vmem:[%s1 + $0x10f0] sm:$0xff]
  %v566 = vld [vmem:[%s1 + $0x10f8] sm:$0xff]
  %v567 = vld [vmem:[%s1 + $0x1100] sm:$0xff]
  %v568 = vld [vmem:[%s1 + $0x1108] sm:$0xff]
  %v569 = vld [vmem:[%s1 + $0x1110] sm:$0xff]
  %v570 = vld [vmem:[%s1 + $0x1118] sm:$0xff]
  %v571 = vld [vmem:[%s1 + $0x1120] sm:$0xff]
  %v572 = vld [vmem:[%s1 + $0x1128] sm:$0xff]
  %v573 = vld [vmem:[%s1 + $0x1130] sm:$0xff]
  %v574 = vld [vmem:[%s1 + $0x1138] sm:$0xff]
  %v575 = vld [vmem:[%s1 + $0x1140] sm:$0xff]
  %v576 = vld [vmem:[%s1 + $0x1148] sm:$0xff]
  %v577 = vld [vmem:[%s1 + $0x1150] sm:$0xff]
  %v578 = vld [vmem:[%s1 + $0x1158] sm:$0xff]
  %v579 = vld [vmem:[%s1 + $0x1160] sm:$0xff]
  %v580 = vld [vmem:[%s1 + $0x1168] sm:$0xff]
  %v581 = vld [vmem:[%s1 + $0x1170] sm:$0xff]
  %v582 = vld [vmem:[%s1 + $0x1178] sm:$0xff]
  %v583 = vld [vmem:[%s1 + $0x1180] sm:$0xff]
  %v584 = vld [vmem:[%s1 + $0x1188] sm:$0xff]
  %v585 = vld [vmem:[%s1 + $0x1190] sm:$0xff]
  %v586 = vld [vmem:[%s1 + $0x1198] sm:$0xff]
  %v587 = vld [vmem:[%s1 + $0x11a0] sm:$0xff]
  %v588 = vld [vmem:[%s1 + $0x11a8] sm:$0xff]
  %v589 = vld [vmem:[%s1 + $0x11b0] sm:$0xff]
  %v590 = vld [vmem:[%s1 + $0x11b8] sm:$0xff]
  %v591 = vld [vmem:[%s1 + $0x11c0] sm:$0xff]
  %v592 = vld [vmem:[%s1 + $0x11c8] sm:$0xff]
  %v593 = vld [vmem:[%s1 + $0x11d0] sm:$0xff]
  %v594 = vld [vmem:[%s1 + $0x11d8] sm:$0xff]
  %v595 = vld [vmem:[%s1 + $0x11e0] sm:$0xff]
  %v596 = vld [vmem:[%s1 + $0x11e8] sm:$0xff]
  %v597 = vld [vmem:[%s1 + $0x11f0] sm:$0xff]
  %v598 = vld [vmem:[%s1 + $0x11f8] sm:$0xff]
  %v599 = vld [vmem:[%s2] sm:$0xf]
  %v601 = vlaneseq
  %v602 = vshrl.u32 %v601, 7
  %v603 = vsub.s32 0, %v602
  %v604 = vrot.slane %v599, %v603
  %v605 = vlaneseq
  %v606 = vshrl.u32 %v605, 7
  %v607 = vsub.s32 1, %v606
  %v608 = vrot.slane %v599, %v607
  %v609 = vlaneseq
  %v610 = vshrl.u32 %v609, 7
  %v611 = vsub.s32 2, %v610
  %v612 = vrot.slane %v599, %v611
  %v613 = vlaneseq
  %v614 = vshrl.u32 %v613, 7
  %v615 = vsub.s32 3, %v614
  %v616 = vrot.slane %v599, %v615
  %v630 = vunpack.c.l.b16 %v14
  %v631 = vunpack.c.h.b16 %v14
  %v632 = vunpack.c.l.b16 %v15
  %v633 = vunpack.c.h.b16 %v15
  %v634 = vunpack.c.l.b16 %v16
  %v635 = vunpack.c.h.b16 %v16
  %v636 = vunpack.c.l.b16 %v17
  %v637 = vunpack.c.h.b16 %v17
  %v638 = vunpack.c.l.b16 %v18
  %v639 = vunpack.c.h.b16 %v18
  %v640 = vunpack.c.l.b16 %v19
  %v641 = vunpack.c.h.b16 %v19
  %v642 = vunpack.c.l.b16 %v20
  %v643 = vunpack.c.h.b16 %v20
  %v644 = vunpack.c.l.b16 %v21
  %v645 = vunpack.c.h.b16 %v21
  %v646 = vunpack.c.l.b16 %v22
  %v647 = vunpack.c.h.b16 %v22
  %v648 = vpack.c.b16 %v630, %v630
  %v649 = vpack.c.b16 %v631, %v631
  %v650 = vpack.c.b16 %v632, %v632
  %v651 = vpack.c.b16 %v633, %v633
  %v652 = vpack.c.b16 %v634, %v634
  %v653 = vpack.c.b16 %v635, %v635
  %v654 = vpack.c.b16 %v636, %v636
  %v655 = vpack.c.b16 %v637, %v637
  %v656 = vpack.c.b16 %v638, %v638
  %v657 = vpack.c.b16 %v639, %v639
  %v658 = vpack.c.b16 %v640, %v640
  %v659 = vpack.c.b16 %v641, %v641
  %v660 = vpack.c.b16 %v642, %v642
  %v661 = vpack.c.b16 %v643, %v643
  %v662 = vpack.c.b16 %v644, %v644
  %v663 = vpack.c.b16 %v645, %v645
  %v664 = vpack.c.b16 %v646, %v646
  %v665 = vpack.c.b16 %v647, %v647
  %v1260 = vunpack.c.l.b16 %v23
  %v1261 = vunpack.c.h.b16 %v23
  %v1262 = vunpack.c.l.b16 %v24
  %v1263 = vunpack.c.h.b16 %v24
  %v1264 = vunpack.c.l.b16 %v25
  %v1265 = vunpack.c.h.b16 %v25
  %v1266 = vunpack.c.l.b16 %v26
  %v1267 = vunpack.c.h.b16 %v26
  %v1268 = vunpack.c.l.b16 %v27
  %v1269 = vunpack.c.h.b16 %v27
  %v1270 = vunpack.c.l.b16 %v28
  %v1271 = vunpack.c.h.b16 %v28
  %v1272 = vunpack.c.l.b16 %v29
  %v1273 = vunpack.c.h.b16 %v29
  %v1274 = vunpack.c.l.b16 %v30
  %v1275 = vunpack.c.h.b16 %v30
  %v1276 = vunpack.c.l.b16 %v31
  %v1277 = vunpack.c.h.b16 %v31
  %v1278 = vunpack.c.l.b16 %v32
  %v1279 = vunpack.c.h.b16 %v32
  %v1280 = vunpack.c.l.b16 %v33
  %v1281 = vunpack.c.h.b16 %v33
  %v1282 = vunpack.c.l.b16 %v34
  %v1283 = vunpack.c.h.b16 %v34
  %v1284 = vunpack.c.l.b16 %v35
  %v1285 = vunpack.c.h.b16 %v35
  %v1286 = vunpack.c.l.b16 %v36
  %v1287 = vunpack.c.h.b16 %v36
  %v1288 = vunpack.c.l.b16 %v37
  %v1289 = vunpack.c.h.b16 %v37
  %v1290 = vunpack.c.l.b16 %v38
  %v1291 = vunpack.c.h.b16 %v38
  %v1292 = vunpack.c.l.b16 %v39
  %v1293 = vunpack.c.h.b16 %v39
  %v1294 = vunpack.c.l.b16 %v40
  %v1295 = vunpack.c.h.b16 %v40
  %v1296 = vunpack.c.l.b16 %v41
  %v1297 = vunpack.c.h.b16 %v41
  %v1298 = vunpack.c.l.b16 %v42
  %v1299 = vunpack.c.h.b16 %v42
  %v1300 = vunpack.c.l.b16 %v43
  %v1301 = vunpack.c.h.b16 %v43
  %v1302 = vunpack.c.l.b16 %v44
  %v1303 = vunpack.c.h.b16 %v44
  %v1304 = vunpack.c.l.b16 %v45
  %v1305 = vunpack.c.h.b16 %v45
  %v1306 = vunpack.c.l.b16 %v46
  %v1307 = vunpack.c.h.b16 %v46
  %v1308 = vunpack.c.l.b16 %v47
  %v1309 = vunpack.c.h.b16 %v47
  %v1310 = vunpack.c.l.b16 %v48
  %v1311 = vunpack.c.h.b16 %v48
  %v1312 = vunpack.c.l.b16 %v49
  %v1313 = vunpack.c.h.b16 %v49
  %v1314 = vunpack.c.l.b16 %v50
  %v1315 = vunpack.c.h.b16 %v50
  %v1316 = vunpack.c.l.b16 %v51
  %v1317 = vunpack.c.h.b16 %v51
  %v1318 = vunpack.c.l.b16 %v52
  %v1319 = vunpack.c.h.b16 %v52
  %v1320 = vunpack.c.l.b16 %v53
  %v1321 = vunpack.c.h.b16 %v53
  %v1322 = vunpack.c.l.b16 %v54
  %v1323 = vunpack.c.h.b16 %v54
  %v1324 = vunpack.c.l.b16 %v55
  %v1325 = vunpack.c.h.b16 %v55
  %v1326 = vunpack.c.l.b16 %v56
  %v1327 = vunpack.c.h.b16 %v56
  %v1328 = vunpack.c.l.b16 %v57
  %v1329 = vunpack.c.h.b16 %v57
  %v1330 = vunpack.c.l.b16 %v58
  %v1331 = vunpack.c.h.b16 %v58
  %v1332 = vunpack.c.l.b16 %v59
  %v1333 = vunpack.c.h.b16 %v59
  %v1334 = vunpack.c.l.b16 %v60
  %v1335 = vunpack.c.h.b16 %v60
  %v1336 = vunpack.c.l.b16 %v61
  %v1337 = vunpack.c.h.b16 %v61
  %v1338 = vunpack.c.l.b16 %v62
  %v1339 = vunpack.c.h.b16 %v62
  %v1340 = vunpack.c.l.b16 %v63
  %v1341 = vunpack.c.h.b16 %v63
  %v1342 = vunpack.c.l.b16 %v64
  %v1343 = vunpack.c.h.b16 %v64
  %v1344 = vunpack.c.l.b16 %v65
  %v1345 = vunpack.c.h.b16 %v65
  %v1346 = vunpack.c.l.b16 %v66
  %v1347 = vunpack.c.h.b16 %v66
  %v1348 = vunpack.c.l.b16 %v67
  %v1349 = vunpack.c.h.b16 %v67
  %v1350 = vunpack.c.l.b16 %v68
  %v1351 = vunpack.c.h.b16 %v68
  %v1352 = vunpack.c.l.b16 %v69
  %v1353 = vunpack.c.h.b16 %v69
  %v1354 = vunpack.c.l.b16 %v70
  %v1355 = vunpack.c.h.b16 %v70
  %v1356 = vunpack.c.l.b16 %v71
  %v1357 = vunpack.c.h.b16 %v71
  %v1358 = vunpack.c.l.b16 %v72
  %v1359 = vunpack.c.h.b16 %v72
  %v1360 = vunpack.c.l.b16 %v73
  %v1361 = vunpack.c.h.b16 %v73
  %v1362 = vunpack.c.l.b16 %v74
  %v1363 = vunpack.c.h.b16 %v74
  %v1364 = vunpack.c.l.b16 %v75
  %v1365 = vunpack.c.h.b16 %v75
  %v1366 = vunpack.c.l.b16 %v76
  %v1367 = vunpack.c.h.b16 %v76
  %v1368 = vunpack.c.l.b16 %v77
  %v1369 = vunpack.c.h.b16 %v77
  %v1370 = vunpack.c.l.b16 %v78
  %v1371 = vunpack.c.h.b16 %v78
  %v1372 = vunpack.c.l.b16 %v79
  %v1373 = vunpack.c.h.b16 %v79
  %v1374 = vunpack.c.l.b16 %v80
  %v1375 = vunpack.c.h.b16 %v80
  %v1376 = vunpack.c.l.b16 %v81
  %v1377 = vunpack.c.h.b16 %v81
  %v1378 = vunpack.c.l.b16 %v82
  %v1379 = vunpack.c.h.b16 %v82
  %v1380 = vunpack.c.l.b16 %v83
  %v1381 = vunpack.c.h.b16 %v83
  %v1382 = vunpack.c.l.b16 %v84
  %v1383 = vunpack.c.h.b16 %v84
  %v1384 = vunpack.c.l.b16 %v85
  %v1385 = vunpack.c.h.b16 %v85
  %v1386 = vunpack.c.l.b16 %v86
  %v1387 = vunpack.c.h.b16 %v86
  %v1388 = vunpack.c.l.b16 %v87
  %v1389 = vunpack.c.h.b16 %v87
  %v1390 = vunpack.c.l.b16 %v88
  %v1391 = vunpack.c.h.b16 %v88
  %v1392 = vunpack.c.l.b16 %v89
  %v1393 = vunpack.c.h.b16 %v89
  %v1394 = vunpack.c.l.b16 %v90
  %v1395 = vunpack.c.h.b16 %v90
  %v1396 = vunpack.c.l.b16 %v91
  %v1397 = vunpack.c.h.b16 %v91
  %v1398 = vunpack.c.l.b16 %v92
  %v1399 = vunpack.c.h.b16 %v92
  %v1400 = vunpack.c.l.b16 %v93
  %v1401 = vunpack.c.h.b16 %v93
  %v1402 = vunpack.c.l.b16 %v94
  %v1403 = vunpack.c.h.b16 %v94
  %v1404 = vunpack.c.l.b16 %v95
  %v1405 = vunpack.c.h.b16 %v95
  %v1406 = vunpack.c.l.b16 %v96
  %v1407 = vunpack.c.h.b16 %v96
  %v1408 = vunpack.c.l.b16 %v97
  %v1409 = vunpack.c.h.b16 %v97
  %v1410 = vunpack.c.l.b16 %v98
  %v1411 = vunpack.c.h.b16 %v98
  %v1412 = vunpack.c.l.b16 %v99
  %v1413 = vunpack.c.h.b16 %v99
  %v1414 = vunpack.c.l.b16 %v100
  %v1415 = vunpack.c.h.b16 %v100
  %v1416 = vunpack.c.l.b16 %v101
  %v1417 = vunpack.c.h.b16 %v101
  %v1418 = vunpack.c.l.b16 %v102
  %v1419 = vunpack.c.h.b16 %v102
  %v1420 = vunpack.c.l.b16 %v103
  %v1421 = vunpack.c.h.b16 %v103
  %v1422 = vunpack.c.l.b16 %v104
  %v1423 = vunpack.c.h.b16 %v104
  %v1424 = vunpack.c.l.b16 %v105
  %v1425 = vunpack.c.h.b16 %v105
  %v1426 = vunpack.c.l.b16 %v106
  %v1427 = vunpack.c.h.b16 %v106
  %v1428 = vunpack.c.l.b16 %v107
  %v1429 = vunpack.c.h.b16 %v107
  %v1430 = vunpack.c.l.b16 %v108
  %v1431 = vunpack.c.h.b16 %v108
  %v1432 = vunpack.c.l.b16 %v109
  %v1433 = vunpack.c.h.b16 %v109
  %v1434 = vunpack.c.l.b16 %v110
  %v1435 = vunpack.c.h.b16 %v110
  %v1436 = vunpack.c.l.b16 %v111
  %v1437 = vunpack.c.h.b16 %v111
  %v1438 = vunpack.c.l.b16 %v112
  %v1439 = vunpack.c.h.b16 %v112
  %v1440 = vunpack.c.l.b16 %v113
  %v1441 = vunpack.c.h.b16 %v113
  %v1442 = vunpack.c.l.b16 %v114
  %v1443 = vunpack.c.h.b16 %v114
  %v1444 = vunpack.c.l.b16 %v115
  %v1445 = vunpack.c.h.b16 %v115
  %v1446 = vunpack.c.l.b16 %v116
  %v1447 = vunpack.c.h.b16 %v116
  %v1448 = vunpack.c.l.b16 %v117
  %v1449 = vunpack.c.h.b16 %v117
  %v1450 = vunpack.c.l.b16 %v118
  %v1451 = vunpack.c.h.b16 %v118
  %v1452 = vunpack.c.l.b16 %v119
  %v1453 = vunpack.c.h.b16 %v119
  %v1454 = vunpack.c.l.b16 %v120
  %v1455 = vunpack.c.h.b16 %v120
  %v1456 = vunpack.c.l.b16 %v121
  %v1457 = vunpack.c.h.b16 %v121
  %v1458 = vunpack.c.l.b16 %v122
  %v1459 = vunpack.c.h.b16 %v122
  %v1460 = vunpack.c.l.b16 %v123
  %v1461 = vunpack.c.h.b16 %v123
  %v1462 = vunpack.c.l.b16 %v124
  %v1463 = vunpack.c.h.b16 %v124
  %v1464 = vunpack.c.l.b16 %v125
  %v1465 = vunpack.c.h.b16 %v125
  %v1466 = vunpack.c.l.b16 %v126
  %v1467 = vunpack.c.h.b16 %v126
  %v1468 = vunpack.c.l.b16 %v127
  %v1469 = vunpack.c.h.b16 %v127
  %v1470 = vunpack.c.l.b16 %v128
  %v1471 = vunpack.c.h.b16 %v128
  %v1472 = vunpack.c.l.b16 %v129
  %v1473 = vunpack.c.h.b16 %v129
  %v1474 = vunpack.c.l.b16 %v130
  %v1475 = vunpack.c.h.b16 %v130
  %v1476 = vunpack.c.l.b16 %v131
  %v1477 = vunpack.c.h.b16 %v131
  %v1478 = vunpack.c.l.b16 %v132
  %v1479 = vunpack.c.h.b16 %v132
  %v1480 = vunpack.c.l.b16 %v133
  %v1481 = vunpack.c.h.b16 %v133
  %v1482 = vunpack.c.l.b16 %v134
  %v1483 = vunpack.c.h.b16 %v134
  %v1484 = vunpack.c.l.b16 %v135
  %v1485 = vunpack.c.h.b16 %v135
  %v1486 = vunpack.c.l.b16 %v136
  %v1487 = vunpack.c.h.b16 %v136
  %v1488 = vunpack.c.l.b16 %v137
  %v1489 = vunpack.c.h.b16 %v137
  %v1490 = vunpack.c.l.b16 %v138
  %v1491 = vunpack.c.h.b16 %v138
  %v1492 = vunpack.c.l.b16 %v139
  %v1493 = vunpack.c.h.b16 %v139
  %v1494 = vunpack.c.l.b16 %v140
  %v1495 = vunpack.c.h.b16 %v140
  %v1496 = vunpack.c.l.b16 %v141
  %v1497 = vunpack.c.h.b16 %v141
  %v1498 = vunpack.c.l.b16 %v142
  %v1499 = vunpack.c.h.b16 %v142
  %v1500 = vunpack.c.l.b16 %v143
  %v1501 = vunpack.c.h.b16 %v143
  %v1502 = vunpack.c.l.b16 %v144
  %v1503 = vunpack.c.h.b16 %v144
  %v1504 = vunpack.c.l.b16 %v145
  %v1505 = vunpack.c.h.b16 %v145
  %v1506 = vunpack.c.l.b16 %v146
  %v1507 = vunpack.c.h.b16 %v146
  %v1508 = vunpack.c.l.b16 %v147
  %v1509 = vunpack.c.h.b16 %v147
  %v1510 = vunpack.c.l.b16 %v148
  %v1511 = vunpack.c.h.b16 %v148
  %v1512 = vunpack.c.l.b16 %v149
  %v1513 = vunpack.c.h.b16 %v149
  %v1514 = vunpack.c.l.b16 %v150
  %v1515 = vunpack.c.h.b16 %v150
  %v1516 = vunpack.c.l.b16 %v151
  %v1517 = vunpack.c.h.b16 %v151
  %v1518 = vunpack.c.l.b16 %v152
  %v1519 = vunpack.c.h.b16 %v152
  %v1520 = vunpack.c.l.b16 %v153
  %v1521 = vunpack.c.h.b16 %v153
  %v1522 = vunpack.c.l.b16 %v154
  %v1523 = vunpack.c.h.b16 %v154
  %v1524 = vunpack.c.l.b16 %v155
  %v1525 = vunpack.c.h.b16 %v155
  %v1526 = vunpack.c.l.b16 %v156
  %v1527 = vunpack.c.h.b16 %v156
  %v1528 = vunpack.c.l.b16 %v157
  %v1529 = vunpack.c.h.b16 %v157
  %v1530 = vunpack.c.l.b16 %v158
  %v1531 = vunpack.c.h.b16 %v158
  %v1532 = vunpack.c.l.b16 %v159
  %v1533 = vunpack.c.h.b16 %v159
  %v1534 = vunpack.c.l.b16 %v160
  %v1535 = vunpack.c.h.b16 %v160
  %v1536 = vunpack.c.l.b16 %v161
  %v1537 = vunpack.c.h.b16 %v161
  %v1538 = vunpack.c.l.b16 %v162
  %v1539 = vunpack.c.h.b16 %v162
  %v1540 = vunpack.c.l.b16 %v163
  %v1541 = vunpack.c.h.b16 %v163
  %v1542 = vunpack.c.l.b16 %v164
  %v1543 = vunpack.c.h.b16 %v164
  %v1544 = vunpack.c.l.b16 %v165
  %v1545 = vunpack.c.h.b16 %v165
  %v1546 = vunpack.c.l.b16 %v166
  %v1547 = vunpack.c.h.b16 %v166
  %v1548 = vunpack.c.l.b16 %v167
  %v1549 = vunpack.c.h.b16 %v167
  %v1550 = vunpack.c.l.b16 %v168
  %v1551 = vunpack.c.h.b16 %v168
  %v1552 = vunpack.c.l.b16 %v169
  %v1553 = vunpack.c.h.b16 %v169
  %v1554 = vunpack.c.l.b16 %v170
  %v1555 = vunpack.c.h.b16 %v170
  %v1556 = vunpack.c.l.b16 %v171
  %v1557 = vunpack.c.h.b16 %v171
  %v1558 = vunpack.c.l.b16 %v172
  %v1559 = vunpack.c.h.b16 %v172
  %v1560 = vunpack.c.l.b16 %v173
  %v1561 = vunpack.c.h.b16 %v173
  %v1562 = vunpack.c.l.b16 %v174
  %v1563 = vunpack.c.h.b16 %v174
  %v1564 = vunpack.c.l.b16 %v175
  %v1565 = vunpack.c.h.b16 %v175
  %v1566 = vunpack.c.l.b16 %v176
  %v1567 = vunpack.c.h.b16 %v176
  %v1568 = vunpack.c.l.b16 %v177
  %v1569 = vunpack.c.h.b16 %v177
  %v1570 = vunpack.c.l.b16 %v178
  %v1571 = vunpack.c.h.b16 %v178
  %v1572 = vunpack.c.l.b16 %v179
  %v1573 = vunpack.c.h.b16 %v179
  %v1574 = vunpack.c.l.b16 %v180
  %v1575 = vunpack.c.h.b16 %v180
  %v1576 = vunpack.c.l.b16 %v181
  %v1577 = vunpack.c.h.b16 %v181
  %v1578 = vunpack.c.l.b16 %v182
  %v1579 = vunpack.c.h.b16 %v182
  %v1580 = vunpack.c.l.b16 %v183
  %v1581 = vunpack.c.h.b16 %v183
  %v1582 = vunpack.c.l.b16 %v184
  %v1583 = vunpack.c.h.b16 %v184
  %v1584 = vunpack.c.l.b16 %v185
  %v1585 = vunpack.c.h.b16 %v185
  %v1586 = vunpack.c.l.b16 %v186
  %v1587 = vunpack.c.h.b16 %v186
  %v1588 = vunpack.c.l.b16 %v187
  %v1589 = vunpack.c.h.b16 %v187
  %v1590 = vunpack.c.l.b16 %v188
  %v1591 = vunpack.c.h.b16 %v188
  %v1592 = vunpack.c.l.b16 %v189
  %v1593 = vunpack.c.h.b16 %v189
  %v1594 = vunpack.c.l.b16 %v190
  %v1595 = vunpack.c.h.b16 %v190
  %v1596 = vunpack.c.l.b16 %v191
  %v1597 = vunpack.c.h.b16 %v191
  %v1598 = vunpack.c.l.b16 %v192
  %v1599 = vunpack.c.h.b16 %v192
  %v1600 = vunpack.c.l.b16 %v193
  %v1601 = vunpack.c.h.b16 %v193
  %v1602 = vunpack.c.l.b16 %v194
  %v1603 = vunpack.c.h.b16 %v194
  %v1604 = vunpack.c.l.b16 %v195
  %v1605 = vunpack.c.h.b16 %v195
  %v1606 = vunpack.c.l.b16 %v196
  %v1607 = vunpack.c.h.b16 %v196
  %v1608 = vunpack.c.l.b16 %v197
  %v1609 = vunpack.c.h.b16 %v197
  %v1610 = vunpack.c.l.b16 %v198
  %v1611 = vunpack.c.h.b16 %v198
  %v1612 = vunpack.c.l.b16 %v199
  %v1613 = vunpack.c.h.b16 %v199
  %v1614 = vunpack.c.l.b16 %v200
  %v1615 = vunpack.c.h.b16 %v200
  %v1616 = vunpack.c.l.b16 %v201
  %v1617 = vunpack.c.h.b16 %v201
  %v1618 = vunpack.c.l.b16 %v202
  %v1619 = vunpack.c.h.b16 %v202
  %v1620 = vunpack.c.l.b16 %v203
  %v1621 = vunpack.c.h.b16 %v203
  %v1622 = vunpack.c.l.b16 %v204
  %v1623 = vunpack.c.h.b16 %v204
  %v1624 = vunpack.c.l.b16 %v205
  %v1625 = vunpack.c.h.b16 %v205
  %v1626 = vunpack.c.l.b16 %v206
  %v1627 = vunpack.c.h.b16 %v206
  %v1628 = vunpack.c.l.b16 %v207
  %v1629 = vunpack.c.h.b16 %v207
  %v1630 = vunpack.c.l.b16 %v208
  %v1631 = vunpack.c.h.b16 %v208
  %v1632 = vunpack.c.l.b16 %v209
  %v1633 = vunpack.c.h.b16 %v209
  %v1634 = vunpack.c.l.b16 %v210
  %v1635 = vunpack.c.h.b16 %v210
  %v1636 = vunpack.c.l.b16 %v211
  %v1637 = vunpack.c.h.b16 %v211
  %v1638 = vunpack.c.l.b16 %v212
  %v1639 = vunpack.c.h.b16 %v212
  %v1640 = vunpack.c.l.b16 %v213
  %v1641 = vunpack.c.h.b16 %v213
  %v1642 = vunpack.c.l.b16 %v214
  %v1643 = vunpack.c.h.b16 %v214
  %v1644 = vunpack.c.l.b16 %v215
  %v1645 = vunpack.c.h.b16 %v215
  %v1646 = vunpack.c.l.b16 %v216
  %v1647 = vunpack.c.h.b16 %v216
  %v1648 = vunpack.c.l.b16 %v217
  %v1649 = vunpack.c.h.b16 %v217
  %v1650 = vunpack.c.l.b16 %v218
  %v1651 = vunpack.c.h.b16 %v218
  %v1652 = vunpack.c.l.b16 %v219
  %v1653 = vunpack.c.h.b16 %v219
  %v1654 = vunpack.c.l.b16 %v220
  %v1655 = vunpack.c.h.b16 %v220
  %v1656 = vunpack.c.l.b16 %v221
  %v1657 = vunpack.c.h.b16 %v221
  %v1658 = vunpack.c.l.b16 %v222
  %v1659 = vunpack.c.h.b16 %v222
  %v1660 = vunpack.c.l.b16 %v223
  %v1661 = vunpack.c.h.b16 %v223
  %v1662 = vunpack.c.l.b16 %v224
  %v1663 = vunpack.c.h.b16 %v224
  %v1664 = vunpack.c.l.b16 %v225
  %v1665 = vunpack.c.h.b16 %v225
  %v1666 = vunpack.c.l.b16 %v226
  %v1667 = vunpack.c.h.b16 %v226
  %v1668 = vunpack.c.l.b16 %v227
  %v1669 = vunpack.c.h.b16 %v227
  %v1670 = vunpack.c.l.b16 %v228
  %v1671 = vunpack.c.h.b16 %v228
  %v1672 = vunpack.c.l.b16 %v229
  %v1673 = vunpack.c.h.b16 %v229
  %v1674 = vunpack.c.l.b16 %v230
  %v1675 = vunpack.c.h.b16 %v230
  %v1676 = vunpack.c.l.b16 %v231
  %v1677 = vunpack.c.h.b16 %v231
  %v1678 = vunpack.c.l.b16 %v232
  %v1679 = vunpack.c.h.b16 %v232
  %v1680 = vunpack.c.l.b16 %v233
  %v1681 = vunpack.c.h.b16 %v233
  %v1682 = vunpack.c.l.b16 %v234
  %v1683 = vunpack.c.h.b16 %v234
  %v1684 = vunpack.c.l.b16 %v235
  %v1685 = vunpack.c.h.b16 %v235
  %v1686 = vunpack.c.l.b16 %v236
  %v1687 = vunpack.c.h.b16 %v236
  %v1688 = vunpack.c.l.b16 %v237
  %v1689 = vunpack.c.h.b16 %v237
  %v1690 = vunpack.c.l.b16 %v238
  %v1691 = vunpack.c.h.b16 %v238
  %v1692 = vunpack.c.l.b16 %v239
  %v1693 = vunpack.c.h.b16 %v239
  %v1694 = vunpack.c.l.b16 %v240
  %v1695 = vunpack.c.h.b16 %v240
  %v1696 = vunpack.c.l.b16 %v241
  %v1697 = vunpack.c.h.b16 %v241
  %v1698 = vunpack.c.l.b16 %v242
  %v1699 = vunpack.c.h.b16 %v242
  %v1700 = vunpack.c.l.b16 %v243
  %v1701 = vunpack.c.h.b16 %v243
  %v1702 = vunpack.c.l.b16 %v244
  %v1703 = vunpack.c.h.b16 %v244
  %v1704 = vunpack.c.l.b16 %v245
  %v1705 = vunpack.c.h.b16 %v245
  %v1706 = vunpack.c.l.b16 %v246
  %v1707 = vunpack.c.h.b16 %v246
  %v1708 = vunpack.c.l.b16 %v247
  %v1709 = vunpack.c.h.b16 %v247
  %v1710 = vunpack.c.l.b16 %v248
  %v1711 = vunpack.c.h.b16 %v248
  %v1712 = vunpack.c.l.b16 %v249
  %v1713 = vunpack.c.h.b16 %v249
  %v1714 = vunpack.c.l.b16 %v250
  %v1715 = vunpack.c.h.b16 %v250
  %v1716 = vunpack.c.l.b16 %v251
  %v1717 = vunpack.c.h.b16 %v251
  %v1718 = vunpack.c.l.b16 %v252
  %v1719 = vunpack.c.h.b16 %v252
  %v1720 = vunpack.c.l.b16 %v253
  %v1721 = vunpack.c.h.b16 %v253
  %v1722 = vunpack.c.l.b16 %v254
  %v1723 = vunpack.c.h.b16 %v254
  %v1724 = vunpack.c.l.b16 %v255
  %v1725 = vunpack.c.h.b16 %v255
  %v1726 = vunpack.c.l.b16 %v256
  %v1727 = vunpack.c.h.b16 %v256
  %v1728 = vunpack.c.l.b16 %v257
  %v1729 = vunpack.c.h.b16 %v257
  %v1730 = vunpack.c.l.b16 %v258
  %v1731 = vunpack.c.h.b16 %v258
  %v1732 = vunpack.c.l.b16 %v259
  %v1733 = vunpack.c.h.b16 %v259
  %v1734 = vunpack.c.l.b16 %v260
  %v1735 = vunpack.c.h.b16 %v260
  %v1736 = vunpack.c.l.b16 %v261
  %v1737 = vunpack.c.h.b16 %v261
  %v1738 = vunpack.c.l.b16 %v262
  %v1739 = vunpack.c.h.b16 %v262
  %v1740 = vunpack.c.l.b16 %v263
  %v1741 = vunpack.c.h.b16 %v263
  %v1742 = vunpack.c.l.b16 %v264
  %v1743 = vunpack.c.h.b16 %v264
  %v1744 = vunpack.c.l.b16 %v265
  %v1745 = vunpack.c.h.b16 %v265
  %v1746 = vunpack.c.l.b16 %v266
  %v1747 = vunpack.c.h.b16 %v266
  %v1748 = vunpack.c.l.b16 %v267
  %v1749 = vunpack.c.h.b16 %v267
  %v1750 = vunpack.c.l.b16 %v268
  %v1751 = vunpack.c.h.b16 %v268
  %v1752 = vunpack.c.l.b16 %v269
  %v1753 = vunpack.c.h.b16 %v269
  %v1754 = vunpack.c.l.b16 %v270
  %v1755 = vunpack.c.h.b16 %v270
  %v1756 = vunpack.c.l.b16 %v271
  %v1757 = vunpack.c.h.b16 %v271
  %v1758 = vunpack.c.l.b16 %v272
  %v1759 = vunpack.c.h.b16 %v272
  %v1760 = vunpack.c.l.b16 %v273
  %v1761 = vunpack.c.h.b16 %v273
  %v1762 = vunpack.c.l.b16 %v274
  %v1763 = vunpack.c.h.b16 %v274
  %v1764 = vunpack.c.l.b16 %v275
  %v1765 = vunpack.c.h.b16 %v275
  %v1766 = vunpack.c.l.b16 %v276
  %v1767 = vunpack.c.h.b16 %v276
  %v1768 = vunpack.c.l.b16 %v277
  %v1769 = vunpack.c.h.b16 %v277
  %v1770 = vunpack.c.l.b16 %v278
  %v1771 = vunpack.c.h.b16 %v278
  %v1772 = vunpack.c.l.b16 %v279
  %v1773 = vunpack.c.h.b16 %v279
  %v1774 = vunpack.c.l.b16 %v280
  %v1775 = vunpack.c.h.b16 %v280
  %v1776 = vunpack.c.l.b16 %v281
  %v1777 = vunpack.c.h.b16 %v281
  %v1778 = vunpack.c.l.b16 %v282
  %v1779 = vunpack.c.h.b16 %v282
  %v1780 = vunpack.c.l.b16 %v283
  %v1781 = vunpack.c.h.b16 %v283
  %v1782 = vunpack.c.l.b16 %v284
  %v1783 = vunpack.c.h.b16 %v284
  %v1784 = vunpack.c.l.b16 %v285
  %v1785 = vunpack.c.h.b16 %v285
  %v1786 = vunpack.c.l.b16 %v286
  %v1787 = vunpack.c.h.b16 %v286
  %v1788 = vunpack.c.l.b16 %v287
  %v1789 = vunpack.c.h.b16 %v287
  %v1790 = vunpack.c.l.b16 %v288
  %v1791 = vunpack.c.h.b16 %v288
  %v1792 = vunpack.c.l.b16 %v289
  %v1793 = vunpack.c.h.b16 %v289
  %v1794 = vunpack.c.l.b16 %v290
  %v1795 = vunpack.c.h.b16 %v290
  %v1796 = vunpack.c.l.b16 %v291
  %v1797 = vunpack.c.h.b16 %v291
  %v1798 = vunpack.c.l.b16 %v292
  %v1799 = vunpack.c.h.b16 %v292
  %v1800 = vunpack.c.l.b16 %v293
  %v1801 = vunpack.c.h.b16 %v293
  %v1802 = vunpack.c.l.b16 %v294
  %v1803 = vunpack.c.h.b16 %v294
  %v1804 = vunpack.c.l.b16 %v295
  %v1805 = vunpack.c.h.b16 %v295
  %v1806 = vunpack.c.l.b16 %v296
  %v1807 = vunpack.c.h.b16 %v296
  %v1808 = vunpack.c.l.b16 %v297
  %v1809 = vunpack.c.h.b16 %v297
  %v1810 = vunpack.c.l.b16 %v298
  %v1811 = vunpack.c.h.b16 %v298
  %v1812 = vunpack.c.l.b16 %v299
  %v1813 = vunpack.c.h.b16 %v299
  %v1814 = vunpack.c.l.b16 %v300
  %v1815 = vunpack.c.h.b16 %v300
  %v1816 = vunpack.c.l.b16 %v301
  %v1817 = vunpack.c.h.b16 %v301
  %v1818 = vunpack.c.l.b16 %v302
  %v1819 = vunpack.c.h.b16 %v302
  %v1820 = vunpack.c.l.b16 %v303
  %v1821 = vunpack.c.h.b16 %v303
  %v1822 = vunpack.c.l.b16 %v304
  %v1823 = vunpack.c.h.b16 %v304
  %v1824 = vunpack.c.l.b16 %v305
  %v1825 = vunpack.c.h.b16 %v305
  %v1826 = vunpack.c.l.b16 %v306
  %v1827 = vunpack.c.h.b16 %v306
  %v1828 = vunpack.c.l.b16 %v307
  %v1829 = vunpack.c.h.b16 %v307
  %v1830 = vunpack.c.l.b16 %v308
  %v1831 = vunpack.c.h.b16 %v308
  %v1832 = vunpack.c.l.b16 %v309
  %v1833 = vunpack.c.h.b16 %v309
  %v1834 = vunpack.c.l.b16 %v310
  %v1835 = vunpack.c.h.b16 %v310
  %v1836 = vunpack.c.l.b16 %v311
  %v1837 = vunpack.c.h.b16 %v311
  %v1838 = vunpack.c.l.b16 %v312
  %v1839 = vunpack.c.h.b16 %v312
  %v1840 = vunpack.c.l.b16 %v313
  %v1841 = vunpack.c.h.b16 %v313
  %v1842 = vunpack.c.l.b16 %v314
  %v1843 = vunpack.c.h.b16 %v314
  %v1844 = vunpack.c.l.b16 %v315
  %v1845 = vunpack.c.h.b16 %v315
  %v1846 = vunpack.c.l.b16 %v316
  %v1847 = vunpack.c.h.b16 %v316
  %v1848 = vunpack.c.l.b16 %v317
  %v1849 = vunpack.c.h.b16 %v317
  %v1850 = vunpack.c.l.b16 %v318
  %v1851 = vunpack.c.h.b16 %v318
  %v1852 = vunpack.c.l.b16 %v319
  %v1853 = vunpack.c.h.b16 %v319
  %v1854 = vunpack.c.l.b16 %v320
  %v1855 = vunpack.c.h.b16 %v320
  %v1856 = vunpack.c.l.b16 %v321
  %v1857 = vunpack.c.h.b16 %v321
  %v1858 = vunpack.c.l.b16 %v322
  %v1859 = vunpack.c.h.b16 %v322
  %v1860 = vunpack.c.l.b16 %v323
  %v1861 = vunpack.c.h.b16 %v323
  %v1862 = vunpack.c.l.b16 %v324
  %v1863 = vunpack.c.h.b16 %v324
  %v1864 = vunpack.c.l.b16 %v325
  %v1865 = vunpack.c.h.b16 %v325
  %v1866 = vunpack.c.l.b16 %v326
  %v1867 = vunpack.c.h.b16 %v326
  %v1868 = vunpack.c.l.b16 %v327
  %v1869 = vunpack.c.h.b16 %v327
  %v1870 = vunpack.c.l.b16 %v328
  %v1871 = vunpack.c.h.b16 %v328
  %v1872 = vunpack.c.l.b16 %v329
  %v1873 = vunpack.c.h.b16 %v329
  %v1874 = vunpack.c.l.b16 %v330
  %v1875 = vunpack.c.h.b16 %v330
  %v1876 = vunpack.c.l.b16 %v331
  %v1877 = vunpack.c.h.b16 %v331
  %v1878 = vunpack.c.l.b16 %v332
  %v1879 = vunpack.c.h.b16 %v332
  %v1880 = vunpack.c.l.b16 %v333
  %v1881 = vunpack.c.h.b16 %v333
  %v1882 = vunpack.c.l.b16 %v334
  %v1883 = vunpack.c.h.b16 %v334
  %v1884 = vunpack.c.l.b16 %v335
  %v1885 = vunpack.c.h.b16 %v335
  %v1886 = vunpack.c.l.b16 %v336
  %v1887 = vunpack.c.h.b16 %v336
  %v1888 = vunpack.c.l.b16 %v337
  %v1889 = vunpack.c.h.b16 %v337
  %v1890 = vunpack.c.l.b16 %v338
  %v1891 = vunpack.c.h.b16 %v338
  %v1892 = vunpack.c.l.b16 %v339
  %v1893 = vunpack.c.h.b16 %v339
  %v1894 = vunpack.c.l.b16 %v340
  %v1895 = vunpack.c.h.b16 %v340
  %v1896 = vunpack.c.l.b16 %v341
  %v1897 = vunpack.c.h.b16 %v341
  %v1898 = vunpack.c.l.b16 %v342
  %v1899 = vunpack.c.h.b16 %v342
  %v1900 = vunpack.c.l.b16 %v343
  %v1901 = vunpack.c.h.b16 %v343
  %v1902 = vunpack.c.l.b16 %v344
  %v1903 = vunpack.c.h.b16 %v344
  %v1904 = vunpack.c.l.b16 %v345
  %v1905 = vunpack.c.h.b16 %v345
  %v1906 = vunpack.c.l.b16 %v346
  %v1907 = vunpack.c.h.b16 %v346
  %v1908 = vunpack.c.l.b16 %v347
  %v1909 = vunpack.c.h.b16 %v347
  %v1910 = vunpack.c.l.b16 %v348
  %v1911 = vunpack.c.h.b16 %v348
  %v1912 = vunpack.c.l.b16 %v349
  %v1913 = vunpack.c.h.b16 %v349
  %v1914 = vunpack.c.l.b16 %v350
  %v1915 = vunpack.c.h.b16 %v350
  %v1916 = vunpack.c.l.b16 %v351
  %v1917 = vunpack.c.h.b16 %v351
  %v1918 = vunpack.c.l.b16 %v352
  %v1919 = vunpack.c.h.b16 %v352
  %v1920 = vunpack.c.l.b16 %v353
  %v1921 = vunpack.c.h.b16 %v353
  %v1922 = vunpack.c.l.b16 %v354
  %v1923 = vunpack.c.h.b16 %v354
  %v1924 = vunpack.c.l.b16 %v355
  %v1925 = vunpack.c.h.b16 %v355
  %v1926 = vunpack.c.l.b16 %v356
  %v1927 = vunpack.c.h.b16 %v356
  %v1928 = vunpack.c.l.b16 %v357
  %v1929 = vunpack.c.h.b16 %v357
  %v1930 = vunpack.c.l.b16 %v358
  %v1931 = vunpack.c.h.b16 %v358
  %v1932 = vunpack.c.l.b16 %v359
  %v1933 = vunpack.c.h.b16 %v359
  %v1934 = vunpack.c.l.b16 %v360
  %v1935 = vunpack.c.h.b16 %v360
  %v1936 = vunpack.c.l.b16 %v361
  %v1937 = vunpack.c.h.b16 %v361
  %v1938 = vunpack.c.l.b16 %v362
  %v1939 = vunpack.c.h.b16 %v362
  %v1940 = vunpack.c.l.b16 %v363
  %v1941 = vunpack.c.h.b16 %v363
  %v1942 = vunpack.c.l.b16 %v364
  %v1943 = vunpack.c.h.b16 %v364
  %v1944 = vunpack.c.l.b16 %v365
  %v1945 = vunpack.c.h.b16 %v365
  %v1946 = vunpack.c.l.b16 %v366
  %v1947 = vunpack.c.h.b16 %v366
  %v1948 = vunpack.c.l.b16 %v367
  %v1949 = vunpack.c.h.b16 %v367
  %v1950 = vunpack.c.l.b16 %v368
  %v1951 = vunpack.c.h.b16 %v368
  %v1952 = vunpack.c.l.b16 %v369
  %v1953 = vunpack.c.h.b16 %v369
  %v1954 = vunpack.c.l.b16 %v370
  %v1955 = vunpack.c.h.b16 %v370
  %v1956 = vunpack.c.l.b16 %v371
  %v1957 = vunpack.c.h.b16 %v371
  %v1958 = vunpack.c.l.b16 %v372
  %v1959 = vunpack.c.h.b16 %v372
  %v1960 = vunpack.c.l.b16 %v373
  %v1961 = vunpack.c.h.b16 %v373
  %v1962 = vunpack.c.l.b16 %v374
  %v1963 = vunpack.c.h.b16 %v374
  %v1964 = vunpack.c.l.b16 %v375
  %v1965 = vunpack.c.h.b16 %v375
  %v1966 = vunpack.c.l.b16 %v376
  %v1967 = vunpack.c.h.b16 %v376
  %v1968 = vunpack.c.l.b16 %v377
  %v1969 = vunpack.c.h.b16 %v377
  %v1970 = vunpack.c.l.b16 %v378
  %v1971 = vunpack.c.h.b16 %v378
  %v1972 = vunpack.c.l.b16 %v379
  %v1973 = vunpack.c.h.b16 %v379
  %v1974 = vunpack.c.l.b16 %v380
  %v1975 = vunpack.c.h.b16 %v380
  %v1976 = vunpack.c.l.b16 %v381
  %v1977 = vunpack.c.h.b16 %v381
  %v1978 = vunpack.c.l.b16 %v382
  %v1979 = vunpack.c.h.b16 %v382
  %v1980 = vunpack.c.l.b16 %v383
  %v1981 = vunpack.c.h.b16 %v383
  %v1982 = vunpack.c.l.b16 %v384
  %v1983 = vunpack.c.h.b16 %v384
  %v1984 = vunpack.c.l.b16 %v385
  %v1985 = vunpack.c.h.b16 %v385
  %v1986 = vunpack.c.l.b16 %v386
  %v1987 = vunpack.c.h.b16 %v386
  %v1988 = vunpack.c.l.b16 %v387
  %v1989 = vunpack.c.h.b16 %v387
  %v1990 = vunpack.c.l.b16 %v388
  %v1991 = vunpack.c.h.b16 %v388
  %v1992 = vunpack.c.l.b16 %v389
  %v1993 = vunpack.c.h.b16 %v389
  %v1994 = vunpack.c.l.b16 %v390
  %v1995 = vunpack.c.h.b16 %v390
  %v1996 = vunpack.c.l.b16 %v391
  %v1997 = vunpack.c.h.b16 %v391
  %v1998 = vunpack.c.l.b16 %v392
  %v1999 = vunpack.c.h.b16 %v392
  %v2000 = vunpack.c.l.b16 %v393
  %v2001 = vunpack.c.h.b16 %v393
  %v2002 = vunpack.c.l.b16 %v394
  %v2003 = vunpack.c.h.b16 %v394
  %v2004 = vunpack.c.l.b16 %v395
  %v2005 = vunpack.c.h.b16 %v395
  %v2006 = vunpack.c.l.b16 %v396
  %v2007 = vunpack.c.h.b16 %v396
  %v2008 = vunpack.c.l.b16 %v397
  %v2009 = vunpack.c.h.b16 %v397
  %v2010 = vunpack.c.l.b16 %v398
  %v2011 = vunpack.c.h.b16 %v398
  %v2012 = vunpack.c.l.b16 %v399
  %v2013 = vunpack.c.h.b16 %v399
  %v2014 = vunpack.c.l.b16 %v400
  %v2015 = vunpack.c.h.b16 %v400
  %v2016 = vunpack.c.l.b16 %v401
  %v2017 = vunpack.c.h.b16 %v401
  %v2018 = vunpack.c.l.b16 %v402
  %v2019 = vunpack.c.h.b16 %v402
  %v2020 = vunpack.c.l.b16 %v403
  %v2021 = vunpack.c.h.b16 %v403
  %v2022 = vunpack.c.l.b16 %v404
  %v2023 = vunpack.c.h.b16 %v404
  %v2024 = vunpack.c.l.b16 %v405
  %v2025 = vunpack.c.h.b16 %v405
  %v2026 = vunpack.c.l.b16 %v406
  %v2027 = vunpack.c.h.b16 %v406
  %v2028 = vunpack.c.l.b16 %v407
  %v2029 = vunpack.c.h.b16 %v407
  %v2030 = vunpack.c.l.b16 %v408
  %v2031 = vunpack.c.h.b16 %v408
  %v2032 = vunpack.c.l.b16 %v409
  %v2033 = vunpack.c.h.b16 %v409
  %v2034 = vunpack.c.l.b16 %v410
  %v2035 = vunpack.c.h.b16 %v410
  %v2036 = vunpack.c.l.b16 %v411
  %v2037 = vunpack.c.h.b16 %v411
  %v2038 = vunpack.c.l.b16 %v412
  %v2039 = vunpack.c.h.b16 %v412
  %v2040 = vunpack.c.l.b16 %v413
  %v2041 = vunpack.c.h.b16 %v413
  %v2042 = vunpack.c.l.b16 %v414
  %v2043 = vunpack.c.h.b16 %v414
  %v2044 = vunpack.c.l.b16 %v415
  %v2045 = vunpack.c.h.b16 %v415
  %v2046 = vunpack.c.l.b16 %v416
  %v2047 = vunpack.c.h.b16 %v416
  %v2048 = vunpack.c.l.b16 %v417
  %v2049 = vunpack.c.h.b16 %v417
  %v2050 = vunpack.c.l.b16 %v418
  %v2051 = vunpack.c.h.b16 %v418
  %v2052 = vunpack.c.l.b16 %v419
  %v2053 = vunpack.c.h.b16 %v419
  %v2054 = vunpack.c.l.b16 %v420
  %v2055 = vunpack.c.h.b16 %v420
  %v2056 = vunpack.c.l.b16 %v421
  %v2057 = vunpack.c.h.b16 %v421
  %v2058 = vunpack.c.l.b16 %v422
  %v2059 = vunpack.c.h.b16 %v422
  %v2060 = vunpack.c.l.b16 %v423
  %v2061 = vunpack.c.h.b16 %v423
  %v2062 = vunpack.c.l.b16 %v424
  %v2063 = vunpack.c.h.b16 %v424
  %v2064 = vunpack.c.l.b16 %v425
  %v2065 = vunpack.c.h.b16 %v425
  %v2066 = vunpack.c.l.b16 %v426
  %v2067 = vunpack.c.h.b16 %v426
  %v2068 = vunpack.c.l.b16 %v427
  %v2069 = vunpack.c.h.b16 %v427
  %v2070 = vunpack.c.l.b16 %v428
  %v2071 = vunpack.c.h.b16 %v428
  %v2072 = vunpack.c.l.b16 %v429
  %v2073 = vunpack.c.h.b16 %v429
  %v2074 = vunpack.c.l.b16 %v430
  %v2075 = vunpack.c.h.b16 %v430
  %v2076 = vunpack.c.l.b16 %v431
  %v2077 = vunpack.c.h.b16 %v431
  %v2078 = vunpack.c.l.b16 %v432
  %v2079 = vunpack.c.h.b16 %v432
  %v2080 = vunpack.c.l.b16 %v433
  %v2081 = vunpack.c.h.b16 %v433
  %v2082 = vunpack.c.l.b16 %v434
  %v2083 = vunpack.c.h.b16 %v434
  %v2084 = vunpack.c.l.b16 %v435
  %v2085 = vunpack.c.h.b16 %v435
  %v2086 = vunpack.c.l.b16 %v436
  %v2087 = vunpack.c.h.b16 %v436
  %v2088 = vunpack.c.l.b16 %v437
  %v2089 = vunpack.c.h.b16 %v437
  %v2090 = vunpack.c.l.b16 %v438
  %v2091 = vunpack.c.h.b16 %v438
  %v2092 = vunpack.c.l.b16 %v439
  %v2093 = vunpack.c.h.b16 %v439
  %v2094 = vunpack.c.l.b16 %v440
  %v2095 = vunpack.c.h.b16 %v440
  %v2096 = vunpack.c.l.b16 %v441
  %v2097 = vunpack.c.h.b16 %v441
  %v2098 = vunpack.c.l.b16 %v442
  %v2099 = vunpack.c.h.b16 %v442
  %v2100 = vunpack.c.l.b16 %v443
  %v2101 = vunpack.c.h.b16 %v443
  %v2102 = vunpack.c.l.b16 %v444
  %v2103 = vunpack.c.h.b16 %v444
  %v2104 = vunpack.c.l.b16 %v445
  %v2105 = vunpack.c.h.b16 %v445
  %v2106 = vunpack.c.l.b16 %v446
  %v2107 = vunpack.c.h.b16 %v446
  %v2108 = vunpack.c.l.b16 %v447
  %v2109 = vunpack.c.h.b16 %v447
  %v2110 = vunpack.c.l.b16 %v448
  %v2111 = vunpack.c.h.b16 %v448
  %v2112 = vunpack.c.l.b16 %v449
  %v2113 = vunpack.c.h.b16 %v449
  %v2114 = vunpack.c.l.b16 %v450
  %v2115 = vunpack.c.h.b16 %v450
  %v2116 = vunpack.c.l.b16 %v451
  %v2117 = vunpack.c.h.b16 %v451
  %v2118 = vunpack.c.l.b16 %v452
  %v2119 = vunpack.c.h.b16 %v452
  %v2120 = vunpack.c.l.b16 %v453
  %v2121 = vunpack.c.h.b16 %v453
  %v2122 = vunpack.c.l.b16 %v454
  %v2123 = vunpack.c.h.b16 %v454
  %v2124 = vunpack.c.l.b16 %v455
  %v2125 = vunpack.c.h.b16 %v455
  %v2126 = vunpack.c.l.b16 %v456
  %v2127 = vunpack.c.h.b16 %v456
  %v2128 = vunpack.c.l.b16 %v457
  %v2129 = vunpack.c.h.b16 %v457
  %v2130 = vunpack.c.l.b16 %v458
  %v2131 = vunpack.c.h.b16 %v458
  %v2132 = vunpack.c.l.b16 %v459
  %v2133 = vunpack.c.h.b16 %v459
  %v2134 = vunpack.c.l.b16 %v460
  %v2135 = vunpack.c.h.b16 %v460
  %v2136 = vunpack.c.l.b16 %v461
  %v2137 = vunpack.c.h.b16 %v461
  %v2138 = vunpack.c.l.b16 %v462
  %v2139 = vunpack.c.h.b16 %v462
  %v2140 = vunpack.c.l.b16 %v463
  %v2141 = vunpack.c.h.b16 %v463
  %v2142 = vunpack.c.l.b16 %v464
  %v2143 = vunpack.c.h.b16 %v464
  %v2144 = vunpack.c.l.b16 %v465
  %v2145 = vunpack.c.h.b16 %v465
  %v2146 = vunpack.c.l.b16 %v466
  %v2147 = vunpack.c.h.b16 %v466
  %v2148 = vunpack.c.l.b16 %v467
  %v2149 = vunpack.c.h.b16 %v467
  %v2150 = vunpack.c.l.b16 %v468
  %v2151 = vunpack.c.h.b16 %v468
  %v2152 = vunpack.c.l.b16 %v469
  %v2153 = vunpack.c.h.b16 %v469
  %v2154 = vunpack.c.l.b16 %v470
  %v2155 = vunpack.c.h.b16 %v470
  %v2156 = vunpack.c.l.b16 %v471
  %v2157 = vunpack.c.h.b16 %v471
  %v2158 = vunpack.c.l.b16 %v472
  %v2159 = vunpack.c.h.b16 %v472
  %v2160 = vunpack.c.l.b16 %v473
  %v2161 = vunpack.c.h.b16 %v473
  %v2162 = vunpack.c.l.b16 %v474
  %v2163 = vunpack.c.h.b16 %v474
  %v2164 = vunpack.c.l.b16 %v475
  %v2165 = vunpack.c.h.b16 %v475
  %v2166 = vunpack.c.l.b16 %v476
  %v2167 = vunpack.c.h.b16 %v476
  %v2168 = vunpack.c.l.b16 %v477
  %v2169 = vunpack.c.h.b16 %v477
  %v2170 = vunpack.c.l.b16 %v478
  %v2171 = vunpack.c.h.b16 %v478
  %v2172 = vunpack.c.l.b16 %v479
  %v2173 = vunpack.c.h.b16 %v479
  %v2174 = vunpack.c.l.b16 %v480
  %v2175 = vunpack.c.h.b16 %v480
  %v2176 = vunpack.c.l.b16 %v481
  %v2177 = vunpack.c.h.b16 %v481
  %v2178 = vunpack.c.l.b16 %v482
  %v2179 = vunpack.c.h.b16 %v482
  %v2180 = vunpack.c.l.b16 %v483
  %v2181 = vunpack.c.h.b16 %v483
  %v2182 = vunpack.c.l.b16 %v484
  %v2183 = vunpack.c.h.b16 %v484
  %v2184 = vunpack.c.l.b16 %v485
  %v2185 = vunpack.c.h.b16 %v485
  %v2186 = vunpack.c.l.b16 %v486
  %v2187 = vunpack.c.h.b16 %v486
  %v2188 = vunpack.c.l.b16 %v487
  %v2189 = vunpack.c.h.b16 %v487
  %v2190 = vunpack.c.l.b16 %v488
  %v2191 = vunpack.c.h.b16 %v488
  %v2192 = vunpack.c.l.b16 %v489
  %v2193 = vunpack.c.h.b16 %v489
  %v2194 = vunpack.c.l.b16 %v490
  %v2195 = vunpack.c.h.b16 %v490
  %v2196 = vunpack.c.l.b16 %v491
  %v2197 = vunpack.c.h.b16 %v491
  %v2198 = vunpack.c.l.b16 %v492
  %v2199 = vunpack.c.h.b16 %v492
  %v2200 = vunpack.c.l.b16 %v493
  %v2201 = vunpack.c.h.b16 %v493
  %v2202 = vunpack.c.l.b16 %v494
  %v2203 = vunpack.c.h.b16 %v494
  %v2204 = vunpack.c.l.b16 %v495
  %v2205 = vunpack.c.h.b16 %v495
  %v2206 = vunpack.c.l.b16 %v496
  %v2207 = vunpack.c.h.b16 %v496
  %v2208 = vunpack.c.l.b16 %v497
  %v2209 = vunpack.c.h.b16 %v497
  %v2210 = vunpack.c.l.b16 %v498
  %v2211 = vunpack.c.h.b16 %v498
  %v2212 = vunpack.c.l.b16 %v499
  %v2213 = vunpack.c.h.b16 %v499
  %v2214 = vunpack.c.l.b16 %v500
  %v2215 = vunpack.c.h.b16 %v500
  %v2216 = vunpack.c.l.b16 %v501
  %v2217 = vunpack.c.h.b16 %v501
  %v2218 = vunpack.c.l.b16 %v502
  %v2219 = vunpack.c.h.b16 %v502
  %v2220 = vunpack.c.l.b16 %v503
  %v2221 = vunpack.c.h.b16 %v503
  %v2222 = vunpack.c.l.b16 %v504
  %v2223 = vunpack.c.h.b16 %v504
  %v2224 = vunpack.c.l.b16 %v505
  %v2225 = vunpack.c.h.b16 %v505
  %v2226 = vunpack.c.l.b16 %v506
  %v2227 = vunpack.c.h.b16 %v506
  %v2228 = vunpack.c.l.b16 %v507
  %v2229 = vunpack.c.h.b16 %v507
  %v2230 = vunpack.c.l.b16 %v508
  %v2231 = vunpack.c.h.b16 %v508
  %v2232 = vunpack.c.l.b16 %v509
  %v2233 = vunpack.c.h.b16 %v509
  %v2234 = vunpack.c.l.b16 %v510
  %v2235 = vunpack.c.h.b16 %v510
  %v2236 = vunpack.c.l.b16 %v511
  %v2237 = vunpack.c.h.b16 %v511
  %v2238 = vunpack.c.l.b16 %v512
  %v2239 = vunpack.c.h.b16 %v512
  %v2240 = vunpack.c.l.b16 %v513
  %v2241 = vunpack.c.h.b16 %v513
  %v2242 = vunpack.c.l.b16 %v514
  %v2243 = vunpack.c.h.b16 %v514
  %v2244 = vunpack.c.l.b16 %v515
  %v2245 = vunpack.c.h.b16 %v515
  %v2246 = vunpack.c.l.b16 %v516
  %v2247 = vunpack.c.h.b16 %v516
  %v2248 = vunpack.c.l.b16 %v517
  %v2249 = vunpack.c.h.b16 %v517
  %v2250 = vunpack.c.l.b16 %v518
  %v2251 = vunpack.c.h.b16 %v518
  %v2252 = vunpack.c.l.b16 %v519
  %v2253 = vunpack.c.h.b16 %v519
  %v2254 = vunpack.c.l.b16 %v520
  %v2255 = vunpack.c.h.b16 %v520
  %v2256 = vunpack.c.l.b16 %v521
  %v2257 = vunpack.c.h.b16 %v521
  %v2258 = vunpack.c.l.b16 %v522
  %v2259 = vunpack.c.h.b16 %v522
  %v2260 = vunpack.c.l.b16 %v523
  %v2261 = vunpack.c.h.b16 %v523
  %v2262 = vunpack.c.l.b16 %v524
  %v2263 = vunpack.c.h.b16 %v524
  %v2264 = vunpack.c.l.b16 %v525
  %v2265 = vunpack.c.h.b16 %v525
  %v2266 = vunpack.c.l.b16 %v526
  %v2267 = vunpack.c.h.b16 %v526
  %v2268 = vunpack.c.l.b16 %v527
  %v2269 = vunpack.c.h.b16 %v527
  %v2270 = vunpack.c.l.b16 %v528
  %v2271 = vunpack.c.h.b16 %v528
  %v2272 = vunpack.c.l.b16 %v529
  %v2273 = vunpack.c.h.b16 %v529
  %v2274 = vunpack.c.l.b16 %v530
  %v2275 = vunpack.c.h.b16 %v530
  %v2276 = vunpack.c.l.b16 %v531
  %v2277 = vunpack.c.h.b16 %v531
  %v2278 = vunpack.c.l.b16 %v532
  %v2279 = vunpack.c.h.b16 %v532
  %v2280 = vunpack.c.l.b16 %v533
  %v2281 = vunpack.c.h.b16 %v533
  %v2282 = vunpack.c.l.b16 %v534
  %v2283 = vunpack.c.h.b16 %v534
  %v2284 = vunpack.c.l.b16 %v535
  %v2285 = vunpack.c.h.b16 %v535
  %v2286 = vunpack.c.l.b16 %v536
  %v2287 = vunpack.c.h.b16 %v536
  %v2288 = vunpack.c.l.b16 %v537
  %v2289 = vunpack.c.h.b16 %v537
  %v2290 = vunpack.c.l.b16 %v538
  %v2291 = vunpack.c.h.b16 %v538
  %v2292 = vunpack.c.l.b16 %v539
  %v2293 = vunpack.c.h.b16 %v539
  %v2294 = vunpack.c.l.b16 %v540
  %v2295 = vunpack.c.h.b16 %v540
  %v2296 = vunpack.c.l.b16 %v541
  %v2297 = vunpack.c.h.b16 %v541
  %v2298 = vunpack.c.l.b16 %v542
  %v2299 = vunpack.c.h.b16 %v542
  %v2300 = vunpack.c.l.b16 %v543
  %v2301 = vunpack.c.h.b16 %v543
  %v2302 = vunpack.c.l.b16 %v544
  %v2303 = vunpack.c.h.b16 %v544
  %v2304 = vunpack.c.l.b16 %v545
  %v2305 = vunpack.c.h.b16 %v545
  %v2306 = vunpack.c.l.b16 %v546
  %v2307 = vunpack.c.h.b16 %v546
  %v2308 = vunpack.c.l.b16 %v547
  %v2309 = vunpack.c.h.b16 %v547
  %v2310 = vunpack.c.l.b16 %v548
  %v2311 = vunpack.c.h.b16 %v548
  %v2312 = vunpack.c.l.b16 %v549
  %v2313 = vunpack.c.h.b16 %v549
  %v2314 = vunpack.c.l.b16 %v550
  %v2315 = vunpack.c.h.b16 %v550
  %v2316 = vunpack.c.l.b16 %v551
  %v2317 = vunpack.c.h.b16 %v551
  %v2318 = vunpack.c.l.b16 %v552
  %v2319 = vunpack.c.h.b16 %v552
  %v2320 = vunpack.c.l.b16 %v553
  %v2321 = vunpack.c.h.b16 %v553
  %v2322 = vunpack.c.l.b16 %v554
  %v2323 = vunpack.c.h.b16 %v554
  %v2324 = vunpack.c.l.b16 %v555
  %v2325 = vunpack.c.h.b16 %v555
  %v2326 = vunpack.c.l.b16 %v556
  %v2327 = vunpack.c.h.b16 %v556
  %v2328 = vunpack.c.l.b16 %v557
  %v2329 = vunpack.c.h.b16 %v557
  %v2330 = vunpack.c.l.b16 %v558
  %v2331 = vunpack.c.h.b16 %v558
  %v2332 = vunpack.c.l.b16 %v559
  %v2333 = vunpack.c.h.b16 %v559
  %v2334 = vunpack.c.l.b16 %v560
  %v2335 = vunpack.c.h.b16 %v560
  %v2336 = vunpack.c.l.b16 %v561
  %v2337 = vunpack.c.h.b16 %v561
  %v2338 = vunpack.c.l.b16 %v562
  %v2339 = vunpack.c.h.b16 %v562
  %v2340 = vunpack.c.l.b16 %v563
  %v2341 = vunpack.c.h.b16 %v563
  %v2342 = vunpack.c.l.b16 %v564
  %v2343 = vunpack.c.h.b16 %v564
  %v2344 = vunpack.c.l.b16 %v565
  %v2345 = vunpack.c.h.b16 %v565
  %v2346 = vunpack.c.l.b16 %v566
  %v2347 = vunpack.c.h.b16 %v566
  %v2348 = vunpack.c.l.b16 %v567
  %v2349 = vunpack.c.h.b16 %v567
  %v2350 = vunpack.c.l.b16 %v568
  %v2351 = vunpack.c.h.b16 %v568
  %v2352 = vunpack.c.l.b16 %v569
  %v2353 = vunpack.c.h.b16 %v569
  %v2354 = vunpack.c.l.b16 %v570
  %v2355 = vunpack.c.h.b16 %v570
  %v2356 = vunpack.c.l.b16 %v571
  %v2357 = vunpack.c.h.b16 %v571
  %v2358 = vunpack.c.l.b16 %v572
  %v2359 = vunpack.c.h.b16 %v572
  %v2360 = vunpack.c.l.b16 %v573
  %v2361 = vunpack.c.h.b16 %v573
  %v2362 = vunpack.c.l.b16 %v574
  %v2363 = vunpack.c.h.b16 %v574
  %v2364 = vunpack.c.l.b16 %v575
  %v2365 = vunpack.c.h.b16 %v575
  %v2366 = vunpack.c.l.b16 %v576
  %v2367 = vunpack.c.h.b16 %v576
  %v2368 = vunpack.c.l.b16 %v577
  %v2369 = vunpack.c.h.b16 %v577
  %v2370 = vunpack.c.l.b16 %v578
  %v2371 = vunpack.c.h.b16 %v578
  %v2372 = vunpack.c.l.b16 %v579
  %v2373 = vunpack.c.h.b16 %v579
  %v2374 = vunpack.c.l.b16 %v580
  %v2375 = vunpack.c.h.b16 %v580
  %v2376 = vunpack.c.l.b16 %v581
  %v2377 = vunpack.c.h.b16 %v581
  %v2378 = vunpack.c.l.b16 %v582
  %v2379 = vunpack.c.h.b16 %v582
  %v2380 = vunpack.c.l.b16 %v583
  %v2381 = vunpack.c.h.b16 %v583
  %v2382 = vunpack.c.l.b16 %v584
  %v2383 = vunpack.c.h.b16 %v584
  %v2384 = vunpack.c.l.b16 %v585
  %v2385 = vunpack.c.h.b16 %v585
  %v2386 = vunpack.c.l.b16 %v586
  %v2387 = vunpack.c.h.b16 %v586
  %v2388 = vunpack.c.l.b16 %v587
  %v2389 = vunpack.c.h.b16 %v587
  %v2390 = vunpack.c.l.b16 %v588
  %v2391 = vunpack.c.h.b16 %v588
  %v2392 = vunpack.c.l.b16 %v589
  %v2393 = vunpack.c.h.b16 %v589
  %v2394 = vunpack.c.l.b16 %v590
  %v2395 = vunpack.c.h.b16 %v590
  %v2396 = vunpack.c.l.b16 %v591
  %v2397 = vunpack.c.h.b16 %v591
  %v2398 = vunpack.c.l.b16 %v592
  %v2399 = vunpack.c.h.b16 %v592
  %v2400 = vunpack.c.l.b16 %v593
  %v2401 = vunpack.c.h.b16 %v593
  %v2402 = vunpack.c.l.b16 %v594
  %v2403 = vunpack.c.h.b16 %v594
  %v2404 = vunpack.c.l.b16 %v595
  %v2405 = vunpack.c.h.b16 %v595
  %v2406 = vunpack.c.l.b16 %v596
  %v2407 = vunpack.c.h.b16 %v596
  %v2408 = vunpack.c.l.b16 %v597
  %v2409 = vunpack.c.h.b16 %v597
  %v2410 = vunpack.c.l.b16 %v598
  %v2411 = vunpack.c.h.b16 %v598
  %v2412 = vpack.c.b16 %v1264, %v1260
  %v2413 = vpack.c.b16 %v1265, %v1261
  %v2414 = vpack.c.b16 %v1266, %v1262
  %v2415 = vpack.c.b16 %v1267, %v1263
  %v2416 = vpack.c.b16 %v1272, %v1268
  %v2417 = vpack.c.b16 %v1273, %v1269
  %v2418 = vpack.c.b16 %v1274, %v1270
  %v2419 = vpack.c.b16 %v1275, %v1271
  %v2420 = vpack.c.b16 %v1280, %v1276
  %v2421 = vpack.c.b16 %v1281, %v1277
  %v2422 = vpack.c.b16 %v1282, %v1278
  %v2423 = vpack.c.b16 %v1283, %v1279
  %v2424 = vpack.c.b16 %v1288, %v1284
  %v2425 = vpack.c.b16 %v1289, %v1285
  %v2426 = vpack.c.b16 %v1290, %v1286
  %v2427 = vpack.c.b16 %v1291, %v1287
  %v2428 = vpack.c.b16 %v1296, %v1292
  %v2429 = vpack.c.b16 %v1297, %v1293
  %v2430 = vpack.c.b16 %v1298, %v1294
  %v2431 = vpack.c.b16 %v1299, %v1295
  %v2432 = vpack.c.b16 %v1304, %v1300
  %v2433 = vpack.c.b16 %v1305, %v1301
  %v2434 = vpack.c.b16 %v1306, %v1302
  %v2435 = vpack.c.b16 %v1307, %v1303
  %v2436 = vpack.c.b16 %v1312, %v1308
  %v2437 = vpack.c.b16 %v1313, %v1309
  %v2438 = vpack.c.b16 %v1314, %v1310
  %v2439 = vpack.c.b16 %v1315, %v1311
  %v2440 = vpack.c.b16 %v1320, %v1316
  %v2441 = vpack.c.b16 %v1321, %v1317
  %v2442 = vpack.c.b16 %v1322, %v1318
  %v2443 = vpack.c.b16 %v1323, %v1319
  %v2444 = vpack.c.b16 %v1328, %v1324
  %v2445 = vpack.c.b16 %v1329, %v1325
  %v2446 = vpack.c.b16 %v1330, %v1326
  %v2447 = vpack.c.b16 %v1331, %v1327
  %v2448 = vpack.c.b16 %v1336, %v1332
  %v2449 = vpack.c.b16 %v1337, %v1333
  %v2450 = vpack.c.b16 %v1338, %v1334
  %v2451 = vpack.c.b16 %v1339, %v1335
  %v2452 = vpack.c.b16 %v1344, %v1340
  %v2453 = vpack.c.b16 %v1345, %v1341
  %v2454 = vpack.c.b16 %v1346, %v1342
  %v2455 = vpack.c.b16 %v1347, %v1343
  %v2456 = vpack.c.b16 %v1352, %v1348
  %v2457 = vpack.c.b16 %v1353, %v1349
  %v2458 = vpack.c.b16 %v1354, %v1350
  %v2459 = vpack.c.b16 %v1355, %v1351
  %v2460 = vpack.c.b16 %v1360, %v1356
  %v2461 = vpack.c.b16 %v1361, %v1357
  %v2462 = vpack.c.b16 %v1362, %v1358
  %v2463 = vpack.c.b16 %v1363, %v1359
  %v2464 = vpack.c.b16 %v1368, %v1364
  %v2465 = vpack.c.b16 %v1369, %v1365
  %v2466 = vpack.c.b16 %v1370, %v1366
  %v2467 = vpack.c.b16 %v1371, %v1367
  %v2468 = vpack.c.b16 %v1376, %v1372
  %v2469 = vpack.c.b16 %v1377, %v1373
  %v2470 = vpack.c.b16 %v1378, %v1374
  %v2471 = vpack.c.b16 %v1379, %v1375
  %v2472 = vpack.c.b16 %v1384, %v1380
  %v2473 = vpack.c.b16 %v1385, %v1381
  %v2474 = vpack.c.b16 %v1386, %v1382
  %v2475 = vpack.c.b16 %v1387, %v1383
  %v2476 = vpack.c.b16 %v1392, %v1388
  %v2477 = vpack.c.b16 %v1393, %v1389
  %v2478 = vpack.c.b16 %v1394, %v1390
  %v2479 = vpack.c.b16 %v1395, %v1391
  %v2480 = vpack.c.b16 %v1400, %v1396
  %v2481 = vpack.c.b16 %v1401, %v1397
  %v2482 = vpack.c.b16 %v1402, %v1398
  %v2483 = vpack.c.b16 %v1403, %v1399
  %v2484 = vpack.c.b16 %v1408, %v1404
  %v2485 = vpack.c.b16 %v1409, %v1405
  %v2486 = vpack.c.b16 %v1410, %v1406
  %v2487 = vpack.c.b16 %v1411, %v1407
  %v2488 = vpack.c.b16 %v1416, %v1412
  %v2489 = vpack.c.b16 %v1417, %v1413
  %v2490 = vpack.c.b16 %v1418, %v1414
  %v2491 = vpack.c.b16 %v1419, %v1415
  %v2492 = vpack.c.b16 %v1424, %v1420
  %v2493 = vpack.c.b16 %v1425, %v1421
  %v2494 = vpack.c.b16 %v1426, %v1422
  %v2495 = vpack.c.b16 %v1427, %v1423
  %v2496 = vpack.c.b16 %v1432, %v1428
  %v2497 = vpack.c.b16 %v1433, %v1429
  %v2498 = vpack.c.b16 %v1434, %v1430
  %v2499 = vpack.c.b16 %v1435, %v1431
  %v2500 = vpack.c.b16 %v1440, %v1436
  %v2501 = vpack.c.b16 %v1441, %v1437
  %v2502 = vpack.c.b16 %v1442, %v1438
  %v2503 = vpack.c.b16 %v1443, %v1439
  %v2504 = vpack.c.b16 %v1448, %v1444
  %v2505 = vpack.c.b16 %v1449, %v1445
  %v2506 = vpack.c.b16 %v1450, %v1446
  %v2507 = vpack.c.b16 %v1451, %v1447
  %v2508 = vpack.c.b16 %v1456, %v1452
  %v2509 = vpack.c.b16 %v1457, %v1453
  %v2510 = vpack.c.b16 %v1458, %v1454
  %v2511 = vpack.c.b16 %v1459, %v1455
  %v2512 = vpack.c.b16 %v1464, %v1460
  %v2513 = vpack.c.b16 %v1465, %v1461
  %v2514 = vpack.c.b16 %v1466, %v1462
  %v2515 = vpack.c.b16 %v1467, %v1463
  %v2516 = vpack.c.b16 %v1472, %v1468
  %v2517 = vpack.c.b16 %v1473, %v1469
  %v2518 = vpack.c.b16 %v1474, %v1470
  %v2519 = vpack.c.b16 %v1475, %v1471
  %v2520 = vpack.c.b16 %v1480, %v1476
  %v2521 = vpack.c.b16 %v1481, %v1477
  %v2522 = vpack.c.b16 %v1482, %v1478
  %v2523 = vpack.c.b16 %v1483, %v1479
  %v2524 = vpack.c.b16 %v1488, %v1484
  %v2525 = vpack.c.b16 %v1489, %v1485
  %v2526 = vpack.c.b16 %v1490, %v1486
  %v2527 = vpack.c.b16 %v1491, %v1487
  %v2528 = vpack.c.b16 %v1496, %v1492
  %v2529 = vpack.c.b16 %v1497, %v1493
  %v2530 = vpack.c.b16 %v1498, %v1494
  %v2531 = vpack.c.b16 %v1499, %v1495
  %v2532 = vpack.c.b16 %v1504, %v1500
  %v2533 = vpack.c.b16 %v1505, %v1501
  %v2534 = vpack.c.b16 %v1506, %v1502
  %v2535 = vpack.c.b16 %v1507, %v1503
  %v2536 = vpack.c.b16 %v1512, %v1508
  %v2537 = vpack.c.b16 %v1513, %v1509
  %v2538 = vpack.c.b16 %v1514, %v1510
  %v2539 = vpack.c.b16 %v1515, %v1511
  %v2540 = vpack.c.b16 %v1520, %v1516
  %v2541 = vpack.c.b16 %v1521, %v1517
  %v2542 = vpack.c.b16 %v1522, %v1518
  %v2543 = vpack.c.b16 %v1523, %v1519
  %v2544 = vpack.c.b16 %v1528, %v1524
  %v2545 = vpack.c.b16 %v1529, %v1525
  %v2546 = vpack.c.b16 %v1530, %v1526
  %v2547 = vpack.c.b16 %v1531, %v1527
  %v2548 = vpack.c.b16 %v1536, %v1532
  %v2549 = vpack.c.b16 %v1537, %v1533
  %v2550 = vpack.c.b16 %v1538, %v1534
  %v2551 = vpack.c.b16 %v1539, %v1535
  %v2552 = vpack.c.b16 %v1544, %v1540
  %v2553 = vpack.c.b16 %v1545, %v1541
  %v2554 = vpack.c.b16 %v1546, %v1542
  %v2555 = vpack.c.b16 %v1547, %v1543
  %v2556 = vpack.c.b16 %v1552, %v1548
  %v2557 = vpack.c.b16 %v1553, %v1549
  %v2558 = vpack.c.b16 %v1554, %v1550
  %v2559 = vpack.c.b16 %v1555, %v1551
  %v2560 = vpack.c.b16 %v1560, %v1556
  %v2561 = vpack.c.b16 %v1561, %v1557
  %v2562 = vpack.c.b16 %v1562, %v1558
  %v2563 = vpack.c.b16 %v1563, %v1559
  %v2564 = vpack.c.b16 %v1568, %v1564
  %v2565 = vpack.c.b16 %v1569, %v1565
  %v2566 = vpack.c.b16 %v1570, %v1566
  %v2567 = vpack.c.b16 %v1571, %v1567
  %v2568 = vpack.c.b16 %v1576, %v1572
  %v2569 = vpack.c.b16 %v1577, %v1573
  %v2570 = vpack.c.b16 %v1578, %v1574
  %v2571 = vpack.c.b16 %v1579, %v1575
  %v2572 = vpack.c.b16 %v1584, %v1580
  %v2573 = vpack.c.b16 %v1585, %v1581
  %v2574 = vpack.c.b16 %v1586, %v1582
  %v2575 = vpack.c.b16 %v1587, %v1583
  %v2576 = vpack.c.b16 %v1592, %v1588
  %v2577 = vpack.c.b16 %v1593, %v1589
  %v2578 = vpack.c.b16 %v1594, %v1590
  %v2579 = vpack.c.b16 %v1595, %v1591
  %v2580 = vpack.c.b16 %v1600, %v1596
  %v2581 = vpack.c.b16 %v1601, %v1597
  %v2582 = vpack.c.b16 %v1602, %v1598
  %v2583 = vpack.c.b16 %v1603, %v1599
  %v2584 = vpack.c.b16 %v1608, %v1604
  %v2585 = vpack.c.b16 %v1609, %v1605
  %v2586 = vpack.c.b16 %v1610, %v1606
  %v2587 = vpack.c.b16 %v1611, %v1607
  %v2588 = vpack.c.b16 %v1616, %v1612
  %v2589 = vpack.c.b16 %v1617, %v1613
  %v2590 = vpack.c.b16 %v1618, %v1614
  %v2591 = vpack.c.b16 %v1619, %v1615
  %v2592 = vpack.c.b16 %v1624, %v1620
  %v2593 = vpack.c.b16 %v1625, %v1621
  %v2594 = vpack.c.b16 %v1626, %v1622
  %v2595 = vpack.c.b16 %v1627, %v1623
  %v2596 = vpack.c.b16 %v1632, %v1628
  %v2597 = vpack.c.b16 %v1633, %v1629
  %v2598 = vpack.c.b16 %v1634, %v1630
  %v2599 = vpack.c.b16 %v1635, %v1631
  %v2600 = vpack.c.b16 %v1640, %v1636
  %v2601 = vpack.c.b16 %v1641, %v1637
  %v2602 = vpack.c.b16 %v1642, %v1638
  %v2603 = vpack.c.b16 %v1643, %v1639
  %v2604 = vpack.c.b16 %v1648, %v1644
  %v2605 = vpack.c.b16 %v1649, %v1645
  %v2606 = vpack.c.b16 %v1650, %v1646
  %v2607 = vpack.c.b16 %v1651, %v1647
  %v2608 = vpack.c.b16 %v1656, %v1652
  %v2609 = vpack.c.b16 %v1657, %v1653
  %v2610 = vpack.c.b16 %v1658, %v1654
  %v2611 = vpack.c.b16 %v1659, %v1655
  %v2612 = vpack.c.b16 %v1664, %v1660
  %v2613 = vpack.c.b16 %v1665, %v1661
  %v2614 = vpack.c.b16 %v1666, %v1662
  %v2615 = vpack.c.b16 %v1667, %v1663
  %v2616 = vpack.c.b16 %v1672, %v1668
  %v2617 = vpack.c.b16 %v1673, %v1669
  %v2618 = vpack.c.b16 %v1674, %v1670
  %v2619 = vpack.c.b16 %v1675, %v1671
  %v2620 = vpack.c.b16 %v1680, %v1676
  %v2621 = vpack.c.b16 %v1681, %v1677
  %v2622 = vpack.c.b16 %v1682, %v1678
  %v2623 = vpack.c.b16 %v1683, %v1679
  %v2624 = vpack.c.b16 %v1688, %v1684
  %v2625 = vpack.c.b16 %v1689, %v1685
  %v2626 = vpack.c.b16 %v1690, %v1686
  %v2627 = vpack.c.b16 %v1691, %v1687
  %v2628 = vpack.c.b16 %v1696, %v1692
  %v2629 = vpack.c.b16 %v1697, %v1693
  %v2630 = vpack.c.b16 %v1698, %v1694
  %v2631 = vpack.c.b16 %v1699, %v1695
  %v2632 = vpack.c.b16 %v1704, %v1700
  %v2633 = vpack.c.b16 %v1705, %v1701
  %v2634 = vpack.c.b16 %v1706, %v1702
  %v2635 = vpack.c.b16 %v1707, %v1703
  %v2636 = vpack.c.b16 %v1712, %v1708
  %v2637 = vpack.c.b16 %v1713, %v1709
  %v2638 = vpack.c.b16 %v1714, %v1710
  %v2639 = vpack.c.b16 %v1715, %v1711
  %v2640 = vpack.c.b16 %v1720, %v1716
  %v2641 = vpack.c.b16 %v1721, %v1717
  %v2642 = vpack.c.b16 %v1722, %v1718
  %v2643 = vpack.c.b16 %v1723, %v1719
  %v2644 = vpack.c.b16 %v1728, %v1724
  %v2645 = vpack.c.b16 %v1729, %v1725
  %v2646 = vpack.c.b16 %v1730, %v1726
  %v2647 = vpack.c.b16 %v1731, %v1727
  %v2648 = vpack.c.b16 %v1736, %v1732
  %v2649 = vpack.c.b16 %v1737, %v1733
  %v2650 = vpack.c.b16 %v1738, %v1734
  %v2651 = vpack.c.b16 %v1739, %v1735
  %v2652 = vpack.c.b16 %v1744, %v1740
  %v2653 = vpack.c.b16 %v1745, %v1741
  %v2654 = vpack.c.b16 %v1746, %v1742
  %v2655 = vpack.c.b16 %v1747, %v1743
  %v2656 = vpack.c.b16 %v1752, %v1748
  %v2657 = vpack.c.b16 %v1753, %v1749
  %v2658 = vpack.c.b16 %v1754, %v1750
  %v2659 = vpack.c.b16 %v1755, %v1751
  %v2660 = vpack.c.b16 %v1760, %v1756
  %v2661 = vpack.c.b16 %v1761, %v1757
  %v2662 = vpack.c.b16 %v1762, %v1758
  %v2663 = vpack.c.b16 %v1763, %v1759
  %v2664 = vpack.c.b16 %v1768, %v1764
  %v2665 = vpack.c.b16 %v1769, %v1765
  %v2666 = vpack.c.b16 %v1770, %v1766
  %v2667 = vpack.c.b16 %v1771, %v1767
  %v2668 = vpack.c.b16 %v1776, %v1772
  %v2669 = vpack.c.b16 %v1777, %v1773
  %v2670 = vpack.c.b16 %v1778, %v1774
  %v2671 = vpack.c.b16 %v1779, %v1775
  %v2672 = vpack.c.b16 %v1784, %v1780
  %v2673 = vpack.c.b16 %v1785, %v1781
  %v2674 = vpack.c.b16 %v1786, %v1782
  %v2675 = vpack.c.b16 %v1787, %v1783
  %v2676 = vpack.c.b16 %v1792, %v1788
  %v2677 = vpack.c.b16 %v1793, %v1789
  %v2678 = vpack.c.b16 %v1794, %v1790
  %v2679 = vpack.c.b16 %v1795, %v1791
  %v2680 = vpack.c.b16 %v1800, %v1796
  %v2681 = vpack.c.b16 %v1801, %v1797
  %v2682 = vpack.c.b16 %v1802, %v1798
  %v2683 = vpack.c.b16 %v1803, %v1799
  %v2684 = vpack.c.b16 %v1808, %v1804
  %v2685 = vpack.c.b16 %v1809, %v1805
  %v2686 = vpack.c.b16 %v1810, %v1806
  %v2687 = vpack.c.b16 %v1811, %v1807
  %v2688 = vpack.c.b16 %v1816, %v1812
  %v2689 = vpack.c.b16 %v1817, %v1813
  %v2690 = vpack.c.b16 %v1818, %v1814
  %v2691 = vpack.c.b16 %v1819, %v1815
  %v2692 = vpack.c.b16 %v1824, %v1820
  %v2693 = vpack.c.b16 %v1825, %v1821
  %v2694 = vpack.c.b16 %v1826, %v1822
  %v2695 = vpack.c.b16 %v1827, %v1823
  %v2696 = vpack.c.b16 %v1832, %v1828
  %v2697 = vpack.c.b16 %v1833, %v1829
  %v2698 = vpack.c.b16 %v1834, %v1830
  %v2699 = vpack.c.b16 %v1835, %v1831
  %v2700 = vpack.c.b16 %v1840, %v1836
  %v2701 = vpack.c.b16 %v1841, %v1837
  %v2702 = vpack.c.b16 %v1842, %v1838
  %v2703 = vpack.c.b16 %v1843, %v1839
  %v2704 = vpack.c.b16 %v1848, %v1844
  %v2705 = vpack.c.b16 %v1849, %v1845
  %v2706 = vpack.c.b16 %v1850, %v1846
  %v2707 = vpack.c.b16 %v1851, %v1847
  %v2708 = vpack.c.b16 %v1856, %v1852
  %v2709 = vpack.c.b16 %v1857, %v1853
  %v2710 = vpack.c.b16 %v1858, %v1854
  %v2711 = vpack.c.b16 %v1859, %v1855
  %v2712 = vpack.c.b16 %v1864, %v1860
  %v2713 = vpack.c.b16 %v1865, %v1861
  %v2714 = vpack.c.b16 %v1866, %v1862
  %v2715 = vpack.c.b16 %v1867, %v1863
  %v2716 = vpack.c.b16 %v1872, %v1868
  %v2717 = vpack.c.b16 %v1873, %v1869
  %v2718 = vpack.c.b16 %v1874, %v1870
  %v2719 = vpack.c.b16 %v1875, %v1871
  %v2720 = vpack.c.b16 %v1880, %v1876
  %v2721 = vpack.c.b16 %v1881, %v1877
  %v2722 = vpack.c.b16 %v1882, %v1878
  %v2723 = vpack.c.b16 %v1883, %v1879
  %v2724 = vpack.c.b16 %v1888, %v1884
  %v2725 = vpack.c.b16 %v1889, %v1885
  %v2726 = vpack.c.b16 %v1890, %v1886
  %v2727 = vpack.c.b16 %v1891, %v1887
  %v2728 = vpack.c.b16 %v1896, %v1892
  %v2729 = vpack.c.b16 %v1897, %v1893
  %v2730 = vpack.c.b16 %v1898, %v1894
  %v2731 = vpack.c.b16 %v1899, %v1895
  %v2732 = vpack.c.b16 %v1904, %v1900
  %v2733 = vpack.c.b16 %v1905, %v1901
  %v2734 = vpack.c.b16 %v1906, %v1902
  %v2735 = vpack.c.b16 %v1907, %v1903
  %v2736 = vpack.c.b16 %v1912, %v1908
  %v2737 = vpack.c.b16 %v1913, %v1909
  %v2738 = vpack.c.b16 %v1914, %v1910
  %v2739 = vpack.c.b16 %v1915, %v1911
  %v2740 = vpack.c.b16 %v1920, %v1916
  %v2741 = vpack.c.b16 %v1921, %v1917
  %v2742 = vpack.c.b16 %v1922, %v1918
  %v2743 = vpack.c.b16 %v1923, %v1919
  %v2744 = vpack.c.b16 %v1928, %v1924
  %v2745 = vpack.c.b16 %v1929, %v1925
  %v2746 = vpack.c.b16 %v1930, %v1926
  %v2747 = vpack.c.b16 %v1931, %v1927
  %v2748 = vpack.c.b16 %v1936, %v1932
  %v2749 = vpack.c.b16 %v1937, %v1933
  %v2750 = vpack.c.b16 %v1938, %v1934
  %v2751 = vpack.c.b16 %v1939, %v1935
  %v2752 = vpack.c.b16 %v1944, %v1940
  %v2753 = vpack.c.b16 %v1945, %v1941
  %v2754 = vpack.c.b16 %v1946, %v1942
  %v2755 = vpack.c.b16 %v1947, %v1943
  %v2756 = vpack.c.b16 %v1952, %v1948
  %v2757 = vpack.c.b16 %v1953, %v1949
  %v2758 = vpack.c.b16 %v1954, %v1950
  %v2759 = vpack.c.b16 %v1955, %v1951
  %v2760 = vpack.c.b16 %v1960, %v1956
  %v2761 = vpack.c.b16 %v1961, %v1957
  %v2762 = vpack.c.b16 %v1962, %v1958
  %v2763 = vpack.c.b16 %v1963, %v1959
  %v2764 = vpack.c.b16 %v1968, %v1964
  %v2765 = vpack.c.b16 %v1969, %v1965
  %v2766 = vpack.c.b16 %v1970, %v1966
  %v2767 = vpack.c.b16 %v1971, %v1967
  %v2768 = vpack.c.b16 %v1976, %v1972
  %v2769 = vpack.c.b16 %v1977, %v1973
  %v2770 = vpack.c.b16 %v1978, %v1974
  %v2771 = vpack.c.b16 %v1979, %v1975
  %v2772 = vpack.c.b16 %v1984, %v1980
  %v2773 = vpack.c.b16 %v1985, %v1981
  %v2774 = vpack.c.b16 %v1986, %v1982
  %v2775 = vpack.c.b16 %v1987, %v1983
  %v2776 = vpack.c.b16 %v1992, %v1988
  %v2777 = vpack.c.b16 %v1993, %v1989
  %v2778 = vpack.c.b16 %v1994, %v1990
  %v2779 = vpack.c.b16 %v1995, %v1991
  %v2780 = vpack.c.b16 %v2000, %v1996
  %v2781 = vpack.c.b16 %v2001, %v1997
  %v2782 = vpack.c.b16 %v2002, %v1998
  %v2783 = vpack.c.b16 %v2003, %v1999
  %v2784 = vpack.c.b16 %v2008, %v2004
  %v2785 = vpack.c.b16 %v2009, %v2005
  %v2786 = vpack.c.b16 %v2010, %v2006
  %v2787 = vpack.c.b16 %v2011, %v2007
  %v2788 = vpack.c.b16 %v2016, %v2012
  %v2789 = vpack.c.b16 %v2017, %v2013
  %v2790 = vpack.c.b16 %v2018, %v2014
  %v2791 = vpack.c.b16 %v2019, %v2015
  %v2792 = vpack.c.b16 %v2024, %v2020
  %v2793 = vpack.c.b16 %v2025, %v2021
  %v2794 = vpack.c.b16 %v2026, %v2022
  %v2795 = vpack.c.b16 %v2027, %v2023
  %v2796 = vpack.c.b16 %v2032, %v2028
  %v2797 = vpack.c.b16 %v2033, %v2029
  %v2798 = vpack.c.b16 %v2034, %v2030
  %v2799 = vpack.c.b16 %v2035, %v2031
  %v2800 = vpack.c.b16 %v2040, %v2036
  %v2801 = vpack.c.b16 %v2041, %v2037
  %v2802 = vpack.c.b16 %v2042, %v2038
  %v2803 = vpack.c.b16 %v2043, %v2039
  %v2804 = vpack.c.b16 %v2048, %v2044
  %v2805 = vpack.c.b16 %v2049, %v2045
  %v2806 = vpack.c.b16 %v2050, %v2046
  %v2807 = vpack.c.b16 %v2051, %v2047
  %v2808 = vpack.c.b16 %v2056, %v2052
  %v2809 = vpack.c.b16 %v2057, %v2053
  %v2810 = vpack.c.b16 %v2058, %v2054
  %v2811 = vpack.c.b16 %v2059, %v2055
  %v2812 = vpack.c.b16 %v2064, %v2060
  %v2813 = vpack.c.b16 %v2065, %v2061
  %v2814 = vpack.c.b16 %v2066, %v2062
  %v2815 = vpack.c.b16 %v2067, %v2063
  %v2816 = vpack.c.b16 %v2072, %v2068
  %v2817 = vpack.c.b16 %v2073, %v2069
  %v2818 = vpack.c.b16 %v2074, %v2070
  %v2819 = vpack.c.b16 %v2075, %v2071
  %v2820 = vpack.c.b16 %v2080, %v2076
  %v2821 = vpack.c.b16 %v2081, %v2077
  %v2822 = vpack.c.b16 %v2082, %v2078
  %v2823 = vpack.c.b16 %v2083, %v2079
  %v2824 = vpack.c.b16 %v2088, %v2084
  %v2825 = vpack.c.b16 %v2089, %v2085
  %v2826 = vpack.c.b16 %v2090, %v2086
  %v2827 = vpack.c.b16 %v2091, %v2087
  %v2828 = vpack.c.b16 %v2096, %v2092
  %v2829 = vpack.c.b16 %v2097, %v2093
  %v2830 = vpack.c.b16 %v2098, %v2094
  %v2831 = vpack.c.b16 %v2099, %v2095
  %v2832 = vpack.c.b16 %v2104, %v2100
  %v2833 = vpack.c.b16 %v2105, %v2101
  %v2834 = vpack.c.b16 %v2106, %v2102
  %v2835 = vpack.c.b16 %v2107, %v2103
  %v2836 = vpack.c.b16 %v2112, %v2108
  %v2837 = vpack.c.b16 %v2113, %v2109
  %v2838 = vpack.c.b16 %v2114, %v2110
  %v2839 = vpack.c.b16 %v2115, %v2111
  %v2840 = vpack.c.b16 %v2120, %v2116
  %v2841 = vpack.c.b16 %v2121, %v2117
  %v2842 = vpack.c.b16 %v2122, %v2118
  %v2843 = vpack.c.b16 %v2123, %v2119
  %v2844 = vpack.c.b16 %v2128, %v2124
  %v2845 = vpack.c.b16 %v2129, %v2125
  %v2846 = vpack.c.b16 %v2130, %v2126
  %v2847 = vpack.c.b16 %v2131, %v2127
  %v2848 = vpack.c.b16 %v2136, %v2132
  %v2849 = vpack.c.b16 %v2137, %v2133
  %v2850 = vpack.c.b16 %v2138, %v2134
  %v2851 = vpack.c.b16 %v2139, %v2135
  %v2852 = vpack.c.b16 %v2144, %v2140
  %v2853 = vpack.c.b16 %v2145, %v2141
  %v2854 = vpack.c.b16 %v2146, %v2142
  %v2855 = vpack.c.b16 %v2147, %v2143
  %v2856 = vpack.c.b16 %v2152, %v2148
  %v2857 = vpack.c.b16 %v2153, %v2149
  %v2858 = vpack.c.b16 %v2154, %v2150
  %v2859 = vpack.c.b16 %v2155, %v2151
  %v2860 = vpack.c.b16 %v2160, %v2156
  %v2861 = vpack.c.b16 %v2161, %v2157
  %v2862 = vpack.c.b16 %v2162, %v2158
  %v2863 = vpack.c.b16 %v2163, %v2159
  %v2864 = vpack.c.b16 %v2168, %v2164
  %v2865 = vpack.c.b16 %v2169, %v2165
  %v2866 = vpack.c.b16 %v2170, %v2166
  %v2867 = vpack.c.b16 %v2171, %v2167
  %v2868 = vpack.c.b16 %v2176, %v2172
  %v2869 = vpack.c.b16 %v2177, %v2173
  %v2870 = vpack.c.b16 %v2178, %v2174
  %v2871 = vpack.c.b16 %v2179, %v2175
  %v2872 = vpack.c.b16 %v2184, %v2180
  %v2873 = vpack.c.b16 %v2185, %v2181
  %v2874 = vpack.c.b16 %v2186, %v2182
  %v2875 = vpack.c.b16 %v2187, %v2183
  %v2876 = vpack.c.b16 %v2192, %v2188
  %v2877 = vpack.c.b16 %v2193, %v2189
  %v2878 = vpack.c.b16 %v2194, %v2190
  %v2879 = vpack.c.b16 %v2195, %v2191
  %v2880 = vpack.c.b16 %v2200, %v2196
  %v2881 = vpack.c.b16 %v2201, %v2197
  %v2882 = vpack.c.b16 %v2202, %v2198
  %v2883 = vpack.c.b16 %v2203, %v2199
  %v2884 = vpack.c.b16 %v2208, %v2204
  %v2885 = vpack.c.b16 %v2209, %v2205
  %v2886 = vpack.c.b16 %v2210, %v2206
  %v2887 = vpack.c.b16 %v2211, %v2207
  %v2888 = vpack.c.b16 %v2216, %v2212
  %v2889 = vpack.c.b16 %v2217, %v2213
  %v2890 = vpack.c.b16 %v2218, %v2214
  %v2891 = vpack.c.b16 %v2219, %v2215
  %v2892 = vpack.c.b16 %v2224, %v2220
  %v2893 = vpack.c.b16 %v2225, %v2221
  %v2894 = vpack.c.b16 %v2226, %v2222
  %v2895 = vpack.c.b16 %v2227, %v2223
  %v2896 = vpack.c.b16 %v2232, %v2228
  %v2897 = vpack.c.b16 %v2233, %v2229
  %v2898 = vpack.c.b16 %v2234, %v2230
  %v2899 = vpack.c.b16 %v2235, %v2231
  %v2900 = vpack.c.b16 %v2240, %v2236
  %v2901 = vpack.c.b16 %v2241, %v2237
  %v2902 = vpack.c.b16 %v2242, %v2238
  %v2903 = vpack.c.b16 %v2243, %v2239
  %v2904 = vpack.c.b16 %v2248, %v2244
  %v2905 = vpack.c.b16 %v2249, %v2245
  %v2906 = vpack.c.b16 %v2250, %v2246
  %v2907 = vpack.c.b16 %v2251, %v2247
  %v2908 = vpack.c.b16 %v2256, %v2252
  %v2909 = vpack.c.b16 %v2257, %v2253
  %v2910 = vpack.c.b16 %v2258, %v2254
  %v2911 = vpack.c.b16 %v2259, %v2255
  %v2912 = vpack.c.b16 %v2264, %v2260
  %v2913 = vpack.c.b16 %v2265, %v2261
  %v2914 = vpack.c.b16 %v2266, %v2262
  %v2915 = vpack.c.b16 %v2267, %v2263
  %v2916 = vpack.c.b16 %v2272, %v2268
  %v2917 = vpack.c.b16 %v2273, %v2269
  %v2918 = vpack.c.b16 %v2274, %v2270
  %v2919 = vpack.c.b16 %v2275, %v2271
  %v2920 = vpack.c.b16 %v2280, %v2276
  %v2921 = vpack.c.b16 %v2281, %v2277
  %v2922 = vpack.c.b16 %v2282, %v2278
  %v2923 = vpack.c.b16 %v2283, %v2279
  %v2924 = vpack.c.b16 %v2288, %v2284
  %v2925 = vpack.c.b16 %v2289, %v2285
  %v2926 = vpack.c.b16 %v2290, %v2286
  %v2927 = vpack.c.b16 %v2291, %v2287
  %v2928 = vpack.c.b16 %v2296, %v2292
  %v2929 = vpack.c.b16 %v2297, %v2293
  %v2930 = vpack.c.b16 %v2298, %v2294
  %v2931 = vpack.c.b16 %v2299, %v2295
  %v2932 = vpack.c.b16 %v2304, %v2300
  %v2933 = vpack.c.b16 %v2305, %v2301
  %v2934 = vpack.c.b16 %v2306, %v2302
  %v2935 = vpack.c.b16 %v2307, %v2303
  %v2936 = vpack.c.b16 %v2312, %v2308
  %v2937 = vpack.c.b16 %v2313, %v2309
  %v2938 = vpack.c.b16 %v2314, %v2310
  %v2939 = vpack.c.b16 %v2315, %v2311
  %v2940 = vpack.c.b16 %v2320, %v2316
  %v2941 = vpack.c.b16 %v2321, %v2317
  %v2942 = vpack.c.b16 %v2322, %v2318
  %v2943 = vpack.c.b16 %v2323, %v2319
  %v2944 = vpack.c.b16 %v2328, %v2324
  %v2945 = vpack.c.b16 %v2329, %v2325
  %v2946 = vpack.c.b16 %v2330, %v2326
  %v2947 = vpack.c.b16 %v2331, %v2327
  %v2948 = vpack.c.b16 %v2336, %v2332
  %v2949 = vpack.c.b16 %v2337, %v2333
  %v2950 = vpack.c.b16 %v2338, %v2334
  %v2951 = vpack.c.b16 %v2339, %v2335
  %v2952 = vpack.c.b16 %v2344, %v2340
  %v2953 = vpack.c.b16 %v2345, %v2341
  %v2954 = vpack.c.b16 %v2346, %v2342
  %v2955 = vpack.c.b16 %v2347, %v2343
  %v2956 = vpack.c.b16 %v2352, %v2348
  %v2957 = vpack.c.b16 %v2353, %v2349
  %v2958 = vpack.c.b16 %v2354, %v2350
  %v2959 = vpack.c.b16 %v2355, %v2351
  %v2960 = vpack.c.b16 %v2360, %v2356
  %v2961 = vpack.c.b16 %v2361, %v2357
  %v2962 = vpack.c.b16 %v2362, %v2358
  %v2963 = vpack.c.b16 %v2363, %v2359
  %v2964 = vpack.c.b16 %v2368, %v2364
  %v2965 = vpack.c.b16 %v2369, %v2365
  %v2966 = vpack.c.b16 %v2370, %v2366
  %v2967 = vpack.c.b16 %v2371, %v2367
  %v2968 = vpack.c.b16 %v2376, %v2372
  %v2969 = vpack.c.b16 %v2377, %v2373
  %v2970 = vpack.c.b16 %v2378, %v2374
  %v2971 = vpack.c.b16 %v2379, %v2375
  %v2972 = vpack.c.b16 %v2384, %v2380
  %v2973 = vpack.c.b16 %v2385, %v2381
  %v2974 = vpack.c.b16 %v2386, %v2382
  %v2975 = vpack.c.b16 %v2387, %v2383
  %v2976 = vpack.c.b16 %v2392, %v2388
  %v2977 = vpack.c.b16 %v2393, %v2389
  %v2978 = vpack.c.b16 %v2394, %v2390
  %v2979 = vpack.c.b16 %v2395, %v2391
  %v2980 = vpack.c.b16 %v2400, %v2396
  %v2981 = vpack.c.b16 %v2401, %v2397
  %v2982 = vpack.c.b16 %v2402, %v2398
  %v2983 = vpack.c.b16 %v2403, %v2399
  %v2984 = vpack.c.b16 %v2408, %v2404
  %v2985 = vpack.c.b16 %v2409, %v2405
  %v2986 = vpack.c.b16 %v2410, %v2406
  %v2987 = vpack.c.b16 %v2411, %v2407
  %3564 = vmatprep.subr.bf16.mxu0 %v2413
  %3565 = vmatpush1.bf16.msra.mxu0 %v2412
  %3566 = vmatprep.subr.bf16.mxu0 %v2417
  %3567 = vmatpush1.bf16.msra.mxu0 %v2416
  %3568 = vmatprep.subr.bf16.mxu0 %v2421
  %3569 = vmatpush1.bf16.msra.mxu0 %v2420
  %3570 = vmatprep.subr.bf16.mxu0 %v2425
  %3571 = vmatpush1.bf16.msra.mxu0 %v2424
  %3572 = vmatprep.subr.bf16.mxu0 %v2429
  %3573 = vmatpush1.bf16.msra.mxu0 %v2428
  %3574 = vmatprep.subr.bf16.mxu0 %v2433
  %3575 = vmatpush1.bf16.msra.mxu0 %v2432
  %3576 = vmatprep.subr.bf16.mxu0 %v2437
  %3577 = vmatpush1.bf16.msra.mxu0 %v2436
  %3578 = vmatprep.subr.bf16.mxu0 %v2441
  %3579 = vmatpush1.bf16.msra.mxu0 %v2440
  %3580 = vmatprep.subr.bf16.mxu0 %v2445
  %3581 = vmatpush1.bf16.msra.mxu0 %v2444
  %3582 = vmatprep.subr.bf16.mxu0 %v2449
  %3583 = vmatpush1.bf16.msra.mxu0 %v2448
  %3584 = vmatprep.subr.bf16.mxu0 %v2453
  %3585 = vmatpush1.bf16.msra.mxu0 %v2452
  %3586 = vmatprep.subr.bf16.mxu0 %v2457
  %3587 = vmatpush1.bf16.msra.mxu0 %v2456
  %3588 = vmatprep.subr.bf16.mxu0 %v2461
  %3589 = vmatpush1.bf16.msra.mxu0 %v2460
  %3590 = vmatprep.subr.bf16.mxu0 %v2465
  %3591 = vmatpush1.bf16.msra.mxu0 %v2464
  %3592 = vmatprep.subr.bf16.mxu0 %v2469
  %3593 = vmatpush1.bf16.msra.mxu0 %v2468
  %3594 = vmatprep.subr.bf16.mxu0 %v2473
  %3595 = vmatpush1.bf16.msra.mxu0 %v2472
  %3596 = vmatprep.mubr.bf16.mxu0 %v649
  %3597 = vmatmul.mubr.bf16.gmra.mrb[0].mxu0 %v648
  %v3598 = vpop.f32.mrb[0].mxu0
  %v3599 = vadd.f32 %v604, %v3598
  %v3600 = vpop.f32.mrb[0].mxu0
  %v3601 = vadd.f32 %v608, %v3600
  %v3602 = vpop.f32.mrb[0].mxu0
  %v3603 = vpop.f32.mrb[0].mxu0
  %3604 = vdwg.mxu0
  %3605 = vmatprep.subr.bf16.mxu0 %v2477
  %3606 = vmatpush1.bf16.msra.mxu0 %v2476
  %3607 = vmatprep.subr.bf16.mxu0 %v2481
  %3608 = vmatpush1.bf16.msra.mxu0 %v2480
  %3609 = vmatprep.subr.bf16.mxu0 %v2485
  %3610 = vmatpush1.bf16.msra.mxu0 %v2484
  %3611 = vmatprep.subr.bf16.mxu0 %v2489
  %3612 = vmatpush1.bf16.msra.mxu0 %v2488
  %3613 = vmatprep.subr.bf16.mxu0 %v2493
  %3614 = vmatpush1.bf16.msra.mxu0 %v2492
  %3615 = vmatprep.subr.bf16.mxu0 %v2497
  %3616 = vmatpush1.bf16.msra.mxu0 %v2496
  %3617 = vmatprep.subr.bf16.mxu0 %v2501
  %3618 = vmatpush1.bf16.msra.mxu0 %v2500
  %3619 = vmatprep.subr.bf16.mxu0 %v2505
  %3620 = vmatpush1.bf16.msra.mxu0 %v2504
  %3621 = vmatprep.subr.bf16.mxu0 %v2509
  %3622 = vmatpush1.bf16.msra.mxu0 %v2508
  %3623 = vmatprep.subr.bf16.mxu0 %v2513
  %3624 = vmatpush1.bf16.msra.mxu0 %v2512
  %3625 = vmatprep.subr.bf16.mxu0 %v2517
  %3626 = vmatpush1.bf16.msra.mxu0 %v2516
  %3627 = vmatprep.subr.bf16.mxu0 %v2521
  %3628 = vmatpush1.bf16.msra.mxu0 %v2520
  %3629 = vmatprep.subr.bf16.mxu0 %v2525
  %3630 = vmatpush1.bf16.msra.mxu0 %v2524
  %3631 = vmatprep.subr.bf16.mxu0 %v2529
  %3632 = vmatpush1.bf16.msra.mxu0 %v2528
  %3633 = vmatprep.subr.bf16.mxu0 %v2533
  %3634 = vmatpush1.bf16.msra.mxu0 %v2532
  %3635 = vmatprep.subr.bf16.mxu0 %v2537
  %3636 = vmatpush1.bf16.msra.mxu0 %v2536
  %3637 = vmatprep.mubr.bf16.mxu0 %v651
  %3638 = vmatmul.mubr.bf16.gmra.mrb[0].mxu0 %v650
  %v3639 = vpop.f32.mrb[0].mxu0
  %v3640 = vadd.f32 %v3599, %v3639
  %v3641 = vpop.f32.mrb[0].mxu0
  %v3642 = vadd.f32 %v3601, %v3641
  %v3643 = vpop.f32.mrb[0].mxu0
  %v3644 = vpop.f32.mrb[0].mxu0
  %3645 = vdwg.mxu0
  %3646 = vmatprep.subr.bf16.mxu0 %v2541
  %3647 = vmatpush1.bf16.msra.mxu0 %v2540
  %3648 = vmatprep.subr.bf16.mxu0 %v2545
  %3649 = vmatpush1.bf16.msra.mxu0 %v2544
  %3650 = vmatprep.subr.bf16.mxu0 %v2549
  %3651 = vmatpush1.bf16.msra.mxu0 %v2548
  %3652 = vmatprep.subr.bf16.mxu0 %v2553
  %3653 = vmatpush1.bf16.msra.mxu0 %v2552
  %3654 = vmatprep.subr.bf16.mxu0 %v2557
  %3655 = vmatpush1.bf16.msra.mxu0 %v2556
  %3656 = vmatprep.subr.bf16.mxu0 %v2561
  %3657 = vmatpush1.bf16.msra.mxu0 %v2560
  %3658 = vmatprep.subr.bf16.mxu0 %v2565
  %3659 = vmatpush1.bf16.msra.mxu0 %v2564
  %3660 = vmatprep.subr.bf16.mxu0 %v2569
  %3661 = vmatpush1.bf16.msra.mxu0 %v2568
  %3662 = vmatprep.subr.bf16.mxu0 %v2573
  %3663 = vmatpush1.bf16.msra.mxu0 %v2572
  %3664 = vmatprep.subr.bf16.mxu0 %v2577
  %3665 = vmatpush1.bf16.msra.mxu0 %v2576
  %3666 = vmatprep.subr.bf16.mxu0 %v2581
  %3667 = vmatpush1.bf16.msra.mxu0 %v2580
  %3668 = vmatprep.subr.bf16.mxu0 %v2585
  %3669 = vmatpush1.bf16.msra.mxu0 %v2584
  %3670 = vmatprep.subr.bf16.mxu0 %v2589
  %3671 = vmatpush1.bf16.msra.mxu0 %v2588
  %3672 = vmatprep.subr.bf16.mxu0 %v2593
  %3673 = vmatpush1.bf16.msra.mxu0 %v2592
  %3674 = vmatprep.subr.bf16.mxu0 %v2597
  %3675 = vmatpush1.bf16.msra.mxu0 %v2596
  %3676 = vmatprep.subr.bf16.mxu0 %v2601
  %3677 = vmatpush1.bf16.msra.mxu0 %v2600
  %3678 = vmatprep.mubr.bf16.mxu0 %v653
  %3679 = vmatmul.mubr.bf16.gmra.mrb[0].mxu0 %v652
  %v3680 = vpop.f32.mrb[0].mxu0
  %v3681 = vadd.f32 %v3640, %v3680
  %v3682 = vpop.f32.mrb[0].mxu0
  %v3683 = vadd.f32 %v3642, %v3682
  %v3684 = vpop.f32.mrb[0].mxu0
  %v3685 = vpop.f32.mrb[0].mxu0
  %3686 = vdwg.mxu0
  %3687 = vmatprep.subr.bf16.mxu0 %v2605
  %3688 = vmatpush1.bf16.msra.mxu0 %v2604
  %3689 = vmatprep.subr.bf16.mxu0 %v2609
  %3690 = vmatpush1.bf16.msra.mxu0 %v2608
  %3691 = vmatprep.subr.bf16.mxu0 %v2613
  %3692 = vmatpush1.bf16.msra.mxu0 %v2612
  %3693 = vmatprep.subr.bf16.mxu0 %v2617
  %3694 = vmatpush1.bf16.msra.mxu0 %v2616
  %3695 = vmatprep.subr.bf16.mxu0 %v2621
  %3696 = vmatpush1.bf16.msra.mxu0 %v2620
  %3697 = vmatprep.subr.bf16.mxu0 %v2625
  %3698 = vmatpush1.bf16.msra.mxu0 %v2624
  %3699 = vmatprep.subr.bf16.mxu0 %v2629
  %3700 = vmatpush1.bf16.msra.mxu0 %v2628
  %3701 = vmatprep.subr.bf16.mxu0 %v2633
  %3702 = vmatpush1.bf16.msra.mxu0 %v2632
  %3703 = vmatprep.subr.bf16.mxu0 %v2637
  %3704 = vmatpush1.bf16.msra.mxu0 %v2636
  %3705 = vmatprep.subr.bf16.mxu0 %v2641
  %3706 = vmatpush1.bf16.msra.mxu0 %v2640
  %3707 = vmatprep.subr.bf16.mxu0 %v2645
  %3708 = vmatpush1.bf16.msra.mxu0 %v2644
  %3709 = vmatprep.subr.bf16.mxu0 %v2649
  %3710 = vmatpush1.bf16.msra.mxu0 %v2648
  %3711 = vmatprep.subr.bf16.mxu0 %v2653
  %3712 = vmatpush1.bf16.msra.mxu0 %v2652
  %3713 = vmatprep.subr.bf16.mxu0 %v2657
  %3714 = vmatpush1.bf16.msra.mxu0 %v2656
  %3715 = vmatprep.subr.bf16.mxu0 %v2661
  %3716 = vmatpush1.bf16.msra.mxu0 %v2660
  %3717 = vmatprep.subr.bf16.mxu0 %v2665
  %3718 = vmatpush1.bf16.msra.mxu0 %v2664
  %3719 = vmatprep.mubr.bf16.mxu0 %v655
  %3720 = vmatmul.mubr.bf16.gmra.mrb[0].mxu0 %v654
  %v3721 = vpop.f32.mrb[0].mxu0
  %v3722 = vadd.f32 %v3681, %v3721
  %v3723 = vpop.f32.mrb[0].mxu0
  %v3724 = vadd.f32 %v3683, %v3723
  %v3725 = vpop.f32.mrb[0].mxu0
  %v3726 = vpop.f32.mrb[0].mxu0
  %3727 = vdwg.mxu0
  %3728 = vmatprep.subr.bf16.mxu0 %v2669
  %3729 = vmatpush1.bf16.msra.mxu0 %v2668
  %3730 = vmatprep.subr.bf16.mxu0 %v2673
  %3731 = vmatpush1.bf16.msra.mxu0 %v2672
  %3732 = vmatprep.subr.bf16.mxu0 %v2677
  %3733 = vmatpush1.bf16.msra.mxu0 %v2676
  %3734 = vmatprep.subr.bf16.mxu0 %v2681
  %3735 = vmatpush1.bf16.msra.mxu0 %v2680
  %3736 = vmatprep.subr.bf16.mxu0 %v2685
  %3737 = vmatpush1.bf16.msra.mxu0 %v2684
  %3738 = vmatprep.subr.bf16.mxu0 %v2689
  %3739 = vmatpush1.bf16.msra.mxu0 %v2688
  %3740 = vmatprep.subr.bf16.mxu0 %v2693
  %3741 = vmatpush1.bf16.msra.mxu0 %v2692
  %3742 = vmatprep.subr.bf16.mxu0 %v2697
  %3743 = vmatpush1.bf16.msra.mxu0 %v2696
  %3744 = vmatprep.subr.bf16.mxu0 %v2701
  %3745 = vmatpush1.bf16.msra.mxu0 %v2700
  %3746 = vmatprep.subr.bf16.mxu0 %v2705
  %3747 = vmatpush1.bf16.msra.mxu0 %v2704
  %3748 = vmatprep.subr.bf16.mxu0 %v2709
  %3749 = vmatpush1.bf16.msra.mxu0 %v2708
  %3750 = vmatprep.subr.bf16.mxu0 %v2713
  %3751 = vmatpush1.bf16.msra.mxu0 %v2712
  %3752 = vmatprep.subr.bf16.mxu0 %v2717
  %3753 = vmatpush1.bf16.msra.mxu0 %v2716
  %3754 = vmatprep.subr.bf16.mxu0 %v2721
  %3755 = vmatpush1.bf16.msra.mxu0 %v2720
  %3756 = vmatprep.subr.bf16.mxu0 %v2725
  %3757 = vmatpush1.bf16.msra.mxu0 %v2724
  %3758 = vmatprep.subr.bf16.mxu0 %v2729
  %3759 = vmatpush1.bf16.msra.mxu0 %v2728
  %3760 = vmatprep.mubr.bf16.mxu0 %v657
  %3761 = vmatmul.mubr.bf16.gmra.mrb[0].mxu0 %v656
  %v3762 = vpop.f32.mrb[0].mxu0
  %v3763 = vadd.f32 %v3722, %v3762
  %v3764 = vpop.f32.mrb[0].mxu0
  %v3765 = vadd.f32 %v3724, %v3764
  %v3766 = vpop.f32.mrb[0].mxu0
  %v3767 = vpop.f32.mrb[0].mxu0
  %3768 = vdwg.mxu0
  %3769 = vmatprep.subr.bf16.mxu0 %v2733
  %3770 = vmatpush1.bf16.msra.mxu0 %v2732
  %3771 = vmatprep.subr.bf16.mxu0 %v2737
  %3772 = vmatpush1.bf16.msra.mxu0 %v2736
  %3773 = vmatprep.subr.bf16.mxu0 %v2741
  %3774 = vmatpush1.bf16.msra.mxu0 %v2740
  %3775 = vmatprep.subr.bf16.mxu0 %v2745
  %3776 = vmatpush1.bf16.msra.mxu0 %v2744
  %3777 = vmatprep.subr.bf16.mxu0 %v2749
  %3778 = vmatpush1.bf16.msra.mxu0 %v2748
  %3779 = vmatprep.subr.bf16.mxu0 %v2753
  %3780 = vmatpush1.bf16.msra.mxu0 %v2752
  %3781 = vmatprep.subr.bf16.mxu0 %v2757
  %3782 = vmatpush1.bf16.msra.mxu0 %v2756
  %3783 = vmatprep.subr.bf16.mxu0 %v2761
  %3784 = vmatpush1.bf16.msra.mxu0 %v2760
  %3785 = vmatprep.subr.bf16.mxu0 %v2765
  %3786 = vmatpush1.bf16.msra.mxu0 %v2764
  %3787 = vmatprep.subr.bf16.mxu0 %v2769
  %3788 = vmatpush1.bf16.msra.mxu0 %v2768
  %3789 = vmatprep.subr.bf16.mxu0 %v2773
  %3790 = vmatpush1.bf16.msra.mxu0 %v2772
  %3791 = vmatprep.subr.bf16.mxu0 %v2777
  %3792 = vmatpush1.bf16.msra.mxu0 %v2776
  %3793 = vmatprep.subr.bf16.mxu0 %v2781
  %3794 = vmatpush1.bf16.msra.mxu0 %v2780
  %3795 = vmatprep.subr.bf16.mxu0 %v2785
  %3796 = vmatpush1.bf16.msra.mxu0 %v2784
  %3797 = vmatprep.subr.bf16.mxu0 %v2789
  %3798 = vmatpush1.bf16.msra.mxu0 %v2788
  %3799 = vmatprep.subr.bf16.mxu0 %v2793
  %3800 = vmatpush1.bf16.msra.mxu0 %v2792
  %3801 = vmatprep.mubr.bf16.mxu0 %v659
  %3802 = vmatmul.mubr.bf16.gmra.mrb[0].mxu0 %v658
  %v3803 = vpop.f32.mrb[0].mxu0
  %v3804 = vadd.f32 %v3763, %v3803
  %v3805 = vpop.f32.mrb[0].mxu0
  %v3806 = vadd.f32 %v3765, %v3805
  %v3807 = vpop.f32.mrb[0].mxu0
  %v3808 = vpop.f32.mrb[0].mxu0
  %3809 = vdwg.mxu0
  %3810 = vmatprep.subr.bf16.mxu0 %v2797
  %3811 = vmatpush1.bf16.msra.mxu0 %v2796
  %3812 = vmatprep.subr.bf16.mxu0 %v2801
  %3813 = vmatpush1.bf16.msra.mxu0 %v2800
  %3814 = vmatprep.subr.bf16.mxu0 %v2805
  %3815 = vmatpush1.bf16.msra.mxu0 %v2804
  %3816 = vmatprep.subr.bf16.mxu0 %v2809
  %3817 = vmatpush1.bf16.msra.mxu0 %v2808
  %3818 = vmatprep.subr.bf16.mxu0 %v2813
  %3819 = vmatpush1.bf16.msra.mxu0 %v2812
  %3820 = vmatprep.subr.bf16.mxu0 %v2817
  %3821 = vmatpush1.bf16.msra.mxu0 %v2816
  %3822 = vmatprep.subr.bf16.mxu0 %v2821
  %3823 = vmatpush1.bf16.msra.mxu0 %v2820
  %3824 = vmatprep.subr.bf16.mxu0 %v2825
  %3825 = vmatpush1.bf16.msra.mxu0 %v2824
  %3826 = vmatprep.subr.bf16.mxu0 %v2829
  %3827 = vmatpush1.bf16.msra.mxu0 %v2828
  %3828 = vmatprep.subr.bf16.mxu0 %v2833
  %3829 = vmatpush1.bf16.msra.mxu0 %v2832
  %3830 = vmatprep.subr.bf16.mxu0 %v2837
  %3831 = vmatpush1.bf16.msra.mxu0 %v2836
  %3832 = vmatprep.subr.bf16.mxu0 %v2841
  %3833 = vmatpush1.bf16.msra.mxu0 %v2840
  %3834 = vmatprep.subr.bf16.mxu0 %v2845
  %3835 = vmatpush1.bf16.msra.mxu0 %v2844
  %3836 = vmatprep.subr.bf16.mxu0 %v2849
  %3837 = vmatpush1.bf16.msra.mxu0 %v2848
  %3838 = vmatprep.subr.bf16.mxu0 %v2853
  %3839 = vmatpush1.bf16.msra.mxu0 %v2852
  %3840 = vmatprep.subr.bf16.mxu0 %v2857
  %3841 = vmatpush1.bf16.msra.mxu0 %v2856
  %3842 = vmatprep.mubr.bf16.mxu0 %v661
  %3843 = vmatmul.mubr.bf16.gmra.mrb[0].mxu0 %v660
  %v3844 = vpop.f32.mrb[0].mxu0
  %v3845 = vadd.f32 %v3804, %v3844
  %v3846 = vpop.f32.mrb[0].mxu0
  %v3847 = vadd.f32 %v3806, %v3846
  %v3848 = vpop.f32.mrb[0].mxu0
  %v3849 = vpop.f32.mrb[0].mxu0
  %3850 = vdwg.mxu0
  %3851 = vmatprep.subr.bf16.mxu0 %v2861
  %3852 = vmatpush1.bf16.msra.mxu0 %v2860
  %3853 = vmatprep.subr.bf16.mxu0 %v2865
  %3854 = vmatpush1.bf16.msra.mxu0 %v2864
  %3855 = vmatprep.subr.bf16.mxu0 %v2869
  %3856 = vmatpush1.bf16.msra.mxu0 %v2868
  %3857 = vmatprep.subr.bf16.mxu0 %v2873
  %3858 = vmatpush1.bf16.msra.mxu0 %v2872
  %3859 = vmatprep.subr.bf16.mxu0 %v2877
  %3860 = vmatpush1.bf16.msra.mxu0 %v2876
  %3861 = vmatprep.subr.bf16.mxu0 %v2881
  %3862 = vmatpush1.bf16.msra.mxu0 %v2880
  %3863 = vmatprep.subr.bf16.mxu0 %v2885
  %3864 = vmatpush1.bf16.msra.mxu0 %v2884
  %3865 = vmatprep.subr.bf16.mxu0 %v2889
  %3866 = vmatpush1.bf16.msra.mxu0 %v2888
  %3867 = vmatprep.subr.bf16.mxu0 %v2893
  %3868 = vmatpush1.bf16.msra.mxu0 %v2892
  %3869 = vmatprep.subr.bf16.mxu0 %v2897
  %3870 = vmatpush1.bf16.msra.mxu0 %v2896
  %3871 = vmatprep.subr.bf16.mxu0 %v2901
  %3872 = vmatpush1.bf16.msra.mxu0 %v2900
  %3873 = vmatprep.subr.bf16.mxu0 %v2905
  %3874 = vmatpush1.bf16.msra.mxu0 %v2904
  %3875 = vmatprep.subr.bf16.mxu0 %v2909
  %3876 = vmatpush1.bf16.msra.mxu0 %v2908
  %3877 = vmatprep.subr.bf16.mxu0 %v2913
  %3878 = vmatpush1.bf16.msra.mxu0 %v2912
  %3879 = vmatprep.subr.bf16.mxu0 %v2917
  %3880 = vmatpush1.bf16.msra.mxu0 %v2916
  %3881 = vmatprep.subr.bf16.mxu0 %v2921
  %3882 = vmatpush1.bf16.msra.mxu0 %v2920
  %3883 = vmatprep.mubr.bf16.mxu0 %v663
  %3884 = vmatmul.mubr.bf16.gmra.mrb[0].mxu0 %v662
  %v3885 = vpop.f32.mrb[0].mxu0
  %v3886 = vadd.f32 %v3845, %v3885
  %v3887 = vpop.f32.mrb[0].mxu0
  %v3888 = vadd.f32 %v3847, %v3887
  %v3889 = vpop.f32.mrb[0].mxu0
  %v3890 = vpop.f32.mrb[0].mxu0
  %3891 = vdwg.mxu0
  %3892 = vmatprep.subr.bf16.mxu0 %v2925
  %3893 = vmatpush1.bf16.msra.mxu0 %v2924
  %3894 = vmatprep.subr.bf16.mxu0 %v2929
  %3895 = vmatpush1.bf16.msra.mxu0 %v2928
  %3896 = vmatprep.subr.bf16.mxu0 %v2933
  %3897 = vmatpush1.bf16.msra.mxu0 %v2932
  %3898 = vmatprep.subr.bf16.mxu0 %v2937
  %3899 = vmatpush1.bf16.msra.mxu0 %v2936
  %3900 = vmatprep.subr.bf16.mxu0 %v2941
  %3901 = vmatpush1.bf16.msra.mxu0 %v2940
  %3902 = vmatprep.subr.bf16.mxu0 %v2945
  %3903 = vmatpush1.bf16.msra.mxu0 %v2944
  %3904 = vmatprep.subr.bf16.mxu0 %v2949
  %3905 = vmatpush1.bf16.msra.mxu0 %v2948
  %3906 = vmatprep.subr.bf16.mxu0 %v2953
  %3907 = vmatpush1.bf16.msra.mxu0 %v2952
  %3908 = vmatprep.subr.bf16.mxu0 %v2957
  %3909 = vmatpush1.bf16.msra.mxu0 %v2956
  %3910 = vmatprep.subr.bf16.mxu0 %v2961
  %3911 = vmatpush1.bf16.msra.mxu0 %v2960
  %3912 = vmatprep.subr.bf16.mxu0 %v2965
  %3913 = vmatpush1.bf16.msra.mxu0 %v2964
  %3914 = vmatprep.subr.bf16.mxu0 %v2969
  %3915 = vmatpush1.bf16.msra.mxu0 %v2968
  %3916 = vmatprep.subr.bf16.mxu0 %v2973
  %3917 = vmatpush1.bf16.msra.mxu0 %v2972
  %3918 = vmatprep.subr.bf16.mxu0 %v2977
  %3919 = vmatpush1.bf16.msra.mxu0 %v2976
  %3920 = vmatprep.subr.bf16.mxu0 %v2981
  %3921 = vmatpush1.bf16.msra.mxu0 %v2980
  %3922 = vmatprep.subr.bf16.mxu0 %v2985
  %3923 = vmatpush1.bf16.msra.mxu0 %v2984
  %3924 = vmatprep.mubr.bf16.mxu0 %v665
  %3925 = vmatmul.mubr.bf16.gmra.mrb[0].mxu0 %v664
  %v3926 = vpop.f32.mrb[0].mxu0
  %v3927 = vadd.f32 %v3886, %v3926
  %v3928 = vpop.f32.mrb[0].mxu0
  %v3929 = vadd.f32 %v3888, %v3928
  %v3930 = vpop.f32.mrb[0].mxu0
  %v3931 = vpop.f32.mrb[0].mxu0
  %3932 = vdwg.mxu0
  %3933 = vmatprep.subr.bf16.mxu0 %v2415
  %3934 = vmatpush1.bf16.msra.mxu0 %v2414
  %3935 = vmatprep.subr.bf16.mxu0 %v2419
  %3936 = vmatpush1.bf16.msra.mxu0 %v2418
  %3937 = vmatprep.subr.bf16.mxu0 %v2423
  %3938 = vmatpush1.bf16.msra.mxu0 %v2422
  %3939 = vmatprep.subr.bf16.mxu0 %v2427
  %3940 = vmatpush1.bf16.msra.mxu0 %v2426
  %3941 = vmatprep.subr.bf16.mxu0 %v2431
  %3942 = vmatpush1.bf16.msra.mxu0 %v2430
  %3943 = vmatprep.subr.bf16.mxu0 %v2435
  %3944 = vmatpush1.bf16.msra.mxu0 %v2434
  %3945 = vmatprep.subr.bf16.mxu0 %v2439
  %3946 = vmatpush1.bf16.msra.mxu0 %v2438
  %3947 = vmatprep.subr.bf16.mxu0 %v2443
  %3948 = vmatpush1.bf16.msra.mxu0 %v2442
  %3949 = vmatprep.subr.bf16.mxu0 %v2447
  %3950 = vmatpush1.bf16.msra.mxu0 %v2446
  %3951 = vmatprep.subr.bf16.mxu0 %v2451
  %3952 = vmatpush1.bf16.msra.mxu0 %v2450
  %3953 = vmatprep.subr.bf16.mxu0 %v2455
  %3954 = vmatpush1.bf16.msra.mxu0 %v2454
  %3955 = vmatprep.subr.bf16.mxu0 %v2459
  %3956 = vmatpush1.bf16.msra.mxu0 %v2458
  %3957 = vmatprep.subr.bf16.mxu0 %v2463
  %3958 = vmatpush1.bf16.msra.mxu0 %v2462
  %3959 = vmatprep.subr.bf16.mxu0 %v2467
  %3960 = vmatpush1.bf16.msra.mxu0 %v2466
  %3961 = vmatprep.subr.bf16.mxu0 %v2471
  %3962 = vmatpush1.bf16.msra.mxu0 %v2470
  %3963 = vmatprep.subr.bf16.mxu0 %v2475
  %3964 = vmatpush1.bf16.msra.mxu0 %v2474
  %3965 = vmatprep.mubr.bf16.mxu0 %v649
  %3966 = vmatmul.mubr.bf16.gmra.mrb[0].mxu0 %v648
  %v3967 = vpop.f32.mrb[0].mxu0
  %v3968 = vadd.f32 %v612, %v3967
  %v3969 = vpop.f32.mrb[0].mxu0
  %v3970 = vadd.f32 %v616, %v3969
  %v3971 = vpop.f32.mrb[0].mxu0
  %v3972 = vpop.f32.mrb[0].mxu0
  %3973 = vdwg.mxu0
  %3974 = vmatprep.subr.bf16.mxu0 %v2479
  %3975 = vmatpush1.bf16.msra.mxu0 %v2478
  %3976 = vmatprep.subr.bf16.mxu0 %v2483
  %3977 = vmatpush1.bf16.msra.mxu0 %v2482
  %3978 = vmatprep.subr.bf16.mxu0 %v2487
  %3979 = vmatpush1.bf16.msra.mxu0 %v2486
  %3980 = vmatprep.subr.bf16.mxu0 %v2491
  %3981 = vmatpush1.bf16.msra.mxu0 %v2490
  %3982 = vmatprep.subr.bf16.mxu0 %v2495
  %3983 = vmatpush1.bf16.msra.mxu0 %v2494
  %3984 = vmatprep.subr.bf16.mxu0 %v2499
  %3985 = vmatpush1.bf16.msra.mxu0 %v2498
  %3986 = vmatprep.subr.bf16.mxu0 %v2503
  %3987 = vmatpush1.bf16.msra.mxu0 %v2502
  %3988 = vmatprep.subr.bf16.mxu0 %v2507
  %3989 = vmatpush1.bf16.msra.mxu0 %v2506
  %3990 = vmatprep.subr.bf16.mxu0 %v2511
  %3991 = vmatpush1.bf16.msra.mxu0 %v2510
  %3992 = vmatprep.subr.bf16.mxu0 %v2515
  %3993 = vmatpush1.bf16.msra.mxu0 %v2514
  %3994 = vmatprep.subr.bf16.mxu0 %v2519
  %3995 = vmatpush1.bf16.msra.mxu0 %v2518
  %3996 = vmatprep.subr.bf16.mxu0 %v2523
  %3997 = vmatpush1.bf16.msra.mxu0 %v2522
  %3998 = vmatprep.subr.bf16.mxu0 %v2527
  %3999 = vmatpush1.bf16.msra.mxu0 %v2526
  %4000 = vmatprep.subr.bf16.mxu0 %v2531
  %4001 = vmatpush1.bf16.msra.mxu0 %v2530
  %4002 = vmatprep.subr.bf16.mxu0 %v2535
  %4003 = vmatpush1.bf16.msra.mxu0 %v2534
  %4004 = vmatprep.subr.bf16.mxu0 %v2539
  %4005 = vmatpush1.bf16.msra.mxu0 %v2538
  %4006 = vmatprep.mubr.bf16.mxu0 %v651
  %4007 = vmatmul.mubr.bf16.gmra.mrb[0].mxu0 %v650
  %v4008 = vpop.f32.mrb[0].mxu0
  %v4009 = vadd.f32 %v3968, %v4008
  %v4010 = vpop.f32.mrb[0].mxu0
  %v4011 = vadd.f32 %v3970, %v4010
  %v4012 = vpop.f32.mrb[0].mxu0
  %v4013 = vpop.f32.mrb[0].mxu0
  %4014 = vdwg.mxu0
  %4015 = vmatprep.subr.bf16.mxu0 %v2543
  %4016 = vmatpush1.bf16.msra.mxu0 %v2542
  %4017 = vmatprep.subr.bf16.mxu0 %v2547
  %4018 = vmatpush1.bf16.msra.mxu0 %v2546
  %4019 = vmatprep.subr.bf16.mxu0 %v2551
  %4020 = vmatpush1.bf16.msra.mxu0 %v2550
  %4021 = vmatprep.subr.bf16.mxu0 %v2555
  %4022 = vmatpush1.bf16.msra.mxu0 %v2554
  %4023 = vmatprep.subr.bf16.mxu0 %v2559
  %4024 = vmatpush1.bf16.msra.mxu0 %v2558
  %4025 = vmatprep.subr.bf16.mxu0 %v2563
  %4026 = vmatpush1.bf16.msra.mxu0 %v2562
  %4027 = vmatprep.subr.bf16.mxu0 %v2567
  %4028 = vmatpush1.bf16.msra.mxu0 %v2566
  %4029 = vmatprep.subr.bf16.mxu0 %v2571
  %4030 = vmatpush1.bf16.msra.mxu0 %v2570
  %4031 = vmatprep.subr.bf16.mxu0 %v2575
  %4032 = vmatpush1.bf16.msra.mxu0 %v2574
  %4033 = vmatprep.subr.bf16.mxu0 %v2579
  %4034 = vmatpush1.bf16.msra.mxu0 %v2578
  %4035 = vmatprep.subr.bf16.mxu0 %v2583
  %4036 = vmatpush1.bf16.msra.mxu0 %v2582
  %4037 = vmatprep.subr.bf16.mxu0 %v2587
  %4038 = vmatpush1.bf16.msra.mxu0 %v2586
  %4039 = vmatprep.subr.bf16.mxu0 %v2591
  %4040 = vmatpush1.bf16.msra.mxu0 %v2590
  %4041 = vmatprep.subr.bf16.mxu0 %v2595
  %4042 = vmatpush1.bf16.msra.mxu0 %v2594
  %4043 = vmatprep.subr.bf16.mxu0 %v2599
  %4044 = vmatpush1.bf16.msra.mxu0 %v2598
  %4045 = vmatprep.subr.bf16.mxu0 %v2603
  %4046 = vmatpush1.bf16.msra.mxu0 %v2602
  %4047 = vmatprep.mubr.bf16.mxu0 %v653
  %4048 = vmatmul.mubr.bf16.gmra.mrb[0].mxu0 %v652
  %v4049 = vpop.f32.mrb[0].mxu0
  %v4050 = vadd.f32 %v4009, %v4049
  %v4051 = vpop.f32.mrb[0].mxu0
  %v4052 = vadd.f32 %v4011, %v4051
  %v4053 = vpop.f32.mrb[0].mxu0
  %v4054 = vpop.f32.mrb[0].mxu0
  %4055 = vdwg.mxu0
  %4056 = vmatprep.subr.bf16.mxu0 %v2607
  %4057 = vmatpush1.bf16.msra.mxu0 %v2606
  %4058 = vmatprep.subr.bf16.mxu0 %v2611
  %4059 = vmatpush1.bf16.msra.mxu0 %v2610
  %4060 = vmatprep.subr.bf16.mxu0 %v2615
  %4061 = vmatpush1.bf16.msra.mxu0 %v2614
  %4062 = vmatprep.subr.bf16.mxu0 %v2619
  %4063 = vmatpush1.bf16.msra.mxu0 %v2618
  %4064 = vmatprep.subr.bf16.mxu0 %v2623
  %4065 = vmatpush1.bf16.msra.mxu0 %v2622
  %4066 = vmatprep.subr.bf16.mxu0 %v2627
  %4067 = vmatpush1.bf16.msra.mxu0 %v2626
  %4068 = vmatprep.subr.bf16.mxu0 %v2631
  %4069 = vmatpush1.bf16.msra.mxu0 %v2630
  %4070 = vmatprep.subr.bf16.mxu0 %v2635
  %4071 = vmatpush1.bf16.msra.mxu0 %v2634
  %4072 = vmatprep.subr.bf16.mxu0 %v2639
  %4073 = vmatpush1.bf16.msra.mxu0 %v2638
  %4074 = vmatprep.subr.bf16.mxu0 %v2643
  %4075 = vmatpush1.bf16.msra.mxu0 %v2642
  %4076 = vmatprep.subr.bf16.mxu0 %v2647
  %4077 = vmatpush1.bf16.msra.mxu0 %v2646
  %4078 = vmatprep.subr.bf16.mxu0 %v2651
  %4079 = vmatpush1.bf16.msra.mxu0 %v2650
  %4080 = vmatprep.subr.bf16.mxu0 %v2655
  %4081 = vmatpush1.bf16.msra.mxu0 %v2654
  %4082 = vmatprep.subr.bf16.mxu0 %v2659
  %4083 = vmatpush1.bf16.msra.mxu0 %v2658
  %4084 = vmatprep.subr.bf16.mxu0 %v2663
  %4085 = vmatpush1.bf16.msra.mxu0 %v2662
  %4086 = vmatprep.subr.bf16.mxu0 %v2667
  %4087 = vmatpush1.bf16.msra.mxu0 %v2666
  %4088 = vmatprep.mubr.bf16.mxu0 %v655
  %4089 = vmatmul.mubr.bf16.gmra.mrb[0].mxu0 %v654
  %v4090 = vpop.f32.mrb[0].mxu0
  %v4091 = vadd.f32 %v4050, %v4090
  %v4092 = vpop.f32.mrb[0].mxu0
  %v4093 = vadd.f32 %v4052, %v4092
  %v4094 = vpop.f32.mrb[0].mxu0
  %v4095 = vpop.f32.mrb[0].mxu0
  %4096 = vdwg.mxu0
  %4097 = vmatprep.subr.bf16.mxu0 %v2671
  %4098 = vmatpush1.bf16.msra.mxu0 %v2670
  %4099 = vmatprep.subr.bf16.mxu0 %v2675
  %4100 = vmatpush1.bf16.msra.mxu0 %v2674
  %4101 = vmatprep.subr.bf16.mxu0 %v2679
  %4102 = vmatpush1.bf16.msra.mxu0 %v2678
  %4103 = vmatprep.subr.bf16.mxu0 %v2683
  %4104 = vmatpush1.bf16.msra.mxu0 %v2682
  %4105 = vmatprep.subr.bf16.mxu0 %v2687
  %4106 = vmatpush1.bf16.msra.mxu0 %v2686
  %4107 = vmatprep.subr.bf16.mxu0 %v2691
  %4108 = vmatpush1.bf16.msra.mxu0 %v2690
  %4109 = vmatprep.subr.bf16.mxu0 %v2695
  %4110 = vmatpush1.bf16.msra.mxu0 %v2694
  %4111 = vmatprep.subr.bf16.mxu0 %v2699
  %4112 = vmatpush1.bf16.msra.mxu0 %v2698
  %4113 = vmatprep.subr.bf16.mxu0 %v2703
  %4114 = vmatpush1.bf16.msra.mxu0 %v2702
  %4115 = vmatprep.subr.bf16.mxu0 %v2707
  %4116 = vmatpush1.bf16.msra.mxu0 %v2706
  %4117 = vmatprep.subr.bf16.mxu0 %v2711
  %4118 = vmatpush1.bf16.msra.mxu0 %v2710
  %4119 = vmatprep.subr.bf16.mxu0 %v2715
  %4120 = vmatpush1.bf16.msra.mxu0 %v2714
  %4121 = vmatprep.subr.bf16.mxu0 %v2719
  %4122 = vmatpush1.bf16.msra.mxu0 %v2718
  %4123 = vmatprep.subr.bf16.mxu0 %v2723
  %4124 = vmatpush1.bf16.msra.mxu0 %v2722
  %4125 = vmatprep.subr.bf16.mxu0 %v2727
  %4126 = vmatpush1.bf16.msra.mxu0 %v2726
  %4127 = vmatprep.subr.bf16.mxu0 %v2731
  %4128 = vmatpush1.bf16.msra.mxu0 %v2730
  %4129 = vmatprep.mubr.bf16.mxu0 %v657
  %4130 = vmatmul.mubr.bf16.gmra.mrb[0].mxu0 %v656
  %v4131 = vpop.f32.mrb[0].mxu0
  %v4132 = vadd.f32 %v4091, %v4131
  %v4133 = vpop.f32.mrb[0].mxu0
  %v4134 = vadd.f32 %v4093, %v4133
  %v4135 = vpop.f32.mrb[0].mxu0
  %v4136 = vpop.f32.mrb[0].mxu0
  %4137 = vdwg.mxu0
  %4138 = vmatprep.subr.bf16.mxu0 %v2735
  %4139 = vmatpush1.bf16.msra.mxu0 %v2734
  %4140 = vmatprep.subr.bf16.mxu0 %v2739
  %4141 = vmatpush1.bf16.msra.mxu0 %v2738
  %4142 = vmatprep.subr.bf16.mxu0 %v2743
  %4143 = vmatpush1.bf16.msra.mxu0 %v2742
  %4144 = vmatprep.subr.bf16.mxu0 %v2747
  %4145 = vmatpush1.bf16.msra.mxu0 %v2746
  %4146 = vmatprep.subr.bf16.mxu0 %v2751
  %4147 = vmatpush1.bf16.msra.mxu0 %v2750
  %4148 = vmatprep.subr.bf16.mxu0 %v2755
  %4149 = vmatpush1.bf16.msra.mxu0 %v2754
  %4150 = vmatprep.subr.bf16.mxu0 %v2759
  %4151 = vmatpush1.bf16.msra.mxu0 %v2758
  %4152 = vmatprep.subr.bf16.mxu0 %v2763
  %4153 = vmatpush1.bf16.msra.mxu0 %v2762
  %4154 = vmatprep.subr.bf16.mxu0 %v2767
  %4155 = vmatpush1.bf16.msra.mxu0 %v2766
  %4156 = vmatprep.subr.bf16.mxu0 %v2771
  %4157 = vmatpush1.bf16.msra.mxu0 %v2770
  %4158 = vmatprep.subr.bf16.mxu0 %v2775
  %4159 = vmatpush1.bf16.msra.mxu0 %v2774
  %4160 = vmatprep.subr.bf16.mxu0 %v2779
  %4161 = vmatpush1.bf16.msra.mxu0 %v2778
  %4162 = vmatprep.subr.bf16.mxu0 %v2783
  %4163 = vmatpush1.bf16.msra.mxu0 %v2782
  %4164 = vmatprep.subr.bf16.mxu0 %v2787
  %4165 = vmatpush1.bf16.msra.mxu0 %v2786
  %4166 = vmatprep.subr.bf16.mxu0 %v2791
  %4167 = vmatpush1.bf16.msra.mxu0 %v2790
  %4168 = vmatprep.subr.bf16.mxu0 %v2795
  %4169 = vmatpush1.bf16.msra.mxu0 %v2794
  %4170 = vmatprep.mubr.bf16.mxu0 %v659
  %4171 = vmatmul.mubr.bf16.gmra.mrb[0].mxu0 %v658
  %v4172 = vpop.f32.mrb[0].mxu0
  %v4173 = vadd.f32 %v4132, %v4172
  %v4174 = vpop.f32.mrb[0].mxu0
  %v4175 = vadd.f32 %v4134, %v4174
  %v4176 = vpop.f32.mrb[0].mxu0
  %v4177 = vpop.f32.mrb[0].mxu0
  %4178 = vdwg.mxu0
  %4179 = vmatprep.subr.bf16.mxu0 %v2799
  %4180 = vmatpush1.bf16.msra.mxu0 %v2798
  %4181 = vmatprep.subr.bf16.mxu0 %v2803
  %4182 = vmatpush1.bf16.msra.mxu0 %v2802
  %4183 = vmatprep.subr.bf16.mxu0 %v2807
  %4184 = vmatpush1.bf16.msra.mxu0 %v2806
  %4185 = vmatprep.subr.bf16.mxu0 %v2811
  %4186 = vmatpush1.bf16.msra.mxu0 %v2810
  %4187 = vmatprep.subr.bf16.mxu0 %v2815
  %4188 = vmatpush1.bf16.msra.mxu0 %v2814
  %4189 = vmatprep.subr.bf16.mxu0 %v2819
  %4190 = vmatpush1.bf16.msra.mxu0 %v2818
  %4191 = vmatprep.subr.bf16.mxu0 %v2823
  %4192 = vmatpush1.bf16.msra.mxu0 %v2822
  %4193 = vmatprep.subr.bf16.mxu0 %v2827
  %4194 = vmatpush1.bf16.msra.mxu0 %v2826
  %4195 = vmatprep.subr.bf16.mxu0 %v2831
  %4196 = vmatpush1.bf16.msra.mxu0 %v2830
  %4197 = vmatprep.subr.bf16.mxu0 %v2835
  %4198 = vmatpush1.bf16.msra.mxu0 %v2834
  %4199 = vmatprep.subr.bf16.mxu0 %v2839
  %4200 = vmatpush1.bf16.msra.mxu0 %v2838
  %4201 = vmatprep.subr.bf16.mxu0 %v2843
  %4202 = vmatpush1.bf16.msra.mxu0 %v2842
  %4203 = vmatprep.subr.bf16.mxu0 %v2847
  %4204 = vmatpush1.bf16.msra.mxu0 %v2846
  %4205 = vmatprep.subr.bf16.mxu0 %v2851
  %4206 = vmatpush1.bf16.msra.mxu0 %v2850
  %4207 = vmatprep.subr.bf16.mxu0 %v2855
  %4208 = vmatpush1.bf16.msra.mxu0 %v2854
  %4209 = vmatprep.subr.bf16.mxu0 %v2859
  %4210 = vmatpush1.bf16.msra.mxu0 %v2858
  %4211 = vmatprep.mubr.bf16.mxu0 %v661
  %4212 = vmatmul.mubr.bf16.gmra.mrb[0].mxu0 %v660
  %v4213 = vpop.f32.mrb[0].mxu0
  %v4214 = vadd.f32 %v4173, %v4213
  %v4215 = vpop.f32.mrb[0].mxu0
  %v4216 = vadd.f32 %v4175, %v4215
  %v4217 = vpop.f32.mrb[0].mxu0
  %v4218 = vpop.f32.mrb[0].mxu0
  %4219 = vdwg.mxu0
  %4220 = vmatprep.subr.bf16.mxu0 %v2863
  %4221 = vmatpush1.bf16.msra.mxu0 %v2862
  %4222 = vmatprep.subr.bf16.mxu0 %v2867
  %4223 = vmatpush1.bf16.msra.mxu0 %v2866
  %4224 = vmatprep.subr.bf16.mxu0 %v2871
  %4225 = vmatpush1.bf16.msra.mxu0 %v2870
  %4226 = vmatprep.subr.bf16.mxu0 %v2875
  %4227 = vmatpush1.bf16.msra.mxu0 %v2874
  %4228 = vmatprep.subr.bf16.mxu0 %v2879
  %4229 = vmatpush1.bf16.msra.mxu0 %v2878
  %4230 = vmatprep.subr.bf16.mxu0 %v2883
  %4231 = vmatpush1.bf16.msra.mxu0 %v2882
  %4232 = vmatprep.subr.bf16.mxu0 %v2887
  %4233 = vmatpush1.bf16.msra.mxu0 %v2886
  %4234 = vmatprep.subr.bf16.mxu0 %v2891
  %4235 = vmatpush1.bf16.msra.mxu0 %v2890
  %4236 = vmatprep.subr.bf16.mxu0 %v2895
  %4237 = vmatpush1.bf16.msra.mxu0 %v2894
  %4238 = vmatprep.subr.bf16.mxu0 %v2899
  %4239 = vmatpush1.bf16.msra.mxu0 %v2898
  %4240 = vmatprep.subr.bf16.mxu0 %v2903
  %4241 = vmatpush1.bf16.msra.mxu0 %v2902
  %4242 = vmatprep.subr.bf16.mxu0 %v2907
  %4243 = vmatpush1.bf16.msra.mxu0 %v2906
  %4244 = vmatprep.subr.bf16.mxu0 %v2911
  %4245 = vmatpush1.bf16.msra.mxu0 %v2910
  %4246 = vmatprep.subr.bf16.mxu0 %v2915
  %4247 = vmatpush1.bf16.msra.mxu0 %v2914
  %4248 = vmatprep.subr.bf16.mxu0 %v2919
  %4249 = vmatpush1.bf16.msra.mxu0 %v2918
  %4250 = vmatprep.subr.bf16.mxu0 %v2923
  %4251 = vmatpush1.bf16.msra.mxu0 %v2922
  %4252 = vmatprep.mubr.bf16.mxu0 %v663
  %4253 = vmatmul.mubr.bf16.gmra.mrb[0].mxu0 %v662
  %v4254 = vpop.f32.mrb[0].mxu0
  %v4255 = vadd.f32 %v4214, %v4254
  %v4256 = vpop.f32.mrb[0].mxu0
  %v4257 = vadd.f32 %v4216, %v4256
  %v4258 = vpop.f32.mrb[0].mxu0
  %v4259 = vpop.f32.mrb[0].mxu0
  %4260 = vdwg.mxu0
  %4261 = vmatprep.subr.bf16.mxu0 %v2927
  %4262 = vmatpush1.bf16.msra.mxu0 %v2926
  %4263 = vmatprep.subr.bf16.mxu0 %v2931
  %4264 = vmatpush1.bf16.msra.mxu0 %v2930
  %4265 = vmatprep.subr.bf16.mxu0 %v2935
  %4266 = vmatpush1.bf16.msra.mxu0 %v2934
  %4267 = vmatprep.subr.bf16.mxu0 %v2939
  %4268 = vmatpush1.bf16.msra.mxu0 %v2938
  %4269 = vmatprep.subr.bf16.mxu0 %v2943
  %4270 = vmatpush1.bf16.msra.mxu0 %v2942
  %4271 = vmatprep.subr.bf16.mxu0 %v2947
  %4272 = vmatpush1.bf16.msra.mxu0 %v2946
  %4273 = vmatprep.subr.bf16.mxu0 %v2951
  %4274 = vmatpush1.bf16.msra.mxu0 %v2950
  %4275 = vmatprep.subr.bf16.mxu0 %v2955
  %4276 = vmatpush1.bf16.msra.mxu0 %v2954
  %4277 = vmatprep.subr.bf16.mxu0 %v2959
  %4278 = vmatpush1.bf16.msra.mxu0 %v2958
  %4279 = vmatprep.subr.bf16.mxu0 %v2963
  %4280 = vmatpush1.bf16.msra.mxu0 %v2962
  %4281 = vmatprep.subr.bf16.mxu0 %v2967
  %4282 = vmatpush1.bf16.msra.mxu0 %v2966
  %4283 = vmatprep.subr.bf16.mxu0 %v2971
  %4284 = vmatpush1.bf16.msra.mxu0 %v2970
  %4285 = vmatprep.subr.bf16.mxu0 %v2975
  %4286 = vmatpush1.bf16.msra.mxu0 %v2974
  %4287 = vmatprep.subr.bf16.mxu0 %v2979
  %4288 = vmatpush1.bf16.msra.mxu0 %v2978
  %4289 = vmatprep.subr.bf16.mxu0 %v2983
  %4290 = vmatpush1.bf16.msra.mxu0 %v2982
  %4291 = vmatprep.subr.bf16.mxu0 %v2987
  %4292 = vmatpush1.bf16.msra.mxu0 %v2986
  %4293 = vmatprep.mubr.bf16.mxu0 %v665
  %4294 = vmatmul.mubr.bf16.gmra.mrb[0].mxu0 %v664
  %v4295 = vpop.f32.mrb[0].mxu0
  %v4296 = vadd.f32 %v4255, %v4295
  %v4297 = vpop.f32.mrb[0].mxu0
  %v4298 = vadd.f32 %v4257, %v4297
  %v4299 = vpop.f32.mrb[0].mxu0
  %v4300 = vpop.f32.mrb[0].mxu0
  %4301 = vdwg.mxu0
  %v4302 = vmul.f32 %v3927, 0.01
  %v4303 = vmul.f32 %v3929, 0.01
  %v4304 = vmul.f32 %v4296, 0.01
  %v4305 = vmul.f32 %v4298, 0.01
  %v4306 = vmax.f32 %v3927, %v4302
  %v4307 = vmax.f32 %v3929, %v4303
  %v4308 = vmax.f32 %v4296, %v4304
  %v4309 = vmax.f32 %v4298, %v4305
  %v4310 = vpack.c.bf16 %v4306, %v4306
  %v4311 = vpack.c.bf16 %v4307, %v4307
  %v4312 = vpack.c.bf16 %v4308, %v4308
  %v4313 = vpack.c.bf16 %v4309, %v4309
  %v4318 = vunpack.c.l.b16 %v4310
  %v4319 = vunpack.c.l.b16 %v4311
  %v4320 = vunpack.c.l.b16 %v4312
  %v4321 = vunpack.c.l.b16 %v4313
  %v4322 = vpack.c.b16 %v4319, %v4318
  %v4323 = vpack.c.b16 %v4321, %v4320
  %4326 = vst [vmem:[%s3] sm:$0xff] %v4322
  %4327 = vst [vmem:[%s3 + $0x8] sm:$0xff] %v4323
  // Predicated region
  $region14: #{clagnosco_autoencoder_forward.14} parent=0 // pred_check
    _
  $region15: #{clagnosco_autoencoder_forward.14} parent=0 // pred_check_branch
    %4329 = sbr.rel (0) target = $region17
  $region16: #{clagnosco_autoencoder_forward.14} parent=0 // pred_region
    _
  $region17: #{clagnosco_autoencoder_forward.14} parent=0 // pred_fallthru
    _
  // Predicated region
  $region18: #{clagnosco_autoencoder_forward.14} parent=0 // pred_check
    _
  $region19: #{clagnosco_autoencoder_forward.14} parent=0 // pred_check_branch
    %4331 = sbr.rel (0) target = $region21
  $region20: #{clagnosco_autoencoder_forward.14} parent=0 // pred_region
    _
  $region21: #{clagnosco_autoencoder_forward.14} parent=0 // pred_fallthru
    _

// kernel: tile.28
$region0: #{tile.28}
  #allocation0 [shape = 's32[1]{0}', space=sflag, size = 0x4, scoped, tag = 'scoped memory for tile.28']
  %s0 = inlined_call_operand.vmem [shape: f32[64], index: 0, kind: input, shape index: {}]
  %s1 = inlined_call_operand.vmem [shape: f32[4,64], index: 1, kind: output, shape index: {}]
  // Predicated region
  $region2: #{tile.28} parent=0 // pred_check
    _
  $region3: #{tile.28} parent=0 // pred_check_branch
    %3 = sbr.rel (0) target = $region5
  $region4: #{tile.28} parent=0 // pred_region
    _
  $region5: #{tile.28} parent=0 // pred_fallthru
    _
  %v4 = vld [vmem:[%s0] ss:$0 sm:$0xff]
  %5 = vst [vmem:[%s1] sm:$0xf] %v4

// kernel: clagnosco_autoencoder_forward.15
$region0: #{clagnosco_autoencoder_forward.15}
  #allocation0 [shape = 'u32[]', space=smem, size = 0x4, offset = 0x4, fixed_abs, tag = 'smem constant byte address 0x4 - core index']
  #allocation1 [shape = 'u32[144,128]{1,0:T(1,128)}', space=vmem, size = 0x12000, scoped, tag = 'internal scratch']
  %s0 = inlined_call_operand.vmem [shape: bf16[8,1152], index: 0, kind: input, shape index: {}]
  %s1 = inlined_call_operand.vmem [shape: bf16[1152,256], index: 1, kind: input, shape index: {}]
  %s2 = inlined_call_operand.vmem [shape: f32[1,256], index: 2, kind: input, shape index: {}]
  %s3 = inlined_call_operand.vmem [shape: bf16[8,256], index: 3, kind: output, shape index: {}]
  %s4 = sld [smem:[#allocation0]]
  $region22: #{clagnosco_autoencoder_forward.15} parent=0
    _
  %s6 = ssub.s32 1, %s4
  %s7 = scalar_select 0, %s6, %s4
  // Predicated region
  $region2: #{clagnosco_autoencoder_forward.15} parent=0 // pred_check
    _
  $region3: #{clagnosco_autoencoder_forward.15} parent=0 // pred_check_branch
    %9 = sbr.rel (0) target = $region5
  $region4: #{clagnosco_autoencoder_forward.15} parent=0 // pred_region
    _
  $region5: #{clagnosco_autoencoder_forward.15} parent=0 // pred_fallthru
    _
  // Predicated region
  $region6: #{clagnosco_autoencoder_forward.15} parent=0 // pred_check
    _
  $region7: #{clagnosco_autoencoder_forward.15} parent=0 // pred_check_branch
    %11 = sbr.rel (0) target = $region9
  $region8: #{clagnosco_autoencoder_forward.15} parent=0 // pred_region
    _
  $region9: #{clagnosco_autoencoder_forward.15} parent=0 // pred_fallthru
    _
  // Predicated region
  $region10: #{clagnosco_autoencoder_forward.15} parent=0 // pred_check
    _
  $region11: #{clagnosco_autoencoder_forward.15} parent=0 // pred_check_branch
    %13 = sbr.rel (0) target = $region13
  $region12: #{clagnosco_autoencoder_forward.15} parent=0 // pred_region
    _
  $region13: #{clagnosco_autoencoder_forward.15} parent=0 // pred_fallthru
    _
  %v15 = vld [vmem:[%s0] sm:$0xff]
  %v16 = vld [vmem:[%s0 + $0x8] sm:$0xff]
  %v17 = vld [vmem:[%s0 + $0x10] sm:$0xff]
  %v18 = vld [vmem:[%s0 + $0x18] sm:$0xff]
  %v19 = vld [vmem:[%s0 + $0x20] sm:$0xf]
  %v20 = vld [vmem:[%s1] sm:$0xff]
  %v21 = vld [vmem:[%s1 + $0x8] sm:$0xff]
  %v22 = vld [vmem:[%s1 + $0x10] sm:$0xff]
  %v23 = vld [vmem:[%s1 + $0x18] sm:$0xff]
  %v24 = vld [vmem:[%s1 + $0x20] sm:$0xff]
  %v25 = vld [vmem:[%s1 + $0x28] sm:$0xff]
  %v26 = vld [vmem:[%s1 + $0x30] sm:$0xff]
  %v27 = vld [vmem:[%s1 + $0x38] sm:$0xff]
  %v28 = vld [vmem:[%s1 + $0x40] sm:$0xff]
  %v29 = vld [vmem:[%s1 + $0x48] sm:$0xff]
  %v30 = vld [vmem:[%s1 + $0x50] sm:$0xff]
  %v31 = vld [vmem:[%s1 + $0x58] sm:$0xff]
  %v32 = vld [vmem:[%s1 + $0x60] sm:$0xff]
  %v33 = vld [vmem:[%s1 + $0x68] sm:$0xff]
  %v34 = vld [vmem:[%s1 + $0x70] sm:$0xff]
  %v35 = vld [vmem:[%s1 + $0x78] sm:$0xff]
  %v36 = vld [vmem:[%s1 + $0x80] sm:$0xff]
  %v37 = vld [vmem:[%s1 + $0x88] sm:$0xff]
  %v38 = vld [vmem:[%s1 + $0x90] sm:$0xff]
  %v39 = vld [vmem:[%s1 + $0x98] sm:$0xff]
  %v40 = vld [vmem:[%s1 + $0xa0] sm:$0xff]
  %v41 = vld [vmem:[%s1 + $0xa8] sm:$0xff]
  %v42 = vld [vmem:[%s1 + $0xb0] sm:$0xff]
  %v43 = vld [vmem:[%s1 + $0xb8] sm:$0xff]
  %v44 = vld [vmem:[%s1 + $0xc0] sm:$0xff]
  %v45 = vld [vmem:[%s1 + $0xc8] sm:$0xff]
  %v46 = vld [vmem:[%s1 + $0xd0] sm:$0xff]
  %v47 = vld [vmem:[%s1 + $0xd8] sm:$0xff]
  %v48 = vld [vmem:[%s1 + $0xe0] sm:$0xff]
  %v49 = vld [vmem:[%s1 + $0xe8] sm:$0xff]
  %v50 = vld [vmem:[%s1 + $0xf0] sm:$0xff]
  %v51 = vld [vmem:[%s1 + $0xf8] sm:$0xff]
  %v52 = vld [vmem:[%s1 + $0x100] sm:$0xff]
  %v53 = vld [vmem:[%s1 + $0x108] sm:$0xff]
  %v54 = vld [vmem:[%s1 + $0x110] sm:$0xff]
  %v55 = vld [vmem:[%s1 + $0x118] sm:$0xff]
  %v56 = vld [vmem:[%s1 + $0x120] sm:$0xff]
  %v57 = vld [vmem:[%s1 + $0x128] sm:$0xff]
  %v58 = vld [vmem:[%s1 + $0x130] sm:$0xff]
  %v59 = vld [vmem:[%s1 + $0x138] sm:$0xff]
  %v60 = vld [vmem:[%s1 + $0x140] sm:$0xff]
  %v61 = vld [vmem:[%s1 + $0x148] sm:$0xff]
  %v62 = vld [vmem:[%s1 + $0x150] sm:$0xff]
  %v63 = vld [vmem:[%s1 + $0x158] sm:$0xff]
  %v64 = vld [vmem:[%s1 + $0x160] sm:$0xff]
  %v65 = vld [vmem:[%s1 + $0x168] sm:$0xff]
  %v66 = vld [vmem:[%s1 + $0x170] sm:$0xff]
  %v67 = vld [vmem:[%s1 + $0x178] sm:$0xff]
  %v68 = vld [vmem:[%s1 + $0x180] sm:$0xff]
  %v69 = vld [vmem:[%s1 + $0x188] sm:$0xff]
  %v70 = vld [vmem:[%s1 + $0x190] sm:$0xff]
  %v71 = vld [vmem:[%s1 + $0x198] sm:$0xff]
  %v72 = vld [vmem:[%s1 + $0x1a0] sm:$0xff]
  %v73 = vld [vmem:[%s1 + $0x1a8] sm:$0xff]
  %v74 = vld [vmem:[%s1 + $0x1b0] sm:$0xff]
  %v75 = vld [vmem:[%s1 + $0x1b8] sm:$0xff]
  %v76 = vld [vmem:[%s1 + $0x1c0] sm:$0xff]
  %v77 = vld [vmem:[%s1 + $0x1c8] sm:$0xff]
  %v78 = vld [vmem:[%s1 + $0x1d0] sm:$0xff]
  %v79 = vld [vmem:[%s1 + $0x1d8] sm:$0xff]
  %v80 = vld [vmem:[%s1 + $0x1e0] sm:$0xff]
  %v81 = vld [vmem:[%s1 + $0x1e8] sm:$0xff]
  %v82 = vld [vmem:[%s1 + $0x1f0] sm:$0xff]
  %v83 = vld [vmem:[%s1 + $0x1f8] sm:$0xff]
  %v84 = vld [vmem:[%s1 + $0x200] sm:$0xff]
  %v85 = vld [vmem:[%s1 + $0x208] sm:$0xff]
  %v86 = vld [vmem:[%s1 + $0x210] sm:$0xff]
  %v87 = vld [vmem:[%s1 + $0x218] sm:$0xff]
  %v88 = vld [vmem:[%s1 + $0x220] sm:$0xff]
  %v89 = vld [vmem:[%s1 + $0x228] sm:$0xff]
  %v90 = vld [vmem:[%s1 + $0x230] sm:$0xff]
  %v91 = vld [vmem:[%s1 + $0x238] sm:$0xff]
  %v92 = vld [vmem:[%s1 + $0x240] sm:$0xff]
  %v93 = vld [vmem:[%s1 + $0x248] sm:$0xff]
  %v94 = vld [vmem:[%s1 + $0x250] sm:$0xff]
  %v95 = vld [vmem:[%s1 + $0x258] sm:$0xff]
  %v96 = vld [vmem:[%s1 + $0x260] sm:$0xff]
  %v97 = vld [vmem:[%s1 + $0x268] sm:$0xff]
  %v98 = vld [vmem:[%s1 + $0x270] sm:$0xff]
  %v99 = vld [vmem:[%s1 + $0x278] sm:$0xff]
  %v100 = vld [vmem:[%s1 + $0x280] sm:$0xff]
  %v101 = vld [vmem:[%s1 + $0x288] sm:$0xff]
  %v102 = vld [vmem:[%s1 + $0x290] sm:$0xff]
  %v103 = vld [vmem:[%s1 + $0x298] sm:$0xff]
  %v104 = vld [vmem:[%s1 + $0x2a0] sm:$0xff]
  %v105 = vld [vmem:[%s1 + $0x2a8] sm:$0xff]
  %v106 = vld [vmem:[%s1 + $0x2b0] sm:$0xff]
  %v107 = vld [vmem:[%s1 + $0x2b8] sm:$0xff]
  %v108 = vld [vmem:[%s1 + $0x2c0] sm:$0xff]
  %v109 = vld [vmem:[%s1 + $0x2c8] sm:$0xff]
  %v110 = vld [vmem:[%s1 + $0x2d0] sm:$0xff]
  %v111 = vld [vmem:[%s1 + $0x2d8] sm:$0xff]
  %v112 = vld [vmem:[%s1 + $0x2e0] sm:$0xff]
  %v113 = vld [vmem:[%s1 + $0x2e8] sm:$0xff]
  %v114 = vld [vmem:[%s1 + $0x2f0] sm:$0xff]
  %v115 = vld [vmem:[%s1 + $0x2f8] sm:$0xff]
  %v116 = vld [vmem:[%s1 + $0x300] sm:$0xff]
  %v117 = vld [vmem:[%s1 + $0x308] sm:$0xff]
  %v118 = vld [vmem:[%s1 + $0x310] sm:$0xff]
  %v119 = vld [vmem:[%s1 + $0x318] sm:$0xff]
  %v120 = vld [vmem:[%s1 + $0x320] sm:$0xff]
  %v121 = vld [vmem:[%s1 + $0x328] sm:$0xff]
  %v122 = vld [vmem:[%s1 + $0x330] sm:$0xff]
  %v123 = vld [vmem:[%s1 + $0x338] sm:$0xff]
  %v124 = vld [vmem:[%s1 + $0x340] sm:$0xff]
  %v125 = vld [vmem:[%s1 + $0x348] sm:$0xff]
  %v126 = vld [vmem:[%s1 + $0x350] sm:$0xff]
  %v127 = vld [vmem:[%s1 + $0x358] sm:$0xff]
  %v128 = vld [vmem:[%s1 + $0x360] sm:$0xff]
  %v129 = vld [vmem:[%s1 + $0x368] sm:$0xff]
  %v130 = vld [vmem:[%s1 + $0x370] sm:$0xff]
  %v131 = vld [vmem:[%s1 + $0x378] sm:$0xff]
  %v132 = vld [vmem:[%s1 + $0x380] sm:$0xff]
  %v133 = vld [vmem:[%s1 + $0x388] sm:$0xff]
  %v134 = vld [vmem:[%s1 + $0x390] sm:$0xff]
  %v135 = vld [vmem:[%s1 + $0x398] sm:$0xff]
  %v136 = vld [vmem:[%s1 + $0x3a0] sm:$0xff]
  %v137 = vld [vmem:[%s1 + $0x3a8] sm:$0xff]
  %v138 = vld [vmem:[%s1 + $0x3b0] sm:$0xff]
  %v139 = vld [vmem:[%s1 + $0x3b8] sm:$0xff]
  %v140 = vld [vmem:[%s1 + $0x3c0] sm:$0xff]
  %v141 = vld [vmem:[%s1 + $0x3c8] sm:$0xff]
  %v142 = vld [vmem:[%s1 + $0x3d0] sm:$0xff]
  %v143 = vld [vmem:[%s1 + $0x3d8] sm:$0xff]
  %v144 = vld [vmem:[%s1 + $0x3e0] sm:$0xff]
  %v145 = vld [vmem:[%s1 + $0x3e8] sm:$0xff]
  %v146 = vld [vmem:[%s1 + $0x3f0] sm:$0xff]
  %v147 = vld [vmem:[%s1 + $0x3f8] sm:$0xff]
  %v148 = vld [vmem:[%s1 + $0x400] sm:$0xff]
  %v149 = vld [vmem:[%s1 + $0x408] sm:$0xff]
  %v150 = vld [vmem:[%s1 + $0x410] sm:$0xff]
  %v151 = vld [vmem:[%s1 + $0x418] sm:$0xff]
  %v152 = vld [vmem:[%s1 + $0x420] sm:$0xff]
  %v153 = vld [vmem:[%s1 + $0x428] sm:$0xff]
  %v154 = vld [vmem:[%s1 + $0x430] sm:$0xff]
  %v155 = vld [vmem:[%s1 + $0x438] sm:$0xff]
  %v156 = vld [vmem:[%s1 + $0x440] sm:$0xff]
  %v157 = vld [vmem:[%s1 + $0x448] sm:$0xff]
  %v158 = vld [vmem:[%s1 + $0x450] sm:$0xff]
  %v159 = vld [vmem:[%s1 + $0x458] sm:$0xff]
  %v160 = vld [vmem:[%s1 + $0x460] sm:$0xff]
  %v161 = vld [vmem:[%s1 + $0x468] sm:$0xff]
  %v162 = vld [vmem:[%s1 + $0x470] sm:$0xff]
  %v163 = vld [vmem:[%s1 + $0x478] sm:$0xff]
  %v164 = vld [vmem:[%s2] sm:$0x3]
  %v166 = vlaneseq
  %v167 = vshrl.u32 %v166, 7
  %v168 = vsub.s32 0, %v167
  %v169 = vrot.slane %v164, %v168
  %v170 = vlaneseq
  %v171 = vshrl.u32 %v170, 7
  %v172 = vsub.s32 1, %v171
  %v173 = vrot.slane %v164, %v172
  %v181 = vunpack.c.l.b16 %v15
  %v182 = vunpack.c.h.b16 %v15
  %v183 = vunpack.c.l.b16 %v16
  %v184 = vunpack.c.h.b16 %v16
  %v185 = vunpack.c.l.b16 %v17
  %v186 = vunpack.c.h.b16 %v17
  %v187 = vunpack.c.l.b16 %v18
  %v188 = vunpack.c.h.b16 %v18
  %v189 = vunpack.c.l.b16 %v19
  %v190 = vpack.c.b16 %v181, %v181
  %v191 = vpack.c.b16 %v182, %v182
  %v192 = vpack.c.b16 %v183, %v183
  %v193 = vpack.c.b16 %v184, %v184
  %v194 = vpack.c.b16 %v185, %v185
  %v195 = vpack.c.b16 %v186, %v186
  %v196 = vpack.c.b16 %v187, %v187
  %v197 = vpack.c.b16 %v188, %v188
  %v198 = vpack.c.b16 %v189, %v189
  %v352 = vunpack.c.l.b16 %v20
  %v353 = vunpack.c.h.b16 %v20
  %v354 = vunpack.c.l.b16 %v21
  %v355 = vunpack.c.h.b16 %v21
  %v356 = vunpack.c.l.b16 %v22
  %v357 = vunpack.c.h.b16 %v22
  %v358 = vunpack.c.l.b16 %v23
  %v359 = vunpack.c.h.b16 %v23
  %v360 = vunpack.c.l.b16 %v24
  %v361 = vunpack.c.h.b16 %v24
  %v362 = vunpack.c.l.b16 %v25
  %v363 = vunpack.c.h.b16 %v25
  %v364 = vunpack.c.l.b16 %v26
  %v365 = vunpack.c.h.b16 %v26
  %v366 = vunpack.c.l.b16 %v27
  %v367 = vunpack.c.h.b16 %v27
  %v368 = vunpack.c.l.b16 %v28
  %v369 = vunpack.c.h.b16 %v28
  %v370 = vunpack.c.l.b16 %v29
  %v371 = vunpack.c.h.b16 %v29
  %v372 = vunpack.c.l.b16 %v30
  %v373 = vunpack.c.h.b16 %v30
  %v374 = vunpack.c.l.b16 %v31
  %v375 = vunpack.c.h.b16 %v31
  %v376 = vunpack.c.l.b16 %v32
  %v377 = vunpack.c.h.b16 %v32
  %v378 = vunpack.c.l.b16 %v33
  %v379 = vunpack.c.h.b16 %v33
  %v380 = vunpack.c.l.b16 %v34
  %v381 = vunpack.c.h.b16 %v34
  %v382 = vunpack.c.l.b16 %v35
  %v383 = vunpack.c.h.b16 %v35
  %v384 = vunpack.c.l.b16 %v36
  %v385 = vunpack.c.h.b16 %v36
  %v386 = vunpack.c.l.b16 %v37
  %v387 = vunpack.c.h.b16 %v37
  %v388 = vunpack.c.l.b16 %v38
  %v389 = vunpack.c.h.b16 %v38
  %v390 = vunpack.c.l.b16 %v39
  %v391 = vunpack.c.h.b16 %v39
  %v392 = vunpack.c.l.b16 %v40
  %v393 = vunpack.c.h.b16 %v40
  %v394 = vunpack.c.l.b16 %v41
  %v395 = vunpack.c.h.b16 %v41
  %v396 = vunpack.c.l.b16 %v42
  %v397 = vunpack.c.h.b16 %v42
  %v398 = vunpack.c.l.b16 %v43
  %v399 = vunpack.c.h.b16 %v43
  %v400 = vunpack.c.l.b16 %v44
  %v401 = vunpack.c.h.b16 %v44
  %v402 = vunpack.c.l.b16 %v45
  %v403 = vunpack.c.h.b16 %v45
  %v404 = vunpack.c.l.b16 %v46
  %v405 = vunpack.c.h.b16 %v46
  %v406 = vunpack.c.l.b16 %v47
  %v407 = vunpack.c.h.b16 %v47
  %v408 = vunpack.c.l.b16 %v48
  %v409 = vunpack.c.h.b16 %v48
  %v410 = vunpack.c.l.b16 %v49
  %v411 = vunpack.c.h.b16 %v49
  %v412 = vunpack.c.l.b16 %v50
  %v413 = vunpack.c.h.b16 %v50
  %v414 = vunpack.c.l.b16 %v51
  %v415 = vunpack.c.h.b16 %v51
  %v416 = vunpack.c.l.b16 %v52
  %v417 = vunpack.c.h.b16 %v52
  %v418 = vunpack.c.l.b16 %v53
  %v419 = vunpack.c.h.b16 %v53
  %v420 = vunpack.c.l.b16 %v54
  %v421 = vunpack.c.h.b16 %v54
  %v422 = vunpack.c.l.b16 %v55
  %v423 = vunpack.c.h.b16 %v55
  %v424 = vunpack.c.l.b16 %v56
  %v425 = vunpack.c.h.b16 %v56
  %v426 = vunpack.c.l.b16 %v57
  %v427 = vunpack.c.h.b16 %v57
  %v428 = vunpack.c.l.b16 %v58
  %v429 = vunpack.c.h.b16 %v58
  %v430 = vunpack.c.l.b16 %v59
  %v431 = vunpack.c.h.b16 %v59
  %v432 = vunpack.c.l.b16 %v60
  %v433 = vunpack.c.h.b16 %v60
  %v434 = vunpack.c.l.b16 %v61
  %v435 = vunpack.c.h.b16 %v61
  %v436 = vunpack.c.l.b16 %v62
  %v437 = vunpack.c.h.b16 %v62
  %v438 = vunpack.c.l.b16 %v63
  %v439 = vunpack.c.h.b16 %v63
  %v440 = vunpack.c.l.b16 %v64
  %v441 = vunpack.c.h.b16 %v64
  %v442 = vunpack.c.l.b16 %v65
  %v443 = vunpack.c.h.b16 %v65
  %v444 = vunpack.c.l.b16 %v66
  %v445 = vunpack.c.h.b16 %v66
  %v446 = vunpack.c.l.b16 %v67
  %v447 = vunpack.c.h.b16 %v67
  %v448 = vunpack.c.l.b16 %v68
  %v449 = vunpack.c.h.b16 %v68
  %v450 = vunpack.c.l.b16 %v69
  %v451 = vunpack.c.h.b16 %v69
  %v452 = vunpack.c.l.b16 %v70
  %v453 = vunpack.c.h.b16 %v70
  %v454 = vunpack.c.l.b16 %v71
  %v455 = vunpack.c.h.b16 %v71
  %v456 = vunpack.c.l.b16 %v72
  %v457 = vunpack.c.h.b16 %v72
  %v458 = vunpack.c.l.b16 %v73
  %v459 = vunpack.c.h.b16 %v73
  %v460 = vunpack.c.l.b16 %v74
  %v461 = vunpack.c.h.b16 %v74
  %v462 = vunpack.c.l.b16 %v75
  %v463 = vunpack.c.h.b16 %v75
  %v464 = vunpack.c.l.b16 %v76
  %v465 = vunpack.c.h.b16 %v76
  %v466 = vunpack.c.l.b16 %v77
  %v467 = vunpack.c.h.b16 %v77
  %v468 = vunpack.c.l.b16 %v78
  %v469 = vunpack.c.h.b16 %v78
  %v470 = vunpack.c.l.b16 %v79
  %v471 = vunpack.c.h.b16 %v79
  %v472 = vunpack.c.l.b16 %v80
  %v473 = vunpack.c.h.b16 %v80
  %v474 = vunpack.c.l.b16 %v81
  %v475 = vunpack.c.h.b16 %v81
  %v476 = vunpack.c.l.b16 %v82
  %v477 = vunpack.c.h.b16 %v82
  %v478 = vunpack.c.l.b16 %v83
  %v479 = vunpack.c.h.b16 %v83
  %v480 = vunpack.c.l.b16 %v84
  %v481 = vunpack.c.h.b16 %v84
  %v482 = vunpack.c.l.b16 %v85
  %v483 = vunpack.c.h.b16 %v85
  %v484 = vunpack.c.l.b16 %v86
  %v485 = vunpack.c.h.b16 %v86
  %v486 = vunpack.c.l.b16 %v87
  %v487 = vunpack.c.h.b16 %v87
  %v488 = vunpack.c.l.b16 %v88
  %v489 = vunpack.c.h.b16 %v88
  %v490 = vunpack.c.l.b16 %v89
  %v491 = vunpack.c.h.b16 %v89
  %v492 = vunpack.c.l.b16 %v90
  %v493 = vunpack.c.h.b16 %v90
  %v494 = vunpack.c.l.b16 %v91
  %v495 = vunpack.c.h.b16 %v91
  %v496 = vunpack.c.l.b16 %v92
  %v497 = vunpack.c.h.b16 %v92
  %v498 = vunpack.c.l.b16 %v93
  %v499 = vunpack.c.h.b16 %v93
  %v500 = vunpack.c.l.b16 %v94
  %v501 = vunpack.c.h.b16 %v94
  %v502 = vunpack.c.l.b16 %v95
  %v503 = vunpack.c.h.b16 %v95
  %v504 = vunpack.c.l.b16 %v96
  %v505 = vunpack.c.h.b16 %v96
  %v506 = vunpack.c.l.b16 %v97
  %v507 = vunpack.c.h.b16 %v97
  %v508 = vunpack.c.l.b16 %v98
  %v509 = vunpack.c.h.b16 %v98
  %v510 = vunpack.c.l.b16 %v99
  %v511 = vunpack.c.h.b16 %v99
  %v512 = vunpack.c.l.b16 %v100
  %v513 = vunpack.c.h.b16 %v100
  %v514 = vunpack.c.l.b16 %v101
  %v515 = vunpack.c.h.b16 %v101
  %v516 = vunpack.c.l.b16 %v102
  %v517 = vunpack.c.h.b16 %v102
  %v518 = vunpack.c.l.b16 %v103
  %v519 = vunpack.c.h.b16 %v103
  %v520 = vunpack.c.l.b16 %v104
  %v521 = vunpack.c.h.b16 %v104
  %v522 = vunpack.c.l.b16 %v105
  %v523 = vunpack.c.h.b16 %v105
  %v524 = vunpack.c.l.b16 %v106
  %v525 = vunpack.c.h.b16 %v106
  %v526 = vunpack.c.l.b16 %v107
  %v527 = vunpack.c.h.b16 %v107
  %v528 = vunpack.c.l.b16 %v108
  %v529 = vunpack.c.h.b16 %v108
  %v530 = vunpack.c.l.b16 %v109
  %v531 = vunpack.c.h.b16 %v109
  %v532 = vunpack.c.l.b16 %v110
  %v533 = vunpack.c.h.b16 %v110
  %v534 = vunpack.c.l.b16 %v111
  %v535 = vunpack.c.h.b16 %v111
  %v536 = vunpack.c.l.b16 %v112
  %v537 = vunpack.c.h.b16 %v112
  %v538 = vunpack.c.l.b16 %v113
  %v539 = vunpack.c.h.b16 %v113
  %v540 = vunpack.c.l.b16 %v114
  %v541 = vunpack.c.h.b16 %v114
  %v542 = vunpack.c.l.b16 %v115
  %v543 = vunpack.c.h.b16 %v115
  %v544 = vunpack.c.l.b16 %v116
  %v545 = vunpack.c.h.b16 %v116
  %v546 = vunpack.c.l.b16 %v117
  %v547 = vunpack.c.h.b16 %v117
  %v548 = vunpack.c.l.b16 %v118
  %v549 = vunpack.c.h.b16 %v118
  %v550 = vunpack.c.l.b16 %v119
  %v551 = vunpack.c.h.b16 %v119
  %v552 = vunpack.c.l.b16 %v120
  %v553 = vunpack.c.h.b16 %v120
  %v554 = vunpack.c.l.b16 %v121
  %v555 = vunpack.c.h.b16 %v121
  %v556 = vunpack.c.l.b16 %v122
  %v557 = vunpack.c.h.b16 %v122
  %v558 = vunpack.c.l.b16 %v123
  %v559 = vunpack.c.h.b16 %v123
  %v560 = vunpack.c.l.b16 %v124
  %v561 = vunpack.c.h.b16 %v124
  %v562 = vunpack.c.l.b16 %v125
  %v563 = vunpack.c.h.b16 %v125
  %v564 = vunpack.c.l.b16 %v126
  %v565 = vunpack.c.h.b16 %v126
  %v566 = vunpack.c.l.b16 %v127
  %v567 = vunpack.c.h.b16 %v127
  %v568 = vunpack.c.l.b16 %v128
  %v569 = vunpack.c.h.b16 %v128
  %v570 = vunpack.c.l.b16 %v129
  %v571 = vunpack.c.h.b16 %v129
  %v572 = vunpack.c.l.b16 %v130
  %v573 = vunpack.c.h.b16 %v130
  %v574 = vunpack.c.l.b16 %v131
  %v575 = vunpack.c.h.b16 %v131
  %v576 = vunpack.c.l.b16 %v132
  %v577 = vunpack.c.h.b16 %v132
  %v578 = vunpack.c.l.b16 %v133
  %v579 = vunpack.c.h.b16 %v133
  %v580 = vunpack.c.l.b16 %v134
  %v581 = vunpack.c.h.b16 %v134
  %v582 = vunpack.c.l.b16 %v135
  %v583 = vunpack.c.h.b16 %v135
  %v584 = vunpack.c.l.b16 %v136
  %v585 = vunpack.c.h.b16 %v136
  %v586 = vunpack.c.l.b16 %v137
  %v587 = vunpack.c.h.b16 %v137
  %v588 = vunpack.c.l.b16 %v138
  %v589 = vunpack.c.h.b16 %v138
  %v590 = vunpack.c.l.b16 %v139
  %v591 = vunpack.c.h.b16 %v139
  %v592 = vunpack.c.l.b16 %v140
  %v593 = vunpack.c.h.b16 %v140
  %v594 = vunpack.c.l.b16 %v141
  %v595 = vunpack.c.h.b16 %v141
  %v596 = vunpack.c.l.b16 %v142
  %v597 = vunpack.c.h.b16 %v142
  %v598 = vunpack.c.l.b16 %v143
  %v599 = vunpack.c.h.b16 %v143
  %v600 = vunpack.c.l.b16 %v144
  %v601 = vunpack.c.h.b16 %v144
  %v602 = vunpack.c.l.b16 %v145
  %v603 = vunpack.c.h.b16 %v145
  %v604 = vunpack.c.l.b16 %v146
  %v605 = vunpack.c.h.b16 %v146
  %v606 = vunpack.c.l.b16 %v147
  %v607 = vunpack.c.h.b16 %v147
  %v608 = vunpack.c.l.b16 %v148
  %v609 = vunpack.c.h.b16 %v148
  %v610 = vunpack.c.l.b16 %v149
  %v611 = vunpack.c.h.b16 %v149
  %v612 = vunpack.c.l.b16 %v150
  %v613 = vunpack.c.h.b16 %v150
  %v614 = vunpack.c.l.b16 %v151
  %v615 = vunpack.c.h.b16 %v151
  %v616 = vunpack.c.l.b16 %v152
  %v617 = vunpack.c.h.b16 %v152
  %v618 = vunpack.c.l.b16 %v153
  %v619 = vunpack.c.h.b16 %v153
  %v620 = vunpack.c.l.b16 %v154
  %v621 = vunpack.c.h.b16 %v154
  %v622 = vunpack.c.l.b16 %v155
  %v623 = vunpack.c.h.b16 %v155
  %v624 = vunpack.c.l.b16 %v156
  %v625 = vunpack.c.h.b16 %v156
  %v626 = vunpack.c.l.b16 %v157
  %v627 = vunpack.c.h.b16 %v157
  %v628 = vunpack.c.l.b16 %v158
  %v629 = vunpack.c.h.b16 %v158
  %v630 = vunpack.c.l.b16 %v159
  %v631 = vunpack.c.h.b16 %v159
  %v632 = vunpack.c.l.b16 %v160
  %v633 = vunpack.c.h.b16 %v160
  %v634 = vunpack.c.l.b16 %v161
  %v635 = vunpack.c.h.b16 %v161
  %v636 = vunpack.c.l.b16 %v162
  %v637 = vunpack.c.h.b16 %v162
  %v638 = vunpack.c.l.b16 %v163
  %v639 = vunpack.c.h.b16 %v163
  %v640 = vpack.c.b16 %v354, %v352
  %v641 = vpack.c.b16 %v355, %v353
  %v642 = vpack.c.b16 %v358, %v356
  %v643 = vpack.c.b16 %v359, %v357
  %v644 = vpack.c.b16 %v362, %v360
  %v645 = vpack.c.b16 %v363, %v361
  %v646 = vpack.c.b16 %v366, %v364
  %v647 = vpack.c.b16 %v367, %v365
  %v648 = vpack.c.b16 %v370, %v368
  %v649 = vpack.c.b16 %v371, %v369
  %v650 = vpack.c.b16 %v374, %v372
  %v651 = vpack.c.b16 %v375, %v373
  %v652 = vpack.c.b16 %v378, %v376
  %v653 = vpack.c.b16 %v379, %v377
  %v654 = vpack.c.b16 %v382, %v380
  %v655 = vpack.c.b16 %v383, %v381
  %v656 = vpack.c.b16 %v386, %v384
  %v657 = vpack.c.b16 %v387, %v385
  %v658 = vpack.c.b16 %v390, %v388
  %v659 = vpack.c.b16 %v391, %v389
  %v660 = vpack.c.b16 %v394, %v392
  %v661 = vpack.c.b16 %v395, %v393
  %v662 = vpack.c.b16 %v398, %v396
  %v663 = vpack.c.b16 %v399, %v397
  %v664 = vpack.c.b16 %v402, %v400
  %v665 = vpack.c.b16 %v403, %v401
  %v666 = vpack.c.b16 %v406, %v404
  %v667 = vpack.c.b16 %v407, %v405
  %v668 = vpack.c.b16 %v410, %v408
  %v669 = vpack.c.b16 %v411, %v409
  %v670 = vpack.c.b16 %v414, %v412
  %v671 = vpack.c.b16 %v415, %v413
  %v672 = vpack.c.b16 %v418, %v416
  %v673 = vpack.c.b16 %v419, %v417
  %v674 = vpack.c.b16 %v422, %v420
  %v675 = vpack.c.b16 %v423, %v421
  %v676 = vpack.c.b16 %v426, %v424
  %v677 = vpack.c.b16 %v427, %v425
  %v678 = vpack.c.b16 %v430, %v428
  %v679 = vpack.c.b16 %v431, %v429
  %v680 = vpack.c.b16 %v434, %v432
  %v681 = vpack.c.b16 %v435, %v433
  %v682 = vpack.c.b16 %v438, %v436
  %v683 = vpack.c.b16 %v439, %v437
  %v684 = vpack.c.b16 %v442, %v440
  %v685 = vpack.c.b16 %v443, %v441
  %v686 = vpack.c.b16 %v446, %v444
  %v687 = vpack.c.b16 %v447, %v445
  %v688 = vpack.c.b16 %v450, %v448
  %v689 = vpack.c.b16 %v451, %v449
  %v690 = vpack.c.b16 %v454, %v452
  %v691 = vpack.c.b16 %v455, %v453
  %v692 = vpack.c.b16 %v458, %v456
  %v693 = vpack.c.b16 %v459, %v457
  %v694 = vpack.c.b16 %v462, %v460
  %v695 = vpack.c.b16 %v463, %v461
  %v696 = vpack.c.b16 %v466, %v464
  %v697 = vpack.c.b16 %v467, %v465
  %v698 = vpack.c.b16 %v470, %v468
  %v699 = vpack.c.b16 %v471, %v469
  %v700 = vpack.c.b16 %v474, %v472
  %v701 = vpack.c.b16 %v475, %v473
  %v702 = vpack.c.b16 %v478, %v476
  %v703 = vpack.c.b16 %v479, %v477
  %v704 = vpack.c.b16 %v482, %v480
  %v705 = vpack.c.b16 %v483, %v481
  %v706 = vpack.c.b16 %v486, %v484
  %v707 = vpack.c.b16 %v487, %v485
  %v708 = vpack.c.b16 %v490, %v488
  %v709 = vpack.c.b16 %v491, %v489
  %v710 = vpack.c.b16 %v494, %v492
  %v711 = vpack.c.b16 %v495, %v493
  %v712 = vpack.c.b16 %v498, %v496
  %v713 = vpack.c.b16 %v499, %v497
  %v714 = vpack.c.b16 %v502, %v500
  %v715 = vpack.c.b16 %v503, %v501
  %v716 = vpack.c.b16 %v506, %v504
  %v717 = vpack.c.b16 %v507, %v505
  %v718 = vpack.c.b16 %v510, %v508
  %v719 = vpack.c.b16 %v511, %v509
  %v720 = vpack.c.b16 %v514, %v512
  %v721 = vpack.c.b16 %v515, %v513
  %v722 = vpack.c.b16 %v518, %v516
  %v723 = vpack.c.b16 %v519, %v517
  %v724 = vpack.c.b16 %v522, %v520
  %v725 = vpack.c.b16 %v523, %v521
  %v726 = vpack.c.b16 %v526, %v524
  %v727 = vpack.c.b16 %v527, %v525
  %v728 = vpack.c.b16 %v530, %v528
  %v729 = vpack.c.b16 %v531, %v529
  %v730 = vpack.c.b16 %v534, %v532
  %v731 = vpack.c.b16 %v535, %v533
  %v732 = vpack.c.b16 %v538, %v536
  %v733 = vpack.c.b16 %v539, %v537
  %v734 = vpack.c.b16 %v542, %v540
  %v735 = vpack.c.b16 %v543, %v541
  %v736 = vpack.c.b16 %v546, %v544
  %v737 = vpack.c.b16 %v547, %v545
  %v738 = vpack.c.b16 %v550, %v548
  %v739 = vpack.c.b16 %v551, %v549
  %v740 = vpack.c.b16 %v554, %v552
  %v741 = vpack.c.b16 %v555, %v553
  %v742 = vpack.c.b16 %v558, %v556
  %v743 = vpack.c.b16 %v559, %v557
  %v744 = vpack.c.b16 %v562, %v560
  %v745 = vpack.c.b16 %v563, %v561
  %v746 = vpack.c.b16 %v566, %v564
  %v747 = vpack.c.b16 %v567, %v565
  %v748 = vpack.c.b16 %v570, %v568
  %v749 = vpack.c.b16 %v571, %v569
  %v750 = vpack.c.b16 %v574, %v572
  %v751 = vpack.c.b16 %v575, %v573
  %v752 = vpack.c.b16 %v578, %v576
  %v753 = vpack.c.b16 %v579, %v577
  %v754 = vpack.c.b16 %v582, %v580
  %v755 = vpack.c.b16 %v583, %v581
  %v756 = vpack.c.b16 %v586, %v584
  %v757 = vpack.c.b16 %v587, %v585
  %v758 = vpack.c.b16 %v590, %v588
  %v759 = vpack.c.b16 %v591, %v589
  %v760 = vpack.c.b16 %v594, %v592
  %v761 = vpack.c.b16 %v595, %v593
  %v762 = vpack.c.b16 %v598, %v596
  %v763 = vpack.c.b16 %v599, %v597
  %v764 = vpack.c.b16 %v602, %v600
  %v765 = vpack.c.b16 %v603, %v601
  %v766 = vpack.c.b16 %v606, %v604
  %v767 = vpack.c.b16 %v607, %v605
  %v768 = vpack.c.b16 %v610, %v608
  %v769 = vpack.c.b16 %v611, %v609
  %v770 = vpack.c.b16 %v614, %v612
  %v771 = vpack.c.b16 %v615, %v613
  %v772 = vpack.c.b16 %v618, %v616
  %v773 = vpack.c.b16 %v619, %v617
  %v774 = vpack.c.b16 %v622, %v620
  %v775 = vpack.c.b16 %v623, %v621
  %v776 = vpack.c.b16 %v626, %v624
  %v777 = vpack.c.b16 %v627, %v625
  %v778 = vpack.c.b16 %v630, %v628
  %v779 = vpack.c.b16 %v631, %v629
  %v780 = vpack.c.b16 %v634, %v632
  %v781 = vpack.c.b16 %v635, %v633
  %v782 = vpack.c.b16 %v638, %v636
  %v783 = vpack.c.b16 %v639, %v637
  %928 = vmatprep.subr.bf16.mxu0 %v641
  %929 = vmatpush1.bf16.msra.mxu0 %v640
  %930 = vmatprep.subr.bf16.mxu0 %v643
  %931 = vmatpush1.bf16.msra.mxu0 %v642
  %932 = vmatprep.subr.bf16.mxu0 %v645
  %933 = vmatpush1.bf16.msra.mxu0 %v644
  %934 = vmatprep.subr.bf16.mxu0 %v647
  %935 = vmatpush1.bf16.msra.mxu0 %v646
  %936 = vmatprep.subr.bf16.mxu0 %v649
  %937 = vmatpush1.bf16.msra.mxu0 %v648
  %938 = vmatprep.subr.bf16.mxu0 %v651
  %939 = vmatpush1.bf16.msra.mxu0 %v650
  %940 = vmatprep.subr.bf16.mxu0 %v653
  %941 = vmatpush1.bf16.msra.mxu0 %v652
  %942 = vmatprep.subr.bf16.mxu0 %v655
  %943 = vmatpush1.bf16.msra.mxu0 %v654
  %944 = vmatprep.subr.bf16.mxu0 %v657
  %945 = vmatpush1.bf16.msra.mxu0 %v656
  %946 = vmatprep.subr.bf16.mxu0 %v659
  %947 = vmatpush1.bf16.msra.mxu0 %v658
  %948 = vmatprep.subr.bf16.mxu0 %v661
  %949 = vmatpush1.bf16.msra.mxu0 %v660
  %950 = vmatprep.subr.bf16.mxu0 %v663
  %951 = vmatpush1.bf16.msra.mxu0 %v662
  %952 = vmatprep.subr.bf16.mxu0 %v665
  %953 = vmatpush1.bf16.msra.mxu0 %v664
  %954 = vmatprep.subr.bf16.mxu0 %v667
  %955 = vmatpush1.bf16.msra.mxu0 %v666
  %956 = vmatprep.subr.bf16.mxu0 %v669
  %957 = vmatpush1.bf16.msra.mxu0 %v668
  %958 = vmatprep.subr.bf16.mxu0 %v671
  %959 = vmatpush1.bf16.msra.mxu0 %v670
  %960 = vmatprep.mubr.bf16.mxu0 %v191
  %961 = vmatmul.mubr.bf16.gmra.mrb[0].mxu0 %v190
  %v962 = vpop.f32.mrb[0].mxu0
  %v963 = vadd.f32 %v169, %v962
  %v964 = vpop.f32.mrb[0].mxu0
  %v965 = vadd.f32 %v173, %v964
  %v966 = vpop.f32.mrb[0].mxu0
  %v967 = vpop.f32.mrb[0].mxu0
  %968 = vdwg.mxu0
  %969 = vmatprep.subr.bf16.mxu0 %v673
  %970 = vmatpush1.bf16.msra.mxu0 %v672
  %971 = vmatprep.subr.bf16.mxu0 %v675
  %972 = vmatpush1.bf16.msra.mxu0 %v674
  %973 = vmatprep.subr.bf16.mxu0 %v677
  %974 = vmatpush1.bf16.msra.mxu0 %v676
  %975 = vmatprep.subr.bf16.mxu0 %v679
  %976 = vmatpush1.bf16.msra.mxu0 %v678
  %977 = vmatprep.subr.bf16.mxu0 %v681
  %978 = vmatpush1.bf16.msra.mxu0 %v680
  %979 = vmatprep.subr.bf16.mxu0 %v683
  %980 = vmatpush1.bf16.msra.mxu0 %v682
  %981 = vmatprep.subr.bf16.mxu0 %v685
  %982 = vmatpush1.bf16.msra.mxu0 %v684
  %983 = vmatprep.subr.bf16.mxu0 %v687
  %984 = vmatpush1.bf16.msra.mxu0 %v686
  %985 = vmatprep.subr.bf16.mxu0 %v689
  %986 = vmatpush1.bf16.msra.mxu0 %v688
  %987 = vmatprep.subr.bf16.mxu0 %v691
  %988 = vmatpush1.bf16.msra.mxu0 %v690
  %989 = vmatprep.subr.bf16.mxu0 %v693
  %990 = vmatpush1.bf16.msra.mxu0 %v692
  %991 = vmatprep.subr.bf16.mxu0 %v695
  %992 = vmatpush1.bf16.msra.mxu0 %v694
  %993 = vmatprep.subr.bf16.mxu0 %v697
  %994 = vmatpush1.bf16.msra.mxu0 %v696
  %995 = vmatprep.subr.bf16.mxu0 %v699
  %996 = vmatpush1.bf16.msra.mxu0 %v698
  %997 = vmatprep.subr.bf16.mxu0 %v701
  %998 = vmatpush1.bf16.msra.mxu0 %v700
  %999 = vmatprep.subr.bf16.mxu0 %v703
  %1000 = vmatpush1.bf16.msra.mxu0 %v702
  %1001 = vmatprep.mubr.bf16.mxu0 %v193
  %1002 = vmatmul.mubr.bf16.gmra.mrb[0].mxu0 %v192
  %v1003 = vpop.f32.mrb[0].mxu0
  %v1004 = vadd.f32 %v963, %v1003
  %v1005 = vpop.f32.mrb[0].mxu0
  %v1006 = vadd.f32 %v965, %v1005
  %v1007 = vpop.f32.mrb[0].mxu0
  %v1008 = vpop.f32.mrb[0].mxu0
  %1009 = vdwg.mxu0
  %1010 = vmatprep.subr.bf16.mxu0 %v705
  %1011 = vmatpush1.bf16.msra.mxu0 %v704
  %1012 = vmatprep.subr.bf16.mxu0 %v707
  %1013 = vmatpush1.bf16.msra.mxu0 %v706
  %1014 = vmatprep.subr.bf16.mxu0 %v709
  %1015 = vmatpush1.bf16.msra.mxu0 %v708
  %1016 = vmatprep.subr.bf16.mxu0 %v711
  %1017 = vmatpush1.bf16.msra.mxu0 %v710
  %1018 = vmatprep.subr.bf16.mxu0 %v713
  %1019 = vmatpush1.bf16.msra.mxu0 %v712
  %1020 = vmatprep.subr.bf16.mxu0 %v715
  %1021 = vmatpush1.bf16.msra.mxu0 %v714
  %1022 = vmatprep.subr.bf16.mxu0 %v717
  %1023 = vmatpush1.bf16.msra.mxu0 %v716
  %1024 = vmatprep.subr.bf16.mxu0 %v719
  %1025 = vmatpush1.bf16.msra.mxu0 %v718
  %1026 = vmatprep.subr.bf16.mxu0 %v721
  %1027 = vmatpush1.bf16.msra.mxu0 %v720
  %1028 = vmatprep.subr.bf16.mxu0 %v723
  %1029 = vmatpush1.bf16.msra.mxu0 %v722
  %1030 = vmatprep.subr.bf16.mxu0 %v725
  %1031 = vmatpush1.bf16.msra.mxu0 %v724
  %1032 = vmatprep.subr.bf16.mxu0 %v727
  %1033 = vmatpush1.bf16.msra.mxu0 %v726
  %1034 = vmatprep.subr.bf16.mxu0 %v729
  %1035 = vmatpush1.bf16.msra.mxu0 %v728
  %1036 = vmatprep.subr.bf16.mxu0 %v731
  %1037 = vmatpush1.bf16.msra.mxu0 %v730
  %1038 = vmatprep.subr.bf16.mxu0 %v733
  %1039 = vmatpush1.bf16.msra.mxu0 %v732
  %1040 = vmatprep.subr.bf16.mxu0 %v735
  %1041 = vmatpush1.bf16.msra.mxu0 %v734
  %1042 = vmatprep.mubr.bf16.mxu0 %v195
  %1043 = vmatmul.mubr.bf16.gmra.mrb[0].mxu0 %v194
  %v1044 = vpop.f32.mrb[0].mxu0
  %v1045 = vadd.f32 %v1004, %v1044
  %v1046 = vpop.f32.mrb[0].mxu0
  %v1047 = vadd.f32 %v1006, %v1046
  %v1048 = vpop.f32.mrb[0].mxu0
  %v1049 = vpop.f32.mrb[0].mxu0
  %1050 = vdwg.mxu0
  %1051 = vmatprep.subr.bf16.mxu0 %v737
  %1052 = vmatpush1.bf16.msra.mxu0 %v736
  %1053 = vmatprep.subr.bf16.mxu0 %v739
  %1054 = vmatpush1.bf16.msra.mxu0 %v738
  %1055 = vmatprep.subr.bf16.mxu0 %v741
  %1056 = vmatpush1.bf16.msra.mxu0 %v740
  %1057 = vmatprep.subr.bf16.mxu0 %v743
  %1058 = vmatpush1.bf16.msra.mxu0 %v742
  %1059 = vmatprep.subr.bf16.mxu0 %v745
  %1060 = vmatpush1.bf16.msra.mxu0 %v744
  %1061 = vmatprep.subr.bf16.mxu0 %v747
  %1062 = vmatpush1.bf16.msra.mxu0 %v746
  %1063 = vmatprep.subr.bf16.mxu0 %v749
  %1064 = vmatpush1.bf16.msra.mxu0 %v748
  %1065 = vmatprep.subr.bf16.mxu0 %v751
  %1066 = vmatpush1.bf16.msra.mxu0 %v750
  %1067 = vmatprep.subr.bf16.mxu0 %v753
  %1068 = vmatpush1.bf16.msra.mxu0 %v752
  %1069 = vmatprep.subr.bf16.mxu0 %v755
  %1070 = vmatpush1.bf16.msra.mxu0 %v754
  %1071 = vmatprep.subr.bf16.mxu0 %v757
  %1072 = vmatpush1.bf16.msra.mxu0 %v756
  %1073 = vmatprep.subr.bf16.mxu0 %v759
  %1074 = vmatpush1.bf16.msra.mxu0 %v758
  %1075 = vmatprep.subr.bf16.mxu0 %v761
  %1076 = vmatpush1.bf16.msra.mxu0 %v760
  %1077 = vmatprep.subr.bf16.mxu0 %v763
  %1078 = vmatpush1.bf16.msra.mxu0 %v762
  %1079 = vmatprep.subr.bf16.mxu0 %v765
  %1080 = vmatpush1.bf16.msra.mxu0 %v764
  %1081 = vmatprep.subr.bf16.mxu0 %v767
  %1082 = vmatpush1.bf16.msra.mxu0 %v766
  %1083 = vmatprep.mubr.bf16.mxu0 %v197
  %1084 = vmatmul.mubr.bf16.gmra.mrb[0].mxu0 %v196
  %v1085 = vpop.f32.mrb[0].mxu0
  %v1086 = vadd.f32 %v1045, %v1085
  %v1087 = vpop.f32.mrb[0].mxu0
  %v1088 = vadd.f32 %v1047, %v1087
  %v1089 = vpop.f32.mrb[0].mxu0
  %v1090 = vpop.f32.mrb[0].mxu0
  %1091 = vdwg.mxu0
  %1092 = vmatprep.subr.bf16.mxu0 %v769
  %1093 = vmatpush1.bf16.msra.mxu0 %v768
  %1094 = vmatprep.subr.bf16.mxu0 %v771
  %1095 = vmatpush1.bf16.msra.mxu0 %v770
  %1096 = vmatprep.subr.bf16.mxu0 %v773
  %1097 = vmatpush1.bf16.msra.mxu0 %v772
  %1098 = vmatprep.subr.bf16.mxu0 %v775
  %1099 = vmatpush1.bf16.msra.mxu0 %v774
  %1100 = vmatprep.subr.bf16.mxu0 %v777
  %1101 = vmatpush1.bf16.msra.mxu0 %v776
  %1102 = vmatprep.subr.bf16.mxu0 %v779
  %1103 = vmatpush1.bf16.msra.mxu0 %v778
  %1104 = vmatprep.subr.bf16.mxu0 %v781
  %1105 = vmatpush1.bf16.msra.mxu0 %v780
  %1106 = vmatprep.subr.bf16.mxu0 %v783
  %1107 = vmatpush1.bf16.msra.mxu0 %v782
  %1108 = vmatprep.subr.bf16.mxu0 0
  %1109 = vmatpush1.bf16.msra.mxu0 0
  %1110 = vmatprep.subr.bf16.mxu0 0
  %1111 = vmatpush1.bf16.msra.mxu0 0
  %1112 = vmatprep.subr.bf16.mxu0 0
  %1113 = vmatpush1.bf16.msra.mxu0 0
  %1114 = vmatprep.subr.bf16.mxu0 0
  %1115 = vmatpush1.bf16.msra.mxu0 0
  %1116 = vmatprep.subr.bf16.mxu0 0
  %1117 = vmatpush1.bf16.msra.mxu0 0
  %1118 = vmatprep.subr.bf16.mxu0 0
  %1119 = vmatpush1.bf16.msra.mxu0 0
  %1120 = vmatprep.subr.bf16.mxu0 0
  %1121 = vmatpush1.bf16.msra.mxu0 0
  %1122 = vmatprep.subr.bf16.mxu0 0
  %1123 = vmatpush1.bf16.msra.mxu0 0
  %1124 = vmatprep.mubr.bf16.mxu0 0
  %1125 = vmatmul.mubr.bf16.gmra.mrb[0].mxu0 %v198
  %v1126 = vpop.f32.mrb[0].mxu0
  %v1127 = vadd.f32 %v1086, %v1126
  %v1128 = vpop.f32.mrb[0].mxu0
  %v1129 = vadd.f32 %v1088, %v1128
  %v1130 = vpop.f32.mrb[0].mxu0
  %v1131 = vpop.f32.mrb[0].mxu0
  %1132 = vdwg.mxu0
  %v1133 = vmul.f32 %v1127, 0.01
  %v1134 = vmul.f32 %v1129, 0.01
  %v1135 = vmax.f32 %v1127, %v1133
  %v1136 = vmax.f32 %v1129, %v1134
  %v1137 = vpack.c.bf16 %v1135, %v1135
  %v1138 = vpack.c.bf16 %v1136, %v1136
  %v1141 = vunpack.c.l.b16 %v1137
  %v1142 = vunpack.c.l.b16 %v1138
  %v1143 = vpack.c.b16 %v1142, %v1141
  %1145 = vst [vmem:[%s3] sm:$0xff] %v1143
  // Predicated region
  $region14: #{clagnosco_autoencoder_forward.15} parent=0 // pred_check
    _
  $region15: #{clagnosco_autoencoder_forward.15} parent=0 // pred_check_branch
    %1147 = sbr.rel (0) target = $region17
  $region16: #{clagnosco_autoencoder_forward.15} parent=0 // pred_region
    _
  $region17: #{clagnosco_autoencoder_forward.15} parent=0 // pred_fallthru
    _
  // Predicated region
  $region18: #{clagnosco_autoencoder_forward.15} parent=0 // pred_check
    _
  $region19: #{clagnosco_autoencoder_forward.15} parent=0 // pred_check_branch
    %1149 = sbr.rel (0) target = $region21
  $region20: #{clagnosco_autoencoder_forward.15} parent=0 // pred_region
    _
  $region21: #{clagnosco_autoencoder_forward.15} parent=0 // pred_fallthru
    _

// kernel: tile.33
$region0: #{tile.33}
  #allocation0 [shape = 's32[1]{0}', space=sflag, size = 0x4, scoped, tag = 'scoped memory for tile.33']
  %s0 = inlined_call_operand.vmem [shape: f32[32], index: 0, kind: input, shape index: {}]
  %s1 = inlined_call_operand.vmem [shape: f32[4,32], index: 1, kind: output, shape index: {}]
  // Predicated region
  $region2: #{tile.33} parent=0 // pred_check
    _
  $region3: #{tile.33} parent=0 // pred_check_branch
    %3 = sbr.rel (0) target = $region5
  $region4: #{tile.33} parent=0 // pred_region
    _
  $region5: #{tile.33} parent=0 // pred_fallthru
    _
  %v4 = vld [vmem:[%s0] ss:$0 sm:$0xff]
  %5 = vst [vmem:[%s1] sm:$0xf] %v4

// kernel: clagnosco_autoencoder_forward.16
$region0: #{clagnosco_autoencoder_forward.16}
  #allocation0 [shape = 'u32[]', space=smem, size = 0x4, offset = 0x4, fixed_abs, tag = 'smem constant byte address 0x4 - core index']
  #allocation1 [shape = 'u32[144,128]{1,0:T(1,128)}', space=vmem, size = 0x12000, scoped, tag = 'internal scratch']
  %s0 = inlined_call_operand.vmem [shape: bf16[32,576], index: 0, kind: input, shape index: {}]
  %s1 = inlined_call_operand.vmem [shape: bf16[576,128], index: 1, kind: input, shape index: {}]
  %s2 = inlined_call_operand.vmem [shape: f32[1,128], index: 2, kind: input, shape index: {}]
  %s3 = inlined_call_operand.vmem [shape: bf16[32,128], index: 3, kind: output, shape index: {}]
  %s4 = sld [smem:[#allocation0]]
  $region45: #{clagnosco_autoencoder_forward.16} parent=0
    _
  %s6 = ssub.s32 1, %s4
  %s7 = scalar_select 0, %s6, %s4
  loop: start=0, step=1, limit=4
  $region2: #{clagnosco_autoencoder_forward.16} parent=0 // loop_pre_header
    _
  $region3: #{clagnosco_autoencoder_forward.16} parent=0 // loop_header
    %s9 = sphi 0, %s13
    %p10 = scmp.ge.s32.totalorder %s9, 4
    %s19 = sphi 0, %s21
    %s22 = sphi 0, %s19
    %s23 = sphi 0, %s22
    %s39 = sphi 0, %s23
    %s43 = sphi 0, %s43
    %s45 = sphi 0, %s43
    %s46 = sphi 0, %s45
    %s60 = sphi 0, %s46
    %s64 = sphi 0, %s64
    %s66 = sphi 0, %s64
    %s67 = sphi 0, %s66
    %s81 = sphi 0, %s67
    %s87 = sphi 0, %s89
    %s90 = sphi 0, %s87
    %s91 = sphi 0, %s90
    %s107 = sphi 0, %s91
  $region4: #{clagnosco_autoencoder_forward.16} parent=0 // loop_header_branch
    %12 = sbr.rel (%p10) target = $region8
  $region5: #{clagnosco_autoencoder_forward.16} parent=0 // loop_body
    %s14 = ssub.s32 %s9, 1
    %s15 = ssub.s32 %s9, 2
    %s16 = sadd.s32 %s9, 1
    %s17 = ssub.s32 %s9, %s16
    %p18 = scmp.eq.s32.totalorder %s17, 0
    %s20 = sadd.s32 %s19, 1
    %s21 = scalar_select %p18, %s19, %s20
    %p24 = pneg %p18
    %p25 = scmp.eq.s32.totalorder %s9, 1
    %p26 = por %p24, %p25
    %p27 = scmp.ne.s32.totalorder %s19, %s22
    %p28 = scmp.eq.s32.totalorder %s9, 0
    %p29 = por %p27, %p28
    %p30 = scmp.ne.s32.totalorder %s19, %s22
    %p31 = scmp.eq.s32.totalorder %s14, 1
    %p32 = por %p30, %p31
    %p33 = scmp.ne.s32.totalorder %s22, %s23
    %p34 = scmp.eq.s32.totalorder %s14, 0
    %p35 = por %p33, %p34
    %p36 = scmp.ne.s32.totalorder %s22, %s23
    %p37 = scmp.eq.s32.totalorder %s15, 1
    %p38 = por %p36, %p37
    %p40 = scmp.ne.s32.totalorder %s23, %s39
    %p41 = scmp.eq.s32.totalorder %s15, 0
    %p42 = por %p40, %p41
    %s44 = sadd.s32 %s43, 1
    %p47 = scmp.eq.s32.totalorder %s9, 1
    %p48 = scmp.ne.s32.totalorder %s43, %s45
    %p49 = scmp.eq.s32.totalorder %s9, 0
    %p50 = por %p48, %p49
    %p51 = scmp.ne.s32.totalorder %s43, %s45
    %p52 = scmp.eq.s32.totalorder %s14, 1
    %p53 = por %p51, %p52
    %p54 = scmp.ne.s32.totalorder %s45, %s46
    %p55 = scmp.eq.s32.totalorder %s14, 0
    %p56 = por %p54, %p55
    %p57 = scmp.ne.s32.totalorder %s45, %s46
    %p58 = scmp.eq.s32.totalorder %s15, 1
    %p59 = por %p57, %p58
    %p61 = scmp.ne.s32.totalorder %s46, %s60
    %p62 = scmp.eq.s32.totalorder %s15, 0
    %p63 = por %p61, %p62
    %s65 = sadd.s32 %s64, 1
    %p68 = scmp.eq.s32.totalorder %s9, 1
    %p69 = scmp.ne.s32.totalorder %s64, %s66
    %p70 = scmp.eq.s32.totalorder %s9, 0
    %p71 = por %p69, %p70
    %p72 = scmp.ne.s32.totalorder %s64, %s66
    %p73 = scmp.eq.s32.totalorder %s14, 1
    %p74 = por %p72, %p73
    %p75 = scmp.ne.s32.totalorder %s66, %s67
    %p76 = scmp.eq.s32.totalorder %s14, 0
    %p77 = por %p75, %p76
    %p78 = scmp.ne.s32.totalorder %s66, %s67
    %p79 = scmp.eq.s32.totalorder %s15, 1
    %p80 = por %p78, %p79
    %p82 = scmp.ne.s32.totalorder %s67, %s81
    %p83 = scmp.eq.s32.totalorder %s15, 0
    %p84 = por %p82, %p83
    %s85 = ssub.s32 %s9, %s16
    %p86 = scmp.eq.s32.totalorder %s85, 0
    %s88 = sadd.s32 %s87, 1
    %s89 = scalar_select %p86, %s87, %s88
    %p92 = pneg %p86
    %p93 = scmp.eq.s32.totalorder %s9, 1
    %p94 = por %p92, %p93
    %p95 = scmp.ne.s32.totalorder %s87, %s90
    %p96 = scmp.eq.s32.totalorder %s9, 0
    %p97 = por %p95, %p96
    %p98 = scmp.ne.s32.totalorder %s87, %s90
    %p99 = scmp.eq.s32.totalorder %s14, 1
    %p100 = por %p98, %p99
    %p101 = scmp.ne.s32.totalorder %s90, %s91
    %p102 = scmp.eq.s32.totalorder %s14, 0
    %p103 = por %p101, %p102
    %p104 = scmp.ne.s32.totalorder %s90, %s91
    %p105 = scmp.eq.s32.totalorder %s15, 1
    %p106 = por %p104, %p105
    %p108 = scmp.ne.s32.totalorder %s91, %s107
    %p109 = scmp.eq.s32.totalorder %s15, 0
    %p110 = por %p108, %p109
    %p111 = scmp.le.s32.totalorder 1, %s9
    %p112 = scmp.lt.s32.totalorder %s9, 3
    %p113 = pnand %p111, %p112
    %p114 = pneg %p113
    // Predicated region
    $region9: #{clagnosco_autoencoder_forward.16} parent=5 // pred_check
      _
    $region10: #{clagnosco_autoencoder_forward.16} parent=5 // pred_check_branch
      %116 = sbr.rel (%p113) target = $region12
    $region11: #{clagnosco_autoencoder_forward.16} parent=5 // pred_region
      %s117 = ssub.s32 %s9, 1
      // Predicated region
      $region13: #{clagnosco_autoencoder_forward.16} parent=11 // pred_check
        %p118 = pneg %p56
      $region14: #{clagnosco_autoencoder_forward.16} parent=11 // pred_check_branch
        %120 = sbr.rel (%p118) target = $region16
      $region15: #{clagnosco_autoencoder_forward.16} parent=11 // pred_region
        _
      $region16: #{clagnosco_autoencoder_forward.16} parent=11 // pred_fallthru
        _
      // Predicated region
      $region17: #{clagnosco_autoencoder_forward.16} parent=11 // pred_check
        %p121 = pneg %p77
      $region18: #{clagnosco_autoencoder_forward.16} parent=11 // pred_check_branch
        %123 = sbr.rel (%p121) target = $region20
      $region19: #{clagnosco_autoencoder_forward.16} parent=11 // pred_region
        _
      $region20: #{clagnosco_autoencoder_forward.16} parent=11 // pred_fallthru
        _
    $region12: #{clagnosco_autoencoder_forward.16} parent=5 // pred_fallthru
      _
    %p124 = scmp.lt.s32.totalorder %s9, 2
    // Predicated region
    $region21: #{clagnosco_autoencoder_forward.16} parent=5 // pred_check
      %p125 = pneg %p124
    $region22: #{clagnosco_autoencoder_forward.16} parent=5 // pred_check_branch
      %127 = sbr.rel (%p125) target = $region24
    $region23: #{clagnosco_autoencoder_forward.16} parent=5 // pred_region
      // Predicated region
      $region25: #{clagnosco_autoencoder_forward.16} parent=23 // pred_check
        %p128 = pneg %p29
      $region26: #{clagnosco_autoencoder_forward.16} parent=23 // pred_check_branch
        %130 = sbr.rel (%p128) target = $region28
      $region27: #{clagnosco_autoencoder_forward.16} parent=23 // pred_region
        %s131 = smul.u32 2, %s9
        %p132 = scmp.lt.s32.totalorder %s131, 3
        %s133 = scalar_select %p132, %s131, 3
        %s134 = smul.addr %s133, 5
        %s135 = smul.addr %s134, 4
        %s136 = scalar_lea.vmem %s0, %s135
        %s137 = smul.u32 2, %s9
      $region28: #{clagnosco_autoencoder_forward.16} parent=23 // pred_fallthru
        _
    $region24: #{clagnosco_autoencoder_forward.16} parent=5 // pred_fallthru
      _
    %p138 = scmp.le.s32.totalorder 1, %s9
    %p139 = scmp.lt.s32.totalorder %s9, 3
    %p140 = pnand %p138, %p139
    %p141 = pneg %p140
    // Predicated region
    $region29: #{clagnosco_autoencoder_forward.16} parent=5 // pred_check
      _
    $region30: #{clagnosco_autoencoder_forward.16} parent=5 // pred_check_branch
      %143 = sbr.rel (%p140) target = $region32
    $region31: #{clagnosco_autoencoder_forward.16} parent=5 // pred_region
      %s144 = ssub.s32 %s9, 1
      %s145 = smul.u32 2, %s14
      %p146 = scmp.lt.s32.totalorder %s145, 3
      %s147 = scalar_select %p146, %s145, 3
      %s148 = smul.addr %s147, 5
      %s149 = smul.addr %s148, 4
      %s150 = scalar_lea.vmem %s0, %s149
      %p151 = pneg %p35
      %p152 = pneg %p32
      %p153 = pneg %p56
      %p154 = pneg %p53
      %p155 = pneg %p77
      %p156 = pneg %p74
      %p157 = pneg %p103
      %p158 = pneg %p100
      %s159 = smul.u32 2, %s14
      %p160 = scmp.lt.s32.totalorder %s159, 3
      %s161 = scalar_select %p160, %s159, 3
      %s162 = smul.addr %s161, 4
      %s163 = scalar_lea.vmem %s3, %s162
      %s164 = smul.u32 2, %s14
      %p165 = scmp.lt.s32.totalorder %s164, 3
      %s166 = scalar_select %p165, %s164, 3
      %s167 = smul.addr %s166, 5
      %s168 = smul.addr %s167, 4
      %s169 = scalar_lea.vmem %s0, %s168
      %s170 = smul.u32 2, %s14
      %s171 = smul.u32 2, %s14
      %p172 = scmp.lt.s32.totalorder %s171, 3
      %s173 = scalar_select %p172, %s171, 3
      %s174 = smul.addr %s173, 4
      %s175 = scalar_lea.vmem %s3, %s174
      %s176 = smul.u32 2, %s14
      %v178 = vld [vmem:[%s169] sm:$0xff]
      %v179 = vld [vmem:[%s169 + $0x8] sm:$0xff]
      %v180 = vld [vmem:[%s169 + $0x10] sm:$0xf]
      %v181 = vld [vmem:[%s169 + $0x14] sm:$0xff]
      %v182 = vld [vmem:[%s169 + $0x1c] sm:$0xff]
      %v183 = vld [vmem:[%s169 + $0x24] sm:$0xf]
      %v184 = vld [vmem:[%s1] sm:$0xf]
      %v185 = vld [vmem:[%s1 + $0x4] sm:$0xf]
      %v186 = vld [vmem:[%s1 + $0x8] sm:$0xf]
      %v187 = vld [vmem:[%s1 + $0xc] sm:$0xf]
      %v188 = vld [vmem:[%s1 + $0x10] sm:$0xf]
      %v189 = vld [vmem:[%s1 + $0x14] sm:$0xf]
      %v190 = vld [vmem:[%s1 + $0x18] sm:$0xf]
      %v191 = vld [vmem:[%s1 + $0x1c] sm:$0xf]
      %v192 = vld [vmem:[%s1 + $0x20] sm:$0xf]
      %v193 = vld [vmem:[%s1 + $0x24] sm:$0xf]
      %v194 = vld [vmem:[%s1 + $0x28] sm:$0xf]
      %v195 = vld [vmem:[%s1 + $0x2c] sm:$0xf]
      %v196 = vld [vmem:[%s1 + $0x30] sm:$0xf]
      %v197 = vld [vmem:[%s1 + $0x34] sm:$0xf]
      %v198 = vld [vmem:[%s1 + $0x38] sm:$0xf]
      %v199 = vld [vmem:[%s1 + $0x3c] sm:$0xf]
      %v200 = vld [vmem:[%s1 + $0x40] sm:$0xf]
      %v201 = vld [vmem:[%s1 + $0x44] sm:$0xf]
      %v202 = vld [vmem:[%s1 + $0x48] sm:$0xf]
      %v203 = vld [vmem:[%s1 + $0x4c] sm:$0xf]
      %v204 = vld [vmem:[%s1 + $0x50] sm:$0xf]
      %v205 = vld [vmem:[%s1 + $0x54] sm:$0xf]
      %v206 = vld [vmem:[%s1 + $0x58] sm:$0xf]
      %v207 = vld [vmem:[%s1 + $0x5c] sm:$0xf]
      %v208 = vld [vmem:[%s1 + $0x60] sm:$0xf]
      %v209 = vld [vmem:[%s1 + $0x64] sm:$0xf]
      %v210 = vld [vmem:[%s1 + $0x68] sm:$0xf]
      %v211 = vld [vmem:[%s1 + $0x6c] sm:$0xf]
      %v212 = vld [vmem:[%s1 + $0x70] sm:$0xf]
      %v213 = vld [vmem:[%s1 + $0x74] sm:$0xf]
      %v214 = vld [vmem:[%s1 + $0x78] sm:$0xf]
      %v215 = vld [vmem:[%s1 + $0x7c] sm:$0xf]
      %v216 = vld [vmem:[%s1 + $0x80] sm:$0xf]
      %v217 = vld [vmem:[%s1 + $0x84] sm:$0xf]
      %v218 = vld [vmem:[%s1 + $0x88] sm:$0xf]
      %v219 = vld [vmem:[%s1 + $0x8c] sm:$0xf]
      %v220 = vld [vmem:[%s1 + $0x90] sm:$0xf]
      %v221 = vld [vmem:[%s1 + $0x94] sm:$0xf]
      %v222 = vld [vmem:[%s1 + $0x98] sm:$0xf]
      %v223 = vld [vmem:[%s1 + $0x9c] sm:$0xf]
      %v224 = vld [vmem:[%s1 + $0xa0] sm:$0xf]
      %v225 = vld [vmem:[%s1 + $0xa4] sm:$0xf]
      %v226 = vld [vmem:[%s1 + $0xa8] sm:$0xf]
      %v227 = vld [vmem:[%s1 + $0xac] sm:$0xf]
      %v228 = vld [vmem:[%s1 + $0xb0] sm:$0xf]
      %v229 = vld [vmem:[%s1 + $0xb4] sm:$0xf]
      %v230 = vld [vmem:[%s1 + $0xb8] sm:$0xf]
      %v231 = vld [vmem:[%s1 + $0xbc] sm:$0xf]
      %v232 = vld [vmem:[%s1 + $0xc0] sm:$0xf]
      %v233 = vld [vmem:[%s1 + $0xc4] sm:$0xf]
      %v234 = vld [vmem:[%s1 + $0xc8] sm:$0xf]
      %v235 = vld [vmem:[%s1 + $0xcc] sm:$0xf]
      %v236 = vld [vmem:[%s1 + $0xd0] sm:$0xf]
      %v237 = vld [vmem:[%s1 + $0xd4] sm:$0xf]
      %v238 = vld [vmem:[%s1 + $0xd8] sm:$0xf]
      %v239 = vld [vmem:[%s1 + $0xdc] sm:$0xf]
      %v240 = vld [vmem:[%s1 + $0xe0] sm:$0xf]
      %v241 = vld [vmem:[%s1 + $0xe4] sm:$0xf]
      %v242 = vld [vmem:[%s1 + $0xe8] sm:$0xf]
      %v243 = vld [vmem:[%s1 + $0xec] sm:$0xf]
      %v244 = vld [vmem:[%s1 + $0xf0] sm:$0xf]
      %v245 = vld [vmem:[%s1 + $0xf4] sm:$0xf]
      %v246 = vld [vmem:[%s1 + $0xf8] sm:$0xf]
      %v247 = vld [vmem:[%s1 + $0xfc] sm:$0xf]
      %v248 = vld [vmem:[%s1 + $0x100] sm:$0xf]
      %v249 = vld [vmem:[%s1 + $0x104] sm:$0xf]
      %v250 = vld [vmem:[%s1 + $0x108] sm:$0xf]
      %v251 = vld [vmem:[%s1 + $0x10c] sm:$0xf]
      %v252 = vld [vmem:[%s1 + $0x110] sm:$0xf]
      %v253 = vld [vmem:[%s1 + $0x114] sm:$0xf]
      %v254 = vld [vmem:[%s1 + $0x118] sm:$0xf]
      %v255 = vld [vmem:[%s1 + $0x11c] sm:$0xf]
      %v256 = vld [vmem:[%s2] sm:$0x1]
      %v258 = vlaneseq
      %v259 = vshrl.u32 %v258, 7
      %v260 = vsub.s32 0, %v259
      %v261 = vrot.slane %v256, %v260
      %v269 = vunpack.c.l.b16 %v178
      %v270 = vunpack.c.h.b16 %v178
      %v271 = vunpack.c.l.b16 %v179
      %v272 = vunpack.c.h.b16 %v179
      %v273 = vunpack.c.l.b16 %v180
      %v274 = vunpack.c.l.b16 %v181
      %v275 = vunpack.c.h.b16 %v181
      %v276 = vunpack.c.l.b16 %v182
      %v277 = vunpack.c.h.b16 %v182
      %v278 = vunpack.c.l.b16 %v183
      %v279 = vpack.c.b16 %v274, %v269
      %v280 = vpack.c.b16 %v275, %v270
      %v281 = vpack.c.b16 %v276, %v271
      %v282 = vpack.c.b16 %v277, %v272
      %v283 = vpack.c.b16 %v278, %v273
      %v360 = vunpack.c.l.b16 %v184
      %v361 = vunpack.c.l.b16 %v185
      %v362 = vunpack.c.l.b16 %v186
      %v363 = vunpack.c.l.b16 %v187
      %v364 = vunpack.c.l.b16 %v188
      %v365 = vunpack.c.l.b16 %v189
      %v366 = vunpack.c.l.b16 %v190
      %v367 = vunpack.c.l.b16 %v191
      %v368 = vunpack.c.l.b16 %v192
      %v369 = vunpack.c.l.b16 %v193
      %v370 = vunpack.c.l.b16 %v194
      %v371 = vunpack.c.l.b16 %v195
      %v372 = vunpack.c.l.b16 %v196
      %v373 = vunpack.c.l.b16 %v197
      %v374 = vunpack.c.l.b16 %v198
      %v375 = vunpack.c.l.b16 %v199
      %v376 = vunpack.c.l.b16 %v200
      %v377 = vunpack.c.l.b16 %v201
      %v378 = vunpack.c.l.b16 %v202
      %v379 = vunpack.c.l.b16 %v203
      %v380 = vunpack.c.l.b16 %v204
      %v381 = vunpack.c.l.b16 %v205
      %v382 = vunpack.c.l.b16 %v206
      %v383 = vunpack.c.l.b16 %v207
      %v384 = vunpack.c.l.b16 %v208
      %v385 = vunpack.c.l.b16 %v209
      %v386 = vunpack.c.l.b16 %v210
      %v387 = vunpack.c.l.b16 %v211
      %v388 = vunpack.c.l.b16 %v212
      %v389 = vunpack.c.l.b16 %v213
      %v390 = vunpack.c.l.b16 %v214
      %v391 = vunpack.c.l.b16 %v215
      %v392 = vunpack.c.l.b16 %v216
      %v393 = vunpack.c.l.b16 %v217
      %v394 = vunpack.c.l.b16 %v218
      %v395 = vunpack.c.l.b16 %v219
      %v396 = vunpack.c.l.b16 %v220
      %v397 = vunpack.c.l.b16 %v221
      %v398 = vunpack.c.l.b16 %v222
      %v399 = vunpack.c.l.b16 %v223
      %v400 = vunpack.c.l.b16 %v224
      %v401 = vunpack.c.l.b16 %v225
      %v402 = vunpack.c.l.b16 %v226
      %v403 = vunpack.c.l.b16 %v227
      %v404 = vunpack.c.l.b16 %v228
      %v405 = vunpack.c.l.b16 %v229
      %v406 = vunpack.c.l.b16 %v230
      %v407 = vunpack.c.l.b16 %v231
      %v408 = vunpack.c.l.b16 %v232
      %v409 = vunpack.c.l.b16 %v233
      %v410 = vunpack.c.l.b16 %v234
      %v411 = vunpack.c.l.b16 %v235
      %v412 = vunpack.c.l.b16 %v236
      %v413 = vunpack.c.l.b16 %v237
      %v414 = vunpack.c.l.b16 %v238
      %v415 = vunpack.c.l.b16 %v239
      %v416 = vunpack.c.l.b16 %v240
      %v417 = vunpack.c.l.b16 %v241
      %v418 = vunpack.c.l.b16 %v242
      %v419 = vunpack.c.l.b16 %v243
      %v420 = vunpack.c.l.b16 %v244
      %v421 = vunpack.c.l.b16 %v245
      %v422 = vunpack.c.l.b16 %v246
      %v423 = vunpack.c.l.b16 %v247
      %v424 = vunpack.c.l.b16 %v248
      %v425 = vunpack.c.l.b16 %v249
      %v426 = vunpack.c.l.b16 %v250
      %v427 = vunpack.c.l.b16 %v251
      %v428 = vunpack.c.l.b16 %v252
      %v429 = vunpack.c.l.b16 %v253
      %v430 = vunpack.c.l.b16 %v254
      %v431 = vunpack.c.l.b16 %v255
      %v432 = vpack.c.b16 %v361, %v360
      %v433 = vpack.c.b16 %v363, %v362
      %v434 = vpack.c.b16 %v365, %v364
      %v435 = vpack.c.b16 %v367, %v366
      %v436 = vpack.c.b16 %v369, %v368
      %v437 = vpack.c.b16 %v371, %v370
      %v438 = vpack.c.b16 %v373, %v372
      %v439 = vpack.c.b16 %v375, %v374
      %v440 = vpack.c.b16 %v377, %v376
      %v441 = vpack.c.b16 %v379, %v378
      %v442 = vpack.c.b16 %v381, %v380
      %v443 = vpack.c.b16 %v383, %v382
      %v444 = vpack.c.b16 %v385, %v384
      %v445 = vpack.c.b16 %v387, %v386
      %v446 = vpack.c.b16 %v389, %v388
      %v447 = vpack.c.b16 %v391, %v390
      %v448 = vpack.c.b16 %v393, %v392
      %v449 = vpack.c.b16 %v395, %v394
      %v450 = vpack.c.b16 %v397, %v396
      %v451 = vpack.c.b16 %v399, %v398
      %v452 = vpack.c.b16 %v401, %v400
      %v453 = vpack.c.b16 %v403, %v402
      %v454 = vpack.c.b16 %v405, %v404
      %v455 = vpack.c.b16 %v407, %v406
      %v456 = vpack.c.b16 %v409, %v408
      %v457 = vpack.c.b16 %v411, %v410
      %v458 = vpack.c.b16 %v413, %v412
      %v459 = vpack.c.b16 %v415, %v414
      %v460 = vpack.c.b16 %v417, %v416
      %v461 = vpack.c.b16 %v419, %v418
      %v462 = vpack.c.b16 %v421, %v420
      %v463 = vpack.c.b16 %v423, %v422
      %v464 = vpack.c.b16 %v425, %v424
      %v465 = vpack.c.b16 %v427, %v426
      %v466 = vpack.c.b16 %v429, %v428
      %v467 = vpack.c.b16 %v431, %v430
      %vm504 = vcmask 523264
      %v506 = vsel %vm504, %v283, 0
      %508 = vmatprep.subr.bf16.mxu0 0
      %509 = vmatpush1.bf16.msra.mxu0 %v432
      %510 = vmatprep.subr.bf16.mxu0 0
      %511 = vmatpush1.bf16.msra.mxu0 %v433
      %512 = vmatprep.subr.bf16.mxu0 0
      %513 = vmatpush1.bf16.msra.mxu0 %v434
      %514 = vmatprep.subr.bf16.mxu0 0
      %515 = vmatpush1.bf16.msra.mxu0 %v435
      %516 = vmatprep.subr.bf16.mxu0 0
      %517 = vmatpush1.bf16.msra.mxu0 %v436
      %518 = vmatprep.subr.bf16.mxu0 0
      %519 = vmatpush1.bf16.msra.mxu0 %v437
      %520 = vmatprep.subr.bf16.mxu0 0
      %521 = vmatpush1.bf16.msra.mxu0 %v438
      %522 = vmatprep.subr.bf16.mxu0 0
      %523 = vmatpush1.bf16.msra.mxu0 %v439
      %524 = vmatprep.subr.bf16.mxu0 0
      %525 = vmatpush1.bf16.msra.mxu0 %v440
      %526 = vmatprep.subr.bf16.mxu0 0
      %527 = vmatpush1.bf16.msra.mxu0 %v441
      %528 = vmatprep.subr.bf16.mxu0 0
      %529 = vmatpush1.bf16.msra.mxu0 %v442
      %530 = vmatprep.subr.bf16.mxu0 0
      %531 = vmatpush1.bf16.msra.mxu0 %v443
      %532 = vmatprep.subr.bf16.mxu0 0
      %533 = vmatpush1.bf16.msra.mxu0 %v444
      %534 = vmatprep.subr.bf16.mxu0 0
      %535 = vmatpush1.bf16.msra.mxu0 %v445
      %536 = vmatprep.subr.bf16.mxu0 0
      %537 = vmatpush1.bf16.msra.mxu0 %v446
      %538 = vmatprep.subr.bf16.mxu0 0
      %539 = vmatpush1.bf16.msra.mxu0 %v447
      %540 = vmatprep.mubr.bf16.mxu0 %v280
      %541 = vmatmul.mubr.bf16.gmra.mrb[0].mxu0 %v279
      %v542 = vpop.f32.mrb[0].mxu0
      %v543 = vadd.f32 %v261, %v542
      %v544 = vpop.f32.mrb[0].mxu0
      %v545 = vpop.f32.mrb[0].mxu0
      %v546 = vadd.f32 %v261, %v545
      %v547 = vpop.f32.mrb[0].mxu0
      %548 = vdwg.mxu0
      %549 = vmatprep.subr.bf16.mxu0 0
      %550 = vmatpush1.bf16.msra.mxu0 %v448
      %551 = vmatprep.subr.bf16.mxu0 0
      %552 = vmatpush1.bf16.msra.mxu0 %v449
      %553 = vmatprep.subr.bf16.mxu0 0
      %554 = vmatpush1.bf16.msra.mxu0 %v450
      %555 = vmatprep.subr.bf16.mxu0 0
      %556 = vmatpush1.bf16.msra.mxu0 %v451
      %557 = vmatprep.subr.bf16.mxu0 0
      %558 = vmatpush1.bf16.msra.mxu0 %v452
      %559 = vmatprep.subr.bf16.mxu0 0
      %560 = vmatpush1.bf16.msra.mxu0 %v453
      %561 = vmatprep.subr.bf16.mxu0 0
      %562 = vmatpush1.bf16.msra.mxu0 %v454
      %563 = vmatprep.subr.bf16.mxu0 0
      %564 = vmatpush1.bf16.msra.mxu0 %v455
      %565 = vmatprep.subr.bf16.mxu0 0
      %566 = vmatpush1.bf16.msra.mxu0 %v456
      %567 = vmatprep.subr.bf16.mxu0 0
      %568 = vmatpush1.bf16.msra.mxu0 %v457
      %569 = vmatprep.subr.bf16.mxu0 0
      %570 = vmatpush1.bf16.msra.mxu0 %v458
      %571 = vmatprep.subr.bf16.mxu0 0
      %572 = vmatpush1.bf16.msra.mxu0 %v459
      %573 = vmatprep.subr.bf16.mxu0 0
      %574 = vmatpush1.bf16.msra.mxu0 %v460
      %575 = vmatprep.subr.bf16.mxu0 0
      %576 = vmatpush1.bf16.msra.mxu0 %v461
      %577 = vmatprep.subr.bf16.mxu0 0
      %578 = vmatpush1.bf16.msra.mxu0 %v462
      %579 = vmatprep.subr.bf16.mxu0 0
      %580 = vmatpush1.bf16.msra.mxu0 %v463
      %581 = vmatprep.mubr.bf16.mxu0 %v282
      %582 = vmatmul.mubr.bf16.gmra.mrb[0].mxu0 %v281
      %v583 = vpop.f32.mrb[0].mxu0
      %v584 = vadd.f32 %v543, %v583
      %v585 = vpop.f32.mrb[0].mxu0
      %v586 = vpop.f32.mrb[0].mxu0
      %v587 = vadd.f32 %v546, %v586
      %v588 = vpop.f32.mrb[0].mxu0
      %589 = vdwg.mxu0
      %590 = vmatprep.subr.bf16.mxu0 0
      %591 = vmatpush1.bf16.msra.mxu0 %v464
      %592 = vmatprep.subr.bf16.mxu0 0
      %593 = vmatpush1.bf16.msra.mxu0 %v465
      %594 = vmatprep.subr.bf16.mxu0 0
      %595 = vmatpush1.bf16.msra.mxu0 %v466
      %596 = vmatprep.subr.bf16.mxu0 0
      %597 = vmatpush1.bf16.msra.mxu0 %v467
      %598 = vmatprep.subr.bf16.mxu0 0
      %599 = vmatpush1.bf16.msra.mxu0 0
      %600 = vmatprep.subr.bf16.mxu0 0
      %601 = vmatpush1.bf16.msra.mxu0 0
      %602 = vmatprep.subr.bf16.mxu0 0
      %603 = vmatpush1.bf16.msra.mxu0 0
      %604 = vmatprep.subr.bf16.mxu0 0
      %605 = vmatpush1.bf16.msra.mxu0 0
      %606 = vmatprep.subr.bf16.mxu0 0
      %607 = vmatpush1.bf16.msra.mxu0 0
      %608 = vmatprep.subr.bf16.mxu0 0
      %609 = vmatpush1.bf16.msra.mxu0 0
      %610 = vmatprep.subr.bf16.mxu0 0
      %611 = vmatpush1.bf16.msra.mxu0 0
      %612 = vmatprep.subr.bf16.mxu0 0
      %613 = vmatpush1.bf16.msra.mxu0 0
      %614 = vmatprep.subr.bf16.mxu0 0
      %615 = vmatpush1.bf16.msra.mxu0 0
      %616 = vmatprep.subr.bf16.mxu0 0
      %617 = vmatpush1.bf16.msra.mxu0 0
      %618 = vmatprep.subr.bf16.mxu0 0
      %619 = vmatpush1.bf16.msra.mxu0 0
      %620 = vmatprep.subr.bf16.mxu0 0
      %621 = vmatpush1.bf16.msra.mxu0 0
      %622 = vmatprep.mubr.bf16.mxu0 0
      %623 = vmatmul.mubr.bf16.gmra.mrb[0].mxu0 %v506
      %v624 = vpop.f32.mrb[0].mxu0
      %v625 = vadd.f32 %v584, %v624
      %v626 = vpop.f32.mrb[0].mxu0
      %v627 = vpop.f32.mrb[0].mxu0
      %v628 = vadd.f32 %v587, %v627
      %v629 = vpop.f32.mrb[0].mxu0
      %630 = vdwg.mxu0
      %v631 = vmul.f32 %v625, 0.01
      %v632 = vmul.f32 %v628, 0.01
      %v633 = vmax.f32 %v625, %v631
      %v634 = vmax.f32 %v628, %v632
      %v635 = vpack.c.bf16 %v634, %v633
      %v637 = vunpack.c.l.b16 %v635
      %v638 = vunpack.c.h.b16 %v635
      %v639 = vpack.c.b16 %v637, %v637
      %v640 = vpack.c.b16 %v638, %v638
      %643 = vst [vmem:[%s175] sm:$0xf] %v639
      %644 = vst [vmem:[%s175 + $0x4] sm:$0xf] %v640
      %s645 = smul.u32 2, %s14
      %p646 = scmp.lt.s32.totalorder %s645, 3
      %s647 = scalar_select %p646, %s645, 3
      %s648 = smul.addr %s647, 4
      %s649 = scalar_lea.vmem %s3, %s648
      // Predicated region
      $region33: #{clagnosco_autoencoder_forward.16} parent=31 // pred_check
        %p650 = pneg %p100
      $region34: #{clagnosco_autoencoder_forward.16} parent=31 // pred_check_branch
        %652 = sbr.rel (%p650) target = $region36
      $region35: #{clagnosco_autoencoder_forward.16} parent=31 // pred_region
        %s653 = smul.u32 2, %s14
      $region36: #{clagnosco_autoencoder_forward.16} parent=31 // pred_fallthru
        _
    $region32: #{clagnosco_autoencoder_forward.16} parent=5 // pred_fallthru
      _
    %p654 = scmp.le.s32.totalorder 2, %s9
    // Predicated region
    $region37: #{clagnosco_autoencoder_forward.16} parent=5 // pred_check
      %p655 = pneg %p654
    $region38: #{clagnosco_autoencoder_forward.16} parent=5 // pred_check_branch
      %657 = sbr.rel (%p655) target = $region40
    $region39: #{clagnosco_autoencoder_forward.16} parent=5 // pred_region
      %s658 = ssub.s32 %s9, 2
      // Predicated region
      $region41: #{clagnosco_autoencoder_forward.16} parent=39 // pred_check
        %p659 = pneg %p106
      $region42: #{clagnosco_autoencoder_forward.16} parent=39 // pred_check_branch
        %661 = sbr.rel (%p659) target = $region44
      $region43: #{clagnosco_autoencoder_forward.16} parent=39 // pred_region
        %s662 = smul.u32 2, %s15
        %p663 = scmp.lt.s32.totalorder %s662, 3
        %s664 = scalar_select %p663, %s662, 3
        %s665 = smul.addr %s664, 4
        %s666 = scalar_lea.vmem %s3, %s665
      $region44: #{clagnosco_autoencoder_forward.16} parent=39 // pred_fallthru
        _
    $region40: #{clagnosco_autoencoder_forward.16} parent=5 // pred_fallthru
      _
  $region6: #{clagnosco_autoencoder_forward.16} parent=0 // loop_footer
    %s13 = sadd.s32 1, %s9
  $region7: #{clagnosco_autoencoder_forward.16} parent=0 // loop_footer_branch
    %8 = sbr.rel target = $region3
  $region8: #{clagnosco_autoencoder_forward.16} parent=0 // loop_exit
    _

// kernel: tile.38
$region0: #{tile.38}
  #allocation0 [shape = 's32[1]{0}', space=sflag, size = 0x4, scoped, tag = 'scoped memory for tile.38']
  %s0 = inlined_call_operand.vmem [shape: f32[3], index: 0, kind: input, shape index: {}]
  %s1 = inlined_call_operand.vmem [shape: f32[4,3], index: 1, kind: output, shape index: {}]
  // Predicated region
  $region2: #{tile.38} parent=0 // pred_check
    _
  $region3: #{tile.38} parent=0 // pred_check_branch
    %3 = sbr.rel (0) target = $region5
  $region4: #{tile.38} parent=0 // pred_region
    _
  $region5: #{tile.38} parent=0 // pred_fallthru
    _
  %v4 = vld [vmem:[%s0] ss:$0 sm:$0xff]
  %5 = vst [vmem:[%s1] sm:$0xf] %v4

// kernel: tile.39
$region0: #{tile.39}
  %s0 = inlined_call_operand.vmem [shape: f32[4,3], index: 0, kind: input, shape index: {}]
  %s1 = inlined_call_operand.vmem [shape: f32[12], index: 1, kind: output, shape index: {}]
  $region1: #{tile.39} parent=0
    #allocation0 [shape = 'u8[4096]{0}', space=vmem, size = 0x1000, scoped, tag = 'scoped mem for output reshape']
    #allocation1 [shape = 'u8[4096]{0}', space=vmem, size = 0x1000, scoped, tag = 'scoped mem for input reshape']
    %s3 = sshllo.u32 0, 4
    %v4 = vld [vmem:[%s0] sm:%s3]
    %5 = vst [vmem:[#allocation1] sm:%s3] %v4
    %v6 = vld [vmem:[#allocation1] sm:$0x1]
    %vm7 = vcmask 23552
    %8 = vst.msk [vmem:[#allocation0] sm:$0x1] %vm7, %v6
    %s9 = scalar_lea.vmem [#allocation1], 3
    %v10 = vld [vmem:[%s9] sm:$0x1]
    %11 = vrot.lane.b32.xlu0 %v10, 9
    %v12 = vpop.permute.xlu0 %11
    %vm13 = vcmask 97352
    %14 = vst.msk [vmem:[#allocation0] sm:$0x1] %vm13, %v12
    %s15 = scalar_lea.vmem [#allocation1], 2
    %v16 = vld [vmem:[%s15] sm:$0x1]
    %17 = vrot.lane.b32.xlu0 %v16, 6
    %v18 = vpop.permute.xlu0 %17
    %vm19 = vcmask 72752
    %20 = vst.msk [vmem:[#allocation0] sm:$0x1] %vm19, %v18
    %s21 = scalar_lea.vmem [#allocation1], 1
    %v22 = vld [vmem:[%s21] sm:$0x1]
    %23 = vrot.lane.b32.xlu0 %v22, 3
    %v24 = vpop.permute.xlu0 %23
    %vm25 = vcmask 48152
    %26 = vst.msk [vmem:[#allocation0] sm:$0x1] %vm25, %v24
    %s28 = sshllo.u32 0, 1
    %v30 = vld [vmem:[#allocation0] sm:%s28]
    %s31 = sshllo.u32 0, 1
    %32 = vst [vmem:[%s1] sm:%s31] %v30

// kernel: clagnosco_autoencoder_forward.17
$region0: #{clagnosco_autoencoder_forward.17}
  #allocation0 [shape = 'u32[]', space=smem, size = 0x4, offset = 0x4, fixed_abs, tag = 'smem constant byte address 0x4 - core index']
  #allocation1 [shape = 'u32[144,128]{1,0:T(1,128)}', space=vmem, size = 0x12000, scoped, tag = 'internal scratch']
  %s0 = inlined_call_operand.vmem [shape: bf16[128,288], index: 0, kind: input, shape index: {}]
  %s1 = inlined_call_operand.vmem [shape: bf16[288,128], index: 1, kind: input, shape index: {}]
  %s2 = inlined_call_operand.vmem [shape: f32[1,128], index: 2, kind: input, shape index: {}]
  %s3 = inlined_call_operand.vmem [shape: bf16[128,128], index: 3, kind: output, shape index: {}]
  %s4 = sld [smem:[#allocation0]]
  $region45: #{clagnosco_autoencoder_forward.17} parent=0
    _
  %s6 = ssub.s32 1, %s4
  %s7 = scalar_select 0, %s6, %s4
  loop: start=0, step=1, limit=4
  $region2: #{clagnosco_autoencoder_forward.17} parent=0 // loop_pre_header
    _
  $region3: #{clagnosco_autoencoder_forward.17} parent=0 // loop_header
    %s9 = sphi 0, %s13
    %p10 = scmp.ge.s32.totalorder %s9, 4
    %s19 = sphi 0, %s21
    %s22 = sphi 0, %s19
    %s23 = sphi 0, %s22
    %s39 = sphi 0, %s23
    %s43 = sphi 0, %s43
    %s45 = sphi 0, %s43
    %s46 = sphi 0, %s45
    %s60 = sphi 0, %s46
    %s64 = sphi 0, %s64
    %s66 = sphi 0, %s64
    %s67 = sphi 0, %s66
    %s81 = sphi 0, %s67
    %s87 = sphi 0, %s89
    %s90 = sphi 0, %s87
    %s91 = sphi 0, %s90
    %s107 = sphi 0, %s91
  $region4: #{clagnosco_autoencoder_forward.17} parent=0 // loop_header_branch
    %12 = sbr.rel (%p10) target = $region8
  $region5: #{clagnosco_autoencoder_forward.17} parent=0 // loop_body
    %s14 = ssub.s32 %s9, 1
    %s15 = ssub.s32 %s9, 2
    %s16 = sadd.s32 %s9, 1
    %s17 = ssub.s32 %s9, %s16
    %p18 = scmp.eq.s32.totalorder %s17, 0
    %s20 = sadd.s32 %s19, 1
    %s21 = scalar_select %p18, %s19, %s20
    %p24 = pneg %p18
    %p25 = scmp.eq.s32.totalorder %s9, 1
    %p26 = por %p24, %p25
    %p27 = scmp.ne.s32.totalorder %s19, %s22
    %p28 = scmp.eq.s32.totalorder %s9, 0
    %p29 = por %p27, %p28
    %p30 = scmp.ne.s32.totalorder %s19, %s22
    %p31 = scmp.eq.s32.totalorder %s14, 1
    %p32 = por %p30, %p31
    %p33 = scmp.ne.s32.totalorder %s22, %s23
    %p34 = scmp.eq.s32.totalorder %s14, 0
    %p35 = por %p33, %p34
    %p36 = scmp.ne.s32.totalorder %s22, %s23
    %p37 = scmp.eq.s32.totalorder %s15, 1
    %p38 = por %p36, %p37
    %p40 = scmp.ne.s32.totalorder %s23, %s39
    %p41 = scmp.eq.s32.totalorder %s15, 0
    %p42 = por %p40, %p41
    %s44 = sadd.s32 %s43, 1
    %p47 = scmp.eq.s32.totalorder %s9, 1
    %p48 = scmp.ne.s32.totalorder %s43, %s45
    %p49 = scmp.eq.s32.totalorder %s9, 0
    %p50 = por %p48, %p49
    %p51 = scmp.ne.s32.totalorder %s43, %s45
    %p52 = scmp.eq.s32.totalorder %s14, 1
    %p53 = por %p51, %p52
    %p54 = scmp.ne.s32.totalorder %s45, %s46
    %p55 = scmp.eq.s32.totalorder %s14, 0
    %p56 = por %p54, %p55
    %p57 = scmp.ne.s32.totalorder %s45, %s46
    %p58 = scmp.eq.s32.totalorder %s15, 1
    %p59 = por %p57, %p58
    %p61 = scmp.ne.s32.totalorder %s46, %s60
    %p62 = scmp.eq.s32.totalorder %s15, 0
    %p63 = por %p61, %p62
    %s65 = sadd.s32 %s64, 1
    %p68 = scmp.eq.s32.totalorder %s9, 1
    %p69 = scmp.ne.s32.totalorder %s64, %s66
    %p70 = scmp.eq.s32.totalorder %s9, 0
    %p71 = por %p69, %p70
    %p72 = scmp.ne.s32.totalorder %s64, %s66
    %p73 = scmp.eq.s32.totalorder %s14, 1
    %p74 = por %p72, %p73
    %p75 = scmp.ne.s32.totalorder %s66, %s67
    %p76 = scmp.eq.s32.totalorder %s14, 0
    %p77 = por %p75, %p76
    %p78 = scmp.ne.s32.totalorder %s66, %s67
    %p79 = scmp.eq.s32.totalorder %s15, 1
    %p80 = por %p78, %p79
    %p82 = scmp.ne.s32.totalorder %s67, %s81
    %p83 = scmp.eq.s32.totalorder %s15, 0
    %p84 = por %p82, %p83
    %s85 = ssub.s32 %s9, %s16
    %p86 = scmp.eq.s32.totalorder %s85, 0
    %s88 = sadd.s32 %s87, 1
    %s89 = scalar_select %p86, %s87, %s88
    %p92 = pneg %p86
    %p93 = scmp.eq.s32.totalorder %s9, 1
    %p94 = por %p92, %p93
    %p95 = scmp.ne.s32.totalorder %s87, %s90
    %p96 = scmp.eq.s32.totalorder %s9, 0
    %p97 = por %p95, %p96
    %p98 = scmp.ne.s32.totalorder %s87, %s90
    %p99 = scmp.eq.s32.totalorder %s14, 1
    %p100 = por %p98, %p99
    %p101 = scmp.ne.s32.totalorder %s90, %s91
    %p102 = scmp.eq.s32.totalorder %s14, 0
    %p103 = por %p101, %p102
    %p104 = scmp.ne.s32.totalorder %s90, %s91
    %p105 = scmp.eq.s32.totalorder %s15, 1
    %p106 = por %p104, %p105
    %p108 = scmp.ne.s32.totalorder %s91, %s107
    %p109 = scmp.eq.s32.totalorder %s15, 0
    %p110 = por %p108, %p109
    %p111 = scmp.le.s32.totalorder 1, %s9
    %p112 = scmp.lt.s32.totalorder %s9, 3
    %p113 = pnand %p111, %p112
    %p114 = pneg %p113
    // Predicated region
    $region9: #{clagnosco_autoencoder_forward.17} parent=5 // pred_check
      _
    $region10: #{clagnosco_autoencoder_forward.17} parent=5 // pred_check_branch
      %116 = sbr.rel (%p113) target = $region12
    $region11: #{clagnosco_autoencoder_forward.17} parent=5 // pred_region
      %s117 = ssub.s32 %s9, 1
      // Predicated region
      $region13: #{clagnosco_autoencoder_forward.17} parent=11 // pred_check
        %p118 = pneg %p56
      $region14: #{clagnosco_autoencoder_forward.17} parent=11 // pred_check_branch
        %120 = sbr.rel (%p118) target = $region16
      $region15: #{clagnosco_autoencoder_forward.17} parent=11 // pred_region
        _
      $region16: #{clagnosco_autoencoder_forward.17} parent=11 // pred_fallthru
        _
      // Predicated region
      $region17: #{clagnosco_autoencoder_forward.17} parent=11 // pred_check
        %p121 = pneg %p77
      $region18: #{clagnosco_autoencoder_forward.17} parent=11 // pred_check_branch
        %123 = sbr.rel (%p121) target = $region20
      $region19: #{clagnosco_autoencoder_forward.17} parent=11 // pred_region
        _
      $region20: #{clagnosco_autoencoder_forward.17} parent=11 // pred_fallthru
        _
    $region12: #{clagnosco_autoencoder_forward.17} parent=5 // pred_fallthru
      _
    %p124 = scmp.lt.s32.totalorder %s9, 2
    // Predicated region
    $region21: #{clagnosco_autoencoder_forward.17} parent=5 // pred_check
      %p125 = pneg %p124
    $region22: #{clagnosco_autoencoder_forward.17} parent=5 // pred_check_branch
      %127 = sbr.rel (%p125) target = $region24
    $region23: #{clagnosco_autoencoder_forward.17} parent=5 // pred_region
      // Predicated region
      $region25: #{clagnosco_autoencoder_forward.17} parent=23 // pred_check
        %p128 = pneg %p29
      $region26: #{clagnosco_autoencoder_forward.17} parent=23 // pred_check_branch
        %130 = sbr.rel (%p128) target = $region28
      $region27: #{clagnosco_autoencoder_forward.17} parent=23 // pred_region
        %s131 = smul.u32 8, %s9
        %p132 = scmp.lt.s32.totalorder %s131, 15
        %s133 = scalar_select %p132, %s131, 15
        %s134 = smul.addr %s133, 3
        %s135 = smul.addr %s134, 4
        %s136 = scalar_lea.vmem %s0, %s135
        %s137 = smul.u32 8, %s9
      $region28: #{clagnosco_autoencoder_forward.17} parent=23 // pred_fallthru
        _
    $region24: #{clagnosco_autoencoder_forward.17} parent=5 // pred_fallthru
      _
    %p138 = scmp.le.s32.totalorder 1, %s9
    %p139 = scmp.lt.s32.totalorder %s9, 3
    %p140 = pnand %p138, %p139
    %p141 = pneg %p140
    // Predicated region
    $region29: #{clagnosco_autoencoder_forward.17} parent=5 // pred_check
      _
    $region30: #{clagnosco_autoencoder_forward.17} parent=5 // pred_check_branch
      %143 = sbr.rel (%p140) target = $region32
    $region31: #{clagnosco_autoencoder_forward.17} parent=5 // pred_region
      %s144 = ssub.s32 %s9, 1
      %s145 = smul.u32 8, %s14
      %p146 = scmp.lt.s32.totalorder %s145, 15
      %s147 = scalar_select %p146, %s145, 15
      %s148 = smul.addr %s147, 3
      %s149 = smul.addr %s148, 4
      %s150 = scalar_lea.vmem %s0, %s149
      %p151 = pneg %p35
      %p152 = pneg %p32
      %p153 = pneg %p56
      %p154 = pneg %p53
      %p155 = pneg %p77
      %p156 = pneg %p74
      %p157 = pneg %p103
      %p158 = pneg %p100
      %s159 = smul.u32 8, %s14
      %p160 = scmp.lt.s32.totalorder %s159, 15
      %s161 = scalar_select %p160, %s159, 15
      %s162 = smul.addr %s161, 4
      %s163 = scalar_lea.vmem %s3, %s162
      %s164 = smul.u32 8, %s14
      %p165 = scmp.lt.s32.totalorder %s164, 15
      %s166 = scalar_select %p165, %s164, 15
      %s167 = smul.addr %s166, 3
      %s168 = smul.addr %s167, 4
      %s169 = scalar_lea.vmem %s0, %s168
      %s170 = smul.u32 8, %s14
      %s171 = smul.u32 8, %s14
      %p172 = scmp.lt.s32.totalorder %s171, 15
      %s173 = scalar_select %p172, %s171, 15
      %s174 = smul.addr %s173, 4
      %s175 = scalar_lea.vmem %s3, %s174
      %s176 = smul.u32 8, %s14
      %v178 = vld [vmem:[%s169] sm:$0xff]
      %v179 = vld [vmem:[%s169 + $0x8] sm:$0xf]
      %v180 = vld [vmem:[%s169 + $0xc] sm:$0xff]
      %v181 = vld [vmem:[%s169 + $0x14] sm:$0xf]
      %v182 = vld [vmem:[%s169 + $0x18] sm:$0xff]
      %v183 = vld [vmem:[%s169 + $0x20] sm:$0xf]
      %v184 = vld [vmem:[%s169 + $0x24] sm:$0xff]
      %v185 = vld [vmem:[%s169 + $0x2c] sm:$0xf]
      %v186 = vld [vmem:[%s169 + $0x30] sm:$0xff]
      %v187 = vld [vmem:[%s169 + $0x38] sm:$0xf]
      %v188 = vld [vmem:[%s169 + $0x3c] sm:$0xff]
      %v189 = vld [vmem:[%s169 + $0x44] sm:$0xf]
      %v190 = vld [vmem:[%s169 + $0x48] sm:$0xff]
      %v191 = vld [vmem:[%s169 + $0x50] sm:$0xf]
      %v192 = vld [vmem:[%s169 + $0x54] sm:$0xff]
      %v193 = vld [vmem:[%s169 + $0x5c] sm:$0xf]
      %v194 = vld [vmem:[%s1] sm:$0xf]
      %v195 = vld [vmem:[%s1 + $0x4] sm:$0xf]
      %v196 = vld [vmem:[%s1 + $0x8] sm:$0xf]
      %v197 = vld [vmem:[%s1 + $0xc] sm:$0xf]
      %v198 = vld [vmem:[%s1 + $0x10] sm:$0xf]
      %v199 = vld [vmem:[%s1 + $0x14] sm:$0xf]
      %v200 = vld [vmem:[%s1 + $0x18] sm:$0xf]
      %v201 = vld [vmem:[%s1 + $0x1c] sm:$0xf]
      %v202 = vld [vmem:[%s1 + $0x20] sm:$0xf]
      %v203 = vld [vmem:[%s1 + $0x24] sm:$0xf]
      %v204 = vld [vmem:[%s1 + $0x28] sm:$0xf]
      %v205 = vld [vmem:[%s1 + $0x2c] sm:$0xf]
      %v206 = vld [vmem:[%s1 + $0x30] sm:$0xf]
      %v207 = vld [vmem:[%s1 + $0x34] sm:$0xf]
      %v208 = vld [vmem:[%s1 + $0x38] sm:$0xf]
      %v209 = vld [vmem:[%s1 + $0x3c] sm:$0xf]
      %v210 = vld [vmem:[%s1 + $0x40] sm:$0xf]
      %v211 = vld [vmem:[%s1 + $0x44] sm:$0xf]
      %v212 = vld [vmem:[%s1 + $0x48] sm:$0xf]
      %v213 = vld [vmem:[%s1 + $0x4c] sm:$0xf]
      %v214 = vld [vmem:[%s1 + $0x50] sm:$0xf]
      %v215 = vld [vmem:[%s1 + $0x54] sm:$0xf]
      %v216 = vld [vmem:[%s1 + $0x58] sm:$0xf]
      %v217 = vld [vmem:[%s1 + $0x5c] sm:$0xf]
      %v218 = vld [vmem:[%s1 + $0x60] sm:$0xf]
      %v219 = vld [vmem:[%s1 + $0x64] sm:$0xf]
      %v220 = vld [vmem:[%s1 + $0x68] sm:$0xf]
      %v221 = vld [vmem:[%s1 + $0x6c] sm:$0xf]
      %v222 = vld [vmem:[%s1 + $0x70] sm:$0xf]
      %v223 = vld [vmem:[%s1 + $0x74] sm:$0xf]
      %v224 = vld [vmem:[%s1 + $0x78] sm:$0xf]
      %v225 = vld [vmem:[%s1 + $0x7c] sm:$0xf]
      %v226 = vld [vmem:[%s1 + $0x80] sm:$0xf]
      %v227 = vld [vmem:[%s1 + $0x84] sm:$0xf]
      %v228 = vld [vmem:[%s1 + $0x88] sm:$0xf]
      %v229 = vld [vmem:[%s1 + $0x8c] sm:$0xf]
      %v230 = vld [vmem:[%s2] sm:$0x1]
      %v232 = vlaneseq
      %v233 = vshrl.u32 %v232, 7
      %v234 = vsub.s32 0, %v233
      %v235 = vrot.slane %v230, %v234
      %v253 = vunpack.c.l.b16 %v178
      %v254 = vunpack.c.h.b16 %v178
      %v255 = vunpack.c.l.b16 %v179
      %v256 = vunpack.c.l.b16 %v180
      %v257 = vunpack.c.h.b16 %v180
      %v258 = vunpack.c.l.b16 %v181
      %v259 = vunpack.c.l.b16 %v182
      %v260 = vunpack.c.h.b16 %v182
      %v261 = vunpack.c.l.b16 %v183
      %v262 = vunpack.c.l.b16 %v184
      %v263 = vunpack.c.h.b16 %v184
      %v264 = vunpack.c.l.b16 %v185
      %v265 = vunpack.c.l.b16 %v186
      %v266 = vunpack.c.h.b16 %v186
      %v267 = vunpack.c.l.b16 %v187
      %v268 = vunpack.c.l.b16 %v188
      %v269 = vunpack.c.h.b16 %v188
      %v270 = vunpack.c.l.b16 %v189
      %v271 = vunpack.c.l.b16 %v190
      %v272 = vunpack.c.h.b16 %v190
      %v273 = vunpack.c.l.b16 %v191
      %v274 = vunpack.c.l.b16 %v192
      %v275 = vunpack.c.h.b16 %v192
      %v276 = vunpack.c.l.b16 %v193
      %v277 = vpack.c.b16 %v256, %v253
      %v278 = vpack.c.b16 %v257, %v254
      %v279 = vpack.c.b16 %v258, %v255
      %v280 = vpack.c.b16 %v262, %v259
      %v281 = vpack.c.b16 %v263, %v260
      %v282 = vpack.c.b16 %v264, %v261
      %v283 = vpack.c.b16 %v268, %v265
      %v284 = vpack.c.b16 %v269, %v266
      %v285 = vpack.c.b16 %v270, %v267
      %v286 = vpack.c.b16 %v274, %v271
      %v287 = vpack.c.b16 %v275, %v272
      %v288 = vpack.c.b16 %v276, %v273
      %v333 = vunpack.c.l.b16 %v194
      %v334 = vunpack.c.l.b16 %v195
      %v335 = vunpack.c.l.b16 %v196
      %v336 = vunpack.c.l.b16 %v197
      %v337 = vunpack.c.l.b16 %v198
      %v338 = vunpack.c.l.b16 %v199
      %v339 = vunpack.c.l.b16 %v200
      %v340 = vunpack.c.l.b16 %v201
      %v341 = vunpack.c.l.b16 %v202
      %v342 = vunpack.c.l.b16 %v203
      %v343 = vunpack.c.l.b16 %v204
      %v344 = vunpack.c.l.b16 %v205
      %v345 = vunpack.c.l.b16 %v206
      %v346 = vunpack.c.l.b16 %v207
      %v347 = vunpack.c.l.b16 %v208
      %v348 = vunpack.c.l.b16 %v209
      %v349 = vunpack.c.l.b16 %v210
      %v350 = vunpack.c.l.b16 %v211
      %v351 = vunpack.c.l.b16 %v212
      %v352 = vunpack.c.l.b16 %v213
      %v353 = vunpack.c.l.b16 %v214
      %v354 = vunpack.c.l.b16 %v215
      %v355 = vunpack.c.l.b16 %v216
      %v356 = vunpack.c.l.b16 %v217
      %v357 = vunpack.c.l.b16 %v218
      %v358 = vunpack.c.l.b16 %v219
      %v359 = vunpack.c.l.b16 %v220
      %v360 = vunpack.c.l.b16 %v221
      %v361 = vunpack.c.l.b16 %v222
      %v362 = vunpack.c.l.b16 %v223
      %v363 = vunpack.c.l.b16 %v224
      %v364 = vunpack.c.l.b16 %v225
      %v365 = vunpack.c.l.b16 %v226
      %v366 = vunpack.c.l.b16 %v227
      %v367 = vunpack.c.l.b16 %v228
      %v368 = vunpack.c.l.b16 %v229
      %v369 = vpack.c.b16 %v334, %v333
      %v370 = vpack.c.b16 %v336, %v335
      %v371 = vpack.c.b16 %v338, %v337
      %v372 = vpack.c.b16 %v340, %v339
      %v373 = vpack.c.b16 %v342, %v341
      %v374 = vpack.c.b16 %v344, %v343
      %v375 = vpack.c.b16 %v346, %v345
      %v376 = vpack.c.b16 %v348, %v347
      %v377 = vpack.c.b16 %v350, %v349
      %v378 = vpack.c.b16 %v352, %v351
      %v379 = vpack.c.b16 %v354, %v353
      %v380 = vpack.c.b16 %v356, %v355
      %v381 = vpack.c.b16 %v358, %v357
      %v382 = vpack.c.b16 %v360, %v359
      %v383 = vpack.c.b16 %v362, %v361
      %v384 = vpack.c.b16 %v364, %v363
      %v385 = vpack.c.b16 %v366, %v365
      %v386 = vpack.c.b16 %v368, %v367
      %vm405 = vcmask 261120
      %v407 = vsel %vm405, %v279, 0
      %v410 = vsel %vm405, %v282, 0
      %v413 = vsel %vm405, %v285, 0
      %v416 = vsel %vm405, %v288, 0
      %418 = vmatprep.subr.bf16.mxu0 0
      %419 = vmatpush1.bf16.msra.mxu0 %v369
      %420 = vmatprep.subr.bf16.mxu0 0
      %421 = vmatpush1.bf16.msra.mxu0 %v370
      %422 = vmatprep.subr.bf16.mxu0 0
      %423 = vmatpush1.bf16.msra.mxu0 %v371
      %424 = vmatprep.subr.bf16.mxu0 0
      %425 = vmatpush1.bf16.msra.mxu0 %v372
      %426 = vmatprep.subr.bf16.mxu0 0
      %427 = vmatpush1.bf16.msra.mxu0 %v373
      %428 = vmatprep.subr.bf16.mxu0 0
      %429 = vmatpush1.bf16.msra.mxu0 %v374
      %430 = vmatprep.subr.bf16.mxu0 0
      %431 = vmatpush1.bf16.msra.mxu0 %v375
      %432 = vmatprep.subr.bf16.mxu0 0
      %433 = vmatpush1.bf16.msra.mxu0 %v376
      %434 = vmatprep.subr.bf16.mxu0 0
      %435 = vmatpush1.bf16.msra.mxu0 %v377
      %436 = vmatprep.subr.bf16.mxu0 0
      %437 = vmatpush1.bf16.msra.mxu0 %v378
      %438 = vmatprep.subr.bf16.mxu0 0
      %439 = vmatpush1.bf16.msra.mxu0 %v379
      %440 = vmatprep.subr.bf16.mxu0 0
      %441 = vmatpush1.bf16.msra.mxu0 %v380
      %442 = vmatprep.subr.bf16.mxu0 0
      %443 = vmatpush1.bf16.msra.mxu0 %v381
      %444 = vmatprep.subr.bf16.mxu0 0
      %445 = vmatpush1.bf16.msra.mxu0 %v382
      %446 = vmatprep.subr.bf16.mxu0 0
      %447 = vmatpush1.bf16.msra.mxu0 %v383
      %448 = vmatprep.subr.bf16.mxu0 0
      %449 = vmatpush1.bf16.msra.mxu0 %v384
      %450 = vmatprep.mubr.bf16.mxu0 %v278
      %451 = vmatmul.mubr.bf16.gmra.mrb[0].mxu0 %v277
      %v452 = vpop.f32.mrb[0].mxu0
      %v453 = vadd.f32 %v235, %v452
      %v454 = vpop.f32.mrb[0].mxu0
      %v455 = vpop.f32.mrb[0].mxu0
      %v456 = vadd.f32 %v235, %v455
      %v457 = vpop.f32.mrb[0].mxu0
      %458 = vmatprep.mubr.bf16.mxu0 %v281
      %459 = vmatmul.mubr.bf16.gmra.mrb[0].mxu0 %v280
      %v460 = vpop.f32.mrb[0].mxu0
      %v461 = vadd.f32 %v235, %v460
      %v462 = vpop.f32.mrb[0].mxu0
      %v463 = vpop.f32.mrb[0].mxu0
      %v464 = vadd.f32 %v235, %v463
      %v465 = vpop.f32.mrb[0].mxu0
      %466 = vmatprep.mubr.bf16.mxu0 %v284
      %467 = vmatmul.mubr.bf16.gmra.mrb[0].mxu0 %v283
      %v468 = vpop.f32.mrb[0].mxu0
      %v469 = vadd.f32 %v235, %v468
      %v470 = vpop.f32.mrb[0].mxu0
      %v471 = vpop.f32.mrb[0].mxu0
      %v472 = vadd.f32 %v235, %v471
      %v473 = vpop.f32.mrb[0].mxu0
      %474 = vmatprep.mubr.bf16.mxu0 %v287
      %475 = vmatmul.mubr.bf16.gmra.mrb[0].mxu0 %v286
      %v476 = vpop.f32.mrb[0].mxu0
      %v477 = vadd.f32 %v235, %v476
      %v478 = vpop.f32.mrb[0].mxu0
      %v479 = vpop.f32.mrb[0].mxu0
      %v480 = vadd.f32 %v235, %v479
      %v481 = vpop.f32.mrb[0].mxu0
      %482 = vdwg.mxu0
      %483 = vmatprep.subr.bf16.mxu0 0
      %484 = vmatpush1.bf16.msra.mxu0 %v385
      %485 = vmatprep.subr.bf16.mxu0 0
      %486 = vmatpush1.bf16.msra.mxu0 %v386
      %487 = vmatprep.subr.bf16.mxu0 0
      %488 = vmatpush1.bf16.msra.mxu0 0
      %489 = vmatprep.subr.bf16.mxu0 0
      %490 = vmatpush1.bf16.msra.mxu0 0
      %491 = vmatprep.subr.bf16.mxu0 0
      %492 = vmatpush1.bf16.msra.mxu0 0
      %493 = vmatprep.subr.bf16.mxu0 0
      %494 = vmatpush1.bf16.msra.mxu0 0
      %495 = vmatprep.subr.bf16.mxu0 0
      %496 = vmatpush1.bf16.msra.mxu0 0
      %497 = vmatprep.subr.bf16.mxu0 0
      %498 = vmatpush1.bf16.msra.mxu0 0
      %499 = vmatprep.subr.bf16.mxu0 0
      %500 = vmatpush1.bf16.msra.mxu0 0
      %501 = vmatprep.subr.bf16.mxu0 0
      %502 = vmatpush1.bf16.msra.mxu0 0
      %503 = vmatprep.subr.bf16.mxu0 0
      %504 = vmatpush1.bf16.msra.mxu0 0
      %505 = vmatprep.subr.bf16.mxu0 0
      %506 = vmatpush1.bf16.msra.mxu0 0
      %507 = vmatprep.subr.bf16.mxu0 0
      %508 = vmatpush1.bf16.msra.mxu0 0
      %509 = vmatprep.subr.bf16.mxu0 0
      %510 = vmatpush1.bf16.msra.mxu0 0
      %511 = vmatprep.subr.bf16.mxu0 0
      %512 = vmatpush1.bf16.msra.mxu0 0
      %513 = vmatprep.subr.bf16.mxu0 0
      %514 = vmatpush1.bf16.msra.mxu0 0
      %515 = vmatprep.mubr.bf16.mxu0 0
      %516 = vmatmul.mubr.bf16.gmra.mrb[0].mxu0 %v407
      %v517 = vpop.f32.mrb[0].mxu0
      %v518 = vadd.f32 %v453, %v517
      %v519 = vpop.f32.mrb[0].mxu0
      %v520 = vpop.f32.mrb[0].mxu0
      %v521 = vadd.f32 %v456, %v520
      %v522 = vpop.f32.mrb[0].mxu0
      %523 = vmatprep.mubr.bf16.mxu0 0
      %524 = vmatmul.mubr.bf16.gmra.mrb[0].mxu0 %v410
      %v525 = vpop.f32.mrb[0].mxu0
      %v526 = vadd.f32 %v461, %v525
      %v527 = vpop.f32.mrb[0].mxu0
      %v528 = vpop.f32.mrb[0].mxu0
      %v529 = vadd.f32 %v464, %v528
      %v530 = vpop.f32.mrb[0].mxu0
      %531 = vmatprep.mubr.bf16.mxu0 0
      %532 = vmatmul.mubr.bf16.gmra.mrb[0].mxu0 %v413
      %v533 = vpop.f32.mrb[0].mxu0
      %v534 = vadd.f32 %v469, %v533
      %v535 = vpop.f32.mrb[0].mxu0
      %v536 = vpop.f32.mrb[0].mxu0
      %v537 = vadd.f32 %v472, %v536
      %v538 = vpop.f32.mrb[0].mxu0
      %539 = vmatprep.mubr.bf16.mxu0 0
      %540 = vmatmul.mubr.bf16.gmra.mrb[0].mxu0 %v416
      %v541 = vpop.f32.mrb[0].mxu0
      %v542 = vadd.f32 %v477, %v541
      %v543 = vpop.f32.mrb[0].mxu0
      %v544 = vpop.f32.mrb[0].mxu0
      %v545 = vadd.f32 %v480, %v544
      %v546 = vpop.f32.mrb[0].mxu0
      %547 = vdwg.mxu0
      %v548 = vsub.f32 0.0, %v518
      %v549 = vsub.f32 0.0, %v521
      %v550 = vsub.f32 0.0, %v526
      %v551 = vsub.f32 0.0, %v529
      %v552 = vsub.f32 0.0, %v534
      %v553 = vsub.f32 0.0, %v537
      %v554 = vsub.f32 0.0, %v542
      %v555 = vsub.f32 0.0, %v545
      %v556 = vmul.f32 %v548, 1.442695
      %v557 = vpow.pop %v556
      %v558 = vmul.f32 %v549, 1.442695
      %v559 = vpow.pop %v558
      %v560 = vmul.f32 %v550, 1.442695
      %v561 = vpow.pop %v560
      %v562 = vmul.f32 %v551, 1.442695
      %v563 = vpow.pop %v562
      %v564 = vmul.f32 %v552, 1.442695
      %v565 = vpow.pop %v564
      %v566 = vmul.f32 %v553, 1.442695
      %v567 = vpow.pop %v566
      %v568 = vmul.f32 %v554, 1.442695
      %v569 = vpow.pop %v568
      %v570 = vmul.f32 %v555, 1.442695
      %v571 = vpow.pop %v570
      %v572 = vadd.f32 %v557, 1.0
      %v573 = vadd.f32 %v559, 1.0
      %v574 = vadd.f32 %v561, 1.0
      %v575 = vadd.f32 %v563, 1.0
      %v576 = vadd.f32 %v565, 1.0
      %v577 = vadd.f32 %v567, 1.0
      %v578 = vadd.f32 %v569, 1.0
      %v579 = vadd.f32 %v571, 1.0
      %v580 = vrcp.pop %v572
      %v581 = vmul.f32 1.0, %v580
      %v582 = vrcp.pop %v573
      %v583 = vmul.f32 1.0, %v582
      %v584 = vrcp.pop %v574
      %v585 = vmul.f32 1.0, %v584
      %v586 = vrcp.pop %v575
      %v587 = vmul.f32 1.0, %v586
      %v588 = vrcp.pop %v576
      %v589 = vmul.f32 1.0, %v588
      %v590 = vrcp.pop %v577
      %v591 = vmul.f32 1.0, %v590
      %v592 = vrcp.pop %v578
      %v593 = vmul.f32 1.0, %v592
      %v594 = vrcp.pop %v579
      %v595 = vmul.f32 1.0, %v594
      %v596 = vpack.c.bf16 %v583, %v581
      %v597 = vpack.c.bf16 %v587, %v585
      %v598 = vpack.c.bf16 %v591, %v589
      %v599 = vpack.c.bf16 %v595, %v593
      %v604 = vunpack.c.l.b16 %v596
      %v605 = vunpack.c.h.b16 %v596
      %v606 = vunpack.c.l.b16 %v597
      %v607 = vunpack.c.h.b16 %v597
      %v608 = vunpack.c.l.b16 %v598
      %v609 = vunpack.c.h.b16 %v598
      %v610 = vunpack.c.l.b16 %v599
      %v611 = vunpack.c.h.b16 %v599
      %v612 = vpack.c.b16 %v604, %v604
      %v613 = vpack.c.b16 %v605, %v605
      %v614 = vpack.c.b16 %v606, %v606
      %v615 = vpack.c.b16 %v607, %v607
      %v616 = vpack.c.b16 %v608, %v608
      %v617 = vpack.c.b16 %v609, %v609
      %v618 = vpack.c.b16 %v610, %v610
      %v619 = vpack.c.b16 %v611, %v611
      %628 = vst [vmem:[%s175] sm:$0xf] %v612
      %629 = vst [vmem:[%s175 + $0x4] sm:$0xf] %v613
      %630 = vst [vmem:[%s175 + $0x8] sm:$0xf] %v614
      %631 = vst [vmem:[%s175 + $0xc] sm:$0xf] %v615
      %632 = vst [vmem:[%s175 + $0x10] sm:$0xf] %v616
      %633 = vst [vmem:[%s175 + $0x14] sm:$0xf] %v617
      %634 = vst [vmem:[%s175 + $0x18] sm:$0xf] %v618
      %635 = vst [vmem:[%s175 + $0x1c] sm:$0xf] %v619
      %s636 = smul.u32 8, %s14
      %p637 = scmp.lt.s32.totalorder %s636, 15
      %s638 = scalar_select %p637, %s636, 15
      %s639 = smul.addr %s638, 4
      %s640 = scalar_lea.vmem %s3, %s639
      // Predicated region
      $region33: #{clagnosco_autoencoder_forward.17} parent=31 // pred_check
        %p641 = pneg %p100
      $region34: #{clagnosco_autoencoder_forward.17} parent=31 // pred_check_branch
        %643 = sbr.rel (%p641) target = $region36
      $region35: #{clagnosco_autoencoder_forward.17} parent=31 // pred_region
        %s644 = smul.u32 8, %s14
      $region36: #{clagnosco_autoencoder_forward.17} parent=31 // pred_fallthru
        _
    $region32: #{clagnosco_autoencoder_forward.17} parent=5 // pred_fallthru
      _
    %p645 = scmp.le.s32.totalorder 2, %s9
    // Predicated region
    $region37: #{clagnosco_autoencoder_forward.17} parent=5 // pred_check
      %p646 = pneg %p645
    $region38: #{clagnosco_autoencoder_forward.17} parent=5 // pred_check_branch
      %648 = sbr.rel (%p646) target = $region40
    $region39: #{clagnosco_autoencoder_forward.17} parent=5 // pred_region
      %s649 = ssub.s32 %s9, 2
      // Predicated region
      $region41: #{clagnosco_autoencoder_forward.17} parent=39 // pred_check
        %p650 = pneg %p106
      $region42: #{clagnosco_autoencoder_forward.17} parent=39 // pred_check_branch
        %652 = sbr.rel (%p650) target = $region44
      $region43: #{clagnosco_autoencoder_forward.17} parent=39 // pred_region
        %s653 = smul.u32 8, %s15
        %p654 = scmp.lt.s32.totalorder %s653, 15
        %s655 = scalar_select %p654, %s653, 15
        %s656 = smul.addr %s655, 4
        %s657 = scalar_lea.vmem %s3, %s656
      $region44: #{clagnosco_autoencoder_forward.17} parent=39 // pred_fallthru
        _
    $region40: #{clagnosco_autoencoder_forward.17} parent=5 // pred_fallthru
      _
  $region6: #{clagnosco_autoencoder_forward.17} parent=0 // loop_footer
    %s13 = sadd.s32 1, %s9
  $region7: #{clagnosco_autoencoder_forward.17} parent=0 // loop_footer_branch
    %8 = sbr.rel target = $region3
  $region8: #{clagnosco_autoencoder_forward.17} parent=0 // loop_exit
    _

</llo_original>
